<compile_context>
chip_gen: v7x
topology: tpu7x:2x2x1
jax: 0.10.0
libtpu: 0.0.40
codegen_flags: <defaults>
</compile_context>

<pallas_src>
import math
from functools import partial, lru_cache

import numpy as np
import jax
import jax.numpy as jnp
from jax import lax
from jax.experimental import pallas as pl
from jax.experimental.pallas import tpu as pltpu

# ----- model hyper-params (module defaults scaled down to a toy size) -----
D_MODEL = 32          # encoder_output_size / attention_dim
N_HEADS = 4
HEAD_DIM = D_MODEL // N_HEADS
FFN_DIM = 64          # linear_units
VOCAB = 64            # vocab_size
NUM_BLOCKS = 2        # left decoder blocks
R_NUM_BLOCKS = 1      # right decoder blocks
EPS = 1e-5
ATTN_SCALE = 1.0 / math.sqrt(HEAD_DIM)
NEG_INF = -1e30       # finite fill keeps f32 softmax NaN-free on fully-masked rows


def _round_up(n, m):
    return ((n + m - 1) // m) * m


def _nbytes(a):
    return int(a.size) * a.dtype.itemsize


# =========================== fused decoder kernel ===========================

def _layer_norm(x, g, b):
    mean = jnp.mean(x, axis=-1, keepdims=True)
    xc = x - mean
    var = jnp.mean(xc * xc, axis=-1, keepdims=True)
    return xc * lax.rsqrt(var + EPS) * g + b


def _attention(xn_q, src, wqkv_ref, bqkv_ref, l, base, w_o, b_o, bias, mask):
    """Multi-head attention + single merged output projection.

    xn_q: (Lp, D) queries source; src: (Tk, D) key/value source.
    wqkv_ref[l, base+{0,1,2}, h] are the per-head (D, dk) q/k/v weights
    (pre-split on a leading axis -> no runtime lane slicing); bias/mask are
    (Lp, Tk) additive bias / bool mask shared across heads.
    """
    parts = []
    for h in range(N_HEADS):
        q = jnp.dot(xn_q, wqkv_ref[l, base + 0, h],
                    preferred_element_type=jnp.float32) + bqkv_ref[l, base + 0, h]
        k = jnp.dot(src, wqkv_ref[l, base + 1, h],
                    preferred_element_type=jnp.float32) + bqkv_ref[l, base + 1, h]
        v = jnp.dot(src, wqkv_ref[l, base + 2, h],
                    preferred_element_type=jnp.float32) + bqkv_ref[l, base + 2, h]
        # scores: contract head_dim of q with head_dim of k (no transpose needed)
        s = lax.dot_general(q, k, (((1,), (1,)), ((), ())),
                            preferred_element_type=jnp.float32) * ATTN_SCALE
        s = s + bias                                   # one add instead of a select
        m = jnp.max(s, axis=-1, keepdims=True)
        p = jnp.exp(s - m)
        inv = pl.reciprocal(jnp.sum(p, axis=-1, keepdims=True), approx=False)
        a = jnp.where(mask, p * inv, 0.0)              # wenet zeroes masked weights
        parts.append(jnp.dot(a, v, preferred_element_type=jnp.float32))
    ctx = jnp.concatenate(parts, axis=-1)              # (Lp, D) head merge
    return jnp.dot(ctx, w_o, preferred_element_type=jnp.float32) + b_o


def _decoder_kernel(lens_ref,                          # SMEM (B,) i32 (prefetch)
                    x_ref, mem_ref, mmask_ref,         # per-batch VMEM blocks
                    wqkv_ref, bqkv_ref, wo_ref, wf1b_ref, wf2_ref,
                    pvec_ref, head_ref,                # packed weight slabs
                    out_ref, *, num_layers, Lp, Tp):
    D = D_MODEL
    b = pl.program_id(0)

    x = x_ref[0]                                       # (Lp, D)  embedded input
    mem = mem_ref[0]                                   # (Tp, D)  encoder memory

    # ---- causal + length mask for self-attn, from the SMEM length scalar ----
    len_b = lens_ref[b]
    kpos = lax.broadcasted_iota(jnp.int32, (Lp, Lp), 1)
    qpos = lax.broadcasted_iota(jnp.int32, (Lp, Lp), 0)
    tgt_mask = (kpos < len_b) & (kpos <= qpos)         # (Lp, Lp) bool
    tgt_bias = jnp.where(tgt_mask, 0.0, NEG_INF)

    # ---- encoder-memory mask -> additive bias, built once ----
    mvalid = mmask_ref[0] > 0.5                        # (1, Tp) bool
    mem_mask = jnp.broadcast_to(mvalid, (Lp, Tp))
    mem_bias = jnp.where(mem_mask, 0.0, NEG_INF)

    for l in range(num_layers):
        g1 = pvec_ref[l, 0:1, :]
        g2 = pvec_ref[l, 1:2, :]
        g3 = pvec_ref[l, 2:3, :]
        be1 = pvec_ref[l, 3:4, :]
        be2 = pvec_ref[l, 4:5, :]
        be3 = pvec_ref[l, 5:6, :]
        b_so = pvec_ref[l, 6:7, :]
        b_co = pvec_ref[l, 7:8, :]
        b_f2 = pvec_ref[l, 8:9, :]

        # -------- self attention (pre-LN, residual folded) --------
        xn = _layer_norm(x, g1, be1)
        x = x + _attention(xn, xn, wqkv_ref, bqkv_ref, l, 0,
                           wo_ref[l, 0], b_so, tgt_bias, tgt_mask)

        # -------- source attention --------
        xn = _layer_norm(x, g2, be2)
        x = x + _attention(xn, mem, wqkv_ref, bqkv_ref, l, 3,
                           wo_ref[l, 1], b_co, mem_bias, mem_mask)

        # -------- position-wise feed forward (ReLU) --------
        xn = _layer_norm(x, g3, be3)
        h = jnp.maximum(
            jnp.dot(xn, wf1b_ref[l, 0:D, :], preferred_element_type=jnp.float32)
            + wf1b_ref[l, D:D + 1, :], 0.0)
        x = x + jnp.dot(h, wf2_ref[l], preferred_element_type=jnp.float32) + b_f2

    # -------- after_norm + output projection (lane-dense, Vp = 128k) --------
    an_g = head_ref[0:1, 0:D]
    an_b = head_ref[1:2, 0:D]
    out_b = head_ref[2:3, :]
    out_w = head_ref[8:8 + D, :]
    xn = _layer_norm(x, an_g, an_b)
    out_ref[0] = jnp.dot(xn, out_w, preferred_element_type=jnp.float32) + out_b


# ============================== python wrappers ==============================

@lru_cache(maxsize=None)
def _pos_encoding(length, d):
    """Sinusoidal PE, computed once per (length, d) with numpy (outside XLA)."""
    pos = np.arange(length, dtype=np.float32)[:, None]
    div = np.exp(np.arange(0, d, 2, dtype=np.float32) * (-math.log(10000.0) / d))
    pe = np.zeros((length, d), np.float32)
    pe[:, 0::2] = np.sin(pos * div)
    pe[:, 1::2] = np.cos(pos * div)
    return pe


@jax.jit
def transformer_decoder_forward(p, memory, memory_mask, ys_in_pad, ys_in_lens):
    """One fused Pallas kernel runs the whole TransformerDecoder forward."""
    B, L = ys_in_pad.shape
    Tin = memory.shape[1]
    nl = p["wqkv"].shape[0]
    D, F = D_MODEL, FFN_DIM
    Lp = _round_up(L, 8)             # keep reshapes / blocks tile-aligned
    Tp = _round_up(Tin, 8)
    Vp = p["head"].shape[1]          # vocab padded to a 128-lane multiple

    tok = ys_in_pad.astype(jnp.int32)
    if Lp != L:
        tok = jnp.pad(tok, ((0, 0), (0, Lp - L)))

    # Embedding lookup as a gather + scale + PE in XLA (O(B*L*D) bytes) instead
    # of an O(B*L*V) one-hot matmul inside the kernel.
    pe = _pos_encoding(Lp, D)
    x0 = p["embed"][tok] * math.sqrt(D) + pe[None, :, :]           # (B, Lp, D)

    mem = memory.astype(jnp.float32)
    mmask = memory_mask.reshape(B, 1, Tin).astype(jnp.float32)
    if Tp != Tin:
        mem = jnp.pad(mem, ((0, 0), (0, Tp - Tin), (0, 0)))
        mmask = jnp.pad(mmask, ((0, 0), (0, 0), (0, Tp - Tin)))
    lens = ys_in_lens.astype(jnp.int32)                             # -> SMEM

    kernel = partial(_decoder_kernel, num_layers=nl, Lp=Lp, Tp=Tp)

    grid_spec = pltpu.PrefetchScalarGridSpec(
        num_scalar_prefetch=1,
        grid=(B,),
        in_specs=[
            pl.BlockSpec((1, Lp, D), lambda b, lens: (b, 0, 0)),       # x0
            pl.BlockSpec((1, Tp, D), lambda b, lens: (b, 0, 0)),       # memory
            pl.BlockSpec((1, 1, Tp), lambda b, lens: (b, 0, 0)),       # mem mask
            pl.BlockSpec(p["wqkv"].shape, lambda b, lens: (0, 0, 0, 0, 0)),
            pl.BlockSpec(p["bqkv"].shape, lambda b, lens: (0, 0, 0, 0, 0)),
            pl.BlockSpec(p["wo"].shape, lambda b, lens: (0, 0, 0, 0)),
            pl.BlockSpec(p["wf1b"].shape, lambda b, lens: (0, 0, 0)),
            pl.BlockSpec(p["wf2"].shape, lambda b, lens: (0, 0, 0)),
            pl.BlockSpec(p["pvec"].shape, lambda b, lens: (0, 0, 0)),
            pl.BlockSpec(p["head"].shape, lambda b, lens: (0, 0)),
        ],
        out_specs=pl.BlockSpec((1, Lp, Vp), lambda b, lens: (b, 0, 0)),
    )

    # rough cost hint for XLA's scheduler
    f_self = 8 * Lp * D * D + 4 * Lp * Lp * D
    f_src = 4 * Lp * D * D + 4 * Tp * D * D + 4 * Lp * Tp * D
    f_ffn = 4 * Lp * D * F
    flops = B * (nl * (f_self + f_src + f_ffn) + 2 * Lp * D * Vp)
    transc = B * nl * N_HEADS * Lp * (Lp + Tp)
    in_bytes = (_nbytes(x0) + _nbytes(mem) + _nbytes(mmask) + _nbytes(lens)
                + sum(_nbytes(p[k]) for k in
                      ("wqkv", "bqkv", "wo", "wf1b", "wf2", "pvec", "head")))
    out_bytes = B * Lp * Vp * 4

    logits = pl.pallas_call(
        kernel,
        out_shape=jax.ShapeDtypeStruct((B, Lp, Vp), jnp.float32),
        grid_spec=grid_spec,
        compiler_params=pltpu.CompilerParams(
            dimension_semantics=("parallel",),
            vmem_limit_bytes=32 * 1024 * 1024,
        ),
        cost_estimate=pl.CostEstimate(flops=flops, transcendentals=transc,
                                      bytes_accessed=in_bytes + out_bytes),
    )(lens, x0, mem, mmask, p["wqkv"], p["bqkv"], p["wo"], p["wf1b"],
      p["wf2"], p["pvec"], p["head"])

    x = logits[:, :L, :VOCAB]

    # olens = tgt_mask.sum(1), matching the torch module (shape (B, L))
    kpos = jnp.arange(L, dtype=jnp.int32)
    key_valid = kpos[None, :] < ys_in_lens[:, None]
    tgt_mask = key_valid[:, None, :] & jnp.tril(jnp.ones((L, L), bool))[None]
    olens = tgt_mask.sum(axis=1).astype(jnp.int32)
    return x, olens


def bi_transformer_decoder_forward(params, memory, memory_mask, ys_in_pad,
                                   ys_in_lens, r_ys_in_pad, reverse_weight=0.0):
    l_x, olens = transformer_decoder_forward(
        params["left"], memory, memory_mask, ys_in_pad, ys_in_lens)
    r_x = jnp.float32(0.0)   # matches torch.tensor(0.0) when reverse_weight == 0
    if reverse_weight > 0.0:
        r_x, olens = transformer_decoder_forward(
            params["right"], memory, memory_mask, r_ys_in_pad, ys_in_lens)
    return l_x, r_x, olens


# ================================ param init ================================

def _init_decoder(key, num_blocks):
    D, F, V, H, dk = D_MODEL, FFN_DIM, VOCAB, N_HEADS, HEAD_DIM
    Vp = _round_up(V, 128)
    k_embed, k_out, k_layers = jax.random.split(key, 3)
    lk = jax.random.split(k_layers, num_blocks * 10)

    def w(kk, shape):
        return 0.02 * jax.random.normal(kk, shape, jnp.float32)

    wqkv, wo, wf1b, wf2 = [], [], [], []
    for i in range(num_blocks):
        base = 10 * i
        w_sq, w_sk, w_sv, w_so = (w(lk[base + j], (D, D)) for j in range(4))
        w_cq, w_ck, w_cv, w_co = (w(lk[base + 4 + j], (D, D)) for j in range(4))
        w_1 = w(lk[base + 8], (D, F))
        w_2 = w(lk[base + 9], (F, D))
        # head-split q/k/v weights -> (6, H, D, dk): head index is a leading
        # axis, so the kernel never lane-slices at runtime.
        qkv = jnp.stack([w_sq, w_sk, w_sv, w_cq, w_ck, w_cv])        # (6, D, D)
        qkv = qkv.reshape(6, D, H, dk).transpose(0, 2, 1, 3)         # (6, H, D, dk)
        wqkv.append(qkv)
        wo.append(jnp.stack([w_so, w_co]))                           # (2, D, D)
        wf1b.append(jnp.concatenate(
            [w_1, jnp.zeros((1, F), jnp.float32)], axis=0))          # w_f1 + b_f1
        wf2.append(w_2)

    # pvec rows: 0-2 LN gammas (norm1/2/3), 3-5 LN betas, 6 b_o_self,
    # 7 b_o_src, 8 b_f2   (all (D,)-wide per-layer vectors in ONE slab)
    pvec = jnp.concatenate([jnp.ones((num_blocks, 3, D), jnp.float32),
                            jnp.zeros((num_blocks, 6, D), jnp.float32)], axis=1)

    # head slab: row 0 = after_norm gamma, row 1 = after_norm beta,
    # row 2 = output bias, rows 8..8+D-1 = output weight (vocab padded to 128)
    head = jnp.zeros((8 + D, Vp), jnp.float32)
    head = head.at[0, :D].set(1.0)
    head = head.at[8:8 + D, :V].set(w(k_out, (D, V)))

    return dict(
        embed=w(k_embed, (V, D)),
        wqkv=jnp.stack(wqkv),                              # (nl, 6, H, D, dk)
        bqkv=jnp.zeros((num_blocks, 6, H, 1, dk), jnp.float32),
        wo=jnp.stack(wo),                                  # (nl, 2, D, D)
        wf1b=jnp.stack(wf1b),                              # (nl, D+1, F)
        wf2=jnp.stack(wf2),                                # (nl, F, D)
        pvec=pvec,                                         # (nl, 9, D)
        head=head,                                         # (8+D, Vp)
    )


def init_bi_decoder(key):
    kl, kr = jax.random.split(key)
    return dict(left=_init_decoder(kl, NUM_BLOCKS),
                right=_init_decoder(kr, R_NUM_BLOCKS))


# ================================== main ==================================

if __name__ == "__main__":
    key = jax.random.PRNGKey(0)
    kp, k1, k2, k3 = jax.random.split(key, 4)

    B, L, Tin = 2, 8, 10
    params = init_bi_decoder(kp)

    memory = jax.random.normal(k1, (B, Tin, D_MODEL), jnp.float32)
    mem_lens = jnp.array([Tin, 7], jnp.int32)
    memory_mask = (jnp.arange(Tin)[None, None, :] < mem_lens[:, None, None])  # (B,1,Tin)
    ys_in_pad = jax.random.randint(k2, (B, L), 0, VOCAB, jnp.int32)
    r_ys_in_pad = jax.random.randint(k3, (B, L), 0, VOCAB, jnp.int32)
    ys_in_lens = jnp.array([L, 5], jnp.int32)

    l_x, r_x, olens = bi_transformer_decoder_forward(
        params, memory, memory_mask, ys_in_pad, ys_in_lens, r_ys_in_pad,
        reverse_weight=0.3)

    jax.block_until_ready((l_x, r_x, olens))
    assert l_x.shape == (B, L, VOCAB)
    assert r_x.shape == (B, L, VOCAB)
    assert olens.shape == (B, L)
    assert bool(jnp.all(jnp.isfinite(l_x))) and bool(jnp.all(jnp.isfinite(r_x)))
    print("KERNEL_OK")
</pallas_src>

<mosaic_0001>
module attributes {stable_mosaic.version = 11 : i64} {
  func.func @_decoder_kernel(%arg0: i32, %arg1: memref<2xi32, #tpu.memory_space<smem>>, %arg2: memref<1x8x32xf32, #tpu.memory_space<vmem>>, %arg3: memref<1x16x32xf32, #tpu.memory_space<vmem>>, %arg4: memref<1x1x16xf32, #tpu.memory_space<vmem>>, %arg5: memref<2x6x4x32x8xf32, #tpu.memory_space<vmem>>, %arg6: memref<2x6x4x1x8xf32, #tpu.memory_space<vmem>>, %arg7: memref<2x2x32x32xf32, #tpu.memory_space<vmem>>, %arg8: memref<2x33x64xf32, #tpu.memory_space<vmem>>, %arg9: memref<2x64x32xf32, #tpu.memory_space<vmem>>, %arg10: memref<2x9x32xf32, #tpu.memory_space<vmem>>, %arg11: memref<40x128xf32, #tpu.memory_space<vmem>>, %arg12: memref<1x8x128xf32, #tpu.memory_space<vmem>>) attributes {dimension_semantics = [#tpu.dimension_semantics<parallel>], iteration_bounds = array<i64: 2>, scalar_prefetch = 1 : i64, scratch_operands = 0 : i64, tpu.core_type = #tpu.core_type<tc>, window_params = [{transform_indices = @transform_0, window_bounds = array<i64: 1, 8, 32>}, {transform_indices = @transform_1, window_bounds = array<i64: 1, 16, 32>}, {transform_indices = @transform_2, window_bounds = array<i64: 1, 1, 16>}, {pipeline_mode = #tpu.pipeline_mode<synchronous>, transform_indices = @transform_3, window_bounds = array<i64: 2, 6, 4, 32, 8>}, {pipeline_mode = #tpu.pipeline_mode<synchronous>, transform_indices = @transform_4, window_bounds = array<i64: 2, 6, 4, 1, 8>}, {pipeline_mode = #tpu.pipeline_mode<synchronous>, transform_indices = @transform_5, window_bounds = array<i64: 2, 2, 32, 32>}, {pipeline_mode = #tpu.pipeline_mode<synchronous>, transform_indices = @transform_6, window_bounds = array<i64: 2, 33, 64>}, {pipeline_mode = #tpu.pipeline_mode<synchronous>, transform_indices = @transform_7, window_bounds = array<i64: 2, 64, 32>}, {pipeline_mode = #tpu.pipeline_mode<synchronous>, transform_indices = @transform_8, window_bounds = array<i64: 2, 9, 32>}, {pipeline_mode = #tpu.pipeline_mode<synchronous>, transform_indices = @transform_9, window_bounds = array<i64: 40, 128>}, {transform_indices = @transform_10, window_bounds = array<i64: 1, 8, 128>}]} {
    %c0 = arith.constant 0 : index
    %c0_0 = arith.constant 0 : index
    %c0_1 = arith.constant 0 : index
    %0 = vector.load %arg2[%c0, %c0_0, %c0_1] : memref<1x8x32xf32, #tpu.memory_space<vmem>>, vector<1x8x32xf32>
    %1 = vector.shape_cast %0 : vector<1x8x32xf32> to vector<8x32xf32>
    %c0_2 = arith.constant 0 : index
    %c0_3 = arith.constant 0 : index
    %c0_4 = arith.constant 0 : index
    %2 = vector.load %arg3[%c0_2, %c0_3, %c0_4] : memref<1x16x32xf32, #tpu.memory_space<vmem>>, vector<1x16x32xf32>
    %3 = vector.shape_cast %2 : vector<1x16x32xf32> to vector<16x32xf32>
    %4 = arith.index_cast %arg0 : i32 to index
    %5 = memref.load %arg1[%4] : memref<2xi32, #tpu.memory_space<smem>>
    %6 = tpu.iota {dimensions = array<i32: 1>} : vector<8x8xi32>
    %7 = tpu.iota {dimensions = array<i32: 0>} : vector<8x8xi32>
    %8 = vector.broadcast %5 : i32 to vector<8x8xi32>
    %9 = arith.cmpi slt, %6, %8 : vector<8x8xi32>
    %10 = arith.cmpi sle, %6, %7 : vector<8x8xi32>
    %11 = arith.andi %9, %10 : vector<8x8xi1>
    %cst = arith.constant 0.000000e+00 : f32
    %cst_5 = arith.constant -1.000000e+30 : f32
    %12 = vector.broadcast %cst : f32 to vector<8x8xf32>
    %13 = vector.broadcast %cst_5 : f32 to vector<8x8xf32>
    %14 = arith.select %11, %12, %13 : vector<8x8xi1>, vector<8x8xf32>
    %c0_6 = arith.constant 0 : index
    %c0_7 = arith.constant 0 : index
    %c0_8 = arith.constant 0 : index
    %15 = vector.load %arg4[%c0_6, %c0_7, %c0_8] : memref<1x1x16xf32, #tpu.memory_space<vmem>>, vector<1x1x16xf32>
    %16 = vector.shape_cast %15 : vector<1x1x16xf32> to vector<1x16xf32>
    %cst_9 = arith.constant 5.000000e-01 : f32
    %17 = vector.broadcast %cst_9 : f32 to vector<1x16xf32>
    %18 = arith.cmpf ogt, %16, %17 : vector<1x16xf32>
    %19 = vector.shape_cast %18 : vector<1x16xi1> to vector<1x16xi1>
    %20 = vector.broadcast %19 : vector<1x16xi1> to vector<8x16xi1>
    %cst_10 = arith.constant 0.000000e+00 : f32
    %cst_11 = arith.constant -1.000000e+30 : f32
    %21 = vector.broadcast %cst_10 : f32 to vector<8x16xf32>
    %22 = vector.broadcast %cst_11 : f32 to vector<8x16xf32>
    %23 = arith.select %20, %21, %22 : vector<8x16xi1>, vector<8x16xf32>
    %c0_12 = arith.constant 0 : index
    %c0_13 = arith.constant 0 : index
    %c0_14 = arith.constant 0 : index
    %24 = vector.load %arg10[%c0_12, %c0_13, %c0_14] : memref<2x9x32xf32, #tpu.memory_space<vmem>>, vector<1x1x32xf32>
    %25 = vector.shape_cast %24 : vector<1x1x32xf32> to vector<1x32xf32>
    %c0_15 = arith.constant 0 : index
    %c1 = arith.constant 1 : index
    %c0_16 = arith.constant 0 : index
    %26 = vector.load %arg10[%c0_15, %c1, %c0_16] : memref<2x9x32xf32, #tpu.memory_space<vmem>>, vector<1x1x32xf32>
    %27 = vector.shape_cast %26 : vector<1x1x32xf32> to vector<1x32xf32>
    %c0_17 = arith.constant 0 : index
    %c2 = arith.constant 2 : index
    %c0_18 = arith.constant 0 : index
    %28 = vector.load %arg10[%c0_17, %c2, %c0_18] : memref<2x9x32xf32, #tpu.memory_space<vmem>>, vector<1x1x32xf32>
    %29 = vector.shape_cast %28 : vector<1x1x32xf32> to vector<1x32xf32>
    %c0_19 = arith.constant 0 : index
    %c3 = arith.constant 3 : index
    %c0_20 = arith.constant 0 : index
    %30 = vector.load %arg10[%c0_19, %c3, %c0_20] : memref<2x9x32xf32, #tpu.memory_space<vmem>>, vector<1x1x32xf32>
    %31 = vector.shape_cast %30 : vector<1x1x32xf32> to vector<1x32xf32>
    %c0_21 = arith.constant 0 : index
    %c4 = arith.constant 4 : index
    %c0_22 = arith.constant 0 : index
    %32 = vector.load %arg10[%c0_21, %c4, %c0_22] : memref<2x9x32xf32, #tpu.memory_space<vmem>>, vector<1x1x32xf32>
    %33 = vector.shape_cast %32 : vector<1x1x32xf32> to vector<1x32xf32>
    %c0_23 = arith.constant 0 : index
    %c5 = arith.constant 5 : index
    %c0_24 = arith.constant 0 : index
    %34 = vector.load %arg10[%c0_23, %c5, %c0_24] : memref<2x9x32xf32, #tpu.memory_space<vmem>>, vector<1x1x32xf32>
    %35 = vector.shape_cast %34 : vector<1x1x32xf32> to vector<1x32xf32>
    %c0_25 = arith.constant 0 : index
    %c6 = arith.constant 6 : index
    %c0_26 = arith.constant 0 : index
    %36 = vector.load %arg10[%c0_25, %c6, %c0_26] : memref<2x9x32xf32, #tpu.memory_space<vmem>>, vector<1x1x32xf32>
    %37 = vector.shape_cast %36 : vector<1x1x32xf32> to vector<1x32xf32>
    %c0_27 = arith.constant 0 : index
    %c7 = arith.constant 7 : index
    %c0_28 = arith.constant 0 : index
    %38 = vector.load %arg10[%c0_27, %c7, %c0_28] : memref<2x9x32xf32, #tpu.memory_space<vmem>>, vector<1x1x32xf32>
    %39 = vector.shape_cast %38 : vector<1x1x32xf32> to vector<1x32xf32>
    %c0_29 = arith.constant 0 : index
    %c8 = arith.constant 8 : index
    %c0_30 = arith.constant 0 : index
    %40 = vector.load %arg10[%c0_29, %c8, %c0_30] : memref<2x9x32xf32, #tpu.memory_space<vmem>>, vector<1x1x32xf32>
    %41 = vector.shape_cast %40 : vector<1x1x32xf32> to vector<1x32xf32>
    %cst_31 = arith.constant dense<0.000000e+00> : vector<8xf32>
    %42 = vector.multi_reduction <add>, %1, %cst_31 [1] : vector<8x32xf32> to vector<8xf32>
    %43 = vector.shape_cast %42 : vector<8xf32> to vector<8x1xf32>
    %cst_32 = arith.constant 3.200000e+01 : f32
    %44 = vector.broadcast %cst_32 : f32 to vector<8x1xf32>
    %45 = arith.divf %43, %44 : vector<8x1xf32>
    %46 = vector.broadcast %45 : vector<8x1xf32> to vector<8x32xf32>
    %47 = arith.subf %1, %46 : vector<8x32xf32>
    %48 = arith.mulf %47, %47 : vector<8x32xf32>
    %cst_33 = arith.constant dense<0.000000e+00> : vector<8xf32>
    %49 = vector.multi_reduction <add>, %48, %cst_33 [1] : vector<8x32xf32> to vector<8xf32>
    %50 = vector.shape_cast %49 : vector<8xf32> to vector<8x1xf32>
    %cst_34 = arith.constant 3.200000e+01 : f32
    %51 = vector.broadcast %cst_34 : f32 to vector<8x1xf32>
    %52 = arith.divf %50, %51 : vector<8x1xf32>
    %cst_35 = arith.constant 9.99999974E-6 : f32
    %53 = vector.broadcast %cst_35 : f32 to vector<8x1xf32>
    %54 = arith.addf %52, %53 : vector<8x1xf32>
    %55 = math.rsqrt %54 : vector<8x1xf32>
    %56 = vector.broadcast %55 : vector<8x1xf32> to vector<8x32xf32>
    %57 = arith.mulf %47, %56 : vector<8x32xf32>
    %58 = vector.broadcast %25 : vector<1x32xf32> to vector<8x32xf32>
    %59 = arith.mulf %57, %58 : vector<8x32xf32>
    %60 = vector.broadcast %31 : vector<1x32xf32> to vector<8x32xf32>
    %61 = arith.addf %59, %60 : vector<8x32xf32>
    %c0_36 = arith.constant 0 : index
    %c0_37 = arith.constant 0 : index
    %c0_38 = arith.constant 0 : index
    %c0_39 = arith.constant 0 : index
    %62 = vector.load %arg7[%c0_36, %c0_37, %c0_38, %c0_39] : memref<2x2x32x32xf32, #tpu.memory_space<vmem>>, vector<1x1x32x32xf32>
    %63 = vector.shape_cast %62 : vector<1x1x32x32xf32> to vector<32x32xf32>
    %c0_40 = arith.constant 0 : index
    %c0_41 = arith.constant 0 : index
    %c0_42 = arith.constant 0 : index
    %c0_43 = arith.constant 0 : index
    %c0_44 = arith.constant 0 : index
    %64 = vector.load %arg5[%c0_40, %c0_41, %c0_42, %c0_43, %c0_44] : memref<2x6x4x32x8xf32, #tpu.memory_space<vmem>>, vector<1x1x1x32x8xf32>
    %65 = vector.shape_cast %64 : vector<1x1x1x32x8xf32> to vector<32x8xf32>
    %cst_45 = arith.constant dense<0.000000e+00> : vector<8x8xf32>
    %66 = tpu.matmul %61, %65, %cst_45 {dimension_numbers = #tpu.dot_dimension_numbers<[1], [0], [0], [1], [0, 0, 1, 1], [], []>} : vector<8x32xf32>, vector<32x8xf32>, vector<8x8xf32> -> vector<8x8xf32>
    %c0_46 = arith.constant 0 : index
    %c0_47 = arith.constant 0 : index
    %c0_48 = arith.constant 0 : index
    %c0_49 = arith.constant 0 : index
    %c0_50 = arith.constant 0 : index
    %67 = vector.load %arg6[%c0_46, %c0_47, %c0_48, %c0_49, %c0_50] : memref<2x6x4x1x8xf32, #tpu.memory_space<vmem>>, vector<1x1x1x1x8xf32>
    %68 = vector.shape_cast %67 : vector<1x1x1x1x8xf32> to vector<1x8xf32>
    %69 = vector.broadcast %68 : vector<1x8xf32> to vector<8x8xf32>
    %70 = arith.addf %66, %69 : vector<8x8xf32>
    %c0_51 = arith.constant 0 : index
    %c1_52 = arith.constant 1 : index
    %c0_53 = arith.constant 0 : index
    %c0_54 = arith.constant 0 : index
    %c0_55 = arith.constant 0 : index
    %71 = vector.load %arg5[%c0_51, %c1_52, %c0_53, %c0_54, %c0_55] : memref<2x6x4x32x8xf32, #tpu.memory_space<vmem>>, vector<1x1x1x32x8xf32>
    %72 = vector.shape_cast %71 : vector<1x1x1x32x8xf32> to vector<32x8xf32>
    %cst_56 = arith.constant dense<0.000000e+00> : vector<8x8xf32>
    %73 = tpu.matmul %61, %72, %cst_56 {dimension_numbers = #tpu.dot_dimension_numbers<[1], [0], [0], [1], [0, 0, 1, 1], [], []>} : vector<8x32xf32>, vector<32x8xf32>, vector<8x8xf32> -> vector<8x8xf32>
    %c0_57 = arith.constant 0 : index
    %c1_58 = arith.constant 1 : index
    %c0_59 = arith.constant 0 : index
    %c0_60 = arith.constant 0 : index
    %c0_61 = arith.constant 0 : index
    %74 = vector.load %arg6[%c0_57, %c1_58, %c0_59, %c0_60, %c0_61] : memref<2x6x4x1x8xf32, #tpu.memory_space<vmem>>, vector<1x1x1x1x8xf32>
    %75 = vector.shape_cast %74 : vector<1x1x1x1x8xf32> to vector<1x8xf32>
    %76 = vector.broadcast %75 : vector<1x8xf32> to vector<8x8xf32>
    %77 = arith.addf %73, %76 : vector<8x8xf32>
    %c0_62 = arith.constant 0 : index
    %c2_63 = arith.constant 2 : index
    %c0_64 = arith.constant 0 : index
    %c0_65 = arith.constant 0 : index
    %c0_66 = arith.constant 0 : index
    %78 = vector.load %arg5[%c0_62, %c2_63, %c0_64, %c0_65, %c0_66] : memref<2x6x4x32x8xf32, #tpu.memory_space<vmem>>, vector<1x1x1x32x8xf32>
    %79 = vector.shape_cast %78 : vector<1x1x1x32x8xf32> to vector<32x8xf32>
    %cst_67 = arith.constant dense<0.000000e+00> : vector<8x8xf32>
    %80 = tpu.matmul %61, %79, %cst_67 {dimension_numbers = #tpu.dot_dimension_numbers<[1], [0], [0], [1], [0, 0, 1, 1], [], []>} : vector<8x32xf32>, vector<32x8xf32>, vector<8x8xf32> -> vector<8x8xf32>
    %c0_68 = arith.constant 0 : index
    %c2_69 = arith.constant 2 : index
    %c0_70 = arith.constant 0 : index
    %c0_71 = arith.constant 0 : index
    %c0_72 = arith.constant 0 : index
    %81 = vector.load %arg6[%c0_68, %c2_69, %c0_70, %c0_71, %c0_72] : memref<2x6x4x1x8xf32, #tpu.memory_space<vmem>>, vector<1x1x1x1x8xf32>
    %82 = vector.shape_cast %81 : vector<1x1x1x1x8xf32> to vector<1x8xf32>
    %83 = vector.broadcast %82 : vector<1x8xf32> to vector<8x8xf32>
    %84 = arith.addf %80, %83 : vector<8x8xf32>
    %cst_73 = arith.constant dense<0.000000e+00> : vector<8x8xf32>
    %85 = tpu.matmul %70, %77, %cst_73 {dimension_numbers = #tpu.dot_dimension_numbers<[1], [1], [0], [0], [0, 0, 1, 0], [], []>} : vector<8x8xf32>, vector<8x8xf32>, vector<8x8xf32> -> vector<8x8xf32>
    %cst_74 = arith.constant 0.353553385 : f32
    %86 = vector.broadcast %cst_74 : f32 to vector<8x8xf32>
    %87 = arith.mulf %85, %86 : vector<8x8xf32>
    %88 = arith.addf %87, %14 : vector<8x8xf32>
    %cst_75 = arith.constant dense<0xFF800000> : vector<8xf32>
    %89 = vector.multi_reduction <maximumf>, %88, %cst_75 [1] : vector<8x8xf32> to vector<8xf32>
    %90 = vector.shape_cast %89 : vector<8xf32> to vector<8x1xf32>
    %91 = vector.broadcast %90 : vector<8x1xf32> to vector<8x8xf32>
    %92 = arith.subf %88, %91 : vector<8x8xf32>
    %93 = math.exp %92 : vector<8x8xf32>
    %cst_76 = arith.constant dense<0.000000e+00> : vector<8xf32>
    %94 = vector.multi_reduction <add>, %93, %cst_76 [1] : vector<8x8xf32> to vector<8xf32>
    %95 = vector.shape_cast %94 : vector<8xf32> to vector<8x1xf32>
    %96 = tpu.reciprocal %95 : vector<8x1xf32> -> vector<8x1xf32>
    %97 = vector.broadcast %96 : vector<8x1xf32> to vector<8x8xf32>
    %98 = arith.mulf %93, %97 : vector<8x8xf32>
    %cst_77 = arith.constant 0.000000e+00 : f32
    %99 = vector.broadcast %cst_77 : f32 to vector<8x8xf32>
    %100 = arith.select %11, %98, %99 : vector<8x8xi1>, vector<8x8xf32>
    %cst_78 = arith.constant dense<0.000000e+00> : vector<8x8xf32>
    %101 = tpu.matmul %100, %84, %cst_78 {dimension_numbers = #tpu.dot_dimension_numbers<[1], [0], [0], [1], [0, 0, 1, 1], [], []>} : vector<8x8xf32>, vector<8x8xf32>, vector<8x8xf32> -> vector<8x8xf32>
    %c0_79 = arith.constant 0 : index
    %c0_80 = arith.constant 0 : index
    %c1_81 = arith.constant 1 : index
    %c0_82 = arith.constant 0 : index
    %c0_83 = arith.constant 0 : index
    %102 = vector.load %arg5[%c0_79, %c0_80, %c1_81, %c0_82, %c0_83] : memref<2x6x4x32x8xf32, #tpu.memory_space<vmem>>, vector<1x1x1x32x8xf32>
    %103 = vector.shape_cast %102 : vector<1x1x1x32x8xf32> to vector<32x8xf32>
    %cst_84 = arith.constant dense<0.000000e+00> : vector<8x8xf32>
    %104 = tpu.matmul %61, %103, %cst_84 {dimension_numbers = #tpu.dot_dimension_numbers<[1], [0], [0], [1], [0, 0, 1, 1], [], []>} : vector<8x32xf32>, vector<32x8xf32>, vector<8x8xf32> -> vector<8x8xf32>
    %c0_85 = arith.constant 0 : index
    %c0_86 = arith.constant 0 : index
    %c1_87 = arith.constant 1 : index
    %c0_88 = arith.constant 0 : index
    %c0_89 = arith.constant 0 : index
    %105 = vector.load %arg6[%c0_85, %c0_86, %c1_87, %c0_88, %c0_89] : memref<2x6x4x1x8xf32, #tpu.memory_space<vmem>>, vector<1x1x1x1x8xf32>
    %106 = vector.shape_cast %105 : vector<1x1x1x1x8xf32> to vector<1x8xf32>
    %107 = vector.broadcast %106 : vector<1x8xf32> to vector<8x8xf32>
    %108 = arith.addf %104, %107 : vector<8x8xf32>
    %c0_90 = arith.constant 0 : index
    %c1_91 = arith.constant 1 : index
    %c1_92 = arith.constant 1 : index
    %c0_93 = arith.constant 0 : index
    %c0_94 = arith.constant 0 : index
    %109 = vector.load %arg5[%c0_90, %c1_91, %c1_92, %c0_93, %c0_94] : memref<2x6x4x32x8xf32, #tpu.memory_space<vmem>>, vector<1x1x1x32x8xf32>
    %110 = vector.shape_cast %109 : vector<1x1x1x32x8xf32> to vector<32x8xf32>
    %cst_95 = arith.constant dense<0.000000e+00> : vector<8x8xf32>
    %111 = tpu.matmul %61, %110, %cst_95 {dimension_numbers = #tpu.dot_dimension_numbers<[1], [0], [0], [1], [0, 0, 1, 1], [], []>} : vector<8x32xf32>, vector<32x8xf32>, vector<8x8xf32> -> vector<8x8xf32>
    %c0_96 = arith.constant 0 : index
    %c1_97 = arith.constant 1 : index
    %c1_98 = arith.constant 1 : index
    %c0_99 = arith.constant 0 : index
    %c0_100 = arith.constant 0 : index
    %112 = vector.load %arg6[%c0_96, %c1_97, %c1_98, %c0_99, %c0_100] : memref<2x6x4x1x8xf32, #tpu.memory_space<vmem>>, vector<1x1x1x1x8xf32>
    %113 = vector.shape_cast %112 : vector<1x1x1x1x8xf32> to vector<1x8xf32>
    %114 = vector.broadcast %113 : vector<1x8xf32> to vector<8x8xf32>
    %115 = arith.addf %111, %114 : vector<8x8xf32>
    %c0_101 = arith.constant 0 : index
    %c2_102 = arith.constant 2 : index
    %c1_103 = arith.constant 1 : index
    %c0_104 = arith.constant 0 : index
    %c0_105 = arith.constant 0 : index
    %116 = vector.load %arg5[%c0_101, %c2_102, %c1_103, %c0_104, %c0_105] : memref<2x6x4x32x8xf32, #tpu.memory_space<vmem>>, vector<1x1x1x32x8xf32>
    %117 = vector.shape_cast %116 : vector<1x1x1x32x8xf32> to vector<32x8xf32>
    %cst_106 = arith.constant dense<0.000000e+00> : vector<8x8xf32>
    %118 = tpu.matmul %61, %117, %cst_106 {dimension_numbers = #tpu.dot_dimension_numbers<[1], [0], [0], [1], [0, 0, 1, 1], [], []>} : vector<8x32xf32>, vector<32x8xf32>, vector<8x8xf32> -> vector<8x8xf32>
    %c0_107 = arith.constant 0 : index
    %c2_108 = arith.constant 2 : index
    %c1_109 = arith.constant 1 : index
    %c0_110 = arith.constant 0 : index
    %c0_111 = arith.constant 0 : index
    %119 = vector.load %arg6[%c0_107, %c2_108, %c1_109, %c0_110, %c0_111] : memref<2x6x4x1x8xf32, #tpu.memory_space<vmem>>, vector<1x1x1x1x8xf32>
    %120 = vector.shape_cast %119 : vector<1x1x1x1x8xf32> to vector<1x8xf32>
    %121 = vector.broadcast %120 : vector<1x8xf32> to vector<8x8xf32>
    %122 = arith.addf %118, %121 : vector<8x8xf32>
    %cst_112 = arith.constant dense<0.000000e+00> : vector<8x8xf32>
    %123 = tpu.matmul %108, %115, %cst_112 {dimension_numbers = #tpu.dot_dimension_numbers<[1], [1], [0], [0], [0, 0, 1, 0], [], []>} : vector<8x8xf32>, vector<8x8xf32>, vector<8x8xf32> -> vector<8x8xf32>
    %cst_113 = arith.constant 0.353553385 : f32
    %124 = vector.broadcast %cst_113 : f32 to vector<8x8xf32>
    %125 = arith.mulf %123, %124 : vector<8x8xf32>
    %126 = arith.addf %125, %14 : vector<8x8xf32>
    %cst_114 = arith.constant dense<0xFF800000> : vector<8xf32>
    %127 = vector.multi_reduction <maximumf>, %126, %cst_114 [1] : vector<8x8xf32> to vector<8xf32>
    %128 = vector.shape_cast %127 : vector<8xf32> to vector<8x1xf32>
    %129 = vector.broadcast %128 : vector<8x1xf32> to vector<8x8xf32>
    %130 = arith.subf %126, %129 : vector<8x8xf32>
    %131 = math.exp %130 : vector<8x8xf32>
    %cst_115 = arith.constant dense<0.000000e+00> : vector<8xf32>
    %132 = vector.multi_reduction <add>, %131, %cst_115 [1] : vector<8x8xf32> to vector<8xf32>
    %133 = vector.shape_cast %132 : vector<8xf32> to vector<8x1xf32>
    %134 = tpu.reciprocal %133 : vector<8x1xf32> -> vector<8x1xf32>
    %135 = vector.broadcast %134 : vector<8x1xf32> to vector<8x8xf32>
    %136 = arith.mulf %131, %135 : vector<8x8xf32>
    %cst_116 = arith.constant 0.000000e+00 : f32
    %137 = vector.broadcast %cst_116 : f32 to vector<8x8xf32>
    %138 = arith.select %11, %136, %137 : vector<8x8xi1>, vector<8x8xf32>
    %cst_117 = arith.constant dense<0.000000e+00> : vector<8x8xf32>
    %139 = tpu.matmul %138, %122, %cst_117 {dimension_numbers = #tpu.dot_dimension_numbers<[1], [0], [0], [1], [0, 0, 1, 1], [], []>} : vector<8x8xf32>, vector<8x8xf32>, vector<8x8xf32> -> vector<8x8xf32>
    %c0_118 = arith.constant 0 : index
    %c0_119 = arith.constant 0 : index
    %c2_120 = arith.constant 2 : index
    %c0_121 = arith.constant 0 : index
    %c0_122 = arith.constant 0 : index
    %140 = vector.load %arg5[%c0_118, %c0_119, %c2_120, %c0_121, %c0_122] : memref<2x6x4x32x8xf32, #tpu.memory_space<vmem>>, vector<1x1x1x32x8xf32>
    %141 = vector.shape_cast %140 : vector<1x1x1x32x8xf32> to vector<32x8xf32>
    %cst_123 = arith.constant dense<0.000000e+00> : vector<8x8xf32>
    %142 = tpu.matmul %61, %141, %cst_123 {dimension_numbers = #tpu.dot_dimension_numbers<[1], [0], [0], [1], [0, 0, 1, 1], [], []>} : vector<8x32xf32>, vector<32x8xf32>, vector<8x8xf32> -> vector<8x8xf32>
    %c0_124 = arith.constant 0 : index
    %c0_125 = arith.constant 0 : index
    %c2_126 = arith.constant 2 : index
    %c0_127 = arith.constant 0 : index
    %c0_128 = arith.constant 0 : index
    %143 = vector.load %arg6[%c0_124, %c0_125, %c2_126, %c0_127, %c0_128] : memref<2x6x4x1x8xf32, #tpu.memory_space<vmem>>, vector<1x1x1x1x8xf32>
    %144 = vector.shape_cast %143 : vector<1x1x1x1x8xf32> to vector<1x8xf32>
    %145 = vector.broadcast %144 : vector<1x8xf32> to vector<8x8xf32>
    %146 = arith.addf %142, %145 : vector<8x8xf32>
    %c0_129 = arith.constant 0 : index
    %c1_130 = arith.constant 1 : index
    %c2_131 = arith.constant 2 : index
    %c0_132 = arith.constant 0 : index
    %c0_133 = arith.constant 0 : index
    %147 = vector.load %arg5[%c0_129, %c1_130, %c2_131, %c0_132, %c0_133] : memref<2x6x4x32x8xf32, #tpu.memory_space<vmem>>, vector<1x1x1x32x8xf32>
    %148 = vector.shape_cast %147 : vector<1x1x1x32x8xf32> to vector<32x8xf32>
    %cst_134 = arith.constant dense<0.000000e+00> : vector<8x8xf32>
    %149 = tpu.matmul %61, %148, %cst_134 {dimension_numbers = #tpu.dot_dimension_numbers<[1], [0], [0], [1], [0, 0, 1, 1], [], []>} : vector<8x32xf32>, vector<32x8xf32>, vector<8x8xf32> -> vector<8x8xf32>
    %c0_135 = arith.constant 0 : index
    %c1_136 = arith.constant 1 : index
    %c2_137 = arith.constant 2 : index
    %c0_138 = arith.constant 0 : index
    %c0_139 = arith.constant 0 : index
    %150 = vector.load %arg6[%c0_135, %c1_136, %c2_137, %c0_138, %c0_139] : memref<2x6x4x1x8xf32, #tpu.memory_space<vmem>>, vector<1x1x1x1x8xf32>
    %151 = vector.shape_cast %150 : vector<1x1x1x1x8xf32> to vector<1x8xf32>
    %152 = vector.broadcast %151 : vector<1x8xf32> to vector<8x8xf32>
    %153 = arith.addf %149, %152 : vector<8x8xf32>
    %c0_140 = arith.constant 0 : index
    %c2_141 = arith.constant 2 : index
    %c2_142 = arith.constant 2 : index
    %c0_143 = arith.constant 0 : index
    %c0_144 = arith.constant 0 : index
    %154 = vector.load %arg5[%c0_140, %c2_141, %c2_142, %c0_143, %c0_144] : memref<2x6x4x32x8xf32, #tpu.memory_space<vmem>>, vector<1x1x1x32x8xf32>
    %155 = vector.shape_cast %154 : vector<1x1x1x32x8xf32> to vector<32x8xf32>
    %cst_145 = arith.constant dense<0.000000e+00> : vector<8x8xf32>
    %156 = tpu.matmul %61, %155, %cst_145 {dimension_numbers = #tpu.dot_dimension_numbers<[1], [0], [0], [1], [0, 0, 1, 1], [], []>} : vector<8x32xf32>, vector<32x8xf32>, vector<8x8xf32> -> vector<8x8xf32>
    %c0_146 = arith.constant 0 : index
    %c2_147 = arith.constant 2 : index
    %c2_148 = arith.constant 2 : index
    %c0_149 = arith.constant 0 : index
    %c0_150 = arith.constant 0 : index
    %157 = vector.load %arg6[%c0_146, %c2_147, %c2_148, %c0_149, %c0_150] : memref<2x6x4x1x8xf32, #tpu.memory_space<vmem>>, vector<1x1x1x1x8xf32>
    %158 = vector.shape_cast %157 : vector<1x1x1x1x8xf32> to vector<1x8xf32>
    %159 = vector.broadcast %158 : vector<1x8xf32> to vector<8x8xf32>
    %160 = arith.addf %156, %159 : vector<8x8xf32>
    %cst_151 = arith.constant dense<0.000000e+00> : vector<8x8xf32>
    %161 = tpu.matmul %146, %153, %cst_151 {dimension_numbers = #tpu.dot_dimension_numbers<[1], [1], [0], [0], [0, 0, 1, 0], [], []>} : vector<8x8xf32>, vector<8x8xf32>, vector<8x8xf32> -> vector<8x8xf32>
    %cst_152 = arith.constant 0.353553385 : f32
    %162 = vector.broadcast %cst_152 : f32 to vector<8x8xf32>
    %163 = arith.mulf %161, %162 : vector<8x8xf32>
    %164 = arith.addf %163, %14 : vector<8x8xf32>
    %cst_153 = arith.constant dense<0xFF800000> : vector<8xf32>
    %165 = vector.multi_reduction <maximumf>, %164, %cst_153 [1] : vector<8x8xf32> to vector<8xf32>
    %166 = vector.shape_cast %165 : vector<8xf32> to vector<8x1xf32>
    %167 = vector.broadcast %166 : vector<8x1xf32> to vector<8x8xf32>
    %168 = arith.subf %164, %167 : vector<8x8xf32>
    %169 = math.exp %168 : vector<8x8xf32>
    %cst_154 = arith.constant dense<0.000000e+00> : vector<8xf32>
    %170 = vector.multi_reduction <add>, %169, %cst_154 [1] : vector<8x8xf32> to vector<8xf32>
    %171 = vector.shape_cast %170 : vector<8xf32> to vector<8x1xf32>
    %172 = tpu.reciprocal %171 : vector<8x1xf32> -> vector<8x1xf32>
    %173 = vector.broadcast %172 : vector<8x1xf32> to vector<8x8xf32>
    %174 = arith.mulf %169, %173 : vector<8x8xf32>
    %cst_155 = arith.constant 0.000000e+00 : f32
    %175 = vector.broadcast %cst_155 : f32 to vector<8x8xf32>
    %176 = arith.select %11, %174, %175 : vector<8x8xi1>, vector<8x8xf32>
    %cst_156 = arith.constant dense<0.000000e+00> : vector<8x8xf32>
    %177 = tpu.matmul %176, %160, %cst_156 {dimension_numbers = #tpu.dot_dimension_numbers<[1], [0], [0], [1], [0, 0, 1, 1], [], []>} : vector<8x8xf32>, vector<8x8xf32>, vector<8x8xf32> -> vector<8x8xf32>
    %c0_157 = arith.constant 0 : index
    %c0_158 = arith.constant 0 : index
    %c3_159 = arith.constant 3 : index
    %c0_160 = arith.constant 0 : index
    %c0_161 = arith.constant 0 : index
    %178 = vector.load %arg5[%c0_157, %c0_158, %c3_159, %c0_160, %c0_161] : memref<2x6x4x32x8xf32, #tpu.memory_space<vmem>>, vector<1x1x1x32x8xf32>
    %179 = vector.shape_cast %178 : vector<1x1x1x32x8xf32> to vector<32x8xf32>
    %cst_162 = arith.constant dense<0.000000e+00> : vector<8x8xf32>
    %180 = tpu.matmul %61, %179, %cst_162 {dimension_numbers = #tpu.dot_dimension_numbers<[1], [0], [0], [1], [0, 0, 1, 1], [], []>} : vector<8x32xf32>, vector<32x8xf32>, vector<8x8xf32> -> vector<8x8xf32>
    %c0_163 = arith.constant 0 : index
    %c0_164 = arith.constant 0 : index
    %c3_165 = arith.constant 3 : index
    %c0_166 = arith.constant 0 : index
    %c0_167 = arith.constant 0 : index
    %181 = vector.load %arg6[%c0_163, %c0_164, %c3_165, %c0_166, %c0_167] : memref<2x6x4x1x8xf32, #tpu.memory_space<vmem>>, vector<1x1x1x1x8xf32>
    %182 = vector.shape_cast %181 : vector<1x1x1x1x8xf32> to vector<1x8xf32>
    %183 = vector.broadcast %182 : vector<1x8xf32> to vector<8x8xf32>
    %184 = arith.addf %180, %183 : vector<8x8xf32>
    %c0_168 = arith.constant 0 : index
    %c1_169 = arith.constant 1 : index
    %c3_170 = arith.constant 3 : index
    %c0_171 = arith.constant 0 : index
    %c0_172 = arith.constant 0 : index
    %185 = vector.load %arg5[%c0_168, %c1_169, %c3_170, %c0_171, %c0_172] : memref<2x6x4x32x8xf32, #tpu.memory_space<vmem>>, vector<1x1x1x32x8xf32>
    %186 = vector.shape_cast %185 : vector<1x1x1x32x8xf32> to vector<32x8xf32>
    %cst_173 = arith.constant dense<0.000000e+00> : vector<8x8xf32>
    %187 = tpu.matmul %61, %186, %cst_173 {dimension_numbers = #tpu.dot_dimension_numbers<[1], [0], [0], [1], [0, 0, 1, 1], [], []>} : vector<8x32xf32>, vector<32x8xf32>, vector<8x8xf32> -> vector<8x8xf32>
    %c0_174 = arith.constant 0 : index
    %c1_175 = arith.constant 1 : index
    %c3_176 = arith.constant 3 : index
    %c0_177 = arith.constant 0 : index
    %c0_178 = arith.constant 0 : index
    %188 = vector.load %arg6[%c0_174, %c1_175, %c3_176, %c0_177, %c0_178] : memref<2x6x4x1x8xf32, #tpu.memory_space<vmem>>, vector<1x1x1x1x8xf32>
    %189 = vector.shape_cast %188 : vector<1x1x1x1x8xf32> to vector<1x8xf32>
    %190 = vector.broadcast %189 : vector<1x8xf32> to vector<8x8xf32>
    %191 = arith.addf %187, %190 : vector<8x8xf32>
    %c0_179 = arith.constant 0 : index
    %c2_180 = arith.constant 2 : index
    %c3_181 = arith.constant 3 : index
    %c0_182 = arith.constant 0 : index
    %c0_183 = arith.constant 0 : index
    %192 = vector.load %arg5[%c0_179, %c2_180, %c3_181, %c0_182, %c0_183] : memref<2x6x4x32x8xf32, #tpu.memory_space<vmem>>, vector<1x1x1x32x8xf32>
    %193 = vector.shape_cast %192 : vector<1x1x1x32x8xf32> to vector<32x8xf32>
    %cst_184 = arith.constant dense<0.000000e+00> : vector<8x8xf32>
    %194 = tpu.matmul %61, %193, %cst_184 {dimension_numbers = #tpu.dot_dimension_numbers<[1], [0], [0], [1], [0, 0, 1, 1], [], []>} : vector<8x32xf32>, vector<32x8xf32>, vector<8x8xf32> -> vector<8x8xf32>
    %c0_185 = arith.constant 0 : index
    %c2_186 = arith.constant 2 : index
    %c3_187 = arith.constant 3 : index
    %c0_188 = arith.constant 0 : index
    %c0_189 = arith.constant 0 : index
    %195 = vector.load %arg6[%c0_185, %c2_186, %c3_187, %c0_188, %c0_189] : memref<2x6x4x1x8xf32, #tpu.memory_space<vmem>>, vector<1x1x1x1x8xf32>
    %196 = vector.shape_cast %195 : vector<1x1x1x1x8xf32> to vector<1x8xf32>
    %197 = vector.broadcast %196 : vector<1x8xf32> to vector<8x8xf32>
    %198 = arith.addf %194, %197 : vector<8x8xf32>
    %cst_190 = arith.constant dense<0.000000e+00> : vector<8x8xf32>
    %199 = tpu.matmul %184, %191, %cst_190 {dimension_numbers = #tpu.dot_dimension_numbers<[1], [1], [0], [0], [0, 0, 1, 0], [], []>} : vector<8x8xf32>, vector<8x8xf32>, vector<8x8xf32> -> vector<8x8xf32>
    %cst_191 = arith.constant 0.353553385 : f32
    %200 = vector.broadcast %cst_191 : f32 to vector<8x8xf32>
    %201 = arith.mulf %199, %200 : vector<8x8xf32>
    %202 = arith.addf %201, %14 : vector<8x8xf32>
    %cst_192 = arith.constant dense<0xFF800000> : vector<8xf32>
    %203 = vector.multi_reduction <maximumf>, %202, %cst_192 [1] : vector<8x8xf32> to vector<8xf32>
    %204 = vector.shape_cast %203 : vector<8xf32> to vector<8x1xf32>
    %205 = vector.broadcast %204 : vector<8x1xf32> to vector<8x8xf32>
    %206 = arith.subf %202, %205 : vector<8x8xf32>
    %207 = math.exp %206 : vector<8x8xf32>
    %cst_193 = arith.constant dense<0.000000e+00> : vector<8xf32>
    %208 = vector.multi_reduction <add>, %207, %cst_193 [1] : vector<8x8xf32> to vector<8xf32>
    %209 = vector.shape_cast %208 : vector<8xf32> to vector<8x1xf32>
    %210 = tpu.reciprocal %209 : vector<8x1xf32> -> vector<8x1xf32>
    %211 = vector.broadcast %210 : vector<8x1xf32> to vector<8x8xf32>
    %212 = arith.mulf %207, %211 : vector<8x8xf32>
    %cst_194 = arith.constant 0.000000e+00 : f32
    %213 = vector.broadcast %cst_194 : f32 to vector<8x8xf32>
    %214 = arith.select %11, %212, %213 : vector<8x8xi1>, vector<8x8xf32>
    %cst_195 = arith.constant dense<0.000000e+00> : vector<8x8xf32>
    %215 = tpu.matmul %214, %198, %cst_195 {dimension_numbers = #tpu.dot_dimension_numbers<[1], [0], [0], [1], [0, 0, 1, 1], [], []>} : vector<8x8xf32>, vector<8x8xf32>, vector<8x8xf32> -> vector<8x8xf32>
    %216 = tpu.concatenate %101, %139, %177, %215 in 1 : vector<8x8xf32>, vector<8x8xf32>, vector<8x8xf32>, vector<8x8xf32> -> vector<8x32xf32>
    %cst_196 = arith.constant dense<0.000000e+00> : vector<8x32xf32>
    %217 = tpu.matmul %216, %63, %cst_196 {dimension_numbers = #tpu.dot_dimension_numbers<[1], [0], [0], [1], [0, 0, 1, 1], [], []>} : vector<8x32xf32>, vector<32x32xf32>, vector<8x32xf32> -> vector<8x32xf32>
    %218 = vector.broadcast %37 : vector<1x32xf32> to vector<8x32xf32>
    %219 = arith.addf %217, %218 : vector<8x32xf32>
    %220 = arith.addf %1, %219 : vector<8x32xf32>
    %cst_197 = arith.constant dense<0.000000e+00> : vector<8xf32>
    %221 = vector.multi_reduction <add>, %220, %cst_197 [1] : vector<8x32xf32> to vector<8xf32>
    %222 = vector.shape_cast %221 : vector<8xf32> to vector<8x1xf32>
    %cst_198 = arith.constant 3.200000e+01 : f32
    %223 = vector.broadcast %cst_198 : f32 to vector<8x1xf32>
    %224 = arith.divf %222, %223 : vector<8x1xf32>
    %225 = vector.broadcast %224 : vector<8x1xf32> to vector<8x32xf32>
    %226 = arith.subf %220, %225 : vector<8x32xf32>
    %227 = arith.mulf %226, %226 : vector<8x32xf32>
    %cst_199 = arith.constant dense<0.000000e+00> : vector<8xf32>
    %228 = vector.multi_reduction <add>, %227, %cst_199 [1] : vector<8x32xf32> to vector<8xf32>
    %229 = vector.shape_cast %228 : vector<8xf32> to vector<8x1xf32>
    %cst_200 = arith.constant 3.200000e+01 : f32
    %230 = vector.broadcast %cst_200 : f32 to vector<8x1xf32>
    %231 = arith.divf %229, %230 : vector<8x1xf32>
    %cst_201 = arith.constant 9.99999974E-6 : f32
    %232 = vector.broadcast %cst_201 : f32 to vector<8x1xf32>
    %233 = arith.addf %231, %232 : vector<8x1xf32>
    %234 = math.rsqrt %233 : vector<8x1xf32>
    %235 = vector.broadcast %234 : vector<8x1xf32> to vector<8x32xf32>
    %236 = arith.mulf %226, %235 : vector<8x32xf32>
    %237 = vector.broadcast %27 : vector<1x32xf32> to vector<8x32xf32>
    %238 = arith.mulf %236, %237 : vector<8x32xf32>
    %239 = vector.broadcast %33 : vector<1x32xf32> to vector<8x32xf32>
    %240 = arith.addf %238, %239 : vector<8x32xf32>
    %c0_202 = arith.constant 0 : index
    %c1_203 = arith.constant 1 : index
    %c0_204 = arith.constant 0 : index
    %c0_205 = arith.constant 0 : index
    %241 = vector.load %arg7[%c0_202, %c1_203, %c0_204, %c0_205] : memref<2x2x32x32xf32, #tpu.memory_space<vmem>>, vector<1x1x32x32xf32>
    %242 = vector.shape_cast %241 : vector<1x1x32x32xf32> to vector<32x32xf32>
    %c0_206 = arith.constant 0 : index
    %c3_207 = arith.constant 3 : index
    %c0_208 = arith.constant 0 : index
    %c0_209 = arith.constant 0 : index
    %c0_210 = arith.constant 0 : index
    %243 = vector.load %arg5[%c0_206, %c3_207, %c0_208, %c0_209, %c0_210] : memref<2x6x4x32x8xf32, #tpu.memory_space<vmem>>, vector<1x1x1x32x8xf32>
    %244 = vector.shape_cast %243 : vector<1x1x1x32x8xf32> to vector<32x8xf32>
    %cst_211 = arith.constant dense<0.000000e+00> : vector<8x8xf32>
    %245 = tpu.matmul %240, %244, %cst_211 {dimension_numbers = #tpu.dot_dimension_numbers<[1], [0], [0], [1], [0, 0, 1, 1], [], []>} : vector<8x32xf32>, vector<32x8xf32>, vector<8x8xf32> -> vector<8x8xf32>
    %c0_212 = arith.constant 0 : index
    %c3_213 = arith.constant 3 : index
    %c0_214 = arith.constant 0 : index
    %c0_215 = arith.constant 0 : index
    %c0_216 = arith.constant 0 : index
    %246 = vector.load %arg6[%c0_212, %c3_213, %c0_214, %c0_215, %c0_216] : memref<2x6x4x1x8xf32, #tpu.memory_space<vmem>>, vector<1x1x1x1x8xf32>
    %247 = vector.shape_cast %246 : vector<1x1x1x1x8xf32> to vector<1x8xf32>
    %248 = vector.broadcast %247 : vector<1x8xf32> to vector<8x8xf32>
    %249 = arith.addf %245, %248 : vector<8x8xf32>
    %c0_217 = arith.constant 0 : index
    %c4_218 = arith.constant 4 : index
    %c0_219 = arith.constant 0 : index
    %c0_220 = arith.constant 0 : index
    %c0_221 = arith.constant 0 : index
    %250 = vector.load %arg5[%c0_217, %c4_218, %c0_219, %c0_220, %c0_221] : memref<2x6x4x32x8xf32, #tpu.memory_space<vmem>>, vector<1x1x1x32x8xf32>
    %251 = vector.shape_cast %250 : vector<1x1x1x32x8xf32> to vector<32x8xf32>
    %cst_222 = arith.constant dense<0.000000e+00> : vector<16x8xf32>
    %252 = tpu.matmul %3, %251, %cst_222 {dimension_numbers = #tpu.dot_dimension_numbers<[1], [0], [0], [1], [0, 0, 1, 1], [], []>} : vector<16x32xf32>, vector<32x8xf32>, vector<16x8xf32> -> vector<16x8xf32>
    %c0_223 = arith.constant 0 : index
    %c4_224 = arith.constant 4 : index
    %c0_225 = arith.constant 0 : index
    %c0_226 = arith.constant 0 : index
    %c0_227 = arith.constant 0 : index
    %253 = vector.load %arg6[%c0_223, %c4_224, %c0_225, %c0_226, %c0_227] : memref<2x6x4x1x8xf32, #tpu.memory_space<vmem>>, vector<1x1x1x1x8xf32>
    %254 = vector.shape_cast %253 : vector<1x1x1x1x8xf32> to vector<1x8xf32>
    %255 = vector.broadcast %254 : vector<1x8xf32> to vector<16x8xf32>
    %256 = arith.addf %252, %255 : vector<16x8xf32>
    %c0_228 = arith.constant 0 : index
    %c5_229 = arith.constant 5 : index
    %c0_230 = arith.constant 0 : index
    %c0_231 = arith.constant 0 : index
    %c0_232 = arith.constant 0 : index
    %257 = vector.load %arg5[%c0_228, %c5_229, %c0_230, %c0_231, %c0_232] : memref<2x6x4x32x8xf32, #tpu.memory_space<vmem>>, vector<1x1x1x32x8xf32>
    %258 = vector.shape_cast %257 : vector<1x1x1x32x8xf32> to vector<32x8xf32>
    %cst_233 = arith.constant dense<0.000000e+00> : vector<16x8xf32>
    %259 = tpu.matmul %3, %258, %cst_233 {dimension_numbers = #tpu.dot_dimension_numbers<[1], [0], [0], [1], [0, 0, 1, 1], [], []>} : vector<16x32xf32>, vector<32x8xf32>, vector<16x8xf32> -> vector<16x8xf32>
    %c0_234 = arith.constant 0 : index
    %c5_235 = arith.constant 5 : index
    %c0_236 = arith.constant 0 : index
    %c0_237 = arith.constant 0 : index
    %c0_238 = arith.constant 0 : index
    %260 = vector.load %arg6[%c0_234, %c5_235, %c0_236, %c0_237, %c0_238] : memref<2x6x4x1x8xf32, #tpu.memory_space<vmem>>, vector<1x1x1x1x8xf32>
    %261 = vector.shape_cast %260 : vector<1x1x1x1x8xf32> to vector<1x8xf32>
    %262 = vector.broadcast %261 : vector<1x8xf32> to vector<16x8xf32>
    %263 = arith.addf %259, %262 : vector<16x8xf32>
    %cst_239 = arith.constant dense<0.000000e+00> : vector<8x16xf32>
    %264 = tpu.matmul %249, %256, %cst_239 {dimension_numbers = #tpu.dot_dimension_numbers<[1], [1], [0], [0], [0, 0, 1, 0], [], []>} : vector<8x8xf32>, vector<16x8xf32>, vector<8x16xf32> -> vector<8x16xf32>
    %cst_240 = arith.constant 0.353553385 : f32
    %265 = vector.broadcast %cst_240 : f32 to vector<8x16xf32>
    %266 = arith.mulf %264, %265 : vector<8x16xf32>
    %267 = arith.addf %266, %23 : vector<8x16xf32>
    %cst_241 = arith.constant dense<0xFF800000> : vector<8xf32>
    %268 = vector.multi_reduction <maximumf>, %267, %cst_241 [1] : vector<8x16xf32> to vector<8xf32>
    %269 = vector.shape_cast %268 : vector<8xf32> to vector<8x1xf32>
    %270 = vector.broadcast %269 : vector<8x1xf32> to vector<8x16xf32>
    %271 = arith.subf %267, %270 : vector<8x16xf32>
    %272 = math.exp %271 : vector<8x16xf32>
    %cst_242 = arith.constant dense<0.000000e+00> : vector<8xf32>
    %273 = vector.multi_reduction <add>, %272, %cst_242 [1] : vector<8x16xf32> to vector<8xf32>
    %274 = vector.shape_cast %273 : vector<8xf32> to vector<8x1xf32>
    %275 = tpu.reciprocal %274 : vector<8x1xf32> -> vector<8x1xf32>
    %276 = vector.broadcast %275 : vector<8x1xf32> to vector<8x16xf32>
    %277 = arith.mulf %272, %276 : vector<8x16xf32>
    %cst_243 = arith.constant 0.000000e+00 : f32
    %278 = vector.broadcast %cst_243 : f32 to vector<8x16xf32>
    %279 = arith.select %20, %277, %278 : vector<8x16xi1>, vector<8x16xf32>
    %cst_244 = arith.constant dense<0.000000e+00> : vector<8x8xf32>
    %280 = tpu.matmul %279, %263, %cst_244 {dimension_numbers = #tpu.dot_dimension_numbers<[1], [0], [0], [1], [0, 0, 1, 1], [], []>} : vector<8x16xf32>, vector<16x8xf32>, vector<8x8xf32> -> vector<8x8xf32>
    %c0_245 = arith.constant 0 : index
    %c3_246 = arith.constant 3 : index
    %c1_247 = arith.constant 1 : index
    %c0_248 = arith.constant 0 : index
    %c0_249 = arith.constant 0 : index
    %281 = vector.load %arg5[%c0_245, %c3_246, %c1_247, %c0_248, %c0_249] : memref<2x6x4x32x8xf32, #tpu.memory_space<vmem>>, vector<1x1x1x32x8xf32>
    %282 = vector.shape_cast %281 : vector<1x1x1x32x8xf32> to vector<32x8xf32>
    %cst_250 = arith.constant dense<0.000000e+00> : vector<8x8xf32>
    %283 = tpu.matmul %240, %282, %cst_250 {dimension_numbers = #tpu.dot_dimension_numbers<[1], [0], [0], [1], [0, 0, 1, 1], [], []>} : vector<8x32xf32>, vector<32x8xf32>, vector<8x8xf32> -> vector<8x8xf32>
    %c0_251 = arith.constant 0 : index
    %c3_252 = arith.constant 3 : index
    %c1_253 = arith.constant 1 : index
    %c0_254 = arith.constant 0 : index
    %c0_255 = arith.constant 0 : index
    %284 = vector.load %arg6[%c0_251, %c3_252, %c1_253, %c0_254, %c0_255] : memref<2x6x4x1x8xf32, #tpu.memory_space<vmem>>, vector<1x1x1x1x8xf32>
    %285 = vector.shape_cast %284 : vector<1x1x1x1x8xf32> to vector<1x8xf32>
    %286 = vector.broadcast %285 : vector<1x8xf32> to vector<8x8xf32>
    %287 = arith.addf %283, %286 : vector<8x8xf32>
    %c0_256 = arith.constant 0 : index
    %c4_257 = arith.constant 4 : index
    %c1_258 = arith.constant 1 : index
    %c0_259 = arith.constant 0 : index
    %c0_260 = arith.constant 0 : index
    %288 = vector.load %arg5[%c0_256, %c4_257, %c1_258, %c0_259, %c0_260] : memref<2x6x4x32x8xf32, #tpu.memory_space<vmem>>, vector<1x1x1x32x8xf32>
    %289 = vector.shape_cast %288 : vector<1x1x1x32x8xf32> to vector<32x8xf32>
    %cst_261 = arith.constant dense<0.000000e+00> : vector<16x8xf32>
    %290 = tpu.matmul %3, %289, %cst_261 {dimension_numbers = #tpu.dot_dimension_numbers<[1], [0], [0], [1], [0, 0, 1, 1], [], []>} : vector<16x32xf32>, vector<32x8xf32>, vector<16x8xf32> -> vector<16x8xf32>
    %c0_262 = arith.constant 0 : index
    %c4_263 = arith.constant 4 : index
    %c1_264 = arith.constant 1 : index
    %c0_265 = arith.constant 0 : index
    %c0_266 = arith.constant 0 : index
    %291 = vector.load %arg6[%c0_262, %c4_263, %c1_264, %c0_265, %c0_266] : memref<2x6x4x1x8xf32, #tpu.memory_space<vmem>>, vector<1x1x1x1x8xf32>
    %292 = vector.shape_cast %291 : vector<1x1x1x1x8xf32> to vector<1x8xf32>
    %293 = vector.broadcast %292 : vector<1x8xf32> to vector<16x8xf32>
    %294 = arith.addf %290, %293 : vector<16x8xf32>
    %c0_267 = arith.constant 0 : index
    %c5_268 = arith.constant 5 : index
    %c1_269 = arith.constant 1 : index
    %c0_270 = arith.constant 0 : index
    %c0_271 = arith.constant 0 : index
    %295 = vector.load %arg5[%c0_267, %c5_268, %c1_269, %c0_270, %c0_271] : memref<2x6x4x32x8xf32, #tpu.memory_space<vmem>>, vector<1x1x1x32x8xf32>
    %296 = vector.shape_cast %295 : vector<1x1x1x32x8xf32> to vector<32x8xf32>
    %cst_272 = arith.constant dense<0.000000e+00> : vector<16x8xf32>
    %297 = tpu.matmul %3, %296, %cst_272 {dimension_numbers = #tpu.dot_dimension_numbers<[1], [0], [0], [1], [0, 0, 1, 1], [], []>} : vector<16x32xf32>, vector<32x8xf32>, vector<16x8xf32> -> vector<16x8xf32>
    %c0_273 = arith.constant 0 : index
    %c5_274 = arith.constant 5 : index
    %c1_275 = arith.constant 1 : index
    %c0_276 = arith.constant 0 : index
    %c0_277 = arith.constant 0 : index
    %298 = vector.load %arg6[%c0_273, %c5_274, %c1_275, %c0_276, %c0_277] : memref<2x6x4x1x8xf32, #tpu.memory_space<vmem>>, vector<1x1x1x1x8xf32>
    %299 = vector.shape_cast %298 : vector<1x1x1x1x8xf32> to vector<1x8xf32>
    %300 = vector.broadcast %299 : vector<1x8xf32> to vector<16x8xf32>
    %301 = arith.addf %297, %300 : vector<16x8xf32>
    %cst_278 = arith.constant dense<0.000000e+00> : vector<8x16xf32>
    %302 = tpu.matmul %287, %294, %cst_278 {dimension_numbers = #tpu.dot_dimension_numbers<[1], [1], [0], [0], [0, 0, 1, 0], [], []>} : vector<8x8xf32>, vector<16x8xf32>, vector<8x16xf32> -> vector<8x16xf32>
    %cst_279 = arith.constant 0.353553385 : f32
    %303 = vector.broadcast %cst_279 : f32 to vector<8x16xf32>
    %304 = arith.mulf %302, %303 : vector<8x16xf32>
    %305 = arith.addf %304, %23 : vector<8x16xf32>
    %cst_280 = arith.constant dense<0xFF800000> : vector<8xf32>
    %306 = vector.multi_reduction <maximumf>, %305, %cst_280 [1] : vector<8x16xf32> to vector<8xf32>
    %307 = vector.shape_cast %306 : vector<8xf32> to vector<8x1xf32>
    %308 = vector.broadcast %307 : vector<8x1xf32> to vector<8x16xf32>
    %309 = arith.subf %305, %308 : vector<8x16xf32>
    %310 = math.exp %309 : vector<8x16xf32>
    %cst_281 = arith.constant dense<0.000000e+00> : vector<8xf32>
    %311 = vector.multi_reduction <add>, %310, %cst_281 [1] : vector<8x16xf32> to vector<8xf32>
    %312 = vector.shape_cast %311 : vector<8xf32> to vector<8x1xf32>
    %313 = tpu.reciprocal %312 : vector<8x1xf32> -> vector<8x1xf32>
    %314 = vector.broadcast %313 : vector<8x1xf32> to vector<8x16xf32>
    %315 = arith.mulf %310, %314 : vector<8x16xf32>
    %cst_282 = arith.constant 0.000000e+00 : f32
    %316 = vector.broadcast %cst_282 : f32 to vector<8x16xf32>
    %317 = arith.select %20, %315, %316 : vector<8x16xi1>, vector<8x16xf32>
    %cst_283 = arith.constant dense<0.000000e+00> : vector<8x8xf32>
    %318 = tpu.matmul %317, %301, %cst_283 {dimension_numbers = #tpu.dot_dimension_numbers<[1], [0], [0], [1], [0, 0, 1, 1], [], []>} : vector<8x16xf32>, vector<16x8xf32>, vector<8x8xf32> -> vector<8x8xf32>
    %c0_284 = arith.constant 0 : index
    %c3_285 = arith.constant 3 : index
    %c2_286 = arith.constant 2 : index
    %c0_287 = arith.constant 0 : index
    %c0_288 = arith.constant 0 : index
    %319 = vector.load %arg5[%c0_284, %c3_285, %c2_286, %c0_287, %c0_288] : memref<2x6x4x32x8xf32, #tpu.memory_space<vmem>>, vector<1x1x1x32x8xf32>
    %320 = vector.shape_cast %319 : vector<1x1x1x32x8xf32> to vector<32x8xf32>
    %cst_289 = arith.constant dense<0.000000e+00> : vector<8x8xf32>
    %321 = tpu.matmul %240, %320, %cst_289 {dimension_numbers = #tpu.dot_dimension_numbers<[1], [0], [0], [1], [0, 0, 1, 1], [], []>} : vector<8x32xf32>, vector<32x8xf32>, vector<8x8xf32> -> vector<8x8xf32>
    %c0_290 = arith.constant 0 : index
    %c3_291 = arith.constant 3 : index
    %c2_292 = arith.constant 2 : index
    %c0_293 = arith.constant 0 : index
    %c0_294 = arith.constant 0 : index
    %322 = vector.load %arg6[%c0_290, %c3_291, %c2_292, %c0_293, %c0_294] : memref<2x6x4x1x8xf32, #tpu.memory_space<vmem>>, vector<1x1x1x1x8xf32>
    %323 = vector.shape_cast %322 : vector<1x1x1x1x8xf32> to vector<1x8xf32>
    %324 = vector.broadcast %323 : vector<1x8xf32> to vector<8x8xf32>
    %325 = arith.addf %321, %324 : vector<8x8xf32>
    %c0_295 = arith.constant 0 : index
    %c4_296 = arith.constant 4 : index
    %c2_297 = arith.constant 2 : index
    %c0_298 = arith.constant 0 : index
    %c0_299 = arith.constant 0 : index
    %326 = vector.load %arg5[%c0_295, %c4_296, %c2_297, %c0_298, %c0_299] : memref<2x6x4x32x8xf32, #tpu.memory_space<vmem>>, vector<1x1x1x32x8xf32>
    %327 = vector.shape_cast %326 : vector<1x1x1x32x8xf32> to vector<32x8xf32>
    %cst_300 = arith.constant dense<0.000000e+00> : vector<16x8xf32>
    %328 = tpu.matmul %3, %327, %cst_300 {dimension_numbers = #tpu.dot_dimension_numbers<[1], [0], [0], [1], [0, 0, 1, 1], [], []>} : vector<16x32xf32>, vector<32x8xf32>, vector<16x8xf32> -> vector<16x8xf32>
    %c0_301 = arith.constant 0 : index
    %c4_302 = arith.constant 4 : index
    %c2_303 = arith.constant 2 : index
    %c0_304 = arith.constant 0 : index
    %c0_305 = arith.constant 0 : index
    %329 = vector.load %arg6[%c0_301, %c4_302, %c2_303, %c0_304, %c0_305] : memref<2x6x4x1x8xf32, #tpu.memory_space<vmem>>, vector<1x1x1x1x8xf32>
    %330 = vector.shape_cast %329 : vector<1x1x1x1x8xf32> to vector<1x8xf32>
    %331 = vector.broadcast %330 : vector<1x8xf32> to vector<16x8xf32>
    %332 = arith.addf %328, %331 : vector<16x8xf32>
    %c0_306 = arith.constant 0 : index
    %c5_307 = arith.constant 5 : index
    %c2_308 = arith.constant 2 : index
    %c0_309 = arith.constant 0 : index
    %c0_310 = arith.constant 0 : index
    %333 = vector.load %arg5[%c0_306, %c5_307, %c2_308, %c0_309, %c0_310] : memref<2x6x4x32x8xf32, #tpu.memory_space<vmem>>, vector<1x1x1x32x8xf32>
    %334 = vector.shape_cast %333 : vector<1x1x1x32x8xf32> to vector<32x8xf32>
    %cst_311 = arith.constant dense<0.000000e+00> : vector<16x8xf32>
    %335 = tpu.matmul %3, %334, %cst_311 {dimension_numbers = #tpu.dot_dimension_numbers<[1], [0], [0], [1], [0, 0, 1, 1], [], []>} : vector<16x32xf32>, vector<32x8xf32>, vector<16x8xf32> -> vector<16x8xf32>
    %c0_312 = arith.constant 0 : index
    %c5_313 = arith.constant 5 : index
    %c2_314 = arith.constant 2 : index
    %c0_315 = arith.constant 0 : index
    %c0_316 = arith.constant 0 : index
    %336 = vector.load %arg6[%c0_312, %c5_313, %c2_314, %c0_315, %c0_316] : memref<2x6x4x1x8xf32, #tpu.memory_space<vmem>>, vector<1x1x1x1x8xf32>
    %337 = vector.shape_cast %336 : vector<1x1x1x1x8xf32> to vector<1x8xf32>
    %338 = vector.broadcast %337 : vector<1x8xf32> to vector<16x8xf32>
    %339 = arith.addf %335, %338 : vector<16x8xf32>
    %cst_317 = arith.constant dense<0.000000e+00> : vector<8x16xf32>
    %340 = tpu.matmul %325, %332, %cst_317 {dimension_numbers = #tpu.dot_dimension_numbers<[1], [1], [0], [0], [0, 0, 1, 0], [], []>} : vector<8x8xf32>, vector<16x8xf32>, vector<8x16xf32> -> vector<8x16xf32>
    %cst_318 = arith.constant 0.353553385 : f32
    %341 = vector.broadcast %cst_318 : f32 to vector<8x16xf32>
    %342 = arith.mulf %340, %341 : vector<8x16xf32>
    %343 = arith.addf %342, %23 : vector<8x16xf32>
    %cst_319 = arith.constant dense<0xFF800000> : vector<8xf32>
    %344 = vector.multi_reduction <maximumf>, %343, %cst_319 [1] : vector<8x16xf32> to vector<8xf32>
    %345 = vector.shape_cast %344 : vector<8xf32> to vector<8x1xf32>
    %346 = vector.broadcast %345 : vector<8x1xf32> to vector<8x16xf32>
    %347 = arith.subf %343, %346 : vector<8x16xf32>
    %348 = math.exp %347 : vector<8x16xf32>
    %cst_320 = arith.constant dense<0.000000e+00> : vector<8xf32>
    %349 = vector.multi_reduction <add>, %348, %cst_320 [1] : vector<8x16xf32> to vector<8xf32>
    %350 = vector.shape_cast %349 : vector<8xf32> to vector<8x1xf32>
    %351 = tpu.reciprocal %350 : vector<8x1xf32> -> vector<8x1xf32>
    %352 = vector.broadcast %351 : vector<8x1xf32> to vector<8x16xf32>
    %353 = arith.mulf %348, %352 : vector<8x16xf32>
    %cst_321 = arith.constant 0.000000e+00 : f32
    %354 = vector.broadcast %cst_321 : f32 to vector<8x16xf32>
    %355 = arith.select %20, %353, %354 : vector<8x16xi1>, vector<8x16xf32>
    %cst_322 = arith.constant dense<0.000000e+00> : vector<8x8xf32>
    %356 = tpu.matmul %355, %339, %cst_322 {dimension_numbers = #tpu.dot_dimension_numbers<[1], [0], [0], [1], [0, 0, 1, 1], [], []>} : vector<8x16xf32>, vector<16x8xf32>, vector<8x8xf32> -> vector<8x8xf32>
    %c0_323 = arith.constant 0 : index
    %c3_324 = arith.constant 3 : index
    %c3_325 = arith.constant 3 : index
    %c0_326 = arith.constant 0 : index
    %c0_327 = arith.constant 0 : index
    %357 = vector.load %arg5[%c0_323, %c3_324, %c3_325, %c0_326, %c0_327] : memref<2x6x4x32x8xf32, #tpu.memory_space<vmem>>, vector<1x1x1x32x8xf32>
    %358 = vector.shape_cast %357 : vector<1x1x1x32x8xf32> to vector<32x8xf32>
    %cst_328 = arith.constant dense<0.000000e+00> : vector<8x8xf32>
    %359 = tpu.matmul %240, %358, %cst_328 {dimension_numbers = #tpu.dot_dimension_numbers<[1], [0], [0], [1], [0, 0, 1, 1], [], []>} : vector<8x32xf32>, vector<32x8xf32>, vector<8x8xf32> -> vector<8x8xf32>
    %c0_329 = arith.constant 0 : index
    %c3_330 = arith.constant 3 : index
    %c3_331 = arith.constant 3 : index
    %c0_332 = arith.constant 0 : index
    %c0_333 = arith.constant 0 : index
    %360 = vector.load %arg6[%c0_329, %c3_330, %c3_331, %c0_332, %c0_333] : memref<2x6x4x1x8xf32, #tpu.memory_space<vmem>>, vector<1x1x1x1x8xf32>
    %361 = vector.shape_cast %360 : vector<1x1x1x1x8xf32> to vector<1x8xf32>
    %362 = vector.broadcast %361 : vector<1x8xf32> to vector<8x8xf32>
    %363 = arith.addf %359, %362 : vector<8x8xf32>
    %c0_334 = arith.constant 0 : index
    %c4_335 = arith.constant 4 : index
    %c3_336 = arith.constant 3 : index
    %c0_337 = arith.constant 0 : index
    %c0_338 = arith.constant 0 : index
    %364 = vector.load %arg5[%c0_334, %c4_335, %c3_336, %c0_337, %c0_338] : memref<2x6x4x32x8xf32, #tpu.memory_space<vmem>>, vector<1x1x1x32x8xf32>
    %365 = vector.shape_cast %364 : vector<1x1x1x32x8xf32> to vector<32x8xf32>
    %cst_339 = arith.constant dense<0.000000e+00> : vector<16x8xf32>
    %366 = tpu.matmul %3, %365, %cst_339 {dimension_numbers = #tpu.dot_dimension_numbers<[1], [0], [0], [1], [0, 0, 1, 1], [], []>} : vector<16x32xf32>, vector<32x8xf32>, vector<16x8xf32> -> vector<16x8xf32>
    %c0_340 = arith.constant 0 : index
    %c4_341 = arith.constant 4 : index
    %c3_342 = arith.constant 3 : index
    %c0_343 = arith.constant 0 : index
    %c0_344 = arith.constant 0 : index
    %367 = vector.load %arg6[%c0_340, %c4_341, %c3_342, %c0_343, %c0_344] : memref<2x6x4x1x8xf32, #tpu.memory_space<vmem>>, vector<1x1x1x1x8xf32>
    %368 = vector.shape_cast %367 : vector<1x1x1x1x8xf32> to vector<1x8xf32>
    %369 = vector.broadcast %368 : vector<1x8xf32> to vector<16x8xf32>
    %370 = arith.addf %366, %369 : vector<16x8xf32>
    %c0_345 = arith.constant 0 : index
    %c5_346 = arith.constant 5 : index
    %c3_347 = arith.constant 3 : index
    %c0_348 = arith.constant 0 : index
    %c0_349 = arith.constant 0 : index
    %371 = vector.load %arg5[%c0_345, %c5_346, %c3_347, %c0_348, %c0_349] : memref<2x6x4x32x8xf32, #tpu.memory_space<vmem>>, vector<1x1x1x32x8xf32>
    %372 = vector.shape_cast %371 : vector<1x1x1x32x8xf32> to vector<32x8xf32>
    %cst_350 = arith.constant dense<0.000000e+00> : vector<16x8xf32>
    %373 = tpu.matmul %3, %372, %cst_350 {dimension_numbers = #tpu.dot_dimension_numbers<[1], [0], [0], [1], [0, 0, 1, 1], [], []>} : vector<16x32xf32>, vector<32x8xf32>, vector<16x8xf32> -> vector<16x8xf32>
    %c0_351 = arith.constant 0 : index
    %c5_352 = arith.constant 5 : index
    %c3_353 = arith.constant 3 : index
    %c0_354 = arith.constant 0 : index
    %c0_355 = arith.constant 0 : index
    %374 = vector.load %arg6[%c0_351, %c5_352, %c3_353, %c0_354, %c0_355] : memref<2x6x4x1x8xf32, #tpu.memory_space<vmem>>, vector<1x1x1x1x8xf32>
    %375 = vector.shape_cast %374 : vector<1x1x1x1x8xf32> to vector<1x8xf32>
    %376 = vector.broadcast %375 : vector<1x8xf32> to vector<16x8xf32>
    %377 = arith.addf %373, %376 : vector<16x8xf32>
    %cst_356 = arith.constant dense<0.000000e+00> : vector<8x16xf32>
    %378 = tpu.matmul %363, %370, %cst_356 {dimension_numbers = #tpu.dot_dimension_numbers<[1], [1], [0], [0], [0, 0, 1, 0], [], []>} : vector<8x8xf32>, vector<16x8xf32>, vector<8x16xf32> -> vector<8x16xf32>
    %cst_357 = arith.constant 0.353553385 : f32
    %379 = vector.broadcast %cst_357 : f32 to vector<8x16xf32>
    %380 = arith.mulf %378, %379 : vector<8x16xf32>
    %381 = arith.addf %380, %23 : vector<8x16xf32>
    %cst_358 = arith.constant dense<0xFF800000> : vector<8xf32>
    %382 = vector.multi_reduction <maximumf>, %381, %cst_358 [1] : vector<8x16xf32> to vector<8xf32>
    %383 = vector.shape_cast %382 : vector<8xf32> to vector<8x1xf32>
    %384 = vector.broadcast %383 : vector<8x1xf32> to vector<8x16xf32>
    %385 = arith.subf %381, %384 : vector<8x16xf32>
    %386 = math.exp %385 : vector<8x16xf32>
    %cst_359 = arith.constant dense<0.000000e+00> : vector<8xf32>
    %387 = vector.multi_reduction <add>, %386, %cst_359 [1] : vector<8x16xf32> to vector<8xf32>
    %388 = vector.shape_cast %387 : vector<8xf32> to vector<8x1xf32>
    %389 = tpu.reciprocal %388 : vector<8x1xf32> -> vector<8x1xf32>
    %390 = vector.broadcast %389 : vector<8x1xf32> to vector<8x16xf32>
    %391 = arith.mulf %386, %390 : vector<8x16xf32>
    %cst_360 = arith.constant 0.000000e+00 : f32
    %392 = vector.broadcast %cst_360 : f32 to vector<8x16xf32>
    %393 = arith.select %20, %391, %392 : vector<8x16xi1>, vector<8x16xf32>
    %cst_361 = arith.constant dense<0.000000e+00> : vector<8x8xf32>
    %394 = tpu.matmul %393, %377, %cst_361 {dimension_numbers = #tpu.dot_dimension_numbers<[1], [0], [0], [1], [0, 0, 1, 1], [], []>} : vector<8x16xf32>, vector<16x8xf32>, vector<8x8xf32> -> vector<8x8xf32>
    %395 = tpu.concatenate %280, %318, %356, %394 in 1 : vector<8x8xf32>, vector<8x8xf32>, vector<8x8xf32>, vector<8x8xf32> -> vector<8x32xf32>
    %cst_362 = arith.constant dense<0.000000e+00> : vector<8x32xf32>
    %396 = tpu.matmul %395, %242, %cst_362 {dimension_numbers = #tpu.dot_dimension_numbers<[1], [0], [0], [1], [0, 0, 1, 1], [], []>} : vector<8x32xf32>, vector<32x32xf32>, vector<8x32xf32> -> vector<8x32xf32>
    %397 = vector.broadcast %39 : vector<1x32xf32> to vector<8x32xf32>
    %398 = arith.addf %396, %397 : vector<8x32xf32>
    %399 = arith.addf %220, %398 : vector<8x32xf32>
    %cst_363 = arith.constant dense<0.000000e+00> : vector<8xf32>
    %400 = vector.multi_reduction <add>, %399, %cst_363 [1] : vector<8x32xf32> to vector<8xf32>
    %401 = vector.shape_cast %400 : vector<8xf32> to vector<8x1xf32>
    %cst_364 = arith.constant 3.200000e+01 : f32
    %402 = vector.broadcast %cst_364 : f32 to vector<8x1xf32>
    %403 = arith.divf %401, %402 : vector<8x1xf32>
    %404 = vector.broadcast %403 : vector<8x1xf32> to vector<8x32xf32>
    %405 = arith.subf %399, %404 : vector<8x32xf32>
    %406 = arith.mulf %405, %405 : vector<8x32xf32>
    %cst_365 = arith.constant dense<0.000000e+00> : vector<8xf32>
    %407 = vector.multi_reduction <add>, %406, %cst_365 [1] : vector<8x32xf32> to vector<8xf32>
    %408 = vector.shape_cast %407 : vector<8xf32> to vector<8x1xf32>
    %cst_366 = arith.constant 3.200000e+01 : f32
    %409 = vector.broadcast %cst_366 : f32 to vector<8x1xf32>
    %410 = arith.divf %408, %409 : vector<8x1xf32>
    %cst_367 = arith.constant 9.99999974E-6 : f32
    %411 = vector.broadcast %cst_367 : f32 to vector<8x1xf32>
    %412 = arith.addf %410, %411 : vector<8x1xf32>
    %413 = math.rsqrt %412 : vector<8x1xf32>
    %414 = vector.broadcast %413 : vector<8x1xf32> to vector<8x32xf32>
    %415 = arith.mulf %405, %414 : vector<8x32xf32>
    %416 = vector.broadcast %29 : vector<1x32xf32> to vector<8x32xf32>
    %417 = arith.mulf %415, %416 : vector<8x32xf32>
    %418 = vector.broadcast %35 : vector<1x32xf32> to vector<8x32xf32>
    %419 = arith.addf %417, %418 : vector<8x32xf32>
    %c0_368 = arith.constant 0 : index
    %c0_369 = arith.constant 0 : index
    %c0_370 = arith.constant 0 : index
    %420 = vector.load %arg8[%c0_368, %c0_369, %c0_370] : memref<2x33x64xf32, #tpu.memory_space<vmem>>, vector<1x32x64xf32>
    %421 = vector.shape_cast %420 : vector<1x32x64xf32> to vector<32x64xf32>
    %cst_371 = arith.constant dense<0.000000e+00> : vector<8x64xf32>
    %422 = tpu.matmul %419, %421, %cst_371 {dimension_numbers = #tpu.dot_dimension_numbers<[1], [0], [0], [1], [0, 0, 1, 1], [], []>} : vector<8x32xf32>, vector<32x64xf32>, vector<8x64xf32> -> vector<8x64xf32>
    %c0_372 = arith.constant 0 : index
    %c32 = arith.constant 32 : index
    %c0_373 = arith.constant 0 : index
    %423 = vector.load %arg8[%c0_372, %c32, %c0_373] : memref<2x33x64xf32, #tpu.memory_space<vmem>>, vector<1x1x64xf32>
    %424 = vector.shape_cast %423 : vector<1x1x64xf32> to vector<1x64xf32>
    %425 = vector.broadcast %424 : vector<1x64xf32> to vector<8x64xf32>
    %426 = arith.addf %422, %425 : vector<8x64xf32>
    %cst_374 = arith.constant 0.000000e+00 : f32
    %427 = vector.broadcast %cst_374 : f32 to vector<8x64xf32>
    %428 = arith.maximumf %426, %427 : vector<8x64xf32>
    %c0_375 = arith.constant 0 : index
    %c0_376 = arith.constant 0 : index
    %c0_377 = arith.constant 0 : index
    %429 = vector.load %arg9[%c0_375, %c0_376, %c0_377] : memref<2x64x32xf32, #tpu.memory_space<vmem>>, vector<1x64x32xf32>
    %430 = vector.shape_cast %429 : vector<1x64x32xf32> to vector<64x32xf32>
    %cst_378 = arith.constant dense<0.000000e+00> : vector<8x32xf32>
    %431 = tpu.matmul %428, %430, %cst_378 {dimension_numbers = #tpu.dot_dimension_numbers<[1], [0], [0], [1], [0, 0, 1, 1], [], []>} : vector<8x64xf32>, vector<64x32xf32>, vector<8x32xf32> -> vector<8x32xf32>
    %432 = arith.addf %399, %431 : vector<8x32xf32>
    %433 = vector.broadcast %41 : vector<1x32xf32> to vector<8x32xf32>
    %434 = arith.addf %432, %433 : vector<8x32xf32>
    %c1_379 = arith.constant 1 : index
    %c0_380 = arith.constant 0 : index
    %c0_381 = arith.constant 0 : index
    %435 = vector.load %arg10[%c1_379, %c0_380, %c0_381] : memref<2x9x32xf32, #tpu.memory_space<vmem>>, vector<1x1x32xf32>
    %436 = vector.shape_cast %435 : vector<1x1x32xf32> to vector<1x32xf32>
    %c1_382 = arith.constant 1 : index
    %c1_383 = arith.constant 1 : index
    %c0_384 = arith.constant 0 : index
    %437 = vector.load %arg10[%c1_382, %c1_383, %c0_384] : memref<2x9x32xf32, #tpu.memory_space<vmem>>, vector<1x1x32xf32>
    %438 = vector.shape_cast %437 : vector<1x1x32xf32> to vector<1x32xf32>
    %c1_385 = arith.constant 1 : index
    %c2_386 = arith.constant 2 : index
    %c0_387 = arith.constant 0 : index
    %439 = vector.load %arg10[%c1_385, %c2_386, %c0_387] : memref<2x9x32xf32, #tpu.memory_space<vmem>>, vector<1x1x32xf32>
    %440 = vector.shape_cast %439 : vector<1x1x32xf32> to vector<1x32xf32>
    %c1_388 = arith.constant 1 : index
    %c3_389 = arith.constant 3 : index
    %c0_390 = arith.constant 0 : index
    %441 = vector.load %arg10[%c1_388, %c3_389, %c0_390] : memref<2x9x32xf32, #tpu.memory_space<vmem>>, vector<1x1x32xf32>
    %442 = vector.shape_cast %441 : vector<1x1x32xf32> to vector<1x32xf32>
    %c1_391 = arith.constant 1 : index
    %c4_392 = arith.constant 4 : index
    %c0_393 = arith.constant 0 : index
    %443 = vector.load %arg10[%c1_391, %c4_392, %c0_393] : memref<2x9x32xf32, #tpu.memory_space<vmem>>, vector<1x1x32xf32>
    %444 = vector.shape_cast %443 : vector<1x1x32xf32> to vector<1x32xf32>
    %c1_394 = arith.constant 1 : index
    %c5_395 = arith.constant 5 : index
    %c0_396 = arith.constant 0 : index
    %445 = vector.load %arg10[%c1_394, %c5_395, %c0_396] : memref<2x9x32xf32, #tpu.memory_space<vmem>>, vector<1x1x32xf32>
    %446 = vector.shape_cast %445 : vector<1x1x32xf32> to vector<1x32xf32>
    %c1_397 = arith.constant 1 : index
    %c6_398 = arith.constant 6 : index
    %c0_399 = arith.constant 0 : index
    %447 = vector.load %arg10[%c1_397, %c6_398, %c0_399] : memref<2x9x32xf32, #tpu.memory_space<vmem>>, vector<1x1x32xf32>
    %448 = vector.shape_cast %447 : vector<1x1x32xf32> to vector<1x32xf32>
    %c1_400 = arith.constant 1 : index
    %c7_401 = arith.constant 7 : index
    %c0_402 = arith.constant 0 : index
    %449 = vector.load %arg10[%c1_400, %c7_401, %c0_402] : memref<2x9x32xf32, #tpu.memory_space<vmem>>, vector<1x1x32xf32>
    %450 = vector.shape_cast %449 : vector<1x1x32xf32> to vector<1x32xf32>
    %c1_403 = arith.constant 1 : index
    %c8_404 = arith.constant 8 : index
    %c0_405 = arith.constant 0 : index
    %451 = vector.load %arg10[%c1_403, %c8_404, %c0_405] : memref<2x9x32xf32, #tpu.memory_space<vmem>>, vector<1x1x32xf32>
    %452 = vector.shape_cast %451 : vector<1x1x32xf32> to vector<1x32xf32>
    %cst_406 = arith.constant dense<0.000000e+00> : vector<8xf32>
    %453 = vector.multi_reduction <add>, %434, %cst_406 [1] : vector<8x32xf32> to vector<8xf32>
    %454 = vector.shape_cast %453 : vector<8xf32> to vector<8x1xf32>
    %cst_407 = arith.constant 3.200000e+01 : f32
    %455 = vector.broadcast %cst_407 : f32 to vector<8x1xf32>
    %456 = arith.divf %454, %455 : vector<8x1xf32>
    %457 = vector.broadcast %456 : vector<8x1xf32> to vector<8x32xf32>
    %458 = arith.subf %434, %457 : vector<8x32xf32>
    %459 = arith.mulf %458, %458 : vector<8x32xf32>
    %cst_408 = arith.constant dense<0.000000e+00> : vector<8xf32>
    %460 = vector.multi_reduction <add>, %459, %cst_408 [1] : vector<8x32xf32> to vector<8xf32>
    %461 = vector.shape_cast %460 : vector<8xf32> to vector<8x1xf32>
    %cst_409 = arith.constant 3.200000e+01 : f32
    %462 = vector.broadcast %cst_409 : f32 to vector<8x1xf32>
    %463 = arith.divf %461, %462 : vector<8x1xf32>
    %cst_410 = arith.constant 9.99999974E-6 : f32
    %464 = vector.broadcast %cst_410 : f32 to vector<8x1xf32>
    %465 = arith.addf %463, %464 : vector<8x1xf32>
    %466 = math.rsqrt %465 : vector<8x1xf32>
    %467 = vector.broadcast %466 : vector<8x1xf32> to vector<8x32xf32>
    %468 = arith.mulf %458, %467 : vector<8x32xf32>
    %469 = vector.broadcast %436 : vector<1x32xf32> to vector<8x32xf32>
    %470 = arith.mulf %468, %469 : vector<8x32xf32>
    %471 = vector.broadcast %442 : vector<1x32xf32> to vector<8x32xf32>
    %472 = arith.addf %470, %471 : vector<8x32xf32>
    %c1_411 = arith.constant 1 : index
    %c0_412 = arith.constant 0 : index
    %c0_413 = arith.constant 0 : index
    %c0_414 = arith.constant 0 : index
    %473 = vector.load %arg7[%c1_411, %c0_412, %c0_413, %c0_414] : memref<2x2x32x32xf32, #tpu.memory_space<vmem>>, vector<1x1x32x32xf32>
    %474 = vector.shape_cast %473 : vector<1x1x32x32xf32> to vector<32x32xf32>
    %c1_415 = arith.constant 1 : index
    %c0_416 = arith.constant 0 : index
    %c0_417 = arith.constant 0 : index
    %c0_418 = arith.constant 0 : index
    %c0_419 = arith.constant 0 : index
    %475 = vector.load %arg5[%c1_415, %c0_416, %c0_417, %c0_418, %c0_419] : memref<2x6x4x32x8xf32, #tpu.memory_space<vmem>>, vector<1x1x1x32x8xf32>
    %476 = vector.shape_cast %475 : vector<1x1x1x32x8xf32> to vector<32x8xf32>
    %cst_420 = arith.constant dense<0.000000e+00> : vector<8x8xf32>
    %477 = tpu.matmul %472, %476, %cst_420 {dimension_numbers = #tpu.dot_dimension_numbers<[1], [0], [0], [1], [0, 0, 1, 1], [], []>} : vector<8x32xf32>, vector<32x8xf32>, vector<8x8xf32> -> vector<8x8xf32>
    %c1_421 = arith.constant 1 : index
    %c0_422 = arith.constant 0 : index
    %c0_423 = arith.constant 0 : index
    %c0_424 = arith.constant 0 : index
    %c0_425 = arith.constant 0 : index
    %478 = vector.load %arg6[%c1_421, %c0_422, %c0_423, %c0_424, %c0_425] : memref<2x6x4x1x8xf32, #tpu.memory_space<vmem>>, vector<1x1x1x1x8xf32>
    %479 = vector.shape_cast %478 : vector<1x1x1x1x8xf32> to vector<1x8xf32>
    %480 = vector.broadcast %479 : vector<1x8xf32> to vector<8x8xf32>
    %481 = arith.addf %477, %480 : vector<8x8xf32>
    %c1_426 = arith.constant 1 : index
    %c1_427 = arith.constant 1 : index
    %c0_428 = arith.constant 0 : index
    %c0_429 = arith.constant 0 : index
    %c0_430 = arith.constant 0 : index
    %482 = vector.load %arg5[%c1_426, %c1_427, %c0_428, %c0_429, %c0_430] : memref<2x6x4x32x8xf32, #tpu.memory_space<vmem>>, vector<1x1x1x32x8xf32>
    %483 = vector.shape_cast %482 : vector<1x1x1x32x8xf32> to vector<32x8xf32>
    %cst_431 = arith.constant dense<0.000000e+00> : vector<8x8xf32>
    %484 = tpu.matmul %472, %483, %cst_431 {dimension_numbers = #tpu.dot_dimension_numbers<[1], [0], [0], [1], [0, 0, 1, 1], [], []>} : vector<8x32xf32>, vector<32x8xf32>, vector<8x8xf32> -> vector<8x8xf32>
    %c1_432 = arith.constant 1 : index
    %c1_433 = arith.constant 1 : index
    %c0_434 = arith.constant 0 : index
    %c0_435 = arith.constant 0 : index
    %c0_436 = arith.constant 0 : index
    %485 = vector.load %arg6[%c1_432, %c1_433, %c0_434, %c0_435, %c0_436] : memref<2x6x4x1x8xf32, #tpu.memory_space<vmem>>, vector<1x1x1x1x8xf32>
    %486 = vector.shape_cast %485 : vector<1x1x1x1x8xf32> to vector<1x8xf32>
    %487 = vector.broadcast %486 : vector<1x8xf32> to vector<8x8xf32>
    %488 = arith.addf %484, %487 : vector<8x8xf32>
    %c1_437 = arith.constant 1 : index
    %c2_438 = arith.constant 2 : index
    %c0_439 = arith.constant 0 : index
    %c0_440 = arith.constant 0 : index
    %c0_441 = arith.constant 0 : index
    %489 = vector.load %arg5[%c1_437, %c2_438, %c0_439, %c0_440, %c0_441] : memref<2x6x4x32x8xf32, #tpu.memory_space<vmem>>, vector<1x1x1x32x8xf32>
    %490 = vector.shape_cast %489 : vector<1x1x1x32x8xf32> to vector<32x8xf32>
    %cst_442 = arith.constant dense<0.000000e+00> : vector<8x8xf32>
    %491 = tpu.matmul %472, %490, %cst_442 {dimension_numbers = #tpu.dot_dimension_numbers<[1], [0], [0], [1], [0, 0, 1, 1], [], []>} : vector<8x32xf32>, vector<32x8xf32>, vector<8x8xf32> -> vector<8x8xf32>
    %c1_443 = arith.constant 1 : index
    %c2_444 = arith.constant 2 : index
    %c0_445 = arith.constant 0 : index
    %c0_446 = arith.constant 0 : index
    %c0_447 = arith.constant 0 : index
    %492 = vector.load %arg6[%c1_443, %c2_444, %c0_445, %c0_446, %c0_447] : memref<2x6x4x1x8xf32, #tpu.memory_space<vmem>>, vector<1x1x1x1x8xf32>
    %493 = vector.shape_cast %492 : vector<1x1x1x1x8xf32> to vector<1x8xf32>
    %494 = vector.broadcast %493 : vector<1x8xf32> to vector<8x8xf32>
    %495 = arith.addf %491, %494 : vector<8x8xf32>
    %cst_448 = arith.constant dense<0.000000e+00> : vector<8x8xf32>
    %496 = tpu.matmul %481, %488, %cst_448 {dimension_numbers = #tpu.dot_dimension_numbers<[1], [1], [0], [0], [0, 0, 1, 0], [], []>} : vector<8x8xf32>, vector<8x8xf32>, vector<8x8xf32> -> vector<8x8xf32>
    %cst_449 = arith.constant 0.353553385 : f32
    %497 = vector.broadcast %cst_449 : f32 to vector<8x8xf32>
    %498 = arith.mulf %496, %497 : vector<8x8xf32>
    %499 = arith.addf %498, %14 : vector<8x8xf32>
    %cst_450 = arith.constant dense<0xFF800000> : vector<8xf32>
    %500 = vector.multi_reduction <maximumf>, %499, %cst_450 [1] : vector<8x8xf32> to vector<8xf32>
    %501 = vector.shape_cast %500 : vector<8xf32> to vector<8x1xf32>
    %502 = vector.broadcast %501 : vector<8x1xf32> to vector<8x8xf32>
    %503 = arith.subf %499, %502 : vector<8x8xf32>
    %504 = math.exp %503 : vector<8x8xf32>
    %cst_451 = arith.constant dense<0.000000e+00> : vector<8xf32>
    %505 = vector.multi_reduction <add>, %504, %cst_451 [1] : vector<8x8xf32> to vector<8xf32>
    %506 = vector.shape_cast %505 : vector<8xf32> to vector<8x1xf32>
    %507 = tpu.reciprocal %506 : vector<8x1xf32> -> vector<8x1xf32>
    %508 = vector.broadcast %507 : vector<8x1xf32> to vector<8x8xf32>
    %509 = arith.mulf %504, %508 : vector<8x8xf32>
    %cst_452 = arith.constant 0.000000e+00 : f32
    %510 = vector.broadcast %cst_452 : f32 to vector<8x8xf32>
    %511 = arith.select %11, %509, %510 : vector<8x8xi1>, vector<8x8xf32>
    %cst_453 = arith.constant dense<0.000000e+00> : vector<8x8xf32>
    %512 = tpu.matmul %511, %495, %cst_453 {dimension_numbers = #tpu.dot_dimension_numbers<[1], [0], [0], [1], [0, 0, 1, 1], [], []>} : vector<8x8xf32>, vector<8x8xf32>, vector<8x8xf32> -> vector<8x8xf32>
    %c1_454 = arith.constant 1 : index
    %c0_455 = arith.constant 0 : index
    %c1_456 = arith.constant 1 : index
    %c0_457 = arith.constant 0 : index
    %c0_458 = arith.constant 0 : index
    %513 = vector.load %arg5[%c1_454, %c0_455, %c1_456, %c0_457, %c0_458] : memref<2x6x4x32x8xf32, #tpu.memory_space<vmem>>, vector<1x1x1x32x8xf32>
    %514 = vector.shape_cast %513 : vector<1x1x1x32x8xf32> to vector<32x8xf32>
    %cst_459 = arith.constant dense<0.000000e+00> : vector<8x8xf32>
    %515 = tpu.matmul %472, %514, %cst_459 {dimension_numbers = #tpu.dot_dimension_numbers<[1], [0], [0], [1], [0, 0, 1, 1], [], []>} : vector<8x32xf32>, vector<32x8xf32>, vector<8x8xf32> -> vector<8x8xf32>
    %c1_460 = arith.constant 1 : index
    %c0_461 = arith.constant 0 : index
    %c1_462 = arith.constant 1 : index
    %c0_463 = arith.constant 0 : index
    %c0_464 = arith.constant 0 : index
    %516 = vector.load %arg6[%c1_460, %c0_461, %c1_462, %c0_463, %c0_464] : memref<2x6x4x1x8xf32, #tpu.memory_space<vmem>>, vector<1x1x1x1x8xf32>
    %517 = vector.shape_cast %516 : vector<1x1x1x1x8xf32> to vector<1x8xf32>
    %518 = vector.broadcast %517 : vector<1x8xf32> to vector<8x8xf32>
    %519 = arith.addf %515, %518 : vector<8x8xf32>
    %c1_465 = arith.constant 1 : index
    %c1_466 = arith.constant 1 : index
    %c1_467 = arith.constant 1 : index
    %c0_468 = arith.constant 0 : index
    %c0_469 = arith.constant 0 : index
    %520 = vector.load %arg5[%c1_465, %c1_466, %c1_467, %c0_468, %c0_469] : memref<2x6x4x32x8xf32, #tpu.memory_space<vmem>>, vector<1x1x1x32x8xf32>
    %521 = vector.shape_cast %520 : vector<1x1x1x32x8xf32> to vector<32x8xf32>
    %cst_470 = arith.constant dense<0.000000e+00> : vector<8x8xf32>
    %522 = tpu.matmul %472, %521, %cst_470 {dimension_numbers = #tpu.dot_dimension_numbers<[1], [0], [0], [1], [0, 0, 1, 1], [], []>} : vector<8x32xf32>, vector<32x8xf32>, vector<8x8xf32> -> vector<8x8xf32>
    %c1_471 = arith.constant 1 : index
    %c1_472 = arith.constant 1 : index
    %c1_473 = arith.constant 1 : index
    %c0_474 = arith.constant 0 : index
    %c0_475 = arith.constant 0 : index
    %523 = vector.load %arg6[%c1_471, %c1_472, %c1_473, %c0_474, %c0_475] : memref<2x6x4x1x8xf32, #tpu.memory_space<vmem>>, vector<1x1x1x1x8xf32>
    %524 = vector.shape_cast %523 : vector<1x1x1x1x8xf32> to vector<1x8xf32>
    %525 = vector.broadcast %524 : vector<1x8xf32> to vector<8x8xf32>
    %526 = arith.addf %522, %525 : vector<8x8xf32>
    %c1_476 = arith.constant 1 : index
    %c2_477 = arith.constant 2 : index
    %c1_478 = arith.constant 1 : index
    %c0_479 = arith.constant 0 : index
    %c0_480 = arith.constant 0 : index
    %527 = vector.load %arg5[%c1_476, %c2_477, %c1_478, %c0_479, %c0_480] : memref<2x6x4x32x8xf32, #tpu.memory_space<vmem>>, vector<1x1x1x32x8xf32>
    %528 = vector.shape_cast %527 : vector<1x1x1x32x8xf32> to vector<32x8xf32>
    %cst_481 = arith.constant dense<0.000000e+00> : vector<8x8xf32>
    %529 = tpu.matmul %472, %528, %cst_481 {dimension_numbers = #tpu.dot_dimension_numbers<[1], [0], [0], [1], [0, 0, 1, 1], [], []>} : vector<8x32xf32>, vector<32x8xf32>, vector<8x8xf32> -> vector<8x8xf32>
    %c1_482 = arith.constant 1 : index
    %c2_483 = arith.constant 2 : index
    %c1_484 = arith.constant 1 : index
    %c0_485 = arith.constant 0 : index
    %c0_486 = arith.constant 0 : index
    %530 = vector.load %arg6[%c1_482, %c2_483, %c1_484, %c0_485, %c0_486] : memref<2x6x4x1x8xf32, #tpu.memory_space<vmem>>, vector<1x1x1x1x8xf32>
    %531 = vector.shape_cast %530 : vector<1x1x1x1x8xf32> to vector<1x8xf32>
    %532 = vector.broadcast %531 : vector<1x8xf32> to vector<8x8xf32>
    %533 = arith.addf %529, %532 : vector<8x8xf32>
    %cst_487 = arith.constant dense<0.000000e+00> : vector<8x8xf32>
    %534 = tpu.matmul %519, %526, %cst_487 {dimension_numbers = #tpu.dot_dimension_numbers<[1], [1], [0], [0], [0, 0, 1, 0], [], []>} : vector<8x8xf32>, vector<8x8xf32>, vector<8x8xf32> -> vector<8x8xf32>
    %cst_488 = arith.constant 0.353553385 : f32
    %535 = vector.broadcast %cst_488 : f32 to vector<8x8xf32>
    %536 = arith.mulf %534, %535 : vector<8x8xf32>
    %537 = arith.addf %536, %14 : vector<8x8xf32>
    %cst_489 = arith.constant dense<0xFF800000> : vector<8xf32>
    %538 = vector.multi_reduction <maximumf>, %537, %cst_489 [1] : vector<8x8xf32> to vector<8xf32>
    %539 = vector.shape_cast %538 : vector<8xf32> to vector<8x1xf32>
    %540 = vector.broadcast %539 : vector<8x1xf32> to vector<8x8xf32>
    %541 = arith.subf %537, %540 : vector<8x8xf32>
    %542 = math.exp %541 : vector<8x8xf32>
    %cst_490 = arith.constant dense<0.000000e+00> : vector<8xf32>
    %543 = vector.multi_reduction <add>, %542, %cst_490 [1] : vector<8x8xf32> to vector<8xf32>
    %544 = vector.shape_cast %543 : vector<8xf32> to vector<8x1xf32>
    %545 = tpu.reciprocal %544 : vector<8x1xf32> -> vector<8x1xf32>
    %546 = vector.broadcast %545 : vector<8x1xf32> to vector<8x8xf32>
    %547 = arith.mulf %542, %546 : vector<8x8xf32>
    %cst_491 = arith.constant 0.000000e+00 : f32
    %548 = vector.broadcast %cst_491 : f32 to vector<8x8xf32>
    %549 = arith.select %11, %547, %548 : vector<8x8xi1>, vector<8x8xf32>
    %cst_492 = arith.constant dense<0.000000e+00> : vector<8x8xf32>
    %550 = tpu.matmul %549, %533, %cst_492 {dimension_numbers = #tpu.dot_dimension_numbers<[1], [0], [0], [1], [0, 0, 1, 1], [], []>} : vector<8x8xf32>, vector<8x8xf32>, vector<8x8xf32> -> vector<8x8xf32>
    %c1_493 = arith.constant 1 : index
    %c0_494 = arith.constant 0 : index
    %c2_495 = arith.constant 2 : index
    %c0_496 = arith.constant 0 : index
    %c0_497 = arith.constant 0 : index
    %551 = vector.load %arg5[%c1_493, %c0_494, %c2_495, %c0_496, %c0_497] : memref<2x6x4x32x8xf32, #tpu.memory_space<vmem>>, vector<1x1x1x32x8xf32>
    %552 = vector.shape_cast %551 : vector<1x1x1x32x8xf32> to vector<32x8xf32>
    %cst_498 = arith.constant dense<0.000000e+00> : vector<8x8xf32>
    %553 = tpu.matmul %472, %552, %cst_498 {dimension_numbers = #tpu.dot_dimension_numbers<[1], [0], [0], [1], [0, 0, 1, 1], [], []>} : vector<8x32xf32>, vector<32x8xf32>, vector<8x8xf32> -> vector<8x8xf32>
    %c1_499 = arith.constant 1 : index
    %c0_500 = arith.constant 0 : index
    %c2_501 = arith.constant 2 : index
    %c0_502 = arith.constant 0 : index
    %c0_503 = arith.constant 0 : index
    %554 = vector.load %arg6[%c1_499, %c0_500, %c2_501, %c0_502, %c0_503] : memref<2x6x4x1x8xf32, #tpu.memory_space<vmem>>, vector<1x1x1x1x8xf32>
    %555 = vector.shape_cast %554 : vector<1x1x1x1x8xf32> to vector<1x8xf32>
    %556 = vector.broadcast %555 : vector<1x8xf32> to vector<8x8xf32>
    %557 = arith.addf %553, %556 : vector<8x8xf32>
    %c1_504 = arith.constant 1 : index
    %c1_505 = arith.constant 1 : index
    %c2_506 = arith.constant 2 : index
    %c0_507 = arith.constant 0 : index
    %c0_508 = arith.constant 0 : index
    %558 = vector.load %arg5[%c1_504, %c1_505, %c2_506, %c0_507, %c0_508] : memref<2x6x4x32x8xf32, #tpu.memory_space<vmem>>, vector<1x1x1x32x8xf32>
    %559 = vector.shape_cast %558 : vector<1x1x1x32x8xf32> to vector<32x8xf32>
    %cst_509 = arith.constant dense<0.000000e+00> : vector<8x8xf32>
    %560 = tpu.matmul %472, %559, %cst_509 {dimension_numbers = #tpu.dot_dimension_numbers<[1], [0], [0], [1], [0, 0, 1, 1], [], []>} : vector<8x32xf32>, vector<32x8xf32>, vector<8x8xf32> -> vector<8x8xf32>
    %c1_510 = arith.constant 1 : index
    %c1_511 = arith.constant 1 : index
    %c2_512 = arith.constant 2 : index
    %c0_513 = arith.constant 0 : index
    %c0_514 = arith.constant 0 : index
    %561 = vector.load %arg6[%c1_510, %c1_511, %c2_512, %c0_513, %c0_514] : memref<2x6x4x1x8xf32, #tpu.memory_space<vmem>>, vector<1x1x1x1x8xf32>
    %562 = vector.shape_cast %561 : vector<1x1x1x1x8xf32> to vector<1x8xf32>
    %563 = vector.broadcast %562 : vector<1x8xf32> to vector<8x8xf32>
    %564 = arith.addf %560, %563 : vector<8x8xf32>
    %c1_515 = arith.constant 1 : index
    %c2_516 = arith.constant 2 : index
    %c2_517 = arith.constant 2 : index
    %c0_518 = arith.constant 0 : index
    %c0_519 = arith.constant 0 : index
    %565 = vector.load %arg5[%c1_515, %c2_516, %c2_517, %c0_518, %c0_519] : memref<2x6x4x32x8xf32, #tpu.memory_space<vmem>>, vector<1x1x1x32x8xf32>
    %566 = vector.shape_cast %565 : vector<1x1x1x32x8xf32> to vector<32x8xf32>
    %cst_520 = arith.constant dense<0.000000e+00> : vector<8x8xf32>
    %567 = tpu.matmul %472, %566, %cst_520 {dimension_numbers = #tpu.dot_dimension_numbers<[1], [0], [0], [1], [0, 0, 1, 1], [], []>} : vector<8x32xf32>, vector<32x8xf32>, vector<8x8xf32> -> vector<8x8xf32>
    %c1_521 = arith.constant 1 : index
    %c2_522 = arith.constant 2 : index
    %c2_523 = arith.constant 2 : index
    %c0_524 = arith.constant 0 : index
    %c0_525 = arith.constant 0 : index
    %568 = vector.load %arg6[%c1_521, %c2_522, %c2_523, %c0_524, %c0_525] : memref<2x6x4x1x8xf32, #tpu.memory_space<vmem>>, vector<1x1x1x1x8xf32>
    %569 = vector.shape_cast %568 : vector<1x1x1x1x8xf32> to vector<1x8xf32>
    %570 = vector.broadcast %569 : vector<1x8xf32> to vector<8x8xf32>
    %571 = arith.addf %567, %570 : vector<8x8xf32>
    %cst_526 = arith.constant dense<0.000000e+00> : vector<8x8xf32>
    %572 = tpu.matmul %557, %564, %cst_526 {dimension_numbers = #tpu.dot_dimension_numbers<[1], [1], [0], [0], [0, 0, 1, 0], [], []>} : vector<8x8xf32>, vector<8x8xf32>, vector<8x8xf32> -> vector<8x8xf32>
    %cst_527 = arith.constant 0.353553385 : f32
    %573 = vector.broadcast %cst_527 : f32 to vector<8x8xf32>
    %574 = arith.mulf %572, %573 : vector<8x8xf32>
    %575 = arith.addf %574, %14 : vector<8x8xf32>
    %cst_528 = arith.constant dense<0xFF800000> : vector<8xf32>
    %576 = vector.multi_reduction <maximumf>, %575, %cst_528 [1] : vector<8x8xf32> to vector<8xf32>
    %577 = vector.shape_cast %576 : vector<8xf32> to vector<8x1xf32>
    %578 = vector.broadcast %577 : vector<8x1xf32> to vector<8x8xf32>
    %579 = arith.subf %575, %578 : vector<8x8xf32>
    %580 = math.exp %579 : vector<8x8xf32>
    %cst_529 = arith.constant dense<0.000000e+00> : vector<8xf32>
    %581 = vector.multi_reduction <add>, %580, %cst_529 [1] : vector<8x8xf32> to vector<8xf32>
    %582 = vector.shape_cast %581 : vector<8xf32> to vector<8x1xf32>
    %583 = tpu.reciprocal %582 : vector<8x1xf32> -> vector<8x1xf32>
    %584 = vector.broadcast %583 : vector<8x1xf32> to vector<8x8xf32>
    %585 = arith.mulf %580, %584 : vector<8x8xf32>
    %cst_530 = arith.constant 0.000000e+00 : f32
    %586 = vector.broadcast %cst_530 : f32 to vector<8x8xf32>
    %587 = arith.select %11, %585, %586 : vector<8x8xi1>, vector<8x8xf32>
    %cst_531 = arith.constant dense<0.000000e+00> : vector<8x8xf32>
    %588 = tpu.matmul %587, %571, %cst_531 {dimension_numbers = #tpu.dot_dimension_numbers<[1], [0], [0], [1], [0, 0, 1, 1], [], []>} : vector<8x8xf32>, vector<8x8xf32>, vector<8x8xf32> -> vector<8x8xf32>
    %c1_532 = arith.constant 1 : index
    %c0_533 = arith.constant 0 : index
    %c3_534 = arith.constant 3 : index
    %c0_535 = arith.constant 0 : index
    %c0_536 = arith.constant 0 : index
    %589 = vector.load %arg5[%c1_532, %c0_533, %c3_534, %c0_535, %c0_536] : memref<2x6x4x32x8xf32, #tpu.memory_space<vmem>>, vector<1x1x1x32x8xf32>
    %590 = vector.shape_cast %589 : vector<1x1x1x32x8xf32> to vector<32x8xf32>
    %cst_537 = arith.constant dense<0.000000e+00> : vector<8x8xf32>
    %591 = tpu.matmul %472, %590, %cst_537 {dimension_numbers = #tpu.dot_dimension_numbers<[1], [0], [0], [1], [0, 0, 1, 1], [], []>} : vector<8x32xf32>, vector<32x8xf32>, vector<8x8xf32> -> vector<8x8xf32>
    %c1_538 = arith.constant 1 : index
    %c0_539 = arith.constant 0 : index
    %c3_540 = arith.constant 3 : index
    %c0_541 = arith.constant 0 : index
    %c0_542 = arith.constant 0 : index
    %592 = vector.load %arg6[%c1_538, %c0_539, %c3_540, %c0_541, %c0_542] : memref<2x6x4x1x8xf32, #tpu.memory_space<vmem>>, vector<1x1x1x1x8xf32>
    %593 = vector.shape_cast %592 : vector<1x1x1x1x8xf32> to vector<1x8xf32>
    %594 = vector.broadcast %593 : vector<1x8xf32> to vector<8x8xf32>
    %595 = arith.addf %591, %594 : vector<8x8xf32>
    %c1_543 = arith.constant 1 : index
    %c1_544 = arith.constant 1 : index
    %c3_545 = arith.constant 3 : index
    %c0_546 = arith.constant 0 : index
    %c0_547 = arith.constant 0 : index
    %596 = vector.load %arg5[%c1_543, %c1_544, %c3_545, %c0_546, %c0_547] : memref<2x6x4x32x8xf32, #tpu.memory_space<vmem>>, vector<1x1x1x32x8xf32>
    %597 = vector.shape_cast %596 : vector<1x1x1x32x8xf32> to vector<32x8xf32>
    %cst_548 = arith.constant dense<0.000000e+00> : vector<8x8xf32>
    %598 = tpu.matmul %472, %597, %cst_548 {dimension_numbers = #tpu.dot_dimension_numbers<[1], [0], [0], [1], [0, 0, 1, 1], [], []>} : vector<8x32xf32>, vector<32x8xf32>, vector<8x8xf32> -> vector<8x8xf32>
    %c1_549 = arith.constant 1 : index
    %c1_550 = arith.constant 1 : index
    %c3_551 = arith.constant 3 : index
    %c0_552 = arith.constant 0 : index
    %c0_553 = arith.constant 0 : index
    %599 = vector.load %arg6[%c1_549, %c1_550, %c3_551, %c0_552, %c0_553] : memref<2x6x4x1x8xf32, #tpu.memory_space<vmem>>, vector<1x1x1x1x8xf32>
    %600 = vector.shape_cast %599 : vector<1x1x1x1x8xf32> to vector<1x8xf32>
    %601 = vector.broadcast %600 : vector<1x8xf32> to vector<8x8xf32>
    %602 = arith.addf %598, %601 : vector<8x8xf32>
    %c1_554 = arith.constant 1 : index
    %c2_555 = arith.constant 2 : index
    %c3_556 = arith.constant 3 : index
    %c0_557 = arith.constant 0 : index
    %c0_558 = arith.constant 0 : index
    %603 = vector.load %arg5[%c1_554, %c2_555, %c3_556, %c0_557, %c0_558] : memref<2x6x4x32x8xf32, #tpu.memory_space<vmem>>, vector<1x1x1x32x8xf32>
    %604 = vector.shape_cast %603 : vector<1x1x1x32x8xf32> to vector<32x8xf32>
    %cst_559 = arith.constant dense<0.000000e+00> : vector<8x8xf32>
    %605 = tpu.matmul %472, %604, %cst_559 {dimension_numbers = #tpu.dot_dimension_numbers<[1], [0], [0], [1], [0, 0, 1, 1], [], []>} : vector<8x32xf32>, vector<32x8xf32>, vector<8x8xf32> -> vector<8x8xf32>
    %c1_560 = arith.constant 1 : index
    %c2_561 = arith.constant 2 : index
    %c3_562 = arith.constant 3 : index
    %c0_563 = arith.constant 0 : index
    %c0_564 = arith.constant 0 : index
    %606 = vector.load %arg6[%c1_560, %c2_561, %c3_562, %c0_563, %c0_564] : memref<2x6x4x1x8xf32, #tpu.memory_space<vmem>>, vector<1x1x1x1x8xf32>
    %607 = vector.shape_cast %606 : vector<1x1x1x1x8xf32> to vector<1x8xf32>
    %608 = vector.broadcast %607 : vector<1x8xf32> to vector<8x8xf32>
    %609 = arith.addf %605, %608 : vector<8x8xf32>
    %cst_565 = arith.constant dense<0.000000e+00> : vector<8x8xf32>
    %610 = tpu.matmul %595, %602, %cst_565 {dimension_numbers = #tpu.dot_dimension_numbers<[1], [1], [0], [0], [0, 0, 1, 0], [], []>} : vector<8x8xf32>, vector<8x8xf32>, vector<8x8xf32> -> vector<8x8xf32>
    %cst_566 = arith.constant 0.353553385 : f32
    %611 = vector.broadcast %cst_566 : f32 to vector<8x8xf32>
    %612 = arith.mulf %610, %611 : vector<8x8xf32>
    %613 = arith.addf %612, %14 : vector<8x8xf32>
    %cst_567 = arith.constant dense<0xFF800000> : vector<8xf32>
    %614 = vector.multi_reduction <maximumf>, %613, %cst_567 [1] : vector<8x8xf32> to vector<8xf32>
    %615 = vector.shape_cast %614 : vector<8xf32> to vector<8x1xf32>
    %616 = vector.broadcast %615 : vector<8x1xf32> to vector<8x8xf32>
    %617 = arith.subf %613, %616 : vector<8x8xf32>
    %618 = math.exp %617 : vector<8x8xf32>
    %cst_568 = arith.constant dense<0.000000e+00> : vector<8xf32>
    %619 = vector.multi_reduction <add>, %618, %cst_568 [1] : vector<8x8xf32> to vector<8xf32>
    %620 = vector.shape_cast %619 : vector<8xf32> to vector<8x1xf32>
    %621 = tpu.reciprocal %620 : vector<8x1xf32> -> vector<8x1xf32>
    %622 = vector.broadcast %621 : vector<8x1xf32> to vector<8x8xf32>
    %623 = arith.mulf %618, %622 : vector<8x8xf32>
    %cst_569 = arith.constant 0.000000e+00 : f32
    %624 = vector.broadcast %cst_569 : f32 to vector<8x8xf32>
    %625 = arith.select %11, %623, %624 : vector<8x8xi1>, vector<8x8xf32>
    %cst_570 = arith.constant dense<0.000000e+00> : vector<8x8xf32>
    %626 = tpu.matmul %625, %609, %cst_570 {dimension_numbers = #tpu.dot_dimension_numbers<[1], [0], [0], [1], [0, 0, 1, 1], [], []>} : vector<8x8xf32>, vector<8x8xf32>, vector<8x8xf32> -> vector<8x8xf32>
    %627 = tpu.concatenate %512, %550, %588, %626 in 1 : vector<8x8xf32>, vector<8x8xf32>, vector<8x8xf32>, vector<8x8xf32> -> vector<8x32xf32>
    %cst_571 = arith.constant dense<0.000000e+00> : vector<8x32xf32>
    %628 = tpu.matmul %627, %474, %cst_571 {dimension_numbers = #tpu.dot_dimension_numbers<[1], [0], [0], [1], [0, 0, 1, 1], [], []>} : vector<8x32xf32>, vector<32x32xf32>, vector<8x32xf32> -> vector<8x32xf32>
    %629 = vector.broadcast %448 : vector<1x32xf32> to vector<8x32xf32>
    %630 = arith.addf %628, %629 : vector<8x32xf32>
    %631 = arith.addf %434, %630 : vector<8x32xf32>
    %cst_572 = arith.constant dense<0.000000e+00> : vector<8xf32>
    %632 = vector.multi_reduction <add>, %631, %cst_572 [1] : vector<8x32xf32> to vector<8xf32>
    %633 = vector.shape_cast %632 : vector<8xf32> to vector<8x1xf32>
    %cst_573 = arith.constant 3.200000e+01 : f32
    %634 = vector.broadcast %cst_573 : f32 to vector<8x1xf32>
    %635 = arith.divf %633, %634 : vector<8x1xf32>
    %636 = vector.broadcast %635 : vector<8x1xf32> to vector<8x32xf32>
    %637 = arith.subf %631, %636 : vector<8x32xf32>
    %638 = arith.mulf %637, %637 : vector<8x32xf32>
    %cst_574 = arith.constant dense<0.000000e+00> : vector<8xf32>
    %639 = vector.multi_reduction <add>, %638, %cst_574 [1] : vector<8x32xf32> to vector<8xf32>
    %640 = vector.shape_cast %639 : vector<8xf32> to vector<8x1xf32>
    %cst_575 = arith.constant 3.200000e+01 : f32
    %641 = vector.broadcast %cst_575 : f32 to vector<8x1xf32>
    %642 = arith.divf %640, %641 : vector<8x1xf32>
    %cst_576 = arith.constant 9.99999974E-6 : f32
    %643 = vector.broadcast %cst_576 : f32 to vector<8x1xf32>
    %644 = arith.addf %642, %643 : vector<8x1xf32>
    %645 = math.rsqrt %644 : vector<8x1xf32>
    %646 = vector.broadcast %645 : vector<8x1xf32> to vector<8x32xf32>
    %647 = arith.mulf %637, %646 : vector<8x32xf32>
    %648 = vector.broadcast %438 : vector<1x32xf32> to vector<8x32xf32>
    %649 = arith.mulf %647, %648 : vector<8x32xf32>
    %650 = vector.broadcast %444 : vector<1x32xf32> to vector<8x32xf32>
    %651 = arith.addf %649, %650 : vector<8x32xf32>
    %c1_577 = arith.constant 1 : index
    %c1_578 = arith.constant 1 : index
    %c0_579 = arith.constant 0 : index
    %c0_580 = arith.constant 0 : index
    %652 = vector.load %arg7[%c1_577, %c1_578, %c0_579, %c0_580] : memref<2x2x32x32xf32, #tpu.memory_space<vmem>>, vector<1x1x32x32xf32>
    %653 = vector.shape_cast %652 : vector<1x1x32x32xf32> to vector<32x32xf32>
    %c1_581 = arith.constant 1 : index
    %c3_582 = arith.constant 3 : index
    %c0_583 = arith.constant 0 : index
    %c0_584 = arith.constant 0 : index
    %c0_585 = arith.constant 0 : index
    %654 = vector.load %arg5[%c1_581, %c3_582, %c0_583, %c0_584, %c0_585] : memref<2x6x4x32x8xf32, #tpu.memory_space<vmem>>, vector<1x1x1x32x8xf32>
    %655 = vector.shape_cast %654 : vector<1x1x1x32x8xf32> to vector<32x8xf32>
    %cst_586 = arith.constant dense<0.000000e+00> : vector<8x8xf32>
    %656 = tpu.matmul %651, %655, %cst_586 {dimension_numbers = #tpu.dot_dimension_numbers<[1], [0], [0], [1], [0, 0, 1, 1], [], []>} : vector<8x32xf32>, vector<32x8xf32>, vector<8x8xf32> -> vector<8x8xf32>
    %c1_587 = arith.constant 1 : index
    %c3_588 = arith.constant 3 : index
    %c0_589 = arith.constant 0 : index
    %c0_590 = arith.constant 0 : index
    %c0_591 = arith.constant 0 : index
    %657 = vector.load %arg6[%c1_587, %c3_588, %c0_589, %c0_590, %c0_591] : memref<2x6x4x1x8xf32, #tpu.memory_space<vmem>>, vector<1x1x1x1x8xf32>
    %658 = vector.shape_cast %657 : vector<1x1x1x1x8xf32> to vector<1x8xf32>
    %659 = vector.broadcast %658 : vector<1x8xf32> to vector<8x8xf32>
    %660 = arith.addf %656, %659 : vector<8x8xf32>
    %c1_592 = arith.constant 1 : index
    %c4_593 = arith.constant 4 : index
    %c0_594 = arith.constant 0 : index
    %c0_595 = arith.constant 0 : index
    %c0_596 = arith.constant 0 : index
    %661 = vector.load %arg5[%c1_592, %c4_593, %c0_594, %c0_595, %c0_596] : memref<2x6x4x32x8xf32, #tpu.memory_space<vmem>>, vector<1x1x1x32x8xf32>
    %662 = vector.shape_cast %661 : vector<1x1x1x32x8xf32> to vector<32x8xf32>
    %cst_597 = arith.constant dense<0.000000e+00> : vector<16x8xf32>
    %663 = tpu.matmul %3, %662, %cst_597 {dimension_numbers = #tpu.dot_dimension_numbers<[1], [0], [0], [1], [0, 0, 1, 1], [], []>} : vector<16x32xf32>, vector<32x8xf32>, vector<16x8xf32> -> vector<16x8xf32>
    %c1_598 = arith.constant 1 : index
    %c4_599 = arith.constant 4 : index
    %c0_600 = arith.constant 0 : index
    %c0_601 = arith.constant 0 : index
    %c0_602 = arith.constant 0 : index
    %664 = vector.load %arg6[%c1_598, %c4_599, %c0_600, %c0_601, %c0_602] : memref<2x6x4x1x8xf32, #tpu.memory_space<vmem>>, vector<1x1x1x1x8xf32>
    %665 = vector.shape_cast %664 : vector<1x1x1x1x8xf32> to vector<1x8xf32>
    %666 = vector.broadcast %665 : vector<1x8xf32> to vector<16x8xf32>
    %667 = arith.addf %663, %666 : vector<16x8xf32>
    %c1_603 = arith.constant 1 : index
    %c5_604 = arith.constant 5 : index
    %c0_605 = arith.constant 0 : index
    %c0_606 = arith.constant 0 : index
    %c0_607 = arith.constant 0 : index
    %668 = vector.load %arg5[%c1_603, %c5_604, %c0_605, %c0_606, %c0_607] : memref<2x6x4x32x8xf32, #tpu.memory_space<vmem>>, vector<1x1x1x32x8xf32>
    %669 = vector.shape_cast %668 : vector<1x1x1x32x8xf32> to vector<32x8xf32>
    %cst_608 = arith.constant dense<0.000000e+00> : vector<16x8xf32>
    %670 = tpu.matmul %3, %669, %cst_608 {dimension_numbers = #tpu.dot_dimension_numbers<[1], [0], [0], [1], [0, 0, 1, 1], [], []>} : vector<16x32xf32>, vector<32x8xf32>, vector<16x8xf32> -> vector<16x8xf32>
    %c1_609 = arith.constant 1 : index
    %c5_610 = arith.constant 5 : index
    %c0_611 = arith.constant 0 : index
    %c0_612 = arith.constant 0 : index
    %c0_613 = arith.constant 0 : index
    %671 = vector.load %arg6[%c1_609, %c5_610, %c0_611, %c0_612, %c0_613] : memref<2x6x4x1x8xf32, #tpu.memory_space<vmem>>, vector<1x1x1x1x8xf32>
    %672 = vector.shape_cast %671 : vector<1x1x1x1x8xf32> to vector<1x8xf32>
    %673 = vector.broadcast %672 : vector<1x8xf32> to vector<16x8xf32>
    %674 = arith.addf %670, %673 : vector<16x8xf32>
    %cst_614 = arith.constant dense<0.000000e+00> : vector<8x16xf32>
    %675 = tpu.matmul %660, %667, %cst_614 {dimension_numbers = #tpu.dot_dimension_numbers<[1], [1], [0], [0], [0, 0, 1, 0], [], []>} : vector<8x8xf32>, vector<16x8xf32>, vector<8x16xf32> -> vector<8x16xf32>
    %cst_615 = arith.constant 0.353553385 : f32
    %676 = vector.broadcast %cst_615 : f32 to vector<8x16xf32>
    %677 = arith.mulf %675, %676 : vector<8x16xf32>
    %678 = arith.addf %677, %23 : vector<8x16xf32>
    %cst_616 = arith.constant dense<0xFF800000> : vector<8xf32>
    %679 = vector.multi_reduction <maximumf>, %678, %cst_616 [1] : vector<8x16xf32> to vector<8xf32>
    %680 = vector.shape_cast %679 : vector<8xf32> to vector<8x1xf32>
    %681 = vector.broadcast %680 : vector<8x1xf32> to vector<8x16xf32>
    %682 = arith.subf %678, %681 : vector<8x16xf32>
    %683 = math.exp %682 : vector<8x16xf32>
    %cst_617 = arith.constant dense<0.000000e+00> : vector<8xf32>
    %684 = vector.multi_reduction <add>, %683, %cst_617 [1] : vector<8x16xf32> to vector<8xf32>
    %685 = vector.shape_cast %684 : vector<8xf32> to vector<8x1xf32>
    %686 = tpu.reciprocal %685 : vector<8x1xf32> -> vector<8x1xf32>
    %687 = vector.broadcast %686 : vector<8x1xf32> to vector<8x16xf32>
    %688 = arith.mulf %683, %687 : vector<8x16xf32>
    %cst_618 = arith.constant 0.000000e+00 : f32
    %689 = vector.broadcast %cst_618 : f32 to vector<8x16xf32>
    %690 = arith.select %20, %688, %689 : vector<8x16xi1>, vector<8x16xf32>
    %cst_619 = arith.constant dense<0.000000e+00> : vector<8x8xf32>
    %691 = tpu.matmul %690, %674, %cst_619 {dimension_numbers = #tpu.dot_dimension_numbers<[1], [0], [0], [1], [0, 0, 1, 1], [], []>} : vector<8x16xf32>, vector<16x8xf32>, vector<8x8xf32> -> vector<8x8xf32>
    %c1_620 = arith.constant 1 : index
    %c3_621 = arith.constant 3 : index
    %c1_622 = arith.constant 1 : index
    %c0_623 = arith.constant 0 : index
    %c0_624 = arith.constant 0 : index
    %692 = vector.load %arg5[%c1_620, %c3_621, %c1_622, %c0_623, %c0_624] : memref<2x6x4x32x8xf32, #tpu.memory_space<vmem>>, vector<1x1x1x32x8xf32>
    %693 = vector.shape_cast %692 : vector<1x1x1x32x8xf32> to vector<32x8xf32>
    %cst_625 = arith.constant dense<0.000000e+00> : vector<8x8xf32>
    %694 = tpu.matmul %651, %693, %cst_625 {dimension_numbers = #tpu.dot_dimension_numbers<[1], [0], [0], [1], [0, 0, 1, 1], [], []>} : vector<8x32xf32>, vector<32x8xf32>, vector<8x8xf32> -> vector<8x8xf32>
    %c1_626 = arith.constant 1 : index
    %c3_627 = arith.constant 3 : index
    %c1_628 = arith.constant 1 : index
    %c0_629 = arith.constant 0 : index
    %c0_630 = arith.constant 0 : index
    %695 = vector.load %arg6[%c1_626, %c3_627, %c1_628, %c0_629, %c0_630] : memref<2x6x4x1x8xf32, #tpu.memory_space<vmem>>, vector<1x1x1x1x8xf32>
    %696 = vector.shape_cast %695 : vector<1x1x1x1x8xf32> to vector<1x8xf32>
    %697 = vector.broadcast %696 : vector<1x8xf32> to vector<8x8xf32>
    %698 = arith.addf %694, %697 : vector<8x8xf32>
    %c1_631 = arith.constant 1 : index
    %c4_632 = arith.constant 4 : index
    %c1_633 = arith.constant 1 : index
    %c0_634 = arith.constant 0 : index
    %c0_635 = arith.constant 0 : index
    %699 = vector.load %arg5[%c1_631, %c4_632, %c1_633, %c0_634, %c0_635] : memref<2x6x4x32x8xf32, #tpu.memory_space<vmem>>, vector<1x1x1x32x8xf32>
    %700 = vector.shape_cast %699 : vector<1x1x1x32x8xf32> to vector<32x8xf32>
    %cst_636 = arith.constant dense<0.000000e+00> : vector<16x8xf32>
    %701 = tpu.matmul %3, %700, %cst_636 {dimension_numbers = #tpu.dot_dimension_numbers<[1], [0], [0], [1], [0, 0, 1, 1], [], []>} : vector<16x32xf32>, vector<32x8xf32>, vector<16x8xf32> -> vector<16x8xf32>
    %c1_637 = arith.constant 1 : index
    %c4_638 = arith.constant 4 : index
    %c1_639 = arith.constant 1 : index
    %c0_640 = arith.constant 0 : index
    %c0_641 = arith.constant 0 : index
    %702 = vector.load %arg6[%c1_637, %c4_638, %c1_639, %c0_640, %c0_641] : memref<2x6x4x1x8xf32, #tpu.memory_space<vmem>>, vector<1x1x1x1x8xf32>
    %703 = vector.shape_cast %702 : vector<1x1x1x1x8xf32> to vector<1x8xf32>
    %704 = vector.broadcast %703 : vector<1x8xf32> to vector<16x8xf32>
    %705 = arith.addf %701, %704 : vector<16x8xf32>
    %c1_642 = arith.constant 1 : index
    %c5_643 = arith.constant 5 : index
    %c1_644 = arith.constant 1 : index
    %c0_645 = arith.constant 0 : index
    %c0_646 = arith.constant 0 : index
    %706 = vector.load %arg5[%c1_642, %c5_643, %c1_644, %c0_645, %c0_646] : memref<2x6x4x32x8xf32, #tpu.memory_space<vmem>>, vector<1x1x1x32x8xf32>
    %707 = vector.shape_cast %706 : vector<1x1x1x32x8xf32> to vector<32x8xf32>
    %cst_647 = arith.constant dense<0.000000e+00> : vector<16x8xf32>
    %708 = tpu.matmul %3, %707, %cst_647 {dimension_numbers = #tpu.dot_dimension_numbers<[1], [0], [0], [1], [0, 0, 1, 1], [], []>} : vector<16x32xf32>, vector<32x8xf32>, vector<16x8xf32> -> vector<16x8xf32>
    %c1_648 = arith.constant 1 : index
    %c5_649 = arith.constant 5 : index
    %c1_650 = arith.constant 1 : index
    %c0_651 = arith.constant 0 : index
    %c0_652 = arith.constant 0 : index
    %709 = vector.load %arg6[%c1_648, %c5_649, %c1_650, %c0_651, %c0_652] : memref<2x6x4x1x8xf32, #tpu.memory_space<vmem>>, vector<1x1x1x1x8xf32>
    %710 = vector.shape_cast %709 : vector<1x1x1x1x8xf32> to vector<1x8xf32>
    %711 = vector.broadcast %710 : vector<1x8xf32> to vector<16x8xf32>
    %712 = arith.addf %708, %711 : vector<16x8xf32>
    %cst_653 = arith.constant dense<0.000000e+00> : vector<8x16xf32>
    %713 = tpu.matmul %698, %705, %cst_653 {dimension_numbers = #tpu.dot_dimension_numbers<[1], [1], [0], [0], [0, 0, 1, 0], [], []>} : vector<8x8xf32>, vector<16x8xf32>, vector<8x16xf32> -> vector<8x16xf32>
    %cst_654 = arith.constant 0.353553385 : f32
    %714 = vector.broadcast %cst_654 : f32 to vector<8x16xf32>
    %715 = arith.mulf %713, %714 : vector<8x16xf32>
    %716 = arith.addf %715, %23 : vector<8x16xf32>
    %cst_655 = arith.constant dense<0xFF800000> : vector<8xf32>
    %717 = vector.multi_reduction <maximumf>, %716, %cst_655 [1] : vector<8x16xf32> to vector<8xf32>
    %718 = vector.shape_cast %717 : vector<8xf32> to vector<8x1xf32>
    %719 = vector.broadcast %718 : vector<8x1xf32> to vector<8x16xf32>
    %720 = arith.subf %716, %719 : vector<8x16xf32>
    %721 = math.exp %720 : vector<8x16xf32>
    %cst_656 = arith.constant dense<0.000000e+00> : vector<8xf32>
    %722 = vector.multi_reduction <add>, %721, %cst_656 [1] : vector<8x16xf32> to vector<8xf32>
    %723 = vector.shape_cast %722 : vector<8xf32> to vector<8x1xf32>
    %724 = tpu.reciprocal %723 : vector<8x1xf32> -> vector<8x1xf32>
    %725 = vector.broadcast %724 : vector<8x1xf32> to vector<8x16xf32>
    %726 = arith.mulf %721, %725 : vector<8x16xf32>
    %cst_657 = arith.constant 0.000000e+00 : f32
    %727 = vector.broadcast %cst_657 : f32 to vector<8x16xf32>
    %728 = arith.select %20, %726, %727 : vector<8x16xi1>, vector<8x16xf32>
    %cst_658 = arith.constant dense<0.000000e+00> : vector<8x8xf32>
    %729 = tpu.matmul %728, %712, %cst_658 {dimension_numbers = #tpu.dot_dimension_numbers<[1], [0], [0], [1], [0, 0, 1, 1], [], []>} : vector<8x16xf32>, vector<16x8xf32>, vector<8x8xf32> -> vector<8x8xf32>
    %c1_659 = arith.constant 1 : index
    %c3_660 = arith.constant 3 : index
    %c2_661 = arith.constant 2 : index
    %c0_662 = arith.constant 0 : index
    %c0_663 = arith.constant 0 : index
    %730 = vector.load %arg5[%c1_659, %c3_660, %c2_661, %c0_662, %c0_663] : memref<2x6x4x32x8xf32, #tpu.memory_space<vmem>>, vector<1x1x1x32x8xf32>
    %731 = vector.shape_cast %730 : vector<1x1x1x32x8xf32> to vector<32x8xf32>
    %cst_664 = arith.constant dense<0.000000e+00> : vector<8x8xf32>
    %732 = tpu.matmul %651, %731, %cst_664 {dimension_numbers = #tpu.dot_dimension_numbers<[1], [0], [0], [1], [0, 0, 1, 1], [], []>} : vector<8x32xf32>, vector<32x8xf32>, vector<8x8xf32> -> vector<8x8xf32>
    %c1_665 = arith.constant 1 : index
    %c3_666 = arith.constant 3 : index
    %c2_667 = arith.constant 2 : index
    %c0_668 = arith.constant 0 : index
    %c0_669 = arith.constant 0 : index
    %733 = vector.load %arg6[%c1_665, %c3_666, %c2_667, %c0_668, %c0_669] : memref<2x6x4x1x8xf32, #tpu.memory_space<vmem>>, vector<1x1x1x1x8xf32>
    %734 = vector.shape_cast %733 : vector<1x1x1x1x8xf32> to vector<1x8xf32>
    %735 = vector.broadcast %734 : vector<1x8xf32> to vector<8x8xf32>
    %736 = arith.addf %732, %735 : vector<8x8xf32>
    %c1_670 = arith.constant 1 : index
    %c4_671 = arith.constant 4 : index
    %c2_672 = arith.constant 2 : index
    %c0_673 = arith.constant 0 : index
    %c0_674 = arith.constant 0 : index
    %737 = vector.load %arg5[%c1_670, %c4_671, %c2_672, %c0_673, %c0_674] : memref<2x6x4x32x8xf32, #tpu.memory_space<vmem>>, vector<1x1x1x32x8xf32>
    %738 = vector.shape_cast %737 : vector<1x1x1x32x8xf32> to vector<32x8xf32>
    %cst_675 = arith.constant dense<0.000000e+00> : vector<16x8xf32>
    %739 = tpu.matmul %3, %738, %cst_675 {dimension_numbers = #tpu.dot_dimension_numbers<[1], [0], [0], [1], [0, 0, 1, 1], [], []>} : vector<16x32xf32>, vector<32x8xf32>, vector<16x8xf32> -> vector<16x8xf32>
    %c1_676 = arith.constant 1 : index
    %c4_677 = arith.constant 4 : index
    %c2_678 = arith.constant 2 : index
    %c0_679 = arith.constant 0 : index
    %c0_680 = arith.constant 0 : index
    %740 = vector.load %arg6[%c1_676, %c4_677, %c2_678, %c0_679, %c0_680] : memref<2x6x4x1x8xf32, #tpu.memory_space<vmem>>, vector<1x1x1x1x8xf32>
    %741 = vector.shape_cast %740 : vector<1x1x1x1x8xf32> to vector<1x8xf32>
    %742 = vector.broadcast %741 : vector<1x8xf32> to vector<16x8xf32>
    %743 = arith.addf %739, %742 : vector<16x8xf32>
    %c1_681 = arith.constant 1 : index
    %c5_682 = arith.constant 5 : index
    %c2_683 = arith.constant 2 : index
    %c0_684 = arith.constant 0 : index
    %c0_685 = arith.constant 0 : index
    %744 = vector.load %arg5[%c1_681, %c5_682, %c2_683, %c0_684, %c0_685] : memref<2x6x4x32x8xf32, #tpu.memory_space<vmem>>, vector<1x1x1x32x8xf32>
    %745 = vector.shape_cast %744 : vector<1x1x1x32x8xf32> to vector<32x8xf32>
    %cst_686 = arith.constant dense<0.000000e+00> : vector<16x8xf32>
    %746 = tpu.matmul %3, %745, %cst_686 {dimension_numbers = #tpu.dot_dimension_numbers<[1], [0], [0], [1], [0, 0, 1, 1], [], []>} : vector<16x32xf32>, vector<32x8xf32>, vector<16x8xf32> -> vector<16x8xf32>
    %c1_687 = arith.constant 1 : index
    %c5_688 = arith.constant 5 : index
    %c2_689 = arith.constant 2 : index
    %c0_690 = arith.constant 0 : index
    %c0_691 = arith.constant 0 : index
    %747 = vector.load %arg6[%c1_687, %c5_688, %c2_689, %c0_690, %c0_691] : memref<2x6x4x1x8xf32, #tpu.memory_space<vmem>>, vector<1x1x1x1x8xf32>
    %748 = vector.shape_cast %747 : vector<1x1x1x1x8xf32> to vector<1x8xf32>
    %749 = vector.broadcast %748 : vector<1x8xf32> to vector<16x8xf32>
    %750 = arith.addf %746, %749 : vector<16x8xf32>
    %cst_692 = arith.constant dense<0.000000e+00> : vector<8x16xf32>
    %751 = tpu.matmul %736, %743, %cst_692 {dimension_numbers = #tpu.dot_dimension_numbers<[1], [1], [0], [0], [0, 0, 1, 0], [], []>} : vector<8x8xf32>, vector<16x8xf32>, vector<8x16xf32> -> vector<8x16xf32>
    %cst_693 = arith.constant 0.353553385 : f32
    %752 = vector.broadcast %cst_693 : f32 to vector<8x16xf32>
    %753 = arith.mulf %751, %752 : vector<8x16xf32>
    %754 = arith.addf %753, %23 : vector<8x16xf32>
    %cst_694 = arith.constant dense<0xFF800000> : vector<8xf32>
    %755 = vector.multi_reduction <maximumf>, %754, %cst_694 [1] : vector<8x16xf32> to vector<8xf32>
    %756 = vector.shape_cast %755 : vector<8xf32> to vector<8x1xf32>
    %757 = vector.broadcast %756 : vector<8x1xf32> to vector<8x16xf32>
    %758 = arith.subf %754, %757 : vector<8x16xf32>
    %759 = math.exp %758 : vector<8x16xf32>
    %cst_695 = arith.constant dense<0.000000e+00> : vector<8xf32>
    %760 = vector.multi_reduction <add>, %759, %cst_695 [1] : vector<8x16xf32> to vector<8xf32>
    %761 = vector.shape_cast %760 : vector<8xf32> to vector<8x1xf32>
    %762 = tpu.reciprocal %761 : vector<8x1xf32> -> vector<8x1xf32>
    %763 = vector.broadcast %762 : vector<8x1xf32> to vector<8x16xf32>
    %764 = arith.mulf %759, %763 : vector<8x16xf32>
    %cst_696 = arith.constant 0.000000e+00 : f32
    %765 = vector.broadcast %cst_696 : f32 to vector<8x16xf32>
    %766 = arith.select %20, %764, %765 : vector<8x16xi1>, vector<8x16xf32>
    %cst_697 = arith.constant dense<0.000000e+00> : vector<8x8xf32>
    %767 = tpu.matmul %766, %750, %cst_697 {dimension_numbers = #tpu.dot_dimension_numbers<[1], [0], [0], [1], [0, 0, 1, 1], [], []>} : vector<8x16xf32>, vector<16x8xf32>, vector<8x8xf32> -> vector<8x8xf32>
    %c1_698 = arith.constant 1 : index
    %c3_699 = arith.constant 3 : index
    %c3_700 = arith.constant 3 : index
    %c0_701 = arith.constant 0 : index
    %c0_702 = arith.constant 0 : index
    %768 = vector.load %arg5[%c1_698, %c3_699, %c3_700, %c0_701, %c0_702] : memref<2x6x4x32x8xf32, #tpu.memory_space<vmem>>, vector<1x1x1x32x8xf32>
    %769 = vector.shape_cast %768 : vector<1x1x1x32x8xf32> to vector<32x8xf32>
    %cst_703 = arith.constant dense<0.000000e+00> : vector<8x8xf32>
    %770 = tpu.matmul %651, %769, %cst_703 {dimension_numbers = #tpu.dot_dimension_numbers<[1], [0], [0], [1], [0, 0, 1, 1], [], []>} : vector<8x32xf32>, vector<32x8xf32>, vector<8x8xf32> -> vector<8x8xf32>
    %c1_704 = arith.constant 1 : index
    %c3_705 = arith.constant 3 : index
    %c3_706 = arith.constant 3 : index
    %c0_707 = arith.constant 0 : index
    %c0_708 = arith.constant 0 : index
    %771 = vector.load %arg6[%c1_704, %c3_705, %c3_706, %c0_707, %c0_708] : memref<2x6x4x1x8xf32, #tpu.memory_space<vmem>>, vector<1x1x1x1x8xf32>
    %772 = vector.shape_cast %771 : vector<1x1x1x1x8xf32> to vector<1x8xf32>
    %773 = vector.broadcast %772 : vector<1x8xf32> to vector<8x8xf32>
    %774 = arith.addf %770, %773 : vector<8x8xf32>
    %c1_709 = arith.constant 1 : index
    %c4_710 = arith.constant 4 : index
    %c3_711 = arith.constant 3 : index
    %c0_712 = arith.constant 0 : index
    %c0_713 = arith.constant 0 : index
    %775 = vector.load %arg5[%c1_709, %c4_710, %c3_711, %c0_712, %c0_713] : memref<2x6x4x32x8xf32, #tpu.memory_space<vmem>>, vector<1x1x1x32x8xf32>
    %776 = vector.shape_cast %775 : vector<1x1x1x32x8xf32> to vector<32x8xf32>
    %cst_714 = arith.constant dense<0.000000e+00> : vector<16x8xf32>
    %777 = tpu.matmul %3, %776, %cst_714 {dimension_numbers = #tpu.dot_dimension_numbers<[1], [0], [0], [1], [0, 0, 1, 1], [], []>} : vector<16x32xf32>, vector<32x8xf32>, vector<16x8xf32> -> vector<16x8xf32>
    %c1_715 = arith.constant 1 : index
    %c4_716 = arith.constant 4 : index
    %c3_717 = arith.constant 3 : index
    %c0_718 = arith.constant 0 : index
    %c0_719 = arith.constant 0 : index
    %778 = vector.load %arg6[%c1_715, %c4_716, %c3_717, %c0_718, %c0_719] : memref<2x6x4x1x8xf32, #tpu.memory_space<vmem>>, vector<1x1x1x1x8xf32>
    %779 = vector.shape_cast %778 : vector<1x1x1x1x8xf32> to vector<1x8xf32>
    %780 = vector.broadcast %779 : vector<1x8xf32> to vector<16x8xf32>
    %781 = arith.addf %777, %780 : vector<16x8xf32>
    %c1_720 = arith.constant 1 : index
    %c5_721 = arith.constant 5 : index
    %c3_722 = arith.constant 3 : index
    %c0_723 = arith.constant 0 : index
    %c0_724 = arith.constant 0 : index
    %782 = vector.load %arg5[%c1_720, %c5_721, %c3_722, %c0_723, %c0_724] : memref<2x6x4x32x8xf32, #tpu.memory_space<vmem>>, vector<1x1x1x32x8xf32>
    %783 = vector.shape_cast %782 : vector<1x1x1x32x8xf32> to vector<32x8xf32>
    %cst_725 = arith.constant dense<0.000000e+00> : vector<16x8xf32>
    %784 = tpu.matmul %3, %783, %cst_725 {dimension_numbers = #tpu.dot_dimension_numbers<[1], [0], [0], [1], [0, 0, 1, 1], [], []>} : vector<16x32xf32>, vector<32x8xf32>, vector<16x8xf32> -> vector<16x8xf32>
    %c1_726 = arith.constant 1 : index
    %c5_727 = arith.constant 5 : index
    %c3_728 = arith.constant 3 : index
    %c0_729 = arith.constant 0 : index
    %c0_730 = arith.constant 0 : index
    %785 = vector.load %arg6[%c1_726, %c5_727, %c3_728, %c0_729, %c0_730] : memref<2x6x4x1x8xf32, #tpu.memory_space<vmem>>, vector<1x1x1x1x8xf32>
    %786 = vector.shape_cast %785 : vector<1x1x1x1x8xf32> to vector<1x8xf32>
    %787 = vector.broadcast %786 : vector<1x8xf32> to vector<16x8xf32>
    %788 = arith.addf %784, %787 : vector<16x8xf32>
    %cst_731 = arith.constant dense<0.000000e+00> : vector<8x16xf32>
    %789 = tpu.matmul %774, %781, %cst_731 {dimension_numbers = #tpu.dot_dimension_numbers<[1], [1], [0], [0], [0, 0, 1, 0], [], []>} : vector<8x8xf32>, vector<16x8xf32>, vector<8x16xf32> -> vector<8x16xf32>
    %cst_732 = arith.constant 0.353553385 : f32
    %790 = vector.broadcast %cst_732 : f32 to vector<8x16xf32>
    %791 = arith.mulf %789, %790 : vector<8x16xf32>
    %792 = arith.addf %791, %23 : vector<8x16xf32>
    %cst_733 = arith.constant dense<0xFF800000> : vector<8xf32>
    %793 = vector.multi_reduction <maximumf>, %792, %cst_733 [1] : vector<8x16xf32> to vector<8xf32>
    %794 = vector.shape_cast %793 : vector<8xf32> to vector<8x1xf32>
    %795 = vector.broadcast %794 : vector<8x1xf32> to vector<8x16xf32>
    %796 = arith.subf %792, %795 : vector<8x16xf32>
    %797 = math.exp %796 : vector<8x16xf32>
    %cst_734 = arith.constant dense<0.000000e+00> : vector<8xf32>
    %798 = vector.multi_reduction <add>, %797, %cst_734 [1] : vector<8x16xf32> to vector<8xf32>
    %799 = vector.shape_cast %798 : vector<8xf32> to vector<8x1xf32>
    %800 = tpu.reciprocal %799 : vector<8x1xf32> -> vector<8x1xf32>
    %801 = vector.broadcast %800 : vector<8x1xf32> to vector<8x16xf32>
    %802 = arith.mulf %797, %801 : vector<8x16xf32>
    %cst_735 = arith.constant 0.000000e+00 : f32
    %803 = vector.broadcast %cst_735 : f32 to vector<8x16xf32>
    %804 = arith.select %20, %802, %803 : vector<8x16xi1>, vector<8x16xf32>
    %cst_736 = arith.constant dense<0.000000e+00> : vector<8x8xf32>
    %805 = tpu.matmul %804, %788, %cst_736 {dimension_numbers = #tpu.dot_dimension_numbers<[1], [0], [0], [1], [0, 0, 1, 1], [], []>} : vector<8x16xf32>, vector<16x8xf32>, vector<8x8xf32> -> vector<8x8xf32>
    %806 = tpu.concatenate %691, %729, %767, %805 in 1 : vector<8x8xf32>, vector<8x8xf32>, vector<8x8xf32>, vector<8x8xf32> -> vector<8x32xf32>
    %cst_737 = arith.constant dense<0.000000e+00> : vector<8x32xf32>
    %807 = tpu.matmul %806, %653, %cst_737 {dimension_numbers = #tpu.dot_dimension_numbers<[1], [0], [0], [1], [0, 0, 1, 1], [], []>} : vector<8x32xf32>, vector<32x32xf32>, vector<8x32xf32> -> vector<8x32xf32>
    %808 = vector.broadcast %450 : vector<1x32xf32> to vector<8x32xf32>
    %809 = arith.addf %807, %808 : vector<8x32xf32>
    %810 = arith.addf %631, %809 : vector<8x32xf32>
    %cst_738 = arith.constant dense<0.000000e+00> : vector<8xf32>
    %811 = vector.multi_reduction <add>, %810, %cst_738 [1] : vector<8x32xf32> to vector<8xf32>
    %812 = vector.shape_cast %811 : vector<8xf32> to vector<8x1xf32>
    %cst_739 = arith.constant 3.200000e+01 : f32
    %813 = vector.broadcast %cst_739 : f32 to vector<8x1xf32>
    %814 = arith.divf %812, %813 : vector<8x1xf32>
    %815 = vector.broadcast %814 : vector<8x1xf32> to vector<8x32xf32>
    %816 = arith.subf %810, %815 : vector<8x32xf32>
    %817 = arith.mulf %816, %816 : vector<8x32xf32>
    %cst_740 = arith.constant dense<0.000000e+00> : vector<8xf32>
    %818 = vector.multi_reduction <add>, %817, %cst_740 [1] : vector<8x32xf32> to vector<8xf32>
    %819 = vector.shape_cast %818 : vector<8xf32> to vector<8x1xf32>
    %cst_741 = arith.constant 3.200000e+01 : f32
    %820 = vector.broadcast %cst_741 : f32 to vector<8x1xf32>
    %821 = arith.divf %819, %820 : vector<8x1xf32>
    %cst_742 = arith.constant 9.99999974E-6 : f32
    %822 = vector.broadcast %cst_742 : f32 to vector<8x1xf32>
    %823 = arith.addf %821, %822 : vector<8x1xf32>
    %824 = math.rsqrt %823 : vector<8x1xf32>
    %825 = vector.broadcast %824 : vector<8x1xf32> to vector<8x32xf32>
    %826 = arith.mulf %816, %825 : vector<8x32xf32>
    %827 = vector.broadcast %440 : vector<1x32xf32> to vector<8x32xf32>
    %828 = arith.mulf %826, %827 : vector<8x32xf32>
    %829 = vector.broadcast %446 : vector<1x32xf32> to vector<8x32xf32>
    %830 = arith.addf %828, %829 : vector<8x32xf32>
    %c1_743 = arith.constant 1 : index
    %c0_744 = arith.constant 0 : index
    %c0_745 = arith.constant 0 : index
    %831 = vector.load %arg8[%c1_743, %c0_744, %c0_745] : memref<2x33x64xf32, #tpu.memory_space<vmem>>, vector<1x32x64xf32>
    %832 = vector.shape_cast %831 : vector<1x32x64xf32> to vector<32x64xf32>
    %cst_746 = arith.constant dense<0.000000e+00> : vector<8x64xf32>
    %833 = tpu.matmul %830, %832, %cst_746 {dimension_numbers = #tpu.dot_dimension_numbers<[1], [0], [0], [1], [0, 0, 1, 1], [], []>} : vector<8x32xf32>, vector<32x64xf32>, vector<8x64xf32> -> vector<8x64xf32>
    %c1_747 = arith.constant 1 : index
    %c32_748 = arith.constant 32 : index
    %c0_749 = arith.constant 0 : index
    %834 = vector.load %arg8[%c1_747, %c32_748, %c0_749] : memref<2x33x64xf32, #tpu.memory_space<vmem>>, vector<1x1x64xf32>
    %835 = vector.shape_cast %834 : vector<1x1x64xf32> to vector<1x64xf32>
    %836 = vector.broadcast %835 : vector<1x64xf32> to vector<8x64xf32>
    %837 = arith.addf %833, %836 : vector<8x64xf32>
    %cst_750 = arith.constant 0.000000e+00 : f32
    %838 = vector.broadcast %cst_750 : f32 to vector<8x64xf32>
    %839 = arith.maximumf %837, %838 : vector<8x64xf32>
    %c1_751 = arith.constant 1 : index
    %c0_752 = arith.constant 0 : index
    %c0_753 = arith.constant 0 : index
    %840 = vector.load %arg9[%c1_751, %c0_752, %c0_753] : memref<2x64x32xf32, #tpu.memory_space<vmem>>, vector<1x64x32xf32>
    %841 = vector.shape_cast %840 : vector<1x64x32xf32> to vector<64x32xf32>
    %cst_754 = arith.constant dense<0.000000e+00> : vector<8x32xf32>
    %842 = tpu.matmul %839, %841, %cst_754 {dimension_numbers = #tpu.dot_dimension_numbers<[1], [0], [0], [1], [0, 0, 1, 1], [], []>} : vector<8x64xf32>, vector<64x32xf32>, vector<8x32xf32> -> vector<8x32xf32>
    %843 = arith.addf %810, %842 : vector<8x32xf32>
    %844 = vector.broadcast %452 : vector<1x32xf32> to vector<8x32xf32>
    %845 = arith.addf %843, %844 : vector<8x32xf32>
    %c0_755 = arith.constant 0 : index
    %c0_756 = arith.constant 0 : index
    %846 = vector.load %arg11[%c0_755, %c0_756] : memref<40x128xf32, #tpu.memory_space<vmem>>, vector<1x32xf32>
    %c1_757 = arith.constant 1 : index
    %c0_758 = arith.constant 0 : index
    %847 = vector.load %arg11[%c1_757, %c0_758] : memref<40x128xf32, #tpu.memory_space<vmem>>, vector<1x32xf32>
    %c2_759 = arith.constant 2 : index
    %c0_760 = arith.constant 0 : index
    %848 = vector.load %arg11[%c2_759, %c0_760] : memref<40x128xf32, #tpu.memory_space<vmem>>, vector<1x128xf32>
    %c8_761 = arith.constant 8 : index
    %c0_762 = arith.constant 0 : index
    %849 = vector.load %arg11[%c8_761, %c0_762] : memref<40x128xf32, #tpu.memory_space<vmem>>, vector<32x128xf32>
    %cst_763 = arith.constant dense<0.000000e+00> : vector<8xf32>
    %850 = vector.multi_reduction <add>, %845, %cst_763 [1] : vector<8x32xf32> to vector<8xf32>
    %851 = vector.shape_cast %850 : vector<8xf32> to vector<8x1xf32>
    %cst_764 = arith.constant 3.200000e+01 : f32
    %852 = vector.broadcast %cst_764 : f32 to vector<8x1xf32>
    %853 = arith.divf %851, %852 : vector<8x1xf32>
    %854 = vector.broadcast %853 : vector<8x1xf32> to vector<8x32xf32>
    %855 = arith.subf %845, %854 : vector<8x32xf32>
    %856 = arith.mulf %855, %855 : vector<8x32xf32>
    %cst_765 = arith.constant dense<0.000000e+00> : vector<8xf32>
    %857 = vector.multi_reduction <add>, %856, %cst_765 [1] : vector<8x32xf32> to vector<8xf32>
    %858 = vector.shape_cast %857 : vector<8xf32> to vector<8x1xf32>
    %cst_766 = arith.constant 3.200000e+01 : f32
    %859 = vector.broadcast %cst_766 : f32 to vector<8x1xf32>
    %860 = arith.divf %858, %859 : vector<8x1xf32>
    %cst_767 = arith.constant 9.99999974E-6 : f32
    %861 = vector.broadcast %cst_767 : f32 to vector<8x1xf32>
    %862 = arith.addf %860, %861 : vector<8x1xf32>
    %863 = math.rsqrt %862 : vector<8x1xf32>
    %864 = vector.broadcast %863 : vector<8x1xf32> to vector<8x32xf32>
    %865 = arith.mulf %855, %864 : vector<8x32xf32>
    %866 = vector.broadcast %846 : vector<1x32xf32> to vector<8x32xf32>
    %867 = arith.mulf %865, %866 : vector<8x32xf32>
    %868 = vector.broadcast %847 : vector<1x32xf32> to vector<8x32xf32>
    %869 = arith.addf %867, %868 : vector<8x32xf32>
    %cst_768 = arith.constant dense<0.000000e+00> : vector<8x128xf32>
    %870 = tpu.matmul %869, %849, %cst_768 {dimension_numbers = #tpu.dot_dimension_numbers<[1], [0], [0], [1], [0, 0, 1, 1], [], []>} : vector<8x32xf32>, vector<32x128xf32>, vector<8x128xf32> -> vector<8x128xf32>
    %871 = vector.broadcast %848 : vector<1x128xf32> to vector<8x128xf32>
    %872 = arith.addf %870, %871 : vector<8x128xf32>
    %c0_769 = arith.constant 0 : index
    %c0_770 = arith.constant 0 : index
    %c0_771 = arith.constant 0 : index
    %873 = vector.load %arg12[%c0_769, %c0_770, %c0_771] : memref<1x8x128xf32, #tpu.memory_space<vmem>>, vector<1x8x128xf32>
    %874 = vector.shape_cast %873 : vector<1x8x128xf32> to vector<8x128xf32>
    %875 = vector.shape_cast %872 : vector<8x128xf32> to vector<1x8x128xf32>
    tpu.vector_store %arg12[%c0_769, %c0_770, %c0_771], %875 {strides = array<i32>} : memref<1x8x128xf32, #tpu.memory_space<vmem>>, vector<1x8x128xf32>,
    return
  }
  func.func @transform_0(%arg0: i32, %arg1: memref<2xi32, #tpu.memory_space<smem>>) -> (i32, i32, i32) {
    %c0_i32 = arith.constant 0 : i32
    %c0_i32_0 = arith.constant 0 : i32
    %c0_i32_1 = arith.constant 0 : i32
    return %arg0, %c0_i32, %c0_i32_0 : i32, i32, i32
  }
  func.func @transform_1(%arg0: i32, %arg1: memref<2xi32, #tpu.memory_space<smem>>) -> (i32, i32, i32) {
    %c0_i32 = arith.constant 0 : i32
    %c0_i32_0 = arith.constant 0 : i32
    %c0_i32_1 = arith.constant 0 : i32
    return %arg0, %c0_i32, %c0_i32_0 : i32, i32, i32
  }
  func.func @transform_2(%arg0: i32, %arg1: memref<2xi32, #tpu.memory_space<smem>>) -> (i32, i32, i32) {
    %c0_i32 = arith.constant 0 : i32
    %c0_i32_0 = arith.constant 0 : i32
    %c0_i32_1 = arith.constant 0 : i32
    return %arg0, %c0_i32, %c0_i32_0 : i32, i32, i32
  }
  func.func @transform_3(%arg0: i32, %arg1: memref<2xi32, #tpu.memory_space<smem>>) -> (i32, i32, i32, i32, i32) {
    %c0_i32 = arith.constant 0 : i32
    %c0_i32_0 = arith.constant 0 : i32
    %c0_i32_1 = arith.constant 0 : i32
    %c0_i32_2 = arith.constant 0 : i32
    %c0_i32_3 = arith.constant 0 : i32
    %c0_i32_4 = arith.constant 0 : i32
    return %c0_i32, %c0_i32_0, %c0_i32_1, %c0_i32_2, %c0_i32_3 : i32, i32, i32, i32, i32
  }
  func.func @transform_4(%arg0: i32, %arg1: memref<2xi32, #tpu.memory_space<smem>>) -> (i32, i32, i32, i32, i32) {
    %c0_i32 = arith.constant 0 : i32
    %c0_i32_0 = arith.constant 0 : i32
    %c0_i32_1 = arith.constant 0 : i32
    %c0_i32_2 = arith.constant 0 : i32
    %c0_i32_3 = arith.constant 0 : i32
    %c0_i32_4 = arith.constant 0 : i32
    return %c0_i32, %c0_i32_0, %c0_i32_1, %c0_i32_2, %c0_i32_3 : i32, i32, i32, i32, i32
  }
  func.func @transform_5(%arg0: i32, %arg1: memref<2xi32, #tpu.memory_space<smem>>) -> (i32, i32, i32, i32) {
    %c0_i32 = arith.constant 0 : i32
    %c0_i32_0 = arith.constant 0 : i32
    %c0_i32_1 = arith.constant 0 : i32
    %c0_i32_2 = arith.constant 0 : i32
    %c0_i32_3 = arith.constant 0 : i32
    return %c0_i32, %c0_i32_0, %c0_i32_1, %c0_i32_2 : i32, i32, i32, i32
  }
  func.func @transform_6(%arg0: i32, %arg1: memref<2xi32, #tpu.memory_space<smem>>) -> (i32, i32, i32) {
    %c0_i32 = arith.constant 0 : i32
    %c0_i32_0 = arith.constant 0 : i32
    %c0_i32_1 = arith.constant 0 : i32
    %c0_i32_2 = arith.constant 0 : i32
    return %c0_i32, %c0_i32_0, %c0_i32_1 : i32, i32, i32
  }
  func.func @transform_7(%arg0: i32, %arg1: memref<2xi32, #tpu.memory_space<smem>>) -> (i32, i32, i32) {
    %c0_i32 = arith.constant 0 : i32
    %c0_i32_0 = arith.constant 0 : i32
    %c0_i32_1 = arith.constant 0 : i32
    %c0_i32_2 = arith.constant 0 : i32
    return %c0_i32, %c0_i32_0, %c0_i32_1 : i32, i32, i32
  }
  func.func @transform_8(%arg0: i32, %arg1: memref<2xi32, #tpu.memory_space<smem>>) -> (i32, i32, i32) {
    %c0_i32 = arith.constant 0 : i32
    %c0_i32_0 = arith.constant 0 : i32
    %c0_i32_1 = arith.constant 0 : i32
    %c0_i32_2 = arith.constant 0 : i32
    return %c0_i32, %c0_i32_0, %c0_i32_1 : i32, i32, i32
  }
  func.func @transform_9(%arg0: i32, %arg1: memref<2xi32, #tpu.memory_space<smem>>) -> (i32, i32) {
    %c0_i32 = arith.constant 0 : i32
    %c0_i32_0 = arith.constant 0 : i32
    %c0_i32_1 = arith.constant 0 : i32
    return %c0_i32, %c0_i32_0 : i32, i32
  }
  func.func @transform_10(%arg0: i32, %arg1: memref<2xi32, #tpu.memory_space<smem>>) -> (i32, i32, i32) {
    %c0_i32 = arith.constant 0 : i32
    %c0_i32_0 = arith.constant 0 : i32
    %c0_i32_1 = arith.constant 0 : i32
    return %arg0, %c0_i32, %c0_i32_0 : i32, i32, i32
  }
}

</mosaic_0001>

<llo_original>
// kernel: transformer_decoder_forward.1
$region0: #{transformer_decoder_forward.1}
  #allocation0 [shape = 'u32[]', space=smem, size = 0x4, offset = 0x4, fixed_abs, tag = 'smem constant byte address 0x4 - core index']
  #allocation1 [shape = 'u32[144,128]{1,0:T(1,128)}', space=vmem, size = 0x12000, scoped, tag = 'internal scratch']
  #allocation2 [shape = 's32[1]{0}', space=sflag, size = 0x4, scoped, tag = 'scoped memory for transformer_decoder_forward.1']
  #allocation3 [shape = 'u8[512]{0}', space=smem, size = 0x200, scoped, tag = 'prefetched SMEM operand 0']
  %s0 = inlined_call_operand.vmem [shape: s32[2], index: 0, kind: input, shape index: {}]
  %s1 = inlined_call_operand.vmem [shape: f32[2,8,32], index: 1, kind: input, shape index: {}]
  %s2 = inlined_call_operand.vmem [shape: f32[2,16,32], index: 2, kind: input, shape index: {}]
  %s3 = inlined_call_operand.vmem [shape: f32[2,1,16], index: 3, kind: input, shape index: {}]
  %s4 = inlined_call_operand.vmem [shape: f32[2,6,4,32,8], index: 4, kind: input, shape index: {}]
  %s5 = inlined_call_operand.vmem [shape: f32[2,6,4,1,8], index: 5, kind: input, shape index: {}]
  %s6 = inlined_call_operand.vmem [shape: f32[2,2,32,32], index: 6, kind: input, shape index: {}]
  %s7 = inlined_call_operand.vmem [shape: f32[2,33,64], index: 7, kind: input, shape index: {}]
  %s8 = inlined_call_operand.vmem [shape: f32[2,64,32], index: 8, kind: input, shape index: {}]
  %s9 = inlined_call_operand.vmem [shape: f32[2,9,32], index: 9, kind: input, shape index: {}]
  %s10 = inlined_call_operand.vmem [shape: f32[40,128], index: 10, kind: input, shape index: {}]
  %s11 = inlined_call_operand.hbm [shape: f32[2,8,128], index: 11, kind: output, shape index: {}]
  %s12 = sld [smem:[#allocation0]]
  $region73: #{transformer_decoder_forward.1} parent=0
    _
  %s14 = ssub.s32 1, %s12
  %s15 = scalar_select 0, %s14, %s12
  %s16 = sshll.u32 %s0, 4
  %s17 = int_to_ptr.vmem [resolvable:$true] %s16
  %19 = dma.vmem_to_smem %s17, 16, [#allocation3], [#allocation2]
  %20 = dma.done [#allocation2], 16
  %21 = sfence
  $region1: #{transformer_decoder_forward.1} parent=0
    #allocation4 [shape = 'u8[8192]{0}', space=vmem, size = 0x2000, scoped, tag = 'output window, operand 0']
    #allocation5 [shape = 's32[2]{0}', space=sflag, size = 0x8, scoped, tag = 'scoped memory for transformer_decoder_forward.1']
    %22 = vsyncpa [#allocation5], 0
    %s23 = scalar_lea.sflag [#allocation5], 1
    %24 = vsyncpa %s23, 0
    loop: start=0, step=1, limit=4
    $region2: #{transformer_decoder_forward.1} parent=1 // loop_pre_header
      _
    $region3: #{transformer_decoder_forward.1} parent=1 // loop_header
      %s26 = sphi 0, %s30
      %p27 = scmp.ge.s32.totalorder %s26, 4
      %s36 = sphi 0, %s38
      %s39 = sphi 0, %s36
      %s40 = sphi 0, %s39
      %s56 = sphi 0, %s40
      %s62 = sphi 0, %s64
      %s65 = sphi 0, %s62
      %s66 = sphi 0, %s65
      %s82 = sphi 0, %s66
      %s88 = sphi 0, %s90
      %s91 = sphi 0, %s88
      %s92 = sphi 0, %s91
      %s108 = sphi 0, %s92
      %s112 = sphi 0, %s112
      %s114 = sphi 0, %s112
      %s115 = sphi 0, %s114
      %s129 = sphi 0, %s115
      %s133 = sphi 0, %s133
      %s135 = sphi 0, %s133
      %s136 = sphi 0, %s135
      %s150 = sphi 0, %s136
      %s154 = sphi 0, %s154
      %s156 = sphi 0, %s154
      %s157 = sphi 0, %s156
      %s171 = sphi 0, %s157
      %s175 = sphi 0, %s175
      %s177 = sphi 0, %s175
      %s178 = sphi 0, %s177
      %s192 = sphi 0, %s178
      %s196 = sphi 0, %s196
      %s198 = sphi 0, %s196
      %s199 = sphi 0, %s198
      %s213 = sphi 0, %s199
      %s217 = sphi 0, %s217
      %s219 = sphi 0, %s217
      %s220 = sphi 0, %s219
      %s234 = sphi 0, %s220
      %s238 = sphi 0, %s238
      %s240 = sphi 0, %s238
      %s241 = sphi 0, %s240
      %s255 = sphi 0, %s241
      %s261 = sphi 0, %s263
      %s264 = sphi 0, %s261
      %s265 = sphi 0, %s264
      %s281 = sphi 0, %s265
    $region4: #{transformer_decoder_forward.1} parent=1 // loop_header_branch
      %29 = sbr.rel (%p27) target = $region8
    $region5: #{transformer_decoder_forward.1} parent=1 // loop_body
      %s31 = ssub.s32 %s26, 1
      %s32 = ssub.s32 %s26, 2
      %s33 = sadd.s32 %s26, 1
      %s34 = ssub.s32 %s26, %s33
      %p35 = scmp.eq.s32.totalorder %s34, 0
      %s37 = sadd.s32 %s36, 1
      %s38 = scalar_select %p35, %s36, %s37
      %p41 = pneg %p35
      %p42 = scmp.eq.s32.totalorder %s26, 1
      %p43 = por %p41, %p42
      %p44 = scmp.ne.s32.totalorder %s36, %s39
      %p45 = scmp.eq.s32.totalorder %s26, 0
      %p46 = por %p44, %p45
      %p47 = scmp.ne.s32.totalorder %s36, %s39
      %p48 = scmp.eq.s32.totalorder %s31, 1
      %p49 = por %p47, %p48
      %p50 = scmp.ne.s32.totalorder %s39, %s40
      %p51 = scmp.eq.s32.totalorder %s31, 0
      %p52 = por %p50, %p51
      %p53 = scmp.ne.s32.totalorder %s39, %s40
      %p54 = scmp.eq.s32.totalorder %s32, 1
      %p55 = por %p53, %p54
      %p57 = scmp.ne.s32.totalorder %s40, %s56
      %p58 = scmp.eq.s32.totalorder %s32, 0
      %p59 = por %p57, %p58
      %s60 = ssub.s32 %s26, %s33
      %p61 = scmp.eq.s32.totalorder %s60, 0
      %s63 = sadd.s32 %s62, 1
      %s64 = scalar_select %p61, %s62, %s63
      %p67 = pneg %p61
      %p68 = scmp.eq.s32.totalorder %s26, 1
      %p69 = por %p67, %p68
      %p70 = scmp.ne.s32.totalorder %s62, %s65
      %p71 = scmp.eq.s32.totalorder %s26, 0
      %p72 = por %p70, %p71
      %p73 = scmp.ne.s32.totalorder %s62, %s65
      %p74 = scmp.eq.s32.totalorder %s31, 1
      %p75 = por %p73, %p74
      %p76 = scmp.ne.s32.totalorder %s65, %s66
      %p77 = scmp.eq.s32.totalorder %s31, 0
      %p78 = por %p76, %p77
      %p79 = scmp.ne.s32.totalorder %s65, %s66
      %p80 = scmp.eq.s32.totalorder %s32, 1
      %p81 = por %p79, %p80
      %p83 = scmp.ne.s32.totalorder %s66, %s82
      %p84 = scmp.eq.s32.totalorder %s32, 0
      %p85 = por %p83, %p84
      %s86 = ssub.s32 %s26, %s33
      %p87 = scmp.eq.s32.totalorder %s86, 0
      %s89 = sadd.s32 %s88, 1
      %s90 = scalar_select %p87, %s88, %s89
      %p93 = pneg %p87
      %p94 = scmp.eq.s32.totalorder %s26, 1
      %p95 = por %p93, %p94
      %p96 = scmp.ne.s32.totalorder %s88, %s91
      %p97 = scmp.eq.s32.totalorder %s26, 0
      %p98 = por %p96, %p97
      %p99 = scmp.ne.s32.totalorder %s88, %s91
      %p100 = scmp.eq.s32.totalorder %s31, 1
      %p101 = por %p99, %p100
      %p102 = scmp.ne.s32.totalorder %s91, %s92
      %p103 = scmp.eq.s32.totalorder %s31, 0
      %p104 = por %p102, %p103
      %p105 = scmp.ne.s32.totalorder %s91, %s92
      %p106 = scmp.eq.s32.totalorder %s32, 1
      %p107 = por %p105, %p106
      %p109 = scmp.ne.s32.totalorder %s92, %s108
      %p110 = scmp.eq.s32.totalorder %s32, 0
      %p111 = por %p109, %p110
      %s113 = sadd.s32 %s112, 1
      %p116 = scmp.eq.s32.totalorder %s26, 1
      %p117 = scmp.ne.s32.totalorder %s112, %s114
      %p118 = scmp.eq.s32.totalorder %s26, 0
      %p119 = por %p117, %p118
      %p120 = scmp.ne.s32.totalorder %s112, %s114
      %p121 = scmp.eq.s32.totalorder %s31, 1
      %p122 = por %p120, %p121
      %p123 = scmp.ne.s32.totalorder %s114, %s115
      %p124 = scmp.eq.s32.totalorder %s31, 0
      %p125 = por %p123, %p124
      %p126 = scmp.ne.s32.totalorder %s114, %s115
      %p127 = scmp.eq.s32.totalorder %s32, 1
      %p128 = por %p126, %p127
      %p130 = scmp.ne.s32.totalorder %s115, %s129
      %p131 = scmp.eq.s32.totalorder %s32, 0
      %p132 = por %p130, %p131
      %s134 = sadd.s32 %s133, 1
      %p137 = scmp.eq.s32.totalorder %s26, 1
      %p138 = scmp.ne.s32.totalorder %s133, %s135
      %p139 = scmp.eq.s32.totalorder %s26, 0
      %p140 = por %p138, %p139
      %p141 = scmp.ne.s32.totalorder %s133, %s135
      %p142 = scmp.eq.s32.totalorder %s31, 1
      %p143 = por %p141, %p142
      %p144 = scmp.ne.s32.totalorder %s135, %s136
      %p145 = scmp.eq.s32.totalorder %s31, 0
      %p146 = por %p144, %p145
      %p147 = scmp.ne.s32.totalorder %s135, %s136
      %p148 = scmp.eq.s32.totalorder %s32, 1
      %p149 = por %p147, %p148
      %p151 = scmp.ne.s32.totalorder %s136, %s150
      %p152 = scmp.eq.s32.totalorder %s32, 0
      %p153 = por %p151, %p152
      %s155 = sadd.s32 %s154, 1
      %p158 = scmp.eq.s32.totalorder %s26, 1
      %p159 = scmp.ne.s32.totalorder %s154, %s156
      %p160 = scmp.eq.s32.totalorder %s26, 0
      %p161 = por %p159, %p160
      %p162 = scmp.ne.s32.totalorder %s154, %s156
      %p163 = scmp.eq.s32.totalorder %s31, 1
      %p164 = por %p162, %p163
      %p165 = scmp.ne.s32.totalorder %s156, %s157
      %p166 = scmp.eq.s32.totalorder %s31, 0
      %p167 = por %p165, %p166
      %p168 = scmp.ne.s32.totalorder %s156, %s157
      %p169 = scmp.eq.s32.totalorder %s32, 1
      %p170 = por %p168, %p169
      %p172 = scmp.ne.s32.totalorder %s157, %s171
      %p173 = scmp.eq.s32.totalorder %s32, 0
      %p174 = por %p172, %p173
      %s176 = sadd.s32 %s175, 1
      %p179 = scmp.eq.s32.totalorder %s26, 1
      %p180 = scmp.ne.s32.totalorder %s175, %s177
      %p181 = scmp.eq.s32.totalorder %s26, 0
      %p182 = por %p180, %p181
      %p183 = scmp.ne.s32.totalorder %s175, %s177
      %p184 = scmp.eq.s32.totalorder %s31, 1
      %p185 = por %p183, %p184
      %p186 = scmp.ne.s32.totalorder %s177, %s178
      %p187 = scmp.eq.s32.totalorder %s31, 0
      %p188 = por %p186, %p187
      %p189 = scmp.ne.s32.totalorder %s177, %s178
      %p190 = scmp.eq.s32.totalorder %s32, 1
      %p191 = por %p189, %p190
      %p193 = scmp.ne.s32.totalorder %s178, %s192
      %p194 = scmp.eq.s32.totalorder %s32, 0
      %p195 = por %p193, %p194
      %s197 = sadd.s32 %s196, 1
      %p200 = scmp.eq.s32.totalorder %s26, 1
      %p201 = scmp.ne.s32.totalorder %s196, %s198
      %p202 = scmp.eq.s32.totalorder %s26, 0
      %p203 = por %p201, %p202
      %p204 = scmp.ne.s32.totalorder %s196, %s198
      %p205 = scmp.eq.s32.totalorder %s31, 1
      %p206 = por %p204, %p205
      %p207 = scmp.ne.s32.totalorder %s198, %s199
      %p208 = scmp.eq.s32.totalorder %s31, 0
      %p209 = por %p207, %p208
      %p210 = scmp.ne.s32.totalorder %s198, %s199
      %p211 = scmp.eq.s32.totalorder %s32, 1
      %p212 = por %p210, %p211
      %p214 = scmp.ne.s32.totalorder %s199, %s213
      %p215 = scmp.eq.s32.totalorder %s32, 0
      %p216 = por %p214, %p215
      %s218 = sadd.s32 %s217, 1
      %p221 = scmp.eq.s32.totalorder %s26, 1
      %p222 = scmp.ne.s32.totalorder %s217, %s219
      %p223 = scmp.eq.s32.totalorder %s26, 0
      %p224 = por %p222, %p223
      %p225 = scmp.ne.s32.totalorder %s217, %s219
      %p226 = scmp.eq.s32.totalorder %s31, 1
      %p227 = por %p225, %p226
      %p228 = scmp.ne.s32.totalorder %s219, %s220
      %p229 = scmp.eq.s32.totalorder %s31, 0
      %p230 = por %p228, %p229
      %p231 = scmp.ne.s32.totalorder %s219, %s220
      %p232 = scmp.eq.s32.totalorder %s32, 1
      %p233 = por %p231, %p232
      %p235 = scmp.ne.s32.totalorder %s220, %s234
      %p236 = scmp.eq.s32.totalorder %s32, 0
      %p237 = por %p235, %p236
      %s239 = sadd.s32 %s238, 1
      %p242 = scmp.eq.s32.totalorder %s26, 1
      %p243 = scmp.ne.s32.totalorder %s238, %s240
      %p244 = scmp.eq.s32.totalorder %s26, 0
      %p245 = por %p243, %p244
      %p246 = scmp.ne.s32.totalorder %s238, %s240
      %p247 = scmp.eq.s32.totalorder %s31, 1
      %p248 = por %p246, %p247
      %p249 = scmp.ne.s32.totalorder %s240, %s241
      %p250 = scmp.eq.s32.totalorder %s31, 0
      %p251 = por %p249, %p250
      %p252 = scmp.ne.s32.totalorder %s240, %s241
      %p253 = scmp.eq.s32.totalorder %s32, 1
      %p254 = por %p252, %p253
      %p256 = scmp.ne.s32.totalorder %s241, %s255
      %p257 = scmp.eq.s32.totalorder %s32, 0
      %p258 = por %p256, %p257
      %s259 = ssub.s32 %s26, %s33
      %p260 = scmp.eq.s32.totalorder %s259, 0
      %s262 = sadd.s32 %s261, 1
      %s263 = scalar_select %p260, %s261, %s262
      %p266 = pneg %p260
      %p267 = scmp.eq.s32.totalorder %s26, 1
      %p268 = por %p266, %p267
      %p269 = scmp.ne.s32.totalorder %s261, %s264
      %p270 = scmp.eq.s32.totalorder %s26, 0
      %p271 = por %p269, %p270
      %p272 = scmp.ne.s32.totalorder %s261, %s264
      %p273 = scmp.eq.s32.totalorder %s31, 1
      %p274 = por %p272, %p273
      %p275 = scmp.ne.s32.totalorder %s264, %s265
      %p276 = scmp.eq.s32.totalorder %s31, 0
      %p277 = por %p275, %p276
      %p278 = scmp.ne.s32.totalorder %s264, %s265
      %p279 = scmp.eq.s32.totalorder %s32, 1
      %p280 = por %p278, %p279
      %p282 = scmp.ne.s32.totalorder %s265, %s281
      %p283 = scmp.eq.s32.totalorder %s32, 0
      %p284 = por %p282, %p283
      %p285 = scmp.le.s32.totalorder 1, %s26
      %p286 = scmp.lt.s32.totalorder %s26, 3
      %p287 = pnand %p285, %p286
      %p288 = pneg %p287
      // Predicated region
      $region9: #{transformer_decoder_forward.1} parent=5 // pred_check
        _
      $region10: #{transformer_decoder_forward.1} parent=5 // pred_check_branch
        %290 = sbr.rel (%p287) target = $region12
      $region11: #{transformer_decoder_forward.1} parent=5 // pred_region
        %s291 = ssub.s32 %s26, 1
        // Predicated region
        $region13: #{transformer_decoder_forward.1} parent=11 // pred_check
          %p292 = pneg %p125
        $region14: #{transformer_decoder_forward.1} parent=11 // pred_check_branch
          %294 = sbr.rel (%p292) target = $region16
        $region15: #{transformer_decoder_forward.1} parent=11 // pred_region
          _
        $region16: #{transformer_decoder_forward.1} parent=11 // pred_fallthru
          _
        // Predicated region
        $region17: #{transformer_decoder_forward.1} parent=11 // pred_check
          %p295 = pneg %p146
        $region18: #{transformer_decoder_forward.1} parent=11 // pred_check_branch
          %297 = sbr.rel (%p295) target = $region20
        $region19: #{transformer_decoder_forward.1} parent=11 // pred_region
          _
        $region20: #{transformer_decoder_forward.1} parent=11 // pred_fallthru
          _
        // Predicated region
        $region21: #{transformer_decoder_forward.1} parent=11 // pred_check
          %p298 = pneg %p167
        $region22: #{transformer_decoder_forward.1} parent=11 // pred_check_branch
          %300 = sbr.rel (%p298) target = $region24
        $region23: #{transformer_decoder_forward.1} parent=11 // pred_region
          _
        $region24: #{transformer_decoder_forward.1} parent=11 // pred_fallthru
          _
        // Predicated region
        $region25: #{transformer_decoder_forward.1} parent=11 // pred_check
          %p301 = pneg %p188
        $region26: #{transformer_decoder_forward.1} parent=11 // pred_check_branch
          %303 = sbr.rel (%p301) target = $region28
        $region27: #{transformer_decoder_forward.1} parent=11 // pred_region
          _
        $region28: #{transformer_decoder_forward.1} parent=11 // pred_fallthru
          _
        // Predicated region
        $region29: #{transformer_decoder_forward.1} parent=11 // pred_check
          %p304 = pneg %p209
        $region30: #{transformer_decoder_forward.1} parent=11 // pred_check_branch
          %306 = sbr.rel (%p304) target = $region32
        $region31: #{transformer_decoder_forward.1} parent=11 // pred_region
          _
        $region32: #{transformer_decoder_forward.1} parent=11 // pred_fallthru
          _
        // Predicated region
        $region33: #{transformer_decoder_forward.1} parent=11 // pred_check
          %p307 = pneg %p230
        $region34: #{transformer_decoder_forward.1} parent=11 // pred_check_branch
          %309 = sbr.rel (%p307) target = $region36
        $region35: #{transformer_decoder_forward.1} parent=11 // pred_region
          _
        $region36: #{transformer_decoder_forward.1} parent=11 // pred_fallthru
          _
        // Predicated region
        $region37: #{transformer_decoder_forward.1} parent=11 // pred_check
          %p310 = pneg %p251
        $region38: #{transformer_decoder_forward.1} parent=11 // pred_check_branch
          %312 = sbr.rel (%p310) target = $region40
        $region39: #{transformer_decoder_forward.1} parent=11 // pred_region
          _
        $region40: #{transformer_decoder_forward.1} parent=11 // pred_fallthru
          _
      $region12: #{transformer_decoder_forward.1} parent=5 // pred_fallthru
        _
      %p313 = scmp.lt.s32.totalorder %s26, 2
      // Predicated region
      $region41: #{transformer_decoder_forward.1} parent=5 // pred_check
        %p314 = pneg %p313
      $region42: #{transformer_decoder_forward.1} parent=5 // pred_check_branch
        %316 = sbr.rel (%p314) target = $region44
      $region43: #{transformer_decoder_forward.1} parent=5 // pred_region
        // Predicated region
        $region45: #{transformer_decoder_forward.1} parent=43 // pred_check
          %p317 = pneg %p46
        $region46: #{transformer_decoder_forward.1} parent=43 // pred_check_branch
          %319 = sbr.rel (%p317) target = $region48
        $region47: #{transformer_decoder_forward.1} parent=43 // pred_region
          %p320 = scmp.lt.s32.totalorder %s26, 1
          %s321 = scalar_select %p320, %s26, 1
          %s322 = smul.addr %s321, 8
          %s323 = scalar_lea.vmem %s1, %s322
        $region48: #{transformer_decoder_forward.1} parent=43 // pred_fallthru
          _
        // Predicated region
        $region49: #{transformer_decoder_forward.1} parent=43 // pred_check
          %p324 = pneg %p72
        $region50: #{transformer_decoder_forward.1} parent=43 // pred_check_branch
          %326 = sbr.rel (%p324) target = $region52
        $region51: #{transformer_decoder_forward.1} parent=43 // pred_region
          %p327 = scmp.lt.s32.totalorder %s26, 1
          %s328 = scalar_select %p327, %s26, 1
          %s329 = smul.addr %s328, 2
          %s330 = smul.addr %s329, 8
          %s331 = scalar_lea.vmem %s2, %s330
        $region52: #{transformer_decoder_forward.1} parent=43 // pred_fallthru
          _
        // Predicated region
        $region53: #{transformer_decoder_forward.1} parent=43 // pred_check
          %p332 = pneg %p98
        $region54: #{transformer_decoder_forward.1} parent=43 // pred_check_branch
          %334 = sbr.rel (%p332) target = $region56
        $region55: #{transformer_decoder_forward.1} parent=43 // pred_region
          %p335 = scmp.lt.s32.totalorder %s26, 1
          %s336 = scalar_select %p335, %s26, 1
          %s337 = scalar_lea.vmem %s3, %s336
        $region56: #{transformer_decoder_forward.1} parent=43 // pred_fallthru
          _
      $region44: #{transformer_decoder_forward.1} parent=5 // pred_fallthru
        _
      %p338 = scmp.le.s32.totalorder 1, %s26
      %p339 = scmp.lt.s32.totalorder %s26, 3
      %p340 = pnand %p338, %p339
      %p341 = pneg %p340
      // Predicated region
      $region57: #{transformer_decoder_forward.1} parent=5 // pred_check
        _
      $region58: #{transformer_decoder_forward.1} parent=5 // pred_check_branch
        %343 = sbr.rel (%p340) target = $region60
      $region59: #{transformer_decoder_forward.1} parent=5 // pred_region
        %s344 = ssub.s32 %s26, 1
        %p345 = scmp.lt.s32.totalorder %s31, 1
        %s346 = scalar_select %p345, %s31, 1
        %s347 = smul.addr %s346, 8
        %s348 = scalar_lea.vmem %s1, %s347
        %p349 = pneg %p52
        %p350 = pneg %p49
        %p351 = scmp.lt.s32.totalorder %s31, 1
        %s352 = scalar_select %p351, %s31, 1
        %s353 = smul.addr %s352, 2
        %s354 = smul.addr %s353, 8
        %s355 = scalar_lea.vmem %s2, %s354
        %p356 = pneg %p78
        %p357 = pneg %p75
        %p358 = scmp.lt.s32.totalorder %s31, 1
        %s359 = scalar_select %p358, %s31, 1
        %s360 = scalar_lea.vmem %s3, %s359
        %p361 = pneg %p104
        %p362 = pneg %p101
        %p363 = pneg %p125
        %p364 = pneg %p122
        %p365 = pneg %p146
        %p366 = pneg %p143
        %p367 = pneg %p167
        %p368 = pneg %p164
        %p369 = pneg %p188
        %p370 = pneg %p185
        %p371 = pneg %p209
        %p372 = pneg %p206
        %p373 = pneg %p230
        %p374 = pneg %p227
        %p375 = pneg %p251
        %p376 = pneg %p248
        %p377 = pneg %p277
        %p378 = pneg %p274
        %s379 = sand.u32 %s264, 1
        %s380 = scalar_lea.sflag [#allocation5], %s379
        %s381 = sand.u32 %s264, 1
        %s382 = smul.addr %s381, 8
        %s383 = scalar_lea.vmem [#allocation4], %s382
        %p384 = scmp.lt.s32.totalorder %s31, 1
        %s385 = scalar_select %p384, %s31, 1
        %s386 = smul.addr %s385, 8
        %s387 = scalar_lea.vmem %s1, %s386
        %p388 = scmp.lt.s32.totalorder %s31, 1
        %s389 = scalar_select %p388, %s31, 1
        %s390 = smul.addr %s389, 2
        %s391 = smul.addr %s390, 8
        %s392 = scalar_lea.vmem %s2, %s391
        %p393 = scmp.lt.s32.totalorder %s31, 1
        %s394 = scalar_select %p393, %s31, 1
        %s395 = scalar_lea.vmem %s3, %s394
        %v396 = vld [vmem:[%s387] sm:$0xff]
        %v397 = vld [vmem:[%s392] sm:$0xff]
        %v398 = vld [vmem:[%s392 + $0x8] sm:$0xff]
        %s399 = sld [smem:[#allocation3 + %s31]]
        %v400 = vlaneseq
        %v401 = vand.u32 %v400, 127
        %v402 = vlaneseq
        %v403 = vshrl.u32 %v402, 7
        %v404 = vstv %s399
        %vm405 = vcmp.lt.s32.totalorder %v401, %v404
        %vm406 = vcmp.le.s32.totalorder %v401, %v403
        %vm407 = vmand %vm405, %vm406
        %v408 = vsel %vm407, 0.0, -1e+30
        %v409 = vld [vmem:[%s395] sm:$0x1]
        %vm410 = vcmp.gt.f32.partialorder %v409, 0.5
        %v411 = vsel %vm410, 1, 0
        %v412 = vlaneseq
        %v413 = vshrl.u32 %v412, 7
        %v414 = vsub.s32 0, %v413
        %v415 = vrot.slane %v411, %v414
        %vm416 = vcmp.eq.s32.totalorder %v415, 1
        %v417 = vsel %vm416, 0.0, -1e+30
        %v418 = vld [vmem:[%s9] sm:$0x1]
        %v419 = vld [vmem:[%s9 + $0x1] sm:$0x1]
        %v420 = vld [vmem:[%s9 + $0x2] sm:$0x1]
        %v421 = vld [vmem:[%s9 + $0x3] sm:$0x1]
        %v422 = vld [vmem:[%s9 + $0x4] sm:$0x1]
        %v423 = vld [vmem:[%s9 + $0x5] sm:$0x1]
        %v424 = vld [vmem:[%s9 + $0x6] sm:$0x1]
        %v425 = vld [vmem:[%s9 + $0x7] sm:$0x1]
        %v426 = vld [vmem:[%s9 + $0x8] sm:$0x1]
        %vm427 = vcmask 261120
        %v428 = vsel %vm427, %v396, 0.0
        %429 = vadd.xlane.f32.xlu0 %v428
        %v430 = vpop.xlane.xlu0 %429
        %v431 = vrcp.pop 32.0
        %v432 = vmul.f32 %v430, %v431
        %v433 = vsub.f32 %v396, %v432
        %v434 = vmul.f32 %v433, %v433
        %v435 = vsel %vm427, %v434, 0.0
        %436 = vadd.xlane.f32.xlu0 %v435
        %v437 = vpop.xlane.xlu0 %436
        %v438 = vmul.f32 %v437, %v431
        %v439 = vadd.f32 %v438, 1e-05
        %v440 = vrsqrt.pop %v439
        %v441 = vmul.f32 %v433, %v440
        %v442 = vlaneseq
        %v443 = vshrl.u32 %v442, 7
        %v444 = vsub.s32 0, %v443
        %v445 = vrot.slane %v418, %v444
        %v446 = vmul.f32 %v441, %v445
        %v447 = vlaneseq
        %v448 = vshrl.u32 %v447, 7
        %v449 = vsub.s32 0, %v448
        %v450 = vrot.slane %v421, %v449
        %v451 = vadd.f32 %v446, %v450
        %v452 = vld [vmem:[%s6] sm:$0xff]
        %v453 = vld [vmem:[%s6 + $0x8] sm:$0xff]
        %v454 = vld [vmem:[%s6 + $0x10] sm:$0xff]
        %v455 = vld [vmem:[%s6 + $0x18] sm:$0xff]
        %v456 = vld [vmem:[%s4] sm:$0xff]
        %v457 = vld [vmem:[%s4 + $0x8] sm:$0xff]
        %v458 = vld [vmem:[%s4 + $0x10] sm:$0xff]
        %v459 = vld [vmem:[%s4 + $0x18] sm:$0xff]
        %v460 = vld [vmem:[%s5] sm:$0x1]
        %v462 = vlaneseq
        %v463 = vshrl.u32 %v462, 7
        %v464 = vsub.s32 0, %v463
        %v465 = vrot.slane %v460, %v464
        %v468 = vsel %vm427, %v451, 0
        %470 = vmatprep.subr.mxu0 0.0
        %471 = vmatpush1.msra.mxu0 %v456
        %472 = vmatprep.subr.mxu0 0.0
        %473 = vmatpush1.msra.mxu0 %v457
        %474 = vmatprep.subr.mxu0 0.0
        %475 = vmatpush1.msra.mxu0 %v458
        %476 = vmatprep.subr.mxu0 0.0
        %477 = vmatpush1.msra.mxu0 %v459
        %478 = vmatprep.subr.mxu0 0.0
        %479 = vmatpush1.msra.mxu0 0.0
        %480 = vmatprep.subr.mxu0 0.0
        %481 = vmatpush1.msra.mxu0 0.0
        %482 = vmatprep.subr.mxu0 0.0
        %483 = vmatpush1.msra.mxu0 0.0
        %484 = vmatprep.subr.mxu0 0.0
        %485 = vmatpush1.msra.mxu0 0.0
        %486 = vmatprep.subr.mxu0 0.0
        %487 = vmatpush1.msra.mxu0 0.0
        %488 = vmatprep.subr.mxu0 0.0
        %489 = vmatpush1.msra.mxu0 0.0
        %490 = vmatprep.subr.mxu0 0.0
        %491 = vmatpush1.msra.mxu0 0.0
        %492 = vmatprep.subr.mxu0 0.0
        %493 = vmatpush1.msra.mxu0 0.0
        %494 = vmatprep.subr.mxu0 0.0
        %495 = vmatpush1.msra.mxu0 0.0
        %496 = vmatprep.subr.mxu0 0.0
        %497 = vmatpush1.msra.mxu0 0.0
        %498 = vmatprep.subr.mxu0 0.0
        %499 = vmatpush1.msra.mxu0 0.0
        %500 = vmatprep.subr.mxu0 0.0
        %501 = vmatpush1.msra.mxu0 0.0
        %502 = vmatprep.subr.mxu0 0.0
        %503 = vmatpush1.msra.mxu0 0.0
        %504 = vmatprep.subr.mxu0 0.0
        %505 = vmatpush1.msra.mxu0 0.0
        %506 = vmatprep.subr.mxu0 0.0
        %507 = vmatpush1.msra.mxu0 0.0
        %508 = vmatprep.subr.mxu0 0.0
        %509 = vmatpush1.msra.mxu0 0.0
        %510 = vmatprep.subr.mxu0 0.0
        %511 = vmatpush1.msra.mxu0 0.0
        %512 = vmatprep.subr.mxu0 0.0
        %513 = vmatpush1.msra.mxu0 0.0
        %514 = vmatprep.subr.mxu0 0.0
        %515 = vmatpush1.msra.mxu0 0.0
        %516 = vmatprep.subr.mxu0 0.0
        %517 = vmatpush1.msra.mxu0 0.0
        %518 = vmatprep.subr.mxu0 0.0
        %519 = vmatpush1.msra.mxu0 0.0
        %520 = vmatprep.subr.mxu0 0.0
        %521 = vmatpush1.msra.mxu0 0.0
        %522 = vmatprep.subr.mxu0 0.0
        %523 = vmatpush1.msra.mxu0 0.0
        %524 = vmatprep.subr.mxu0 0.0
        %525 = vmatpush1.msra.mxu0 0.0
        %526 = vmatprep.subr.mxu0 0.0
        %527 = vmatpush1.msra.mxu0 0.0
        %528 = vmatprep.subr.mxu0 0.0
        %529 = vmatpush1.msra.mxu0 0.0
        %530 = vmatprep.subr.mxu0 0.0
        %531 = vmatpush1.msra.mxu0 0.0
        %532 = vmatprep.subr.mxu0 0.0
        %533 = vmatpush1.msra.mxu0 0.0
        %534 = vmatprep.mubr.f32.mxu0 0.0
        %535 = vmatmul.mubr.f32.gmra.mrb[0].mxu0 %v468
        %v536 = vpop.f32.mrb[0].mxu0
        %v537 = vadd.f32 %v465, %v536
        %v538 = vpop.f32.mrb[0].mxu0
        %539 = vdwg.mxu0
        %s540 = scalar_lea.vmem %s4, 128
        %v541 = vld [vmem:[%s540] sm:$0xff]
        %v542 = vld [vmem:[%s540 + $0x8] sm:$0xff]
        %v543 = vld [vmem:[%s540 + $0x10] sm:$0xff]
        %v544 = vld [vmem:[%s540 + $0x18] sm:$0xff]
        %s545 = scalar_lea.vmem %s5, 4
        %v546 = vld [vmem:[%s545] sm:$0x1]
        %v548 = vlaneseq
        %v549 = vshrl.u32 %v548, 7
        %v550 = vsub.s32 0, %v549
        %v551 = vrot.slane %v546, %v550
        %553 = vmatprep.subr.mxu0 0.0
        %554 = vmatpush1.msra.mxu0 %v541
        %555 = vmatprep.subr.mxu0 0.0
        %556 = vmatpush1.msra.mxu0 %v542
        %557 = vmatprep.subr.mxu0 0.0
        %558 = vmatpush1.msra.mxu0 %v543
        %559 = vmatprep.subr.mxu0 0.0
        %560 = vmatpush1.msra.mxu0 %v544
        %561 = vmatprep.subr.mxu0 0.0
        %562 = vmatpush1.msra.mxu0 0.0
        %563 = vmatprep.subr.mxu0 0.0
        %564 = vmatpush1.msra.mxu0 0.0
        %565 = vmatprep.subr.mxu0 0.0
        %566 = vmatpush1.msra.mxu0 0.0
        %567 = vmatprep.subr.mxu0 0.0
        %568 = vmatpush1.msra.mxu0 0.0
        %569 = vmatprep.subr.mxu0 0.0
        %570 = vmatpush1.msra.mxu0 0.0
        %571 = vmatprep.subr.mxu0 0.0
        %572 = vmatpush1.msra.mxu0 0.0
        %573 = vmatprep.subr.mxu0 0.0
        %574 = vmatpush1.msra.mxu0 0.0
        %575 = vmatprep.subr.mxu0 0.0
        %576 = vmatpush1.msra.mxu0 0.0
        %577 = vmatprep.subr.mxu0 0.0
        %578 = vmatpush1.msra.mxu0 0.0
        %579 = vmatprep.subr.mxu0 0.0
        %580 = vmatpush1.msra.mxu0 0.0
        %581 = vmatprep.subr.mxu0 0.0
        %582 = vmatpush1.msra.mxu0 0.0
        %583 = vmatprep.subr.mxu0 0.0
        %584 = vmatpush1.msra.mxu0 0.0
        %585 = vmatprep.subr.mxu0 0.0
        %586 = vmatpush1.msra.mxu0 0.0
        %587 = vmatprep.subr.mxu0 0.0
        %588 = vmatpush1.msra.mxu0 0.0
        %589 = vmatprep.subr.mxu0 0.0
        %590 = vmatpush1.msra.mxu0 0.0
        %591 = vmatprep.subr.mxu0 0.0
        %592 = vmatpush1.msra.mxu0 0.0
        %593 = vmatprep.subr.mxu0 0.0
        %594 = vmatpush1.msra.mxu0 0.0
        %595 = vmatprep.subr.mxu0 0.0
        %596 = vmatpush1.msra.mxu0 0.0
        %597 = vmatprep.subr.mxu0 0.0
        %598 = vmatpush1.msra.mxu0 0.0
        %599 = vmatprep.subr.mxu0 0.0
        %600 = vmatpush1.msra.mxu0 0.0
        %601 = vmatprep.subr.mxu0 0.0
        %602 = vmatpush1.msra.mxu0 0.0
        %603 = vmatprep.subr.mxu0 0.0
        %604 = vmatpush1.msra.mxu0 0.0
        %605 = vmatprep.subr.mxu0 0.0
        %606 = vmatpush1.msra.mxu0 0.0
        %607 = vmatprep.subr.mxu0 0.0
        %608 = vmatpush1.msra.mxu0 0.0
        %609 = vmatprep.subr.mxu0 0.0
        %610 = vmatpush1.msra.mxu0 0.0
        %611 = vmatprep.subr.mxu0 0.0
        %612 = vmatpush1.msra.mxu0 0.0
        %613 = vmatprep.subr.mxu0 0.0
        %614 = vmatpush1.msra.mxu0 0.0
        %615 = vmatprep.subr.mxu0 0.0
        %616 = vmatpush1.msra.mxu0 0.0
        %617 = vmatprep.mubr.f32.mxu0 0.0
        %618 = vmatmul.mubr.f32.gmra.mrb[0].mxu0 %v468
        %v619 = vpop.f32.mrb[0].mxu0
        %v620 = vadd.f32 %v551, %v619
        %v621 = vpop.f32.mrb[0].mxu0
        %622 = vdwg.mxu0
        %s623 = scalar_lea.vmem %s4, 256
        %v624 = vld [vmem:[%s623] sm:$0xff]
        %v625 = vld [vmem:[%s623 + $0x8] sm:$0xff]
        %v626 = vld [vmem:[%s623 + $0x10] sm:$0xff]
        %v627 = vld [vmem:[%s623 + $0x18] sm:$0xff]
        %s628 = scalar_lea.vmem %s5, 8
        %v629 = vld [vmem:[%s628] sm:$0x1]
        %v631 = vlaneseq
        %v632 = vshrl.u32 %v631, 7
        %v633 = vsub.s32 0, %v632
        %v634 = vrot.slane %v629, %v633
        %636 = vmatprep.subr.mxu0 0.0
        %637 = vmatpush1.msra.mxu0 %v624
        %638 = vmatprep.subr.mxu0 0.0
        %639 = vmatpush1.msra.mxu0 %v625
        %640 = vmatprep.subr.mxu0 0.0
        %641 = vmatpush1.msra.mxu0 %v626
        %642 = vmatprep.subr.mxu0 0.0
        %643 = vmatpush1.msra.mxu0 %v627
        %644 = vmatprep.subr.mxu0 0.0
        %645 = vmatpush1.msra.mxu0 0.0
        %646 = vmatprep.subr.mxu0 0.0
        %647 = vmatpush1.msra.mxu0 0.0
        %648 = vmatprep.subr.mxu0 0.0
        %649 = vmatpush1.msra.mxu0 0.0
        %650 = vmatprep.subr.mxu0 0.0
        %651 = vmatpush1.msra.mxu0 0.0
        %652 = vmatprep.subr.mxu0 0.0
        %653 = vmatpush1.msra.mxu0 0.0
        %654 = vmatprep.subr.mxu0 0.0
        %655 = vmatpush1.msra.mxu0 0.0
        %656 = vmatprep.subr.mxu0 0.0
        %657 = vmatpush1.msra.mxu0 0.0
        %658 = vmatprep.subr.mxu0 0.0
        %659 = vmatpush1.msra.mxu0 0.0
        %660 = vmatprep.subr.mxu0 0.0
        %661 = vmatpush1.msra.mxu0 0.0
        %662 = vmatprep.subr.mxu0 0.0
        %663 = vmatpush1.msra.mxu0 0.0
        %664 = vmatprep.subr.mxu0 0.0
        %665 = vmatpush1.msra.mxu0 0.0
        %666 = vmatprep.subr.mxu0 0.0
        %667 = vmatpush1.msra.mxu0 0.0
        %668 = vmatprep.subr.mxu0 0.0
        %669 = vmatpush1.msra.mxu0 0.0
        %670 = vmatprep.subr.mxu0 0.0
        %671 = vmatpush1.msra.mxu0 0.0
        %672 = vmatprep.subr.mxu0 0.0
        %673 = vmatpush1.msra.mxu0 0.0
        %674 = vmatprep.subr.mxu0 0.0
        %675 = vmatpush1.msra.mxu0 0.0
        %676 = vmatprep.subr.mxu0 0.0
        %677 = vmatpush1.msra.mxu0 0.0
        %678 = vmatprep.subr.mxu0 0.0
        %679 = vmatpush1.msra.mxu0 0.0
        %680 = vmatprep.subr.mxu0 0.0
        %681 = vmatpush1.msra.mxu0 0.0
        %682 = vmatprep.subr.mxu0 0.0
        %683 = vmatpush1.msra.mxu0 0.0
        %684 = vmatprep.subr.mxu0 0.0
        %685 = vmatpush1.msra.mxu0 0.0
        %686 = vmatprep.subr.mxu0 0.0
        %687 = vmatpush1.msra.mxu0 0.0
        %688 = vmatprep.subr.mxu0 0.0
        %689 = vmatpush1.msra.mxu0 0.0
        %690 = vmatprep.subr.mxu0 0.0
        %691 = vmatpush1.msra.mxu0 0.0
        %692 = vmatprep.subr.mxu0 0.0
        %693 = vmatpush1.msra.mxu0 0.0
        %694 = vmatprep.subr.mxu0 0.0
        %695 = vmatpush1.msra.mxu0 0.0
        %696 = vmatprep.subr.mxu0 0.0
        %697 = vmatpush1.msra.mxu0 0.0
        %698 = vmatprep.subr.mxu0 0.0
        %699 = vmatpush1.msra.mxu0 0.0
        %700 = vmatprep.mubr.f32.mxu0 0.0
        %701 = vmatmul.mubr.f32.gmra.mrb[0].mxu0 %v468
        %v702 = vpop.f32.mrb[0].mxu0
        %v703 = vadd.f32 %v634, %v702
        %v704 = vpop.f32.mrb[0].mxu0
        %705 = vdwg.mxu0
        %vm706 = vcmask 64512
        %v708 = vsel %vm706, %v537, 0
        %v711 = vsel %vm706, %v620, 0
        %713 = vmatprep.subr.mxu0 0.0
        %714 = vmatpush1.xpose.msra.mxu0 %v711
        %715 = vmatprep.subr.mxu0 0.0
        %716 = vmatpush1.xpose.msra.mxu0 0.0
        %717 = vmatprep.subr.mxu0 0.0
        %718 = vmatpush1.xpose.msra.mxu0 0.0
        %719 = vmatprep.subr.mxu0 0.0
        %720 = vmatpush1.xpose.msra.mxu0 0.0
        %721 = vmatprep.subr.mxu0 0.0
        %722 = vmatpush1.xpose.msra.mxu0 0.0
        %723 = vmatprep.subr.mxu0 0.0
        %724 = vmatpush1.xpose.msra.mxu0 0.0
        %725 = vmatprep.subr.mxu0 0.0
        %726 = vmatpush1.xpose.msra.mxu0 0.0
        %727 = vmatprep.subr.mxu0 0.0
        %728 = vmatpush1.xpose.msra.mxu0 0.0
        %729 = vmatprep.subr.mxu0 0.0
        %730 = vmatpush1.xpose.msra.mxu0 0.0
        %731 = vmatprep.subr.mxu0 0.0
        %732 = vmatpush1.xpose.msra.mxu0 0.0
        %733 = vmatprep.subr.mxu0 0.0
        %734 = vmatpush1.xpose.msra.mxu0 0.0
        %735 = vmatprep.subr.mxu0 0.0
        %736 = vmatpush1.xpose.msra.mxu0 0.0
        %737 = vmatprep.subr.mxu0 0.0
        %738 = vmatpush1.xpose.msra.mxu0 0.0
        %739 = vmatprep.subr.mxu0 0.0
        %740 = vmatpush1.xpose.msra.mxu0 0.0
        %741 = vmatprep.subr.mxu0 0.0
        %742 = vmatpush1.xpose.msra.mxu0 0.0
        %743 = vmatprep.subr.mxu0 0.0
        %744 = vmatpush1.xpose.msra.mxu0 0.0
        %745 = vmatprep.subr.mxu0 0.0
        %746 = vmatpush1.xpose.msra.mxu0 0.0
        %747 = vmatprep.subr.mxu0 0.0
        %748 = vmatpush1.xpose.msra.mxu0 0.0
        %749 = vmatprep.subr.mxu0 0.0
        %750 = vmatpush1.xpose.msra.mxu0 0.0
        %751 = vmatprep.subr.mxu0 0.0
        %752 = vmatpush1.xpose.msra.mxu0 0.0
        %753 = vmatprep.subr.mxu0 0.0
        %754 = vmatpush1.xpose.msra.mxu0 0.0
        %755 = vmatprep.subr.mxu0 0.0
        %756 = vmatpush1.xpose.msra.mxu0 0.0
        %757 = vmatprep.subr.mxu0 0.0
        %758 = vmatpush1.xpose.msra.mxu0 0.0
        %759 = vmatprep.subr.mxu0 0.0
        %760 = vmatpush1.xpose.msra.mxu0 0.0
        %761 = vmatprep.subr.mxu0 0.0
        %762 = vmatpush1.xpose.msra.mxu0 0.0
        %763 = vmatprep.subr.mxu0 0.0
        %764 = vmatpush1.xpose.msra.mxu0 0.0
        %765 = vmatprep.subr.mxu0 0.0
        %766 = vmatpush1.xpose.msra.mxu0 0.0
        %767 = vmatprep.subr.mxu0 0.0
        %768 = vmatpush1.xpose.msra.mxu0 0.0
        %769 = vmatprep.subr.mxu0 0.0
        %770 = vmatpush1.xpose.msra.mxu0 0.0
        %771 = vmatprep.subr.mxu0 0.0
        %772 = vmatpush1.xpose.msra.mxu0 0.0
        %773 = vmatprep.subr.mxu0 0.0
        %774 = vmatpush1.xpose.msra.mxu0 0.0
        %775 = vmatprep.subr.mxu0 0.0
        %776 = vmatpush1.xpose.msra.mxu0 0.0
        %777 = vmatprep.mubr.f32.mxu0 0.0
        %778 = vmatmul.mubr.f32.gmra.mrb[0].mxu0 %v708
        %v779 = vpop.f32.mrb[0].mxu0
        %v780 = vadd.f32 0.0, %v779
        %v781 = vpop.f32.mrb[0].mxu0
        %782 = vdwg.mxu0
        %v783 = vmul.f32 %v780, 0.35355338
        %v784 = vadd.f32 %v783, %v408
        %v785 = vsel %vm706, %v784, -inf
        %786 = vmax.xlane.f32.xlu0 %v785
        %v787 = vpop.xlane.xlu0 %786
        %v788 = vsub.f32 %v784, %v787
        %v789 = vmul.f32 %v788, 1.442695
        %v790 = vpow.pop %v789
        %v791 = vsel %vm706, %v790, 0.0
        %792 = vadd.xlane.f32.xlu0 %v791
        %v793 = vpop.xlane.xlu0 %792
        %v794 = vrcp.pop %v793
        %v795 = vmul.f32 %v790, %v794
        %v796 = vsel %vm407, %v795, 0.0
        %v798 = vsel %vm706, %v796, 0
        %800 = vmatprep.subr.mxu0 0.0
        %801 = vmatpush1.msra.mxu0 %v703
        %802 = vmatprep.subr.mxu0 0.0
        %803 = vmatpush1.msra.mxu0 0.0
        %804 = vmatprep.subr.mxu0 0.0
        %805 = vmatpush1.msra.mxu0 0.0
        %806 = vmatprep.subr.mxu0 0.0
        %807 = vmatpush1.msra.mxu0 0.0
        %808 = vmatprep.subr.mxu0 0.0
        %809 = vmatpush1.msra.mxu0 0.0
        %810 = vmatprep.subr.mxu0 0.0
        %811 = vmatpush1.msra.mxu0 0.0
        %812 = vmatprep.subr.mxu0 0.0
        %813 = vmatpush1.msra.mxu0 0.0
        %814 = vmatprep.subr.mxu0 0.0
        %815 = vmatpush1.msra.mxu0 0.0
        %816 = vmatprep.subr.mxu0 0.0
        %817 = vmatpush1.msra.mxu0 0.0
        %818 = vmatprep.subr.mxu0 0.0
        %819 = vmatpush1.msra.mxu0 0.0
        %820 = vmatprep.subr.mxu0 0.0
        %821 = vmatpush1.msra.mxu0 0.0
        %822 = vmatprep.subr.mxu0 0.0
        %823 = vmatpush1.msra.mxu0 0.0
        %824 = vmatprep.subr.mxu0 0.0
        %825 = vmatpush1.msra.mxu0 0.0
        %826 = vmatprep.subr.mxu0 0.0
        %827 = vmatpush1.msra.mxu0 0.0
        %828 = vmatprep.subr.mxu0 0.0
        %829 = vmatpush1.msra.mxu0 0.0
        %830 = vmatprep.subr.mxu0 0.0
        %831 = vmatpush1.msra.mxu0 0.0
        %832 = vmatprep.subr.mxu0 0.0
        %833 = vmatpush1.msra.mxu0 0.0
        %834 = vmatprep.subr.mxu0 0.0
        %835 = vmatpush1.msra.mxu0 0.0
        %836 = vmatprep.subr.mxu0 0.0
        %837 = vmatpush1.msra.mxu0 0.0
        %838 = vmatprep.subr.mxu0 0.0
        %839 = vmatpush1.msra.mxu0 0.0
        %840 = vmatprep.subr.mxu0 0.0
        %841 = vmatpush1.msra.mxu0 0.0
        %842 = vmatprep.subr.mxu0 0.0
        %843 = vmatpush1.msra.mxu0 0.0
        %844 = vmatprep.subr.mxu0 0.0
        %845 = vmatpush1.msra.mxu0 0.0
        %846 = vmatprep.subr.mxu0 0.0
        %847 = vmatpush1.msra.mxu0 0.0
        %848 = vmatprep.subr.mxu0 0.0
        %849 = vmatpush1.msra.mxu0 0.0
        %850 = vmatprep.subr.mxu0 0.0
        %851 = vmatpush1.msra.mxu0 0.0
        %852 = vmatprep.subr.mxu0 0.0
        %853 = vmatpush1.msra.mxu0 0.0
        %854 = vmatprep.subr.mxu0 0.0
        %855 = vmatpush1.msra.mxu0 0.0
        %856 = vmatprep.subr.mxu0 0.0
        %857 = vmatpush1.msra.mxu0 0.0
        %858 = vmatprep.subr.mxu0 0.0
        %859 = vmatpush1.msra.mxu0 0.0
        %860 = vmatprep.subr.mxu0 0.0
        %861 = vmatpush1.msra.mxu0 0.0
        %862 = vmatprep.subr.mxu0 0.0
        %863 = vmatpush1.msra.mxu0 0.0
        %864 = vmatprep.mubr.f32.mxu0 0.0
        %865 = vmatmul.mubr.f32.gmra.mrb[0].mxu0 %v798
        %v866 = vpop.f32.mrb[0].mxu0
        %v867 = vadd.f32 0.0, %v866
        %v868 = vpop.f32.mrb[0].mxu0
        %869 = vdwg.mxu0
        %s870 = scalar_lea.vmem %s4, 32
        %v871 = vld [vmem:[%s870] sm:$0xff]
        %v872 = vld [vmem:[%s870 + $0x8] sm:$0xff]
        %v873 = vld [vmem:[%s870 + $0x10] sm:$0xff]
        %v874 = vld [vmem:[%s870 + $0x18] sm:$0xff]
        %s875 = scalar_lea.vmem %s5, 1
        %v876 = vld [vmem:[%s875] sm:$0x1]
        %v878 = vlaneseq
        %v879 = vshrl.u32 %v878, 7
        %v880 = vsub.s32 0, %v879
        %v881 = vrot.slane %v876, %v880
        %883 = vmatprep.subr.mxu0 0.0
        %884 = vmatpush1.msra.mxu0 %v871
        %885 = vmatprep.subr.mxu0 0.0
        %886 = vmatpush1.msra.mxu0 %v872
        %887 = vmatprep.subr.mxu0 0.0
        %888 = vmatpush1.msra.mxu0 %v873
        %889 = vmatprep.subr.mxu0 0.0
        %890 = vmatpush1.msra.mxu0 %v874
        %891 = vmatprep.subr.mxu0 0.0
        %892 = vmatpush1.msra.mxu0 0.0
        %893 = vmatprep.subr.mxu0 0.0
        %894 = vmatpush1.msra.mxu0 0.0
        %895 = vmatprep.subr.mxu0 0.0
        %896 = vmatpush1.msra.mxu0 0.0
        %897 = vmatprep.subr.mxu0 0.0
        %898 = vmatpush1.msra.mxu0 0.0
        %899 = vmatprep.subr.mxu0 0.0
        %900 = vmatpush1.msra.mxu0 0.0
        %901 = vmatprep.subr.mxu0 0.0
        %902 = vmatpush1.msra.mxu0 0.0
        %903 = vmatprep.subr.mxu0 0.0
        %904 = vmatpush1.msra.mxu0 0.0
        %905 = vmatprep.subr.mxu0 0.0
        %906 = vmatpush1.msra.mxu0 0.0
        %907 = vmatprep.subr.mxu0 0.0
        %908 = vmatpush1.msra.mxu0 0.0
        %909 = vmatprep.subr.mxu0 0.0
        %910 = vmatpush1.msra.mxu0 0.0
        %911 = vmatprep.subr.mxu0 0.0
        %912 = vmatpush1.msra.mxu0 0.0
        %913 = vmatprep.subr.mxu0 0.0
        %914 = vmatpush1.msra.mxu0 0.0
        %915 = vmatprep.subr.mxu0 0.0
        %916 = vmatpush1.msra.mxu0 0.0
        %917 = vmatprep.subr.mxu0 0.0
        %918 = vmatpush1.msra.mxu0 0.0
        %919 = vmatprep.subr.mxu0 0.0
        %920 = vmatpush1.msra.mxu0 0.0
        %921 = vmatprep.subr.mxu0 0.0
        %922 = vmatpush1.msra.mxu0 0.0
        %923 = vmatprep.subr.mxu0 0.0
        %924 = vmatpush1.msra.mxu0 0.0
        %925 = vmatprep.subr.mxu0 0.0
        %926 = vmatpush1.msra.mxu0 0.0
        %927 = vmatprep.subr.mxu0 0.0
        %928 = vmatpush1.msra.mxu0 0.0
        %929 = vmatprep.subr.mxu0 0.0
        %930 = vmatpush1.msra.mxu0 0.0
        %931 = vmatprep.subr.mxu0 0.0
        %932 = vmatpush1.msra.mxu0 0.0
        %933 = vmatprep.subr.mxu0 0.0
        %934 = vmatpush1.msra.mxu0 0.0
        %935 = vmatprep.subr.mxu0 0.0
        %936 = vmatpush1.msra.mxu0 0.0
        %937 = vmatprep.subr.mxu0 0.0
        %938 = vmatpush1.msra.mxu0 0.0
        %939 = vmatprep.subr.mxu0 0.0
        %940 = vmatpush1.msra.mxu0 0.0
        %941 = vmatprep.subr.mxu0 0.0
        %942 = vmatpush1.msra.mxu0 0.0
        %943 = vmatprep.subr.mxu0 0.0
        %944 = vmatpush1.msra.mxu0 0.0
        %945 = vmatprep.subr.mxu0 0.0
        %946 = vmatpush1.msra.mxu0 0.0
        %947 = vmatprep.mubr.f32.mxu0 0.0
        %948 = vmatmul.mubr.f32.gmra.mrb[0].mxu0 %v468
        %v949 = vpop.f32.mrb[0].mxu0
        %v950 = vadd.f32 %v881, %v949
        %v951 = vpop.f32.mrb[0].mxu0
        %952 = vdwg.mxu0
        %s953 = scalar_lea.vmem %s4, 160
        %v954 = vld [vmem:[%s953] sm:$0xff]
        %v955 = vld [vmem:[%s953 + $0x8] sm:$0xff]
        %v956 = vld [vmem:[%s953 + $0x10] sm:$0xff]
        %v957 = vld [vmem:[%s953 + $0x18] sm:$0xff]
        %s958 = scalar_lea.vmem %s5, 5
        %v959 = vld [vmem:[%s958] sm:$0x1]
        %v961 = vlaneseq
        %v962 = vshrl.u32 %v961, 7
        %v963 = vsub.s32 0, %v962
        %v964 = vrot.slane %v959, %v963
        %966 = vmatprep.subr.mxu0 0.0
        %967 = vmatpush1.msra.mxu0 %v954
        %968 = vmatprep.subr.mxu0 0.0
        %969 = vmatpush1.msra.mxu0 %v955
        %970 = vmatprep.subr.mxu0 0.0
        %971 = vmatpush1.msra.mxu0 %v956
        %972 = vmatprep.subr.mxu0 0.0
        %973 = vmatpush1.msra.mxu0 %v957
        %974 = vmatprep.subr.mxu0 0.0
        %975 = vmatpush1.msra.mxu0 0.0
        %976 = vmatprep.subr.mxu0 0.0
        %977 = vmatpush1.msra.mxu0 0.0
        %978 = vmatprep.subr.mxu0 0.0
        %979 = vmatpush1.msra.mxu0 0.0
        %980 = vmatprep.subr.mxu0 0.0
        %981 = vmatpush1.msra.mxu0 0.0
        %982 = vmatprep.subr.mxu0 0.0
        %983 = vmatpush1.msra.mxu0 0.0
        %984 = vmatprep.subr.mxu0 0.0
        %985 = vmatpush1.msra.mxu0 0.0
        %986 = vmatprep.subr.mxu0 0.0
        %987 = vmatpush1.msra.mxu0 0.0
        %988 = vmatprep.subr.mxu0 0.0
        %989 = vmatpush1.msra.mxu0 0.0
        %990 = vmatprep.subr.mxu0 0.0
        %991 = vmatpush1.msra.mxu0 0.0
        %992 = vmatprep.subr.mxu0 0.0
        %993 = vmatpush1.msra.mxu0 0.0
        %994 = vmatprep.subr.mxu0 0.0
        %995 = vmatpush1.msra.mxu0 0.0
        %996 = vmatprep.subr.mxu0 0.0
        %997 = vmatpush1.msra.mxu0 0.0
        %998 = vmatprep.subr.mxu0 0.0
        %999 = vmatpush1.msra.mxu0 0.0
        %1000 = vmatprep.subr.mxu0 0.0
        %1001 = vmatpush1.msra.mxu0 0.0
        %1002 = vmatprep.subr.mxu0 0.0
        %1003 = vmatpush1.msra.mxu0 0.0
        %1004 = vmatprep.subr.mxu0 0.0
        %1005 = vmatpush1.msra.mxu0 0.0
        %1006 = vmatprep.subr.mxu0 0.0
        %1007 = vmatpush1.msra.mxu0 0.0
        %1008 = vmatprep.subr.mxu0 0.0
        %1009 = vmatpush1.msra.mxu0 0.0
        %1010 = vmatprep.subr.mxu0 0.0
        %1011 = vmatpush1.msra.mxu0 0.0
        %1012 = vmatprep.subr.mxu0 0.0
        %1013 = vmatpush1.msra.mxu0 0.0
        %1014 = vmatprep.subr.mxu0 0.0
        %1015 = vmatpush1.msra.mxu0 0.0
        %1016 = vmatprep.subr.mxu0 0.0
        %1017 = vmatpush1.msra.mxu0 0.0
        %1018 = vmatprep.subr.mxu0 0.0
        %1019 = vmatpush1.msra.mxu0 0.0
        %1020 = vmatprep.subr.mxu0 0.0
        %1021 = vmatpush1.msra.mxu0 0.0
        %1022 = vmatprep.subr.mxu0 0.0
        %1023 = vmatpush1.msra.mxu0 0.0
        %1024 = vmatprep.subr.mxu0 0.0
        %1025 = vmatpush1.msra.mxu0 0.0
        %1026 = vmatprep.subr.mxu0 0.0
        %1027 = vmatpush1.msra.mxu0 0.0
        %1028 = vmatprep.subr.mxu0 0.0
        %1029 = vmatpush1.msra.mxu0 0.0
        %1030 = vmatprep.mubr.f32.mxu0 0.0
        %1031 = vmatmul.mubr.f32.gmra.mrb[0].mxu0 %v468
        %v1032 = vpop.f32.mrb[0].mxu0
        %v1033 = vadd.f32 %v964, %v1032
        %v1034 = vpop.f32.mrb[0].mxu0
        %1035 = vdwg.mxu0
        %s1036 = scalar_lea.vmem %s4, 288
        %v1037 = vld [vmem:[%s1036] sm:$0xff]
        %v1038 = vld [vmem:[%s1036 + $0x8] sm:$0xff]
        %v1039 = vld [vmem:[%s1036 + $0x10] sm:$0xff]
        %v1040 = vld [vmem:[%s1036 + $0x18] sm:$0xff]
        %s1041 = scalar_lea.vmem %s5, 9
        %v1042 = vld [vmem:[%s1041] sm:$0x1]
        %v1044 = vlaneseq
        %v1045 = vshrl.u32 %v1044, 7
        %v1046 = vsub.s32 0, %v1045
        %v1047 = vrot.slane %v1042, %v1046
        %1049 = vmatprep.subr.mxu0 0.0
        %1050 = vmatpush1.msra.mxu0 %v1037
        %1051 = vmatprep.subr.mxu0 0.0
        %1052 = vmatpush1.msra.mxu0 %v1038
        %1053 = vmatprep.subr.mxu0 0.0
        %1054 = vmatpush1.msra.mxu0 %v1039
        %1055 = vmatprep.subr.mxu0 0.0
        %1056 = vmatpush1.msra.mxu0 %v1040
        %1057 = vmatprep.subr.mxu0 0.0
        %1058 = vmatpush1.msra.mxu0 0.0
        %1059 = vmatprep.subr.mxu0 0.0
        %1060 = vmatpush1.msra.mxu0 0.0
        %1061 = vmatprep.subr.mxu0 0.0
        %1062 = vmatpush1.msra.mxu0 0.0
        %1063 = vmatprep.subr.mxu0 0.0
        %1064 = vmatpush1.msra.mxu0 0.0
        %1065 = vmatprep.subr.mxu0 0.0
        %1066 = vmatpush1.msra.mxu0 0.0
        %1067 = vmatprep.subr.mxu0 0.0
        %1068 = vmatpush1.msra.mxu0 0.0
        %1069 = vmatprep.subr.mxu0 0.0
        %1070 = vmatpush1.msra.mxu0 0.0
        %1071 = vmatprep.subr.mxu0 0.0
        %1072 = vmatpush1.msra.mxu0 0.0
        %1073 = vmatprep.subr.mxu0 0.0
        %1074 = vmatpush1.msra.mxu0 0.0
        %1075 = vmatprep.subr.mxu0 0.0
        %1076 = vmatpush1.msra.mxu0 0.0
        %1077 = vmatprep.subr.mxu0 0.0
        %1078 = vmatpush1.msra.mxu0 0.0
        %1079 = vmatprep.subr.mxu0 0.0
        %1080 = vmatpush1.msra.mxu0 0.0
        %1081 = vmatprep.subr.mxu0 0.0
        %1082 = vmatpush1.msra.mxu0 0.0
        %1083 = vmatprep.subr.mxu0 0.0
        %1084 = vmatpush1.msra.mxu0 0.0
        %1085 = vmatprep.subr.mxu0 0.0
        %1086 = vmatpush1.msra.mxu0 0.0
        %1087 = vmatprep.subr.mxu0 0.0
        %1088 = vmatpush1.msra.mxu0 0.0
        %1089 = vmatprep.subr.mxu0 0.0
        %1090 = vmatpush1.msra.mxu0 0.0
        %1091 = vmatprep.subr.mxu0 0.0
        %1092 = vmatpush1.msra.mxu0 0.0
        %1093 = vmatprep.subr.mxu0 0.0
        %1094 = vmatpush1.msra.mxu0 0.0
        %1095 = vmatprep.subr.mxu0 0.0
        %1096 = vmatpush1.msra.mxu0 0.0
        %1097 = vmatprep.subr.mxu0 0.0
        %1098 = vmatpush1.msra.mxu0 0.0
        %1099 = vmatprep.subr.mxu0 0.0
        %1100 = vmatpush1.msra.mxu0 0.0
        %1101 = vmatprep.subr.mxu0 0.0
        %1102 = vmatpush1.msra.mxu0 0.0
        %1103 = vmatprep.subr.mxu0 0.0
        %1104 = vmatpush1.msra.mxu0 0.0
        %1105 = vmatprep.subr.mxu0 0.0
        %1106 = vmatpush1.msra.mxu0 0.0
        %1107 = vmatprep.subr.mxu0 0.0
        %1108 = vmatpush1.msra.mxu0 0.0
        %1109 = vmatprep.subr.mxu0 0.0
        %1110 = vmatpush1.msra.mxu0 0.0
        %1111 = vmatprep.subr.mxu0 0.0
        %1112 = vmatpush1.msra.mxu0 0.0
        %1113 = vmatprep.mubr.f32.mxu0 0.0
        %1114 = vmatmul.mubr.f32.gmra.mrb[0].mxu0 %v468
        %v1115 = vpop.f32.mrb[0].mxu0
        %v1116 = vadd.f32 %v1047, %v1115
        %v1117 = vpop.f32.mrb[0].mxu0
        %1118 = vdwg.mxu0
        %v1120 = vsel %vm706, %v950, 0
        %v1123 = vsel %vm706, %v1033, 0
        %1125 = vmatprep.subr.mxu0 0.0
        %1126 = vmatpush1.xpose.msra.mxu0 %v1123
        %1127 = vmatprep.subr.mxu0 0.0
        %1128 = vmatpush1.xpose.msra.mxu0 0.0
        %1129 = vmatprep.subr.mxu0 0.0
        %1130 = vmatpush1.xpose.msra.mxu0 0.0
        %1131 = vmatprep.subr.mxu0 0.0
        %1132 = vmatpush1.xpose.msra.mxu0 0.0
        %1133 = vmatprep.subr.mxu0 0.0
        %1134 = vmatpush1.xpose.msra.mxu0 0.0
        %1135 = vmatprep.subr.mxu0 0.0
        %1136 = vmatpush1.xpose.msra.mxu0 0.0
        %1137 = vmatprep.subr.mxu0 0.0
        %1138 = vmatpush1.xpose.msra.mxu0 0.0
        %1139 = vmatprep.subr.mxu0 0.0
        %1140 = vmatpush1.xpose.msra.mxu0 0.0
        %1141 = vmatprep.subr.mxu0 0.0
        %1142 = vmatpush1.xpose.msra.mxu0 0.0
        %1143 = vmatprep.subr.mxu0 0.0
        %1144 = vmatpush1.xpose.msra.mxu0 0.0
        %1145 = vmatprep.subr.mxu0 0.0
        %1146 = vmatpush1.xpose.msra.mxu0 0.0
        %1147 = vmatprep.subr.mxu0 0.0
        %1148 = vmatpush1.xpose.msra.mxu0 0.0
        %1149 = vmatprep.subr.mxu0 0.0
        %1150 = vmatpush1.xpose.msra.mxu0 0.0
        %1151 = vmatprep.subr.mxu0 0.0
        %1152 = vmatpush1.xpose.msra.mxu0 0.0
        %1153 = vmatprep.subr.mxu0 0.0
        %1154 = vmatpush1.xpose.msra.mxu0 0.0
        %1155 = vmatprep.subr.mxu0 0.0
        %1156 = vmatpush1.xpose.msra.mxu0 0.0
        %1157 = vmatprep.subr.mxu0 0.0
        %1158 = vmatpush1.xpose.msra.mxu0 0.0
        %1159 = vmatprep.subr.mxu0 0.0
        %1160 = vmatpush1.xpose.msra.mxu0 0.0
        %1161 = vmatprep.subr.mxu0 0.0
        %1162 = vmatpush1.xpose.msra.mxu0 0.0
        %1163 = vmatprep.subr.mxu0 0.0
        %1164 = vmatpush1.xpose.msra.mxu0 0.0
        %1165 = vmatprep.subr.mxu0 0.0
        %1166 = vmatpush1.xpose.msra.mxu0 0.0
        %1167 = vmatprep.subr.mxu0 0.0
        %1168 = vmatpush1.xpose.msra.mxu0 0.0
        %1169 = vmatprep.subr.mxu0 0.0
        %1170 = vmatpush1.xpose.msra.mxu0 0.0
        %1171 = vmatprep.subr.mxu0 0.0
        %1172 = vmatpush1.xpose.msra.mxu0 0.0
        %1173 = vmatprep.subr.mxu0 0.0
        %1174 = vmatpush1.xpose.msra.mxu0 0.0
        %1175 = vmatprep.subr.mxu0 0.0
        %1176 = vmatpush1.xpose.msra.mxu0 0.0
        %1177 = vmatprep.subr.mxu0 0.0
        %1178 = vmatpush1.xpose.msra.mxu0 0.0
        %1179 = vmatprep.subr.mxu0 0.0
        %1180 = vmatpush1.xpose.msra.mxu0 0.0
        %1181 = vmatprep.subr.mxu0 0.0
        %1182 = vmatpush1.xpose.msra.mxu0 0.0
        %1183 = vmatprep.subr.mxu0 0.0
        %1184 = vmatpush1.xpose.msra.mxu0 0.0
        %1185 = vmatprep.subr.mxu0 0.0
        %1186 = vmatpush1.xpose.msra.mxu0 0.0
        %1187 = vmatprep.subr.mxu0 0.0
        %1188 = vmatpush1.xpose.msra.mxu0 0.0
        %1189 = vmatprep.mubr.f32.mxu0 0.0
        %1190 = vmatmul.mubr.f32.gmra.mrb[0].mxu0 %v1120
        %v1191 = vpop.f32.mrb[0].mxu0
        %v1192 = vadd.f32 0.0, %v1191
        %v1193 = vpop.f32.mrb[0].mxu0
        %1194 = vdwg.mxu0
        %v1195 = vmul.f32 %v1192, 0.35355338
        %v1196 = vadd.f32 %v1195, %v408
        %v1197 = vsel %vm706, %v1196, -inf
        %1198 = vmax.xlane.f32.xlu0 %v1197
        %v1199 = vpop.xlane.xlu0 %1198
        %v1200 = vsub.f32 %v1196, %v1199
        %v1201 = vmul.f32 %v1200, 1.442695
        %v1202 = vpow.pop %v1201
        %v1203 = vsel %vm706, %v1202, 0.0
        %1204 = vadd.xlane.f32.xlu0 %v1203
        %v1205 = vpop.xlane.xlu0 %1204
        %v1206 = vrcp.pop %v1205
        %v1207 = vmul.f32 %v1202, %v1206
        %v1208 = vsel %vm407, %v1207, 0.0
        %v1210 = vsel %vm706, %v1208, 0
        %1212 = vmatprep.subr.mxu0 0.0
        %1213 = vmatpush1.msra.mxu0 %v1116
        %1214 = vmatprep.subr.mxu0 0.0
        %1215 = vmatpush1.msra.mxu0 0.0
        %1216 = vmatprep.subr.mxu0 0.0
        %1217 = vmatpush1.msra.mxu0 0.0
        %1218 = vmatprep.subr.mxu0 0.0
        %1219 = vmatpush1.msra.mxu0 0.0
        %1220 = vmatprep.subr.mxu0 0.0
        %1221 = vmatpush1.msra.mxu0 0.0
        %1222 = vmatprep.subr.mxu0 0.0
        %1223 = vmatpush1.msra.mxu0 0.0
        %1224 = vmatprep.subr.mxu0 0.0
        %1225 = vmatpush1.msra.mxu0 0.0
        %1226 = vmatprep.subr.mxu0 0.0
        %1227 = vmatpush1.msra.mxu0 0.0
        %1228 = vmatprep.subr.mxu0 0.0
        %1229 = vmatpush1.msra.mxu0 0.0
        %1230 = vmatprep.subr.mxu0 0.0
        %1231 = vmatpush1.msra.mxu0 0.0
        %1232 = vmatprep.subr.mxu0 0.0
        %1233 = vmatpush1.msra.mxu0 0.0
        %1234 = vmatprep.subr.mxu0 0.0
        %1235 = vmatpush1.msra.mxu0 0.0
        %1236 = vmatprep.subr.mxu0 0.0
        %1237 = vmatpush1.msra.mxu0 0.0
        %1238 = vmatprep.subr.mxu0 0.0
        %1239 = vmatpush1.msra.mxu0 0.0
        %1240 = vmatprep.subr.mxu0 0.0
        %1241 = vmatpush1.msra.mxu0 0.0
        %1242 = vmatprep.subr.mxu0 0.0
        %1243 = vmatpush1.msra.mxu0 0.0
        %1244 = vmatprep.subr.mxu0 0.0
        %1245 = vmatpush1.msra.mxu0 0.0
        %1246 = vmatprep.subr.mxu0 0.0
        %1247 = vmatpush1.msra.mxu0 0.0
        %1248 = vmatprep.subr.mxu0 0.0
        %1249 = vmatpush1.msra.mxu0 0.0
        %1250 = vmatprep.subr.mxu0 0.0
        %1251 = vmatpush1.msra.mxu0 0.0
        %1252 = vmatprep.subr.mxu0 0.0
        %1253 = vmatpush1.msra.mxu0 0.0
        %1254 = vmatprep.subr.mxu0 0.0
        %1255 = vmatpush1.msra.mxu0 0.0
        %1256 = vmatprep.subr.mxu0 0.0
        %1257 = vmatpush1.msra.mxu0 0.0
        %1258 = vmatprep.subr.mxu0 0.0
        %1259 = vmatpush1.msra.mxu0 0.0
        %1260 = vmatprep.subr.mxu0 0.0
        %1261 = vmatpush1.msra.mxu0 0.0
        %1262 = vmatprep.subr.mxu0 0.0
        %1263 = vmatpush1.msra.mxu0 0.0
        %1264 = vmatprep.subr.mxu0 0.0
        %1265 = vmatpush1.msra.mxu0 0.0
        %1266 = vmatprep.subr.mxu0 0.0
        %1267 = vmatpush1.msra.mxu0 0.0
        %1268 = vmatprep.subr.mxu0 0.0
        %1269 = vmatpush1.msra.mxu0 0.0
        %1270 = vmatprep.subr.mxu0 0.0
        %1271 = vmatpush1.msra.mxu0 0.0
        %1272 = vmatprep.subr.mxu0 0.0
        %1273 = vmatpush1.msra.mxu0 0.0
        %1274 = vmatprep.subr.mxu0 0.0
        %1275 = vmatpush1.msra.mxu0 0.0
        %1276 = vmatprep.mubr.f32.mxu0 0.0
        %1277 = vmatmul.mubr.f32.gmra.mrb[0].mxu0 %v1210
        %v1278 = vpop.f32.mrb[0].mxu0
        %v1279 = vadd.f32 0.0, %v1278
        %v1280 = vpop.f32.mrb[0].mxu0
        %1281 = vdwg.mxu0
        %s1282 = scalar_lea.vmem %s4, 64
        %v1283 = vld [vmem:[%s1282] sm:$0xff]
        %v1284 = vld [vmem:[%s1282 + $0x8] sm:$0xff]
        %v1285 = vld [vmem:[%s1282 + $0x10] sm:$0xff]
        %v1286 = vld [vmem:[%s1282 + $0x18] sm:$0xff]
        %s1287 = scalar_lea.vmem %s5, 2
        %v1288 = vld [vmem:[%s1287] sm:$0x1]
        %v1290 = vlaneseq
        %v1291 = vshrl.u32 %v1290, 7
        %v1292 = vsub.s32 0, %v1291
        %v1293 = vrot.slane %v1288, %v1292
        %1295 = vmatprep.subr.mxu0 0.0
        %1296 = vmatpush1.msra.mxu0 %v1283
        %1297 = vmatprep.subr.mxu0 0.0
        %1298 = vmatpush1.msra.mxu0 %v1284
        %1299 = vmatprep.subr.mxu0 0.0
        %1300 = vmatpush1.msra.mxu0 %v1285
        %1301 = vmatprep.subr.mxu0 0.0
        %1302 = vmatpush1.msra.mxu0 %v1286
        %1303 = vmatprep.subr.mxu0 0.0
        %1304 = vmatpush1.msra.mxu0 0.0
        %1305 = vmatprep.subr.mxu0 0.0
        %1306 = vmatpush1.msra.mxu0 0.0
        %1307 = vmatprep.subr.mxu0 0.0
        %1308 = vmatpush1.msra.mxu0 0.0
        %1309 = vmatprep.subr.mxu0 0.0
        %1310 = vmatpush1.msra.mxu0 0.0
        %1311 = vmatprep.subr.mxu0 0.0
        %1312 = vmatpush1.msra.mxu0 0.0
        %1313 = vmatprep.subr.mxu0 0.0
        %1314 = vmatpush1.msra.mxu0 0.0
        %1315 = vmatprep.subr.mxu0 0.0
        %1316 = vmatpush1.msra.mxu0 0.0
        %1317 = vmatprep.subr.mxu0 0.0
        %1318 = vmatpush1.msra.mxu0 0.0
        %1319 = vmatprep.subr.mxu0 0.0
        %1320 = vmatpush1.msra.mxu0 0.0
        %1321 = vmatprep.subr.mxu0 0.0
        %1322 = vmatpush1.msra.mxu0 0.0
        %1323 = vmatprep.subr.mxu0 0.0
        %1324 = vmatpush1.msra.mxu0 0.0
        %1325 = vmatprep.subr.mxu0 0.0
        %1326 = vmatpush1.msra.mxu0 0.0
        %1327 = vmatprep.subr.mxu0 0.0
        %1328 = vmatpush1.msra.mxu0 0.0
        %1329 = vmatprep.subr.mxu0 0.0
        %1330 = vmatpush1.msra.mxu0 0.0
        %1331 = vmatprep.subr.mxu0 0.0
        %1332 = vmatpush1.msra.mxu0 0.0
        %1333 = vmatprep.subr.mxu0 0.0
        %1334 = vmatpush1.msra.mxu0 0.0
        %1335 = vmatprep.subr.mxu0 0.0
        %1336 = vmatpush1.msra.mxu0 0.0
        %1337 = vmatprep.subr.mxu0 0.0
        %1338 = vmatpush1.msra.mxu0 0.0
        %1339 = vmatprep.subr.mxu0 0.0
        %1340 = vmatpush1.msra.mxu0 0.0
        %1341 = vmatprep.subr.mxu0 0.0
        %1342 = vmatpush1.msra.mxu0 0.0
        %1343 = vmatprep.subr.mxu0 0.0
        %1344 = vmatpush1.msra.mxu0 0.0
        %1345 = vmatprep.subr.mxu0 0.0
        %1346 = vmatpush1.msra.mxu0 0.0
        %1347 = vmatprep.subr.mxu0 0.0
        %1348 = vmatpush1.msra.mxu0 0.0
        %1349 = vmatprep.subr.mxu0 0.0
        %1350 = vmatpush1.msra.mxu0 0.0
        %1351 = vmatprep.subr.mxu0 0.0
        %1352 = vmatpush1.msra.mxu0 0.0
        %1353 = vmatprep.subr.mxu0 0.0
        %1354 = vmatpush1.msra.mxu0 0.0
        %1355 = vmatprep.subr.mxu0 0.0
        %1356 = vmatpush1.msra.mxu0 0.0
        %1357 = vmatprep.subr.mxu0 0.0
        %1358 = vmatpush1.msra.mxu0 0.0
        %1359 = vmatprep.mubr.f32.mxu0 0.0
        %1360 = vmatmul.mubr.f32.gmra.mrb[0].mxu0 %v468
        %v1361 = vpop.f32.mrb[0].mxu0
        %v1362 = vadd.f32 %v1293, %v1361
        %v1363 = vpop.f32.mrb[0].mxu0
        %1364 = vdwg.mxu0
        %s1365 = scalar_lea.vmem %s4, 192
        %v1366 = vld [vmem:[%s1365] sm:$0xff]
        %v1367 = vld [vmem:[%s1365 + $0x8] sm:$0xff]
        %v1368 = vld [vmem:[%s1365 + $0x10] sm:$0xff]
        %v1369 = vld [vmem:[%s1365 + $0x18] sm:$0xff]
        %s1370 = scalar_lea.vmem %s5, 6
        %v1371 = vld [vmem:[%s1370] sm:$0x1]
        %v1373 = vlaneseq
        %v1374 = vshrl.u32 %v1373, 7
        %v1375 = vsub.s32 0, %v1374
        %v1376 = vrot.slane %v1371, %v1375
        %1378 = vmatprep.subr.mxu0 0.0
        %1379 = vmatpush1.msra.mxu0 %v1366
        %1380 = vmatprep.subr.mxu0 0.0
        %1381 = vmatpush1.msra.mxu0 %v1367
        %1382 = vmatprep.subr.mxu0 0.0
        %1383 = vmatpush1.msra.mxu0 %v1368
        %1384 = vmatprep.subr.mxu0 0.0
        %1385 = vmatpush1.msra.mxu0 %v1369
        %1386 = vmatprep.subr.mxu0 0.0
        %1387 = vmatpush1.msra.mxu0 0.0
        %1388 = vmatprep.subr.mxu0 0.0
        %1389 = vmatpush1.msra.mxu0 0.0
        %1390 = vmatprep.subr.mxu0 0.0
        %1391 = vmatpush1.msra.mxu0 0.0
        %1392 = vmatprep.subr.mxu0 0.0
        %1393 = vmatpush1.msra.mxu0 0.0
        %1394 = vmatprep.subr.mxu0 0.0
        %1395 = vmatpush1.msra.mxu0 0.0
        %1396 = vmatprep.subr.mxu0 0.0
        %1397 = vmatpush1.msra.mxu0 0.0
        %1398 = vmatprep.subr.mxu0 0.0
        %1399 = vmatpush1.msra.mxu0 0.0
        %1400 = vmatprep.subr.mxu0 0.0
        %1401 = vmatpush1.msra.mxu0 0.0
        %1402 = vmatprep.subr.mxu0 0.0
        %1403 = vmatpush1.msra.mxu0 0.0
        %1404 = vmatprep.subr.mxu0 0.0
        %1405 = vmatpush1.msra.mxu0 0.0
        %1406 = vmatprep.subr.mxu0 0.0
        %1407 = vmatpush1.msra.mxu0 0.0
        %1408 = vmatprep.subr.mxu0 0.0
        %1409 = vmatpush1.msra.mxu0 0.0
        %1410 = vmatprep.subr.mxu0 0.0
        %1411 = vmatpush1.msra.mxu0 0.0
        %1412 = vmatprep.subr.mxu0 0.0
        %1413 = vmatpush1.msra.mxu0 0.0
        %1414 = vmatprep.subr.mxu0 0.0
        %1415 = vmatpush1.msra.mxu0 0.0
        %1416 = vmatprep.subr.mxu0 0.0
        %1417 = vmatpush1.msra.mxu0 0.0
        %1418 = vmatprep.subr.mxu0 0.0
        %1419 = vmatpush1.msra.mxu0 0.0
        %1420 = vmatprep.subr.mxu0 0.0
        %1421 = vmatpush1.msra.mxu0 0.0
        %1422 = vmatprep.subr.mxu0 0.0
        %1423 = vmatpush1.msra.mxu0 0.0
        %1424 = vmatprep.subr.mxu0 0.0
        %1425 = vmatpush1.msra.mxu0 0.0
        %1426 = vmatprep.subr.mxu0 0.0
        %1427 = vmatpush1.msra.mxu0 0.0
        %1428 = vmatprep.subr.mxu0 0.0
        %1429 = vmatpush1.msra.mxu0 0.0
        %1430 = vmatprep.subr.mxu0 0.0
        %1431 = vmatpush1.msra.mxu0 0.0
        %1432 = vmatprep.subr.mxu0 0.0
        %1433 = vmatpush1.msra.mxu0 0.0
        %1434 = vmatprep.subr.mxu0 0.0
        %1435 = vmatpush1.msra.mxu0 0.0
        %1436 = vmatprep.subr.mxu0 0.0
        %1437 = vmatpush1.msra.mxu0 0.0
        %1438 = vmatprep.subr.mxu0 0.0
        %1439 = vmatpush1.msra.mxu0 0.0
        %1440 = vmatprep.subr.mxu0 0.0
        %1441 = vmatpush1.msra.mxu0 0.0
        %1442 = vmatprep.mubr.f32.mxu0 0.0
        %1443 = vmatmul.mubr.f32.gmra.mrb[0].mxu0 %v468
        %v1444 = vpop.f32.mrb[0].mxu0
        %v1445 = vadd.f32 %v1376, %v1444
        %v1446 = vpop.f32.mrb[0].mxu0
        %1447 = vdwg.mxu0
        %s1448 = scalar_lea.vmem %s4, 320
        %v1449 = vld [vmem:[%s1448] sm:$0xff]
        %v1450 = vld [vmem:[%s1448 + $0x8] sm:$0xff]
        %v1451 = vld [vmem:[%s1448 + $0x10] sm:$0xff]
        %v1452 = vld [vmem:[%s1448 + $0x18] sm:$0xff]
        %s1453 = scalar_lea.vmem %s5, 10
        %v1454 = vld [vmem:[%s1453] sm:$0x1]
        %v1456 = vlaneseq
        %v1457 = vshrl.u32 %v1456, 7
        %v1458 = vsub.s32 0, %v1457
        %v1459 = vrot.slane %v1454, %v1458
        %1461 = vmatprep.subr.mxu0 0.0
        %1462 = vmatpush1.msra.mxu0 %v1449
        %1463 = vmatprep.subr.mxu0 0.0
        %1464 = vmatpush1.msra.mxu0 %v1450
        %1465 = vmatprep.subr.mxu0 0.0
        %1466 = vmatpush1.msra.mxu0 %v1451
        %1467 = vmatprep.subr.mxu0 0.0
        %1468 = vmatpush1.msra.mxu0 %v1452
        %1469 = vmatprep.subr.mxu0 0.0
        %1470 = vmatpush1.msra.mxu0 0.0
        %1471 = vmatprep.subr.mxu0 0.0
        %1472 = vmatpush1.msra.mxu0 0.0
        %1473 = vmatprep.subr.mxu0 0.0
        %1474 = vmatpush1.msra.mxu0 0.0
        %1475 = vmatprep.subr.mxu0 0.0
        %1476 = vmatpush1.msra.mxu0 0.0
        %1477 = vmatprep.subr.mxu0 0.0
        %1478 = vmatpush1.msra.mxu0 0.0
        %1479 = vmatprep.subr.mxu0 0.0
        %1480 = vmatpush1.msra.mxu0 0.0
        %1481 = vmatprep.subr.mxu0 0.0
        %1482 = vmatpush1.msra.mxu0 0.0
        %1483 = vmatprep.subr.mxu0 0.0
        %1484 = vmatpush1.msra.mxu0 0.0
        %1485 = vmatprep.subr.mxu0 0.0
        %1486 = vmatpush1.msra.mxu0 0.0
        %1487 = vmatprep.subr.mxu0 0.0
        %1488 = vmatpush1.msra.mxu0 0.0
        %1489 = vmatprep.subr.mxu0 0.0
        %1490 = vmatpush1.msra.mxu0 0.0
        %1491 = vmatprep.subr.mxu0 0.0
        %1492 = vmatpush1.msra.mxu0 0.0
        %1493 = vmatprep.subr.mxu0 0.0
        %1494 = vmatpush1.msra.mxu0 0.0
        %1495 = vmatprep.subr.mxu0 0.0
        %1496 = vmatpush1.msra.mxu0 0.0
        %1497 = vmatprep.subr.mxu0 0.0
        %1498 = vmatpush1.msra.mxu0 0.0
        %1499 = vmatprep.subr.mxu0 0.0
        %1500 = vmatpush1.msra.mxu0 0.0
        %1501 = vmatprep.subr.mxu0 0.0
        %1502 = vmatpush1.msra.mxu0 0.0
        %1503 = vmatprep.subr.mxu0 0.0
        %1504 = vmatpush1.msra.mxu0 0.0
        %1505 = vmatprep.subr.mxu0 0.0
        %1506 = vmatpush1.msra.mxu0 0.0
        %1507 = vmatprep.subr.mxu0 0.0
        %1508 = vmatpush1.msra.mxu0 0.0
        %1509 = vmatprep.subr.mxu0 0.0
        %1510 = vmatpush1.msra.mxu0 0.0
        %1511 = vmatprep.subr.mxu0 0.0
        %1512 = vmatpush1.msra.mxu0 0.0
        %1513 = vmatprep.subr.mxu0 0.0
        %1514 = vmatpush1.msra.mxu0 0.0
        %1515 = vmatprep.subr.mxu0 0.0
        %1516 = vmatpush1.msra.mxu0 0.0
        %1517 = vmatprep.subr.mxu0 0.0
        %1518 = vmatpush1.msra.mxu0 0.0
        %1519 = vmatprep.subr.mxu0 0.0
        %1520 = vmatpush1.msra.mxu0 0.0
        %1521 = vmatprep.subr.mxu0 0.0
        %1522 = vmatpush1.msra.mxu0 0.0
        %1523 = vmatprep.subr.mxu0 0.0
        %1524 = vmatpush1.msra.mxu0 0.0
        %1525 = vmatprep.mubr.f32.mxu0 0.0
        %1526 = vmatmul.mubr.f32.gmra.mrb[0].mxu0 %v468
        %v1527 = vpop.f32.mrb[0].mxu0
        %v1528 = vadd.f32 %v1459, %v1527
        %v1529 = vpop.f32.mrb[0].mxu0
        %1530 = vdwg.mxu0
        %v1532 = vsel %vm706, %v1362, 0
        %v1535 = vsel %vm706, %v1445, 0
        %1537 = vmatprep.subr.mxu0 0.0
        %1538 = vmatpush1.xpose.msra.mxu0 %v1535
        %1539 = vmatprep.subr.mxu0 0.0
        %1540 = vmatpush1.xpose.msra.mxu0 0.0
        %1541 = vmatprep.subr.mxu0 0.0
        %1542 = vmatpush1.xpose.msra.mxu0 0.0
        %1543 = vmatprep.subr.mxu0 0.0
        %1544 = vmatpush1.xpose.msra.mxu0 0.0
        %1545 = vmatprep.subr.mxu0 0.0
        %1546 = vmatpush1.xpose.msra.mxu0 0.0
        %1547 = vmatprep.subr.mxu0 0.0
        %1548 = vmatpush1.xpose.msra.mxu0 0.0
        %1549 = vmatprep.subr.mxu0 0.0
        %1550 = vmatpush1.xpose.msra.mxu0 0.0
        %1551 = vmatprep.subr.mxu0 0.0
        %1552 = vmatpush1.xpose.msra.mxu0 0.0
        %1553 = vmatprep.subr.mxu0 0.0
        %1554 = vmatpush1.xpose.msra.mxu0 0.0
        %1555 = vmatprep.subr.mxu0 0.0
        %1556 = vmatpush1.xpose.msra.mxu0 0.0
        %1557 = vmatprep.subr.mxu0 0.0
        %1558 = vmatpush1.xpose.msra.mxu0 0.0
        %1559 = vmatprep.subr.mxu0 0.0
        %1560 = vmatpush1.xpose.msra.mxu0 0.0
        %1561 = vmatprep.subr.mxu0 0.0
        %1562 = vmatpush1.xpose.msra.mxu0 0.0
        %1563 = vmatprep.subr.mxu0 0.0
        %1564 = vmatpush1.xpose.msra.mxu0 0.0
        %1565 = vmatprep.subr.mxu0 0.0
        %1566 = vmatpush1.xpose.msra.mxu0 0.0
        %1567 = vmatprep.subr.mxu0 0.0
        %1568 = vmatpush1.xpose.msra.mxu0 0.0
        %1569 = vmatprep.subr.mxu0 0.0
        %1570 = vmatpush1.xpose.msra.mxu0 0.0
        %1571 = vmatprep.subr.mxu0 0.0
        %1572 = vmatpush1.xpose.msra.mxu0 0.0
        %1573 = vmatprep.subr.mxu0 0.0
        %1574 = vmatpush1.xpose.msra.mxu0 0.0
        %1575 = vmatprep.subr.mxu0 0.0
        %1576 = vmatpush1.xpose.msra.mxu0 0.0
        %1577 = vmatprep.subr.mxu0 0.0
        %1578 = vmatpush1.xpose.msra.mxu0 0.0
        %1579 = vmatprep.subr.mxu0 0.0
        %1580 = vmatpush1.xpose.msra.mxu0 0.0
        %1581 = vmatprep.subr.mxu0 0.0
        %1582 = vmatpush1.xpose.msra.mxu0 0.0
        %1583 = vmatprep.subr.mxu0 0.0
        %1584 = vmatpush1.xpose.msra.mxu0 0.0
        %1585 = vmatprep.subr.mxu0 0.0
        %1586 = vmatpush1.xpose.msra.mxu0 0.0
        %1587 = vmatprep.subr.mxu0 0.0
        %1588 = vmatpush1.xpose.msra.mxu0 0.0
        %1589 = vmatprep.subr.mxu0 0.0
        %1590 = vmatpush1.xpose.msra.mxu0 0.0
        %1591 = vmatprep.subr.mxu0 0.0
        %1592 = vmatpush1.xpose.msra.mxu0 0.0
        %1593 = vmatprep.subr.mxu0 0.0
        %1594 = vmatpush1.xpose.msra.mxu0 0.0
        %1595 = vmatprep.subr.mxu0 0.0
        %1596 = vmatpush1.xpose.msra.mxu0 0.0
        %1597 = vmatprep.subr.mxu0 0.0
        %1598 = vmatpush1.xpose.msra.mxu0 0.0
        %1599 = vmatprep.subr.mxu0 0.0
        %1600 = vmatpush1.xpose.msra.mxu0 0.0
        %1601 = vmatprep.mubr.f32.mxu0 0.0
        %1602 = vmatmul.mubr.f32.gmra.mrb[0].mxu0 %v1532
        %v1603 = vpop.f32.mrb[0].mxu0
        %v1604 = vadd.f32 0.0, %v1603
        %v1605 = vpop.f32.mrb[0].mxu0
        %1606 = vdwg.mxu0
        %v1607 = vmul.f32 %v1604, 0.35355338
        %v1608 = vadd.f32 %v1607, %v408
        %v1609 = vsel %vm706, %v1608, -inf
        %1610 = vmax.xlane.f32.xlu0 %v1609
        %v1611 = vpop.xlane.xlu0 %1610
        %v1612 = vsub.f32 %v1608, %v1611
        %v1613 = vmul.f32 %v1612, 1.442695
        %v1614 = vpow.pop %v1613
        %v1615 = vsel %vm706, %v1614, 0.0
        %1616 = vadd.xlane.f32.xlu0 %v1615
        %v1617 = vpop.xlane.xlu0 %1616
        %v1618 = vrcp.pop %v1617
        %v1619 = vmul.f32 %v1614, %v1618
        %v1620 = vsel %vm407, %v1619, 0.0
        %v1622 = vsel %vm706, %v1620, 0
        %1624 = vmatprep.subr.mxu0 0.0
        %1625 = vmatpush1.msra.mxu0 %v1528
        %1626 = vmatprep.subr.mxu0 0.0
        %1627 = vmatpush1.msra.mxu0 0.0
        %1628 = vmatprep.subr.mxu0 0.0
        %1629 = vmatpush1.msra.mxu0 0.0
        %1630 = vmatprep.subr.mxu0 0.0
        %1631 = vmatpush1.msra.mxu0 0.0
        %1632 = vmatprep.subr.mxu0 0.0
        %1633 = vmatpush1.msra.mxu0 0.0
        %1634 = vmatprep.subr.mxu0 0.0
        %1635 = vmatpush1.msra.mxu0 0.0
        %1636 = vmatprep.subr.mxu0 0.0
        %1637 = vmatpush1.msra.mxu0 0.0
        %1638 = vmatprep.subr.mxu0 0.0
        %1639 = vmatpush1.msra.mxu0 0.0
        %1640 = vmatprep.subr.mxu0 0.0
        %1641 = vmatpush1.msra.mxu0 0.0
        %1642 = vmatprep.subr.mxu0 0.0
        %1643 = vmatpush1.msra.mxu0 0.0
        %1644 = vmatprep.subr.mxu0 0.0
        %1645 = vmatpush1.msra.mxu0 0.0
        %1646 = vmatprep.subr.mxu0 0.0
        %1647 = vmatpush1.msra.mxu0 0.0
        %1648 = vmatprep.subr.mxu0 0.0
        %1649 = vmatpush1.msra.mxu0 0.0
        %1650 = vmatprep.subr.mxu0 0.0
        %1651 = vmatpush1.msra.mxu0 0.0
        %1652 = vmatprep.subr.mxu0 0.0
        %1653 = vmatpush1.msra.mxu0 0.0
        %1654 = vmatprep.subr.mxu0 0.0
        %1655 = vmatpush1.msra.mxu0 0.0
        %1656 = vmatprep.subr.mxu0 0.0
        %1657 = vmatpush1.msra.mxu0 0.0
        %1658 = vmatprep.subr.mxu0 0.0
        %1659 = vmatpush1.msra.mxu0 0.0
        %1660 = vmatprep.subr.mxu0 0.0
        %1661 = vmatpush1.msra.mxu0 0.0
        %1662 = vmatprep.subr.mxu0 0.0
        %1663 = vmatpush1.msra.mxu0 0.0
        %1664 = vmatprep.subr.mxu0 0.0
        %1665 = vmatpush1.msra.mxu0 0.0
        %1666 = vmatprep.subr.mxu0 0.0
        %1667 = vmatpush1.msra.mxu0 0.0
        %1668 = vmatprep.subr.mxu0 0.0
        %1669 = vmatpush1.msra.mxu0 0.0
        %1670 = vmatprep.subr.mxu0 0.0
        %1671 = vmatpush1.msra.mxu0 0.0
        %1672 = vmatprep.subr.mxu0 0.0
        %1673 = vmatpush1.msra.mxu0 0.0
        %1674 = vmatprep.subr.mxu0 0.0
        %1675 = vmatpush1.msra.mxu0 0.0
        %1676 = vmatprep.subr.mxu0 0.0
        %1677 = vmatpush1.msra.mxu0 0.0
        %1678 = vmatprep.subr.mxu0 0.0
        %1679 = vmatpush1.msra.mxu0 0.0
        %1680 = vmatprep.subr.mxu0 0.0
        %1681 = vmatpush1.msra.mxu0 0.0
        %1682 = vmatprep.subr.mxu0 0.0
        %1683 = vmatpush1.msra.mxu0 0.0
        %1684 = vmatprep.subr.mxu0 0.0
        %1685 = vmatpush1.msra.mxu0 0.0
        %1686 = vmatprep.subr.mxu0 0.0
        %1687 = vmatpush1.msra.mxu0 0.0
        %1688 = vmatprep.mubr.f32.mxu0 0.0
        %1689 = vmatmul.mubr.f32.gmra.mrb[0].mxu0 %v1622
        %v1690 = vpop.f32.mrb[0].mxu0
        %v1691 = vadd.f32 0.0, %v1690
        %v1692 = vpop.f32.mrb[0].mxu0
        %1693 = vdwg.mxu0
        %s1694 = scalar_lea.vmem %s4, 96
        %v1695 = vld [vmem:[%s1694] sm:$0xff]
        %v1696 = vld [vmem:[%s1694 + $0x8] sm:$0xff]
        %v1697 = vld [vmem:[%s1694 + $0x10] sm:$0xff]
        %v1698 = vld [vmem:[%s1694 + $0x18] sm:$0xff]
        %s1699 = scalar_lea.vmem %s5, 3
        %v1700 = vld [vmem:[%s1699] sm:$0x1]
        %v1702 = vlaneseq
        %v1703 = vshrl.u32 %v1702, 7
        %v1704 = vsub.s32 0, %v1703
        %v1705 = vrot.slane %v1700, %v1704
        %1707 = vmatprep.subr.mxu0 0.0
        %1708 = vmatpush1.msra.mxu0 %v1695
        %1709 = vmatprep.subr.mxu0 0.0
        %1710 = vmatpush1.msra.mxu0 %v1696
        %1711 = vmatprep.subr.mxu0 0.0
        %1712 = vmatpush1.msra.mxu0 %v1697
        %1713 = vmatprep.subr.mxu0 0.0
        %1714 = vmatpush1.msra.mxu0 %v1698
        %1715 = vmatprep.subr.mxu0 0.0
        %1716 = vmatpush1.msra.mxu0 0.0
        %1717 = vmatprep.subr.mxu0 0.0
        %1718 = vmatpush1.msra.mxu0 0.0
        %1719 = vmatprep.subr.mxu0 0.0
        %1720 = vmatpush1.msra.mxu0 0.0
        %1721 = vmatprep.subr.mxu0 0.0
        %1722 = vmatpush1.msra.mxu0 0.0
        %1723 = vmatprep.subr.mxu0 0.0
        %1724 = vmatpush1.msra.mxu0 0.0
        %1725 = vmatprep.subr.mxu0 0.0
        %1726 = vmatpush1.msra.mxu0 0.0
        %1727 = vmatprep.subr.mxu0 0.0
        %1728 = vmatpush1.msra.mxu0 0.0
        %1729 = vmatprep.subr.mxu0 0.0
        %1730 = vmatpush1.msra.mxu0 0.0
        %1731 = vmatprep.subr.mxu0 0.0
        %1732 = vmatpush1.msra.mxu0 0.0
        %1733 = vmatprep.subr.mxu0 0.0
        %1734 = vmatpush1.msra.mxu0 0.0
        %1735 = vmatprep.subr.mxu0 0.0
        %1736 = vmatpush1.msra.mxu0 0.0
        %1737 = vmatprep.subr.mxu0 0.0
        %1738 = vmatpush1.msra.mxu0 0.0
        %1739 = vmatprep.subr.mxu0 0.0
        %1740 = vmatpush1.msra.mxu0 0.0
        %1741 = vmatprep.subr.mxu0 0.0
        %1742 = vmatpush1.msra.mxu0 0.0
        %1743 = vmatprep.subr.mxu0 0.0
        %1744 = vmatpush1.msra.mxu0 0.0
        %1745 = vmatprep.subr.mxu0 0.0
        %1746 = vmatpush1.msra.mxu0 0.0
        %1747 = vmatprep.subr.mxu0 0.0
        %1748 = vmatpush1.msra.mxu0 0.0
        %1749 = vmatprep.subr.mxu0 0.0
        %1750 = vmatpush1.msra.mxu0 0.0
        %1751 = vmatprep.subr.mxu0 0.0
        %1752 = vmatpush1.msra.mxu0 0.0
        %1753 = vmatprep.subr.mxu0 0.0
        %1754 = vmatpush1.msra.mxu0 0.0
        %1755 = vmatprep.subr.mxu0 0.0
        %1756 = vmatpush1.msra.mxu0 0.0
        %1757 = vmatprep.subr.mxu0 0.0
        %1758 = vmatpush1.msra.mxu0 0.0
        %1759 = vmatprep.subr.mxu0 0.0
        %1760 = vmatpush1.msra.mxu0 0.0
        %1761 = vmatprep.subr.mxu0 0.0
        %1762 = vmatpush1.msra.mxu0 0.0
        %1763 = vmatprep.subr.mxu0 0.0
        %1764 = vmatpush1.msra.mxu0 0.0
        %1765 = vmatprep.subr.mxu0 0.0
        %1766 = vmatpush1.msra.mxu0 0.0
        %1767 = vmatprep.subr.mxu0 0.0
        %1768 = vmatpush1.msra.mxu0 0.0
        %1769 = vmatprep.subr.mxu0 0.0
        %1770 = vmatpush1.msra.mxu0 0.0
        %1771 = vmatprep.mubr.f32.mxu0 0.0
        %1772 = vmatmul.mubr.f32.gmra.mrb[0].mxu0 %v468
        %v1773 = vpop.f32.mrb[0].mxu0
        %v1774 = vadd.f32 %v1705, %v1773
        %v1775 = vpop.f32.mrb[0].mxu0
        %1776 = vdwg.mxu0
        %s1777 = scalar_lea.vmem %s4, 224
        %v1778 = vld [vmem:[%s1777] sm:$0xff]
        %v1779 = vld [vmem:[%s1777 + $0x8] sm:$0xff]
        %v1780 = vld [vmem:[%s1777 + $0x10] sm:$0xff]
        %v1781 = vld [vmem:[%s1777 + $0x18] sm:$0xff]
        %s1782 = scalar_lea.vmem %s5, 7
        %v1783 = vld [vmem:[%s1782] sm:$0x1]
        %v1785 = vlaneseq
        %v1786 = vshrl.u32 %v1785, 7
        %v1787 = vsub.s32 0, %v1786
        %v1788 = vrot.slane %v1783, %v1787
        %1790 = vmatprep.subr.mxu0 0.0
        %1791 = vmatpush1.msra.mxu0 %v1778
        %1792 = vmatprep.subr.mxu0 0.0
        %1793 = vmatpush1.msra.mxu0 %v1779
        %1794 = vmatprep.subr.mxu0 0.0
        %1795 = vmatpush1.msra.mxu0 %v1780
        %1796 = vmatprep.subr.mxu0 0.0
        %1797 = vmatpush1.msra.mxu0 %v1781
        %1798 = vmatprep.subr.mxu0 0.0
        %1799 = vmatpush1.msra.mxu0 0.0
        %1800 = vmatprep.subr.mxu0 0.0
        %1801 = vmatpush1.msra.mxu0 0.0
        %1802 = vmatprep.subr.mxu0 0.0
        %1803 = vmatpush1.msra.mxu0 0.0
        %1804 = vmatprep.subr.mxu0 0.0
        %1805 = vmatpush1.msra.mxu0 0.0
        %1806 = vmatprep.subr.mxu0 0.0
        %1807 = vmatpush1.msra.mxu0 0.0
        %1808 = vmatprep.subr.mxu0 0.0
        %1809 = vmatpush1.msra.mxu0 0.0
        %1810 = vmatprep.subr.mxu0 0.0
        %1811 = vmatpush1.msra.mxu0 0.0
        %1812 = vmatprep.subr.mxu0 0.0
        %1813 = vmatpush1.msra.mxu0 0.0
        %1814 = vmatprep.subr.mxu0 0.0
        %1815 = vmatpush1.msra.mxu0 0.0
        %1816 = vmatprep.subr.mxu0 0.0
        %1817 = vmatpush1.msra.mxu0 0.0
        %1818 = vmatprep.subr.mxu0 0.0
        %1819 = vmatpush1.msra.mxu0 0.0
        %1820 = vmatprep.subr.mxu0 0.0
        %1821 = vmatpush1.msra.mxu0 0.0
        %1822 = vmatprep.subr.mxu0 0.0
        %1823 = vmatpush1.msra.mxu0 0.0
        %1824 = vmatprep.subr.mxu0 0.0
        %1825 = vmatpush1.msra.mxu0 0.0
        %1826 = vmatprep.subr.mxu0 0.0
        %1827 = vmatpush1.msra.mxu0 0.0
        %1828 = vmatprep.subr.mxu0 0.0
        %1829 = vmatpush1.msra.mxu0 0.0
        %1830 = vmatprep.subr.mxu0 0.0
        %1831 = vmatpush1.msra.mxu0 0.0
        %1832 = vmatprep.subr.mxu0 0.0
        %1833 = vmatpush1.msra.mxu0 0.0
        %1834 = vmatprep.subr.mxu0 0.0
        %1835 = vmatpush1.msra.mxu0 0.0
        %1836 = vmatprep.subr.mxu0 0.0
        %1837 = vmatpush1.msra.mxu0 0.0
        %1838 = vmatprep.subr.mxu0 0.0
        %1839 = vmatpush1.msra.mxu0 0.0
        %1840 = vmatprep.subr.mxu0 0.0
        %1841 = vmatpush1.msra.mxu0 0.0
        %1842 = vmatprep.subr.mxu0 0.0
        %1843 = vmatpush1.msra.mxu0 0.0
        %1844 = vmatprep.subr.mxu0 0.0
        %1845 = vmatpush1.msra.mxu0 0.0
        %1846 = vmatprep.subr.mxu0 0.0
        %1847 = vmatpush1.msra.mxu0 0.0
        %1848 = vmatprep.subr.mxu0 0.0
        %1849 = vmatpush1.msra.mxu0 0.0
        %1850 = vmatprep.subr.mxu0 0.0
        %1851 = vmatpush1.msra.mxu0 0.0
        %1852 = vmatprep.subr.mxu0 0.0
        %1853 = vmatpush1.msra.mxu0 0.0
        %1854 = vmatprep.mubr.f32.mxu0 0.0
        %1855 = vmatmul.mubr.f32.gmra.mrb[0].mxu0 %v468
        %v1856 = vpop.f32.mrb[0].mxu0
        %v1857 = vadd.f32 %v1788, %v1856
        %v1858 = vpop.f32.mrb[0].mxu0
        %1859 = vdwg.mxu0
        %s1860 = scalar_lea.vmem %s4, 352
        %v1861 = vld [vmem:[%s1860] sm:$0xff]
        %v1862 = vld [vmem:[%s1860 + $0x8] sm:$0xff]
        %v1863 = vld [vmem:[%s1860 + $0x10] sm:$0xff]
        %v1864 = vld [vmem:[%s1860 + $0x18] sm:$0xff]
        %s1865 = scalar_lea.vmem %s5, 11
        %v1866 = vld [vmem:[%s1865] sm:$0x1]
        %v1868 = vlaneseq
        %v1869 = vshrl.u32 %v1868, 7
        %v1870 = vsub.s32 0, %v1869
        %v1871 = vrot.slane %v1866, %v1870
        %1873 = vmatprep.subr.mxu0 0.0
        %1874 = vmatpush1.msra.mxu0 %v1861
        %1875 = vmatprep.subr.mxu0 0.0
        %1876 = vmatpush1.msra.mxu0 %v1862
        %1877 = vmatprep.subr.mxu0 0.0
        %1878 = vmatpush1.msra.mxu0 %v1863
        %1879 = vmatprep.subr.mxu0 0.0
        %1880 = vmatpush1.msra.mxu0 %v1864
        %1881 = vmatprep.subr.mxu0 0.0
        %1882 = vmatpush1.msra.mxu0 0.0
        %1883 = vmatprep.subr.mxu0 0.0
        %1884 = vmatpush1.msra.mxu0 0.0
        %1885 = vmatprep.subr.mxu0 0.0
        %1886 = vmatpush1.msra.mxu0 0.0
        %1887 = vmatprep.subr.mxu0 0.0
        %1888 = vmatpush1.msra.mxu0 0.0
        %1889 = vmatprep.subr.mxu0 0.0
        %1890 = vmatpush1.msra.mxu0 0.0
        %1891 = vmatprep.subr.mxu0 0.0
        %1892 = vmatpush1.msra.mxu0 0.0
        %1893 = vmatprep.subr.mxu0 0.0
        %1894 = vmatpush1.msra.mxu0 0.0
        %1895 = vmatprep.subr.mxu0 0.0
        %1896 = vmatpush1.msra.mxu0 0.0
        %1897 = vmatprep.subr.mxu0 0.0
        %1898 = vmatpush1.msra.mxu0 0.0
        %1899 = vmatprep.subr.mxu0 0.0
        %1900 = vmatpush1.msra.mxu0 0.0
        %1901 = vmatprep.subr.mxu0 0.0
        %1902 = vmatpush1.msra.mxu0 0.0
        %1903 = vmatprep.subr.mxu0 0.0
        %1904 = vmatpush1.msra.mxu0 0.0
        %1905 = vmatprep.subr.mxu0 0.0
        %1906 = vmatpush1.msra.mxu0 0.0
        %1907 = vmatprep.subr.mxu0 0.0
        %1908 = vmatpush1.msra.mxu0 0.0
        %1909 = vmatprep.subr.mxu0 0.0
        %1910 = vmatpush1.msra.mxu0 0.0
        %1911 = vmatprep.subr.mxu0 0.0
        %1912 = vmatpush1.msra.mxu0 0.0
        %1913 = vmatprep.subr.mxu0 0.0
        %1914 = vmatpush1.msra.mxu0 0.0
        %1915 = vmatprep.subr.mxu0 0.0
        %1916 = vmatpush1.msra.mxu0 0.0
        %1917 = vmatprep.subr.mxu0 0.0
        %1918 = vmatpush1.msra.mxu0 0.0
        %1919 = vmatprep.subr.mxu0 0.0
        %1920 = vmatpush1.msra.mxu0 0.0
        %1921 = vmatprep.subr.mxu0 0.0
        %1922 = vmatpush1.msra.mxu0 0.0
        %1923 = vmatprep.subr.mxu0 0.0
        %1924 = vmatpush1.msra.mxu0 0.0
        %1925 = vmatprep.subr.mxu0 0.0
        %1926 = vmatpush1.msra.mxu0 0.0
        %1927 = vmatprep.subr.mxu0 0.0
        %1928 = vmatpush1.msra.mxu0 0.0
        %1929 = vmatprep.subr.mxu0 0.0
        %1930 = vmatpush1.msra.mxu0 0.0
        %1931 = vmatprep.subr.mxu0 0.0
        %1932 = vmatpush1.msra.mxu0 0.0
        %1933 = vmatprep.subr.mxu0 0.0
        %1934 = vmatpush1.msra.mxu0 0.0
        %1935 = vmatprep.subr.mxu0 0.0
        %1936 = vmatpush1.msra.mxu0 0.0
        %1937 = vmatprep.mubr.f32.mxu0 0.0
        %1938 = vmatmul.mubr.f32.gmra.mrb[0].mxu0 %v468
        %v1939 = vpop.f32.mrb[0].mxu0
        %v1940 = vadd.f32 %v1871, %v1939
        %v1941 = vpop.f32.mrb[0].mxu0
        %1942 = vdwg.mxu0
        %v1944 = vsel %vm706, %v1774, 0
        %v1947 = vsel %vm706, %v1857, 0
        %1949 = vmatprep.subr.mxu0 0.0
        %1950 = vmatpush1.xpose.msra.mxu0 %v1947
        %1951 = vmatprep.subr.mxu0 0.0
        %1952 = vmatpush1.xpose.msra.mxu0 0.0
        %1953 = vmatprep.subr.mxu0 0.0
        %1954 = vmatpush1.xpose.msra.mxu0 0.0
        %1955 = vmatprep.subr.mxu0 0.0
        %1956 = vmatpush1.xpose.msra.mxu0 0.0
        %1957 = vmatprep.subr.mxu0 0.0
        %1958 = vmatpush1.xpose.msra.mxu0 0.0
        %1959 = vmatprep.subr.mxu0 0.0
        %1960 = vmatpush1.xpose.msra.mxu0 0.0
        %1961 = vmatprep.subr.mxu0 0.0
        %1962 = vmatpush1.xpose.msra.mxu0 0.0
        %1963 = vmatprep.subr.mxu0 0.0
        %1964 = vmatpush1.xpose.msra.mxu0 0.0
        %1965 = vmatprep.subr.mxu0 0.0
        %1966 = vmatpush1.xpose.msra.mxu0 0.0
        %1967 = vmatprep.subr.mxu0 0.0
        %1968 = vmatpush1.xpose.msra.mxu0 0.0
        %1969 = vmatprep.subr.mxu0 0.0
        %1970 = vmatpush1.xpose.msra.mxu0 0.0
        %1971 = vmatprep.subr.mxu0 0.0
        %1972 = vmatpush1.xpose.msra.mxu0 0.0
        %1973 = vmatprep.subr.mxu0 0.0
        %1974 = vmatpush1.xpose.msra.mxu0 0.0
        %1975 = vmatprep.subr.mxu0 0.0
        %1976 = vmatpush1.xpose.msra.mxu0 0.0
        %1977 = vmatprep.subr.mxu0 0.0
        %1978 = vmatpush1.xpose.msra.mxu0 0.0
        %1979 = vmatprep.subr.mxu0 0.0
        %1980 = vmatpush1.xpose.msra.mxu0 0.0
        %1981 = vmatprep.subr.mxu0 0.0
        %1982 = vmatpush1.xpose.msra.mxu0 0.0
        %1983 = vmatprep.subr.mxu0 0.0
        %1984 = vmatpush1.xpose.msra.mxu0 0.0
        %1985 = vmatprep.subr.mxu0 0.0
        %1986 = vmatpush1.xpose.msra.mxu0 0.0
        %1987 = vmatprep.subr.mxu0 0.0
        %1988 = vmatpush1.xpose.msra.mxu0 0.0
        %1989 = vmatprep.subr.mxu0 0.0
        %1990 = vmatpush1.xpose.msra.mxu0 0.0
        %1991 = vmatprep.subr.mxu0 0.0
        %1992 = vmatpush1.xpose.msra.mxu0 0.0
        %1993 = vmatprep.subr.mxu0 0.0
        %1994 = vmatpush1.xpose.msra.mxu0 0.0
        %1995 = vmatprep.subr.mxu0 0.0
        %1996 = vmatpush1.xpose.msra.mxu0 0.0
        %1997 = vmatprep.subr.mxu0 0.0
        %1998 = vmatpush1.xpose.msra.mxu0 0.0
        %1999 = vmatprep.subr.mxu0 0.0
        %2000 = vmatpush1.xpose.msra.mxu0 0.0
        %2001 = vmatprep.subr.mxu0 0.0
        %2002 = vmatpush1.xpose.msra.mxu0 0.0
        %2003 = vmatprep.subr.mxu0 0.0
        %2004 = vmatpush1.xpose.msra.mxu0 0.0
        %2005 = vmatprep.subr.mxu0 0.0
        %2006 = vmatpush1.xpose.msra.mxu0 0.0
        %2007 = vmatprep.subr.mxu0 0.0
        %2008 = vmatpush1.xpose.msra.mxu0 0.0
        %2009 = vmatprep.subr.mxu0 0.0
        %2010 = vmatpush1.xpose.msra.mxu0 0.0
        %2011 = vmatprep.subr.mxu0 0.0
        %2012 = vmatpush1.xpose.msra.mxu0 0.0
        %2013 = vmatprep.mubr.f32.mxu0 0.0
        %2014 = vmatmul.mubr.f32.gmra.mrb[0].mxu0 %v1944
        %v2015 = vpop.f32.mrb[0].mxu0
        %v2016 = vadd.f32 0.0, %v2015
        %v2017 = vpop.f32.mrb[0].mxu0
        %2018 = vdwg.mxu0
        %v2019 = vmul.f32 %v2016, 0.35355338
        %v2020 = vadd.f32 %v2019, %v408
        %v2021 = vsel %vm706, %v2020, -inf
        %2022 = vmax.xlane.f32.xlu0 %v2021
        %v2023 = vpop.xlane.xlu0 %2022
        %v2024 = vsub.f32 %v2020, %v2023
        %v2025 = vmul.f32 %v2024, 1.442695
        %v2026 = vpow.pop %v2025
        %v2027 = vsel %vm706, %v2026, 0.0
        %2028 = vadd.xlane.f32.xlu0 %v2027
        %v2029 = vpop.xlane.xlu0 %2028
        %v2030 = vrcp.pop %v2029
        %v2031 = vmul.f32 %v2026, %v2030
        %v2032 = vsel %vm407, %v2031, 0.0
        %v2034 = vsel %vm706, %v2032, 0
        %2036 = vmatprep.subr.mxu0 0.0
        %2037 = vmatpush1.msra.mxu0 %v1940
        %2038 = vmatprep.subr.mxu0 0.0
        %2039 = vmatpush1.msra.mxu0 0.0
        %2040 = vmatprep.subr.mxu0 0.0
        %2041 = vmatpush1.msra.mxu0 0.0
        %2042 = vmatprep.subr.mxu0 0.0
        %2043 = vmatpush1.msra.mxu0 0.0
        %2044 = vmatprep.subr.mxu0 0.0
        %2045 = vmatpush1.msra.mxu0 0.0
        %2046 = vmatprep.subr.mxu0 0.0
        %2047 = vmatpush1.msra.mxu0 0.0
        %2048 = vmatprep.subr.mxu0 0.0
        %2049 = vmatpush1.msra.mxu0 0.0
        %2050 = vmatprep.subr.mxu0 0.0
        %2051 = vmatpush1.msra.mxu0 0.0
        %2052 = vmatprep.subr.mxu0 0.0
        %2053 = vmatpush1.msra.mxu0 0.0
        %2054 = vmatprep.subr.mxu0 0.0
        %2055 = vmatpush1.msra.mxu0 0.0
        %2056 = vmatprep.subr.mxu0 0.0
        %2057 = vmatpush1.msra.mxu0 0.0
        %2058 = vmatprep.subr.mxu0 0.0
        %2059 = vmatpush1.msra.mxu0 0.0
        %2060 = vmatprep.subr.mxu0 0.0
        %2061 = vmatpush1.msra.mxu0 0.0
        %2062 = vmatprep.subr.mxu0 0.0
        %2063 = vmatpush1.msra.mxu0 0.0
        %2064 = vmatprep.subr.mxu0 0.0
        %2065 = vmatpush1.msra.mxu0 0.0
        %2066 = vmatprep.subr.mxu0 0.0
        %2067 = vmatpush1.msra.mxu0 0.0
        %2068 = vmatprep.subr.mxu0 0.0
        %2069 = vmatpush1.msra.mxu0 0.0
        %2070 = vmatprep.subr.mxu0 0.0
        %2071 = vmatpush1.msra.mxu0 0.0
        %2072 = vmatprep.subr.mxu0 0.0
        %2073 = vmatpush1.msra.mxu0 0.0
        %2074 = vmatprep.subr.mxu0 0.0
        %2075 = vmatpush1.msra.mxu0 0.0
        %2076 = vmatprep.subr.mxu0 0.0
        %2077 = vmatpush1.msra.mxu0 0.0
        %2078 = vmatprep.subr.mxu0 0.0
        %2079 = vmatpush1.msra.mxu0 0.0
        %2080 = vmatprep.subr.mxu0 0.0
        %2081 = vmatpush1.msra.mxu0 0.0
        %2082 = vmatprep.subr.mxu0 0.0
        %2083 = vmatpush1.msra.mxu0 0.0
        %2084 = vmatprep.subr.mxu0 0.0
        %2085 = vmatpush1.msra.mxu0 0.0
        %2086 = vmatprep.subr.mxu0 0.0
        %2087 = vmatpush1.msra.mxu0 0.0
        %2088 = vmatprep.subr.mxu0 0.0
        %2089 = vmatpush1.msra.mxu0 0.0
        %2090 = vmatprep.subr.mxu0 0.0
        %2091 = vmatpush1.msra.mxu0 0.0
        %2092 = vmatprep.subr.mxu0 0.0
        %2093 = vmatpush1.msra.mxu0 0.0
        %2094 = vmatprep.subr.mxu0 0.0
        %2095 = vmatpush1.msra.mxu0 0.0
        %2096 = vmatprep.subr.mxu0 0.0
        %2097 = vmatpush1.msra.mxu0 0.0
        %2098 = vmatprep.subr.mxu0 0.0
        %2099 = vmatpush1.msra.mxu0 0.0
        %2100 = vmatprep.mubr.f32.mxu0 0.0
        %2101 = vmatmul.mubr.f32.gmra.mrb[0].mxu0 %v2034
        %v2102 = vpop.f32.mrb[0].mxu0
        %v2103 = vadd.f32 0.0, %v2102
        %v2104 = vpop.f32.mrb[0].mxu0
        %2105 = vdwg.mxu0
        %2107 = vrot.lane.b32.xlu0 %v1279, 8
        %v2108 = vpop.permute.xlu0 %2107
        %2111 = vrot.lane.b32.xlu0 %v1691, 16
        %v2112 = vpop.permute.xlu0 %2111
        %2115 = vrot.lane.b32.xlu0 %v2103, 24
        %v2116 = vpop.permute.xlu0 %2115
        %v2118 = vsel %vm706, %v867, %v2108
        %vm2119 = vcmask 130048
        %v2120 = vsel %vm2119, %v2118, %v2112
        %vm2121 = vcmask 195584
        %v2122 = vsel %vm2121, %v2120, %v2116
        %v2123 = vlaneseq
        %v2124 = vshrl.u32 %v2123, 7
        %v2125 = vsub.s32 0, %v2124
        %v2126 = vrot.slane %v424, %v2125
        %v2128 = vsel %vm427, %v2122, 0
        %2130 = vmatprep.subr.mxu0 0.0
        %2131 = vmatpush1.msra.mxu0 %v452
        %2132 = vmatprep.subr.mxu0 0.0
        %2133 = vmatpush1.msra.mxu0 %v453
        %2134 = vmatprep.subr.mxu0 0.0
        %2135 = vmatpush1.msra.mxu0 %v454
        %2136 = vmatprep.subr.mxu0 0.0
        %2137 = vmatpush1.msra.mxu0 %v455
        %2138 = vmatprep.subr.mxu0 0.0
        %2139 = vmatpush1.msra.mxu0 0.0
        %2140 = vmatprep.subr.mxu0 0.0
        %2141 = vmatpush1.msra.mxu0 0.0
        %2142 = vmatprep.subr.mxu0 0.0
        %2143 = vmatpush1.msra.mxu0 0.0
        %2144 = vmatprep.subr.mxu0 0.0
        %2145 = vmatpush1.msra.mxu0 0.0
        %2146 = vmatprep.subr.mxu0 0.0
        %2147 = vmatpush1.msra.mxu0 0.0
        %2148 = vmatprep.subr.mxu0 0.0
        %2149 = vmatpush1.msra.mxu0 0.0
        %2150 = vmatprep.subr.mxu0 0.0
        %2151 = vmatpush1.msra.mxu0 0.0
        %2152 = vmatprep.subr.mxu0 0.0
        %2153 = vmatpush1.msra.mxu0 0.0
        %2154 = vmatprep.subr.mxu0 0.0
        %2155 = vmatpush1.msra.mxu0 0.0
        %2156 = vmatprep.subr.mxu0 0.0
        %2157 = vmatpush1.msra.mxu0 0.0
        %2158 = vmatprep.subr.mxu0 0.0
        %2159 = vmatpush1.msra.mxu0 0.0
        %2160 = vmatprep.subr.mxu0 0.0
        %2161 = vmatpush1.msra.mxu0 0.0
        %2162 = vmatprep.subr.mxu0 0.0
        %2163 = vmatpush1.msra.mxu0 0.0
        %2164 = vmatprep.subr.mxu0 0.0
        %2165 = vmatpush1.msra.mxu0 0.0
        %2166 = vmatprep.subr.mxu0 0.0
        %2167 = vmatpush1.msra.mxu0 0.0
        %2168 = vmatprep.subr.mxu0 0.0
        %2169 = vmatpush1.msra.mxu0 0.0
        %2170 = vmatprep.subr.mxu0 0.0
        %2171 = vmatpush1.msra.mxu0 0.0
        %2172 = vmatprep.subr.mxu0 0.0
        %2173 = vmatpush1.msra.mxu0 0.0
        %2174 = vmatprep.subr.mxu0 0.0
        %2175 = vmatpush1.msra.mxu0 0.0
        %2176 = vmatprep.subr.mxu0 0.0
        %2177 = vmatpush1.msra.mxu0 0.0
        %2178 = vmatprep.subr.mxu0 0.0
        %2179 = vmatpush1.msra.mxu0 0.0
        %2180 = vmatprep.subr.mxu0 0.0
        %2181 = vmatpush1.msra.mxu0 0.0
        %2182 = vmatprep.subr.mxu0 0.0
        %2183 = vmatpush1.msra.mxu0 0.0
        %2184 = vmatprep.subr.mxu0 0.0
        %2185 = vmatpush1.msra.mxu0 0.0
        %2186 = vmatprep.subr.mxu0 0.0
        %2187 = vmatpush1.msra.mxu0 0.0
        %2188 = vmatprep.subr.mxu0 0.0
        %2189 = vmatpush1.msra.mxu0 0.0
        %2190 = vmatprep.subr.mxu0 0.0
        %2191 = vmatpush1.msra.mxu0 0.0
        %2192 = vmatprep.subr.mxu0 0.0
        %2193 = vmatpush1.msra.mxu0 0.0
        %2194 = vmatprep.mubr.f32.mxu0 0.0
        %2195 = vmatmul.mubr.f32.gmra.mrb[0].mxu0 %v2128
        %v2196 = vpop.f32.mrb[0].mxu0
        %v2197 = vadd.f32 %v2126, %v2196
        %v2198 = vpop.f32.mrb[0].mxu0
        %2199 = vdwg.mxu0
        %v2200 = vadd.f32 %v396, %v2197
        %v2201 = vsel %vm427, %v2200, 0.0
        %2202 = vadd.xlane.f32.xlu0 %v2201
        %v2203 = vpop.xlane.xlu0 %2202
        %v2204 = vmul.f32 %v2203, %v431
        %v2205 = vsub.f32 %v2200, %v2204
        %v2206 = vmul.f32 %v2205, %v2205
        %v2207 = vsel %vm427, %v2206, 0.0
        %2208 = vadd.xlane.f32.xlu0 %v2207
        %v2209 = vpop.xlane.xlu0 %2208
        %v2210 = vmul.f32 %v2209, %v431
        %v2211 = vadd.f32 %v2210, 1e-05
        %v2212 = vrsqrt.pop %v2211
        %v2213 = vmul.f32 %v2205, %v2212
        %v2214 = vlaneseq
        %v2215 = vshrl.u32 %v2214, 7
        %v2216 = vsub.s32 0, %v2215
        %v2217 = vrot.slane %v419, %v2216
        %v2218 = vmul.f32 %v2213, %v2217
        %v2219 = vlaneseq
        %v2220 = vshrl.u32 %v2219, 7
        %v2221 = vsub.s32 0, %v2220
        %v2222 = vrot.slane %v422, %v2221
        %v2223 = vadd.f32 %v2218, %v2222
        %s2224 = scalar_lea.vmem %s6, 32
        %v2225 = vld [vmem:[%s2224] sm:$0xff]
        %v2226 = vld [vmem:[%s2224 + $0x8] sm:$0xff]
        %v2227 = vld [vmem:[%s2224 + $0x10] sm:$0xff]
        %v2228 = vld [vmem:[%s2224 + $0x18] sm:$0xff]
        %s2229 = scalar_lea.vmem %s4, 384
        %v2230 = vld [vmem:[%s2229] sm:$0xff]
        %v2231 = vld [vmem:[%s2229 + $0x8] sm:$0xff]
        %v2232 = vld [vmem:[%s2229 + $0x10] sm:$0xff]
        %v2233 = vld [vmem:[%s2229 + $0x18] sm:$0xff]
        %s2234 = scalar_lea.vmem %s5, 12
        %v2235 = vld [vmem:[%s2234] sm:$0x1]
        %v2237 = vlaneseq
        %v2238 = vshrl.u32 %v2237, 7
        %v2239 = vsub.s32 0, %v2238
        %v2240 = vrot.slane %v2235, %v2239
        %v2243 = vsel %vm427, %v2223, 0
        %2245 = vmatprep.subr.mxu0 0.0
        %2246 = vmatpush1.msra.mxu0 %v2230
        %2247 = vmatprep.subr.mxu0 0.0
        %2248 = vmatpush1.msra.mxu0 %v2231
        %2249 = vmatprep.subr.mxu0 0.0
        %2250 = vmatpush1.msra.mxu0 %v2232
        %2251 = vmatprep.subr.mxu0 0.0
        %2252 = vmatpush1.msra.mxu0 %v2233
        %2253 = vmatprep.subr.mxu0 0.0
        %2254 = vmatpush1.msra.mxu0 0.0
        %2255 = vmatprep.subr.mxu0 0.0
        %2256 = vmatpush1.msra.mxu0 0.0
        %2257 = vmatprep.subr.mxu0 0.0
        %2258 = vmatpush1.msra.mxu0 0.0
        %2259 = vmatprep.subr.mxu0 0.0
        %2260 = vmatpush1.msra.mxu0 0.0
        %2261 = vmatprep.subr.mxu0 0.0
        %2262 = vmatpush1.msra.mxu0 0.0
        %2263 = vmatprep.subr.mxu0 0.0
        %2264 = vmatpush1.msra.mxu0 0.0
        %2265 = vmatprep.subr.mxu0 0.0
        %2266 = vmatpush1.msra.mxu0 0.0
        %2267 = vmatprep.subr.mxu0 0.0
        %2268 = vmatpush1.msra.mxu0 0.0
        %2269 = vmatprep.subr.mxu0 0.0
        %2270 = vmatpush1.msra.mxu0 0.0
        %2271 = vmatprep.subr.mxu0 0.0
        %2272 = vmatpush1.msra.mxu0 0.0
        %2273 = vmatprep.subr.mxu0 0.0
        %2274 = vmatpush1.msra.mxu0 0.0
        %2275 = vmatprep.subr.mxu0 0.0
        %2276 = vmatpush1.msra.mxu0 0.0
        %2277 = vmatprep.subr.mxu0 0.0
        %2278 = vmatpush1.msra.mxu0 0.0
        %2279 = vmatprep.subr.mxu0 0.0
        %2280 = vmatpush1.msra.mxu0 0.0
        %2281 = vmatprep.subr.mxu0 0.0
        %2282 = vmatpush1.msra.mxu0 0.0
        %2283 = vmatprep.subr.mxu0 0.0
        %2284 = vmatpush1.msra.mxu0 0.0
        %2285 = vmatprep.subr.mxu0 0.0
        %2286 = vmatpush1.msra.mxu0 0.0
        %2287 = vmatprep.subr.mxu0 0.0
        %2288 = vmatpush1.msra.mxu0 0.0
        %2289 = vmatprep.subr.mxu0 0.0
        %2290 = vmatpush1.msra.mxu0 0.0
        %2291 = vmatprep.subr.mxu0 0.0
        %2292 = vmatpush1.msra.mxu0 0.0
        %2293 = vmatprep.subr.mxu0 0.0
        %2294 = vmatpush1.msra.mxu0 0.0
        %2295 = vmatprep.subr.mxu0 0.0
        %2296 = vmatpush1.msra.mxu0 0.0
        %2297 = vmatprep.subr.mxu0 0.0
        %2298 = vmatpush1.msra.mxu0 0.0
        %2299 = vmatprep.subr.mxu0 0.0
        %2300 = vmatpush1.msra.mxu0 0.0
        %2301 = vmatprep.subr.mxu0 0.0
        %2302 = vmatpush1.msra.mxu0 0.0
        %2303 = vmatprep.subr.mxu0 0.0
        %2304 = vmatpush1.msra.mxu0 0.0
        %2305 = vmatprep.subr.mxu0 0.0
        %2306 = vmatpush1.msra.mxu0 0.0
        %2307 = vmatprep.subr.mxu0 0.0
        %2308 = vmatpush1.msra.mxu0 0.0
        %2309 = vmatprep.mubr.f32.mxu0 0.0
        %2310 = vmatmul.mubr.f32.gmra.mrb[0].mxu0 %v2243
        %v2311 = vpop.f32.mrb[0].mxu0
        %v2312 = vadd.f32 %v2240, %v2311
        %v2313 = vpop.f32.mrb[0].mxu0
        %2314 = vdwg.mxu0
        %s2315 = scalar_lea.vmem %s4, 512
        %v2316 = vld [vmem:[%s2315] sm:$0xff]
        %v2317 = vld [vmem:[%s2315 + $0x8] sm:$0xff]
        %v2318 = vld [vmem:[%s2315 + $0x10] sm:$0xff]
        %v2319 = vld [vmem:[%s2315 + $0x18] sm:$0xff]
        %s2320 = scalar_lea.vmem %s5, 16
        %v2321 = vld [vmem:[%s2320] sm:$0x1]
        %v2323 = vlaneseq
        %v2324 = vshrl.u32 %v2323, 7
        %v2325 = vsub.s32 0, %v2324
        %v2326 = vrot.slane %v2321, %v2325
        %v2329 = vsel %vm427, %v397, 0
        %v2332 = vsel %vm427, %v398, 0
        %2334 = vmatprep.subr.mxu0 0.0
        %2335 = vmatpush1.msra.mxu0 %v2316
        %2336 = vmatprep.subr.mxu0 0.0
        %2337 = vmatpush1.msra.mxu0 %v2317
        %2338 = vmatprep.subr.mxu0 0.0
        %2339 = vmatpush1.msra.mxu0 %v2318
        %2340 = vmatprep.subr.mxu0 0.0
        %2341 = vmatpush1.msra.mxu0 %v2319
        %2342 = vmatprep.subr.mxu0 0.0
        %2343 = vmatpush1.msra.mxu0 0.0
        %2344 = vmatprep.subr.mxu0 0.0
        %2345 = vmatpush1.msra.mxu0 0.0
        %2346 = vmatprep.subr.mxu0 0.0
        %2347 = vmatpush1.msra.mxu0 0.0
        %2348 = vmatprep.subr.mxu0 0.0
        %2349 = vmatpush1.msra.mxu0 0.0
        %2350 = vmatprep.subr.mxu0 0.0
        %2351 = vmatpush1.msra.mxu0 0.0
        %2352 = vmatprep.subr.mxu0 0.0
        %2353 = vmatpush1.msra.mxu0 0.0
        %2354 = vmatprep.subr.mxu0 0.0
        %2355 = vmatpush1.msra.mxu0 0.0
        %2356 = vmatprep.subr.mxu0 0.0
        %2357 = vmatpush1.msra.mxu0 0.0
        %2358 = vmatprep.subr.mxu0 0.0
        %2359 = vmatpush1.msra.mxu0 0.0
        %2360 = vmatprep.subr.mxu0 0.0
        %2361 = vmatpush1.msra.mxu0 0.0
        %2362 = vmatprep.subr.mxu0 0.0
        %2363 = vmatpush1.msra.mxu0 0.0
        %2364 = vmatprep.subr.mxu0 0.0
        %2365 = vmatpush1.msra.mxu0 0.0
        %2366 = vmatprep.subr.mxu0 0.0
        %2367 = vmatpush1.msra.mxu0 0.0
        %2368 = vmatprep.subr.mxu0 0.0
        %2369 = vmatpush1.msra.mxu0 0.0
        %2370 = vmatprep.subr.mxu0 0.0
        %2371 = vmatpush1.msra.mxu0 0.0
        %2372 = vmatprep.subr.mxu0 0.0
        %2373 = vmatpush1.msra.mxu0 0.0
        %2374 = vmatprep.subr.mxu0 0.0
        %2375 = vmatpush1.msra.mxu0 0.0
        %2376 = vmatprep.subr.mxu0 0.0
        %2377 = vmatpush1.msra.mxu0 0.0
        %2378 = vmatprep.subr.mxu0 0.0
        %2379 = vmatpush1.msra.mxu0 0.0
        %2380 = vmatprep.subr.mxu0 0.0
        %2381 = vmatpush1.msra.mxu0 0.0
        %2382 = vmatprep.subr.mxu0 0.0
        %2383 = vmatpush1.msra.mxu0 0.0
        %2384 = vmatprep.subr.mxu0 0.0
        %2385 = vmatpush1.msra.mxu0 0.0
        %2386 = vmatprep.subr.mxu0 0.0
        %2387 = vmatpush1.msra.mxu0 0.0
        %2388 = vmatprep.subr.mxu0 0.0
        %2389 = vmatpush1.msra.mxu0 0.0
        %2390 = vmatprep.subr.mxu0 0.0
        %2391 = vmatpush1.msra.mxu0 0.0
        %2392 = vmatprep.subr.mxu0 0.0
        %2393 = vmatpush1.msra.mxu0 0.0
        %2394 = vmatprep.subr.mxu0 0.0
        %2395 = vmatpush1.msra.mxu0 0.0
        %2396 = vmatprep.subr.mxu0 0.0
        %2397 = vmatpush1.msra.mxu0 0.0
        %2398 = vmatprep.mubr.f32.mxu0 0.0
        %2399 = vmatmul.mubr.f32.gmra.mrb[0].mxu0 %v2329
        %v2400 = vpop.f32.mrb[0].mxu0
        %v2401 = vadd.f32 %v2326, %v2400
        %v2402 = vpop.f32.mrb[0].mxu0
        %2403 = vmatprep.mubr.f32.mxu0 0.0
        %2404 = vmatmul.mubr.f32.gmra.mrb[0].mxu0 %v2332
        %v2405 = vpop.f32.mrb[0].mxu0
        %v2406 = vadd.f32 %v2326, %v2405
        %v2407 = vpop.f32.mrb[0].mxu0
        %2408 = vdwg.mxu0
        %s2409 = scalar_lea.vmem %s4, 640
        %v2410 = vld [vmem:[%s2409] sm:$0xff]
        %v2411 = vld [vmem:[%s2409 + $0x8] sm:$0xff]
        %v2412 = vld [vmem:[%s2409 + $0x10] sm:$0xff]
        %v2413 = vld [vmem:[%s2409 + $0x18] sm:$0xff]
        %s2414 = scalar_lea.vmem %s5, 20
        %v2415 = vld [vmem:[%s2414] sm:$0x1]
        %v2417 = vlaneseq
        %v2418 = vshrl.u32 %v2417, 7
        %v2419 = vsub.s32 0, %v2418
        %v2420 = vrot.slane %v2415, %v2419
        %2422 = vmatprep.subr.mxu0 0.0
        %2423 = vmatpush1.msra.mxu0 %v2410
        %2424 = vmatprep.subr.mxu0 0.0
        %2425 = vmatpush1.msra.mxu0 %v2411
        %2426 = vmatprep.subr.mxu0 0.0
        %2427 = vmatpush1.msra.mxu0 %v2412
        %2428 = vmatprep.subr.mxu0 0.0
        %2429 = vmatpush1.msra.mxu0 %v2413
        %2430 = vmatprep.subr.mxu0 0.0
        %2431 = vmatpush1.msra.mxu0 0.0
        %2432 = vmatprep.subr.mxu0 0.0
        %2433 = vmatpush1.msra.mxu0 0.0
        %2434 = vmatprep.subr.mxu0 0.0
        %2435 = vmatpush1.msra.mxu0 0.0
        %2436 = vmatprep.subr.mxu0 0.0
        %2437 = vmatpush1.msra.mxu0 0.0
        %2438 = vmatprep.subr.mxu0 0.0
        %2439 = vmatpush1.msra.mxu0 0.0
        %2440 = vmatprep.subr.mxu0 0.0
        %2441 = vmatpush1.msra.mxu0 0.0
        %2442 = vmatprep.subr.mxu0 0.0
        %2443 = vmatpush1.msra.mxu0 0.0
        %2444 = vmatprep.subr.mxu0 0.0
        %2445 = vmatpush1.msra.mxu0 0.0
        %2446 = vmatprep.subr.mxu0 0.0
        %2447 = vmatpush1.msra.mxu0 0.0
        %2448 = vmatprep.subr.mxu0 0.0
        %2449 = vmatpush1.msra.mxu0 0.0
        %2450 = vmatprep.subr.mxu0 0.0
        %2451 = vmatpush1.msra.mxu0 0.0
        %2452 = vmatprep.subr.mxu0 0.0
        %2453 = vmatpush1.msra.mxu0 0.0
        %2454 = vmatprep.subr.mxu0 0.0
        %2455 = vmatpush1.msra.mxu0 0.0
        %2456 = vmatprep.subr.mxu0 0.0
        %2457 = vmatpush1.msra.mxu0 0.0
        %2458 = vmatprep.subr.mxu0 0.0
        %2459 = vmatpush1.msra.mxu0 0.0
        %2460 = vmatprep.subr.mxu0 0.0
        %2461 = vmatpush1.msra.mxu0 0.0
        %2462 = vmatprep.subr.mxu0 0.0
        %2463 = vmatpush1.msra.mxu0 0.0
        %2464 = vmatprep.subr.mxu0 0.0
        %2465 = vmatpush1.msra.mxu0 0.0
        %2466 = vmatprep.subr.mxu0 0.0
        %2467 = vmatpush1.msra.mxu0 0.0
        %2468 = vmatprep.subr.mxu0 0.0
        %2469 = vmatpush1.msra.mxu0 0.0
        %2470 = vmatprep.subr.mxu0 0.0
        %2471 = vmatpush1.msra.mxu0 0.0
        %2472 = vmatprep.subr.mxu0 0.0
        %2473 = vmatpush1.msra.mxu0 0.0
        %2474 = vmatprep.subr.mxu0 0.0
        %2475 = vmatpush1.msra.mxu0 0.0
        %2476 = vmatprep.subr.mxu0 0.0
        %2477 = vmatpush1.msra.mxu0 0.0
        %2478 = vmatprep.subr.mxu0 0.0
        %2479 = vmatpush1.msra.mxu0 0.0
        %2480 = vmatprep.subr.mxu0 0.0
        %2481 = vmatpush1.msra.mxu0 0.0
        %2482 = vmatprep.subr.mxu0 0.0
        %2483 = vmatpush1.msra.mxu0 0.0
        %2484 = vmatprep.subr.mxu0 0.0
        %2485 = vmatpush1.msra.mxu0 0.0
        %2486 = vmatprep.mubr.f32.mxu0 0.0
        %2487 = vmatmul.mubr.f32.gmra.mrb[0].mxu0 %v2329
        %v2488 = vpop.f32.mrb[0].mxu0
        %v2489 = vadd.f32 %v2420, %v2488
        %v2490 = vpop.f32.mrb[0].mxu0
        %2491 = vmatprep.mubr.f32.mxu0 0.0
        %2492 = vmatmul.mubr.f32.gmra.mrb[0].mxu0 %v2332
        %v2493 = vpop.f32.mrb[0].mxu0
        %v2494 = vadd.f32 %v2420, %v2493
        %v2495 = vpop.f32.mrb[0].mxu0
        %2496 = vdwg.mxu0
        %v2498 = vsel %vm706, %v2312, 0
        %v2501 = vsel %vm706, %v2401, 0
        %v2504 = vsel %vm706, %v2406, 0
        %2506 = vmatprep.subr.mxu0 0.0
        %2507 = vmatpush1.xpose.msra.mxu0 %v2501
        %2508 = vmatprep.subr.mxu0 0.0
        %2509 = vmatpush1.xpose.msra.mxu0 %v2504
        %2510 = vmatprep.subr.mxu0 0.0
        %2511 = vmatpush1.xpose.msra.mxu0 0.0
        %2512 = vmatprep.subr.mxu0 0.0
        %2513 = vmatpush1.xpose.msra.mxu0 0.0
        %2514 = vmatprep.subr.mxu0 0.0
        %2515 = vmatpush1.xpose.msra.mxu0 0.0
        %2516 = vmatprep.subr.mxu0 0.0
        %2517 = vmatpush1.xpose.msra.mxu0 0.0
        %2518 = vmatprep.subr.mxu0 0.0
        %2519 = vmatpush1.xpose.msra.mxu0 0.0
        %2520 = vmatprep.subr.mxu0 0.0
        %2521 = vmatpush1.xpose.msra.mxu0 0.0
        %2522 = vmatprep.subr.mxu0 0.0
        %2523 = vmatpush1.xpose.msra.mxu0 0.0
        %2524 = vmatprep.subr.mxu0 0.0
        %2525 = vmatpush1.xpose.msra.mxu0 0.0
        %2526 = vmatprep.subr.mxu0 0.0
        %2527 = vmatpush1.xpose.msra.mxu0 0.0
        %2528 = vmatprep.subr.mxu0 0.0
        %2529 = vmatpush1.xpose.msra.mxu0 0.0
        %2530 = vmatprep.subr.mxu0 0.0
        %2531 = vmatpush1.xpose.msra.mxu0 0.0
        %2532 = vmatprep.subr.mxu0 0.0
        %2533 = vmatpush1.xpose.msra.mxu0 0.0
        %2534 = vmatprep.subr.mxu0 0.0
        %2535 = vmatpush1.xpose.msra.mxu0 0.0
        %2536 = vmatprep.subr.mxu0 0.0
        %2537 = vmatpush1.xpose.msra.mxu0 0.0
        %2538 = vmatprep.subr.mxu0 0.0
        %2539 = vmatpush1.xpose.msra.mxu0 0.0
        %2540 = vmatprep.subr.mxu0 0.0
        %2541 = vmatpush1.xpose.msra.mxu0 0.0
        %2542 = vmatprep.subr.mxu0 0.0
        %2543 = vmatpush1.xpose.msra.mxu0 0.0
        %2544 = vmatprep.subr.mxu0 0.0
        %2545 = vmatpush1.xpose.msra.mxu0 0.0
        %2546 = vmatprep.subr.mxu0 0.0
        %2547 = vmatpush1.xpose.msra.mxu0 0.0
        %2548 = vmatprep.subr.mxu0 0.0
        %2549 = vmatpush1.xpose.msra.mxu0 0.0
        %2550 = vmatprep.subr.mxu0 0.0
        %2551 = vmatpush1.xpose.msra.mxu0 0.0
        %2552 = vmatprep.subr.mxu0 0.0
        %2553 = vmatpush1.xpose.msra.mxu0 0.0
        %2554 = vmatprep.subr.mxu0 0.0
        %2555 = vmatpush1.xpose.msra.mxu0 0.0
        %2556 = vmatprep.subr.mxu0 0.0
        %2557 = vmatpush1.xpose.msra.mxu0 0.0
        %2558 = vmatprep.subr.mxu0 0.0
        %2559 = vmatpush1.xpose.msra.mxu0 0.0
        %2560 = vmatprep.subr.mxu0 0.0
        %2561 = vmatpush1.xpose.msra.mxu0 0.0
        %2562 = vmatprep.subr.mxu0 0.0
        %2563 = vmatpush1.xpose.msra.mxu0 0.0
        %2564 = vmatprep.subr.mxu0 0.0
        %2565 = vmatpush1.xpose.msra.mxu0 0.0
        %2566 = vmatprep.subr.mxu0 0.0
        %2567 = vmatpush1.xpose.msra.mxu0 0.0
        %2568 = vmatprep.subr.mxu0 0.0
        %2569 = vmatpush1.xpose.msra.mxu0 0.0
        %2570 = vmatprep.mubr.f32.mxu0 0.0
        %2571 = vmatmul.mubr.f32.gmra.mrb[0].mxu0 %v2498
        %v2572 = vpop.f32.mrb[0].mxu0
        %v2573 = vadd.f32 0.0, %v2572
        %v2574 = vpop.f32.mrb[0].mxu0
        %2575 = vdwg.mxu0
        %v2576 = vmul.f32 %v2573, 0.35355338
        %v2577 = vadd.f32 %v2576, %v417
        %v2578 = vsel %vm2119, %v2577, -inf
        %2579 = vmax.xlane.f32.xlu0 %v2578
        %v2580 = vpop.xlane.xlu0 %2579
        %v2581 = vsub.f32 %v2577, %v2580
        %v2582 = vmul.f32 %v2581, 1.442695
        %v2583 = vpow.pop %v2582
        %v2584 = vsel %vm2119, %v2583, 0.0
        %2585 = vadd.xlane.f32.xlu0 %v2584
        %v2586 = vpop.xlane.xlu0 %2585
        %v2587 = vrcp.pop %v2586
        %v2588 = vmul.f32 %v2583, %v2587
        %v2589 = vsel %vm416, %v2588, 0.0
        %v2591 = vsel %vm2119, %v2589, 0
        %2593 = vmatprep.subr.mxu0 0.0
        %2594 = vmatpush1.msra.mxu0 %v2489
        %2595 = vmatprep.subr.mxu0 0.0
        %2596 = vmatpush1.msra.mxu0 %v2494
        %2597 = vmatprep.subr.mxu0 0.0
        %2598 = vmatpush1.msra.mxu0 0.0
        %2599 = vmatprep.subr.mxu0 0.0
        %2600 = vmatpush1.msra.mxu0 0.0
        %2601 = vmatprep.subr.mxu0 0.0
        %2602 = vmatpush1.msra.mxu0 0.0
        %2603 = vmatprep.subr.mxu0 0.0
        %2604 = vmatpush1.msra.mxu0 0.0
        %2605 = vmatprep.subr.mxu0 0.0
        %2606 = vmatpush1.msra.mxu0 0.0
        %2607 = vmatprep.subr.mxu0 0.0
        %2608 = vmatpush1.msra.mxu0 0.0
        %2609 = vmatprep.subr.mxu0 0.0
        %2610 = vmatpush1.msra.mxu0 0.0
        %2611 = vmatprep.subr.mxu0 0.0
        %2612 = vmatpush1.msra.mxu0 0.0
        %2613 = vmatprep.subr.mxu0 0.0
        %2614 = vmatpush1.msra.mxu0 0.0
        %2615 = vmatprep.subr.mxu0 0.0
        %2616 = vmatpush1.msra.mxu0 0.0
        %2617 = vmatprep.subr.mxu0 0.0
        %2618 = vmatpush1.msra.mxu0 0.0
        %2619 = vmatprep.subr.mxu0 0.0
        %2620 = vmatpush1.msra.mxu0 0.0
        %2621 = vmatprep.subr.mxu0 0.0
        %2622 = vmatpush1.msra.mxu0 0.0
        %2623 = vmatprep.subr.mxu0 0.0
        %2624 = vmatpush1.msra.mxu0 0.0
        %2625 = vmatprep.subr.mxu0 0.0
        %2626 = vmatpush1.msra.mxu0 0.0
        %2627 = vmatprep.subr.mxu0 0.0
        %2628 = vmatpush1.msra.mxu0 0.0
        %2629 = vmatprep.subr.mxu0 0.0
        %2630 = vmatpush1.msra.mxu0 0.0
        %2631 = vmatprep.subr.mxu0 0.0
        %2632 = vmatpush1.msra.mxu0 0.0
        %2633 = vmatprep.subr.mxu0 0.0
        %2634 = vmatpush1.msra.mxu0 0.0
        %2635 = vmatprep.subr.mxu0 0.0
        %2636 = vmatpush1.msra.mxu0 0.0
        %2637 = vmatprep.subr.mxu0 0.0
        %2638 = vmatpush1.msra.mxu0 0.0
        %2639 = vmatprep.subr.mxu0 0.0
        %2640 = vmatpush1.msra.mxu0 0.0
        %2641 = vmatprep.subr.mxu0 0.0
        %2642 = vmatpush1.msra.mxu0 0.0
        %2643 = vmatprep.subr.mxu0 0.0
        %2644 = vmatpush1.msra.mxu0 0.0
        %2645 = vmatprep.subr.mxu0 0.0
        %2646 = vmatpush1.msra.mxu0 0.0
        %2647 = vmatprep.subr.mxu0 0.0
        %2648 = vmatpush1.msra.mxu0 0.0
        %2649 = vmatprep.subr.mxu0 0.0
        %2650 = vmatpush1.msra.mxu0 0.0
        %2651 = vmatprep.subr.mxu0 0.0
        %2652 = vmatpush1.msra.mxu0 0.0
        %2653 = vmatprep.subr.mxu0 0.0
        %2654 = vmatpush1.msra.mxu0 0.0
        %2655 = vmatprep.subr.mxu0 0.0
        %2656 = vmatpush1.msra.mxu0 0.0
        %2657 = vmatprep.mubr.f32.mxu0 0.0
        %2658 = vmatmul.mubr.f32.gmra.mrb[0].mxu0 %v2591
        %v2659 = vpop.f32.mrb[0].mxu0
        %v2660 = vadd.f32 0.0, %v2659
        %v2661 = vpop.f32.mrb[0].mxu0
        %2662 = vdwg.mxu0
        %s2663 = scalar_lea.vmem %s4, 416
        %v2664 = vld [vmem:[%s2663] sm:$0xff]
        %v2665 = vld [vmem:[%s2663 + $0x8] sm:$0xff]
        %v2666 = vld [vmem:[%s2663 + $0x10] sm:$0xff]
        %v2667 = vld [vmem:[%s2663 + $0x18] sm:$0xff]
        %s2668 = scalar_lea.vmem %s5, 13
        %v2669 = vld [vmem:[%s2668] sm:$0x1]
        %v2671 = vlaneseq
        %v2672 = vshrl.u32 %v2671, 7
        %v2673 = vsub.s32 0, %v2672
        %v2674 = vrot.slane %v2669, %v2673
        %2676 = vmatprep.subr.mxu0 0.0
        %2677 = vmatpush1.msra.mxu0 %v2664
        %2678 = vmatprep.subr.mxu0 0.0
        %2679 = vmatpush1.msra.mxu0 %v2665
        %2680 = vmatprep.subr.mxu0 0.0
        %2681 = vmatpush1.msra.mxu0 %v2666
        %2682 = vmatprep.subr.mxu0 0.0
        %2683 = vmatpush1.msra.mxu0 %v2667
        %2684 = vmatprep.subr.mxu0 0.0
        %2685 = vmatpush1.msra.mxu0 0.0
        %2686 = vmatprep.subr.mxu0 0.0
        %2687 = vmatpush1.msra.mxu0 0.0
        %2688 = vmatprep.subr.mxu0 0.0
        %2689 = vmatpush1.msra.mxu0 0.0
        %2690 = vmatprep.subr.mxu0 0.0
        %2691 = vmatpush1.msra.mxu0 0.0
        %2692 = vmatprep.subr.mxu0 0.0
        %2693 = vmatpush1.msra.mxu0 0.0
        %2694 = vmatprep.subr.mxu0 0.0
        %2695 = vmatpush1.msra.mxu0 0.0
        %2696 = vmatprep.subr.mxu0 0.0
        %2697 = vmatpush1.msra.mxu0 0.0
        %2698 = vmatprep.subr.mxu0 0.0
        %2699 = vmatpush1.msra.mxu0 0.0
        %2700 = vmatprep.subr.mxu0 0.0
        %2701 = vmatpush1.msra.mxu0 0.0
        %2702 = vmatprep.subr.mxu0 0.0
        %2703 = vmatpush1.msra.mxu0 0.0
        %2704 = vmatprep.subr.mxu0 0.0
        %2705 = vmatpush1.msra.mxu0 0.0
        %2706 = vmatprep.subr.mxu0 0.0
        %2707 = vmatpush1.msra.mxu0 0.0
        %2708 = vmatprep.subr.mxu0 0.0
        %2709 = vmatpush1.msra.mxu0 0.0
        %2710 = vmatprep.subr.mxu0 0.0
        %2711 = vmatpush1.msra.mxu0 0.0
        %2712 = vmatprep.subr.mxu0 0.0
        %2713 = vmatpush1.msra.mxu0 0.0
        %2714 = vmatprep.subr.mxu0 0.0
        %2715 = vmatpush1.msra.mxu0 0.0
        %2716 = vmatprep.subr.mxu0 0.0
        %2717 = vmatpush1.msra.mxu0 0.0
        %2718 = vmatprep.subr.mxu0 0.0
        %2719 = vmatpush1.msra.mxu0 0.0
        %2720 = vmatprep.subr.mxu0 0.0
        %2721 = vmatpush1.msra.mxu0 0.0
        %2722 = vmatprep.subr.mxu0 0.0
        %2723 = vmatpush1.msra.mxu0 0.0
        %2724 = vmatprep.subr.mxu0 0.0
        %2725 = vmatpush1.msra.mxu0 0.0
        %2726 = vmatprep.subr.mxu0 0.0
        %2727 = vmatpush1.msra.mxu0 0.0
        %2728 = vmatprep.subr.mxu0 0.0
        %2729 = vmatpush1.msra.mxu0 0.0
        %2730 = vmatprep.subr.mxu0 0.0
        %2731 = vmatpush1.msra.mxu0 0.0
        %2732 = vmatprep.subr.mxu0 0.0
        %2733 = vmatpush1.msra.mxu0 0.0
        %2734 = vmatprep.subr.mxu0 0.0
        %2735 = vmatpush1.msra.mxu0 0.0
        %2736 = vmatprep.subr.mxu0 0.0
        %2737 = vmatpush1.msra.mxu0 0.0
        %2738 = vmatprep.subr.mxu0 0.0
        %2739 = vmatpush1.msra.mxu0 0.0
        %2740 = vmatprep.mubr.f32.mxu0 0.0
        %2741 = vmatmul.mubr.f32.gmra.mrb[0].mxu0 %v2243
        %v2742 = vpop.f32.mrb[0].mxu0
        %v2743 = vadd.f32 %v2674, %v2742
        %v2744 = vpop.f32.mrb[0].mxu0
        %2745 = vdwg.mxu0
        %s2746 = scalar_lea.vmem %s4, 544
        %v2747 = vld [vmem:[%s2746] sm:$0xff]
        %v2748 = vld [vmem:[%s2746 + $0x8] sm:$0xff]
        %v2749 = vld [vmem:[%s2746 + $0x10] sm:$0xff]
        %v2750 = vld [vmem:[%s2746 + $0x18] sm:$0xff]
        %s2751 = scalar_lea.vmem %s5, 17
        %v2752 = vld [vmem:[%s2751] sm:$0x1]
        %v2754 = vlaneseq
        %v2755 = vshrl.u32 %v2754, 7
        %v2756 = vsub.s32 0, %v2755
        %v2757 = vrot.slane %v2752, %v2756
        %2759 = vmatprep.subr.mxu0 0.0
        %2760 = vmatpush1.msra.mxu0 %v2747
        %2761 = vmatprep.subr.mxu0 0.0
        %2762 = vmatpush1.msra.mxu0 %v2748
        %2763 = vmatprep.subr.mxu0 0.0
        %2764 = vmatpush1.msra.mxu0 %v2749
        %2765 = vmatprep.subr.mxu0 0.0
        %2766 = vmatpush1.msra.mxu0 %v2750
        %2767 = vmatprep.subr.mxu0 0.0
        %2768 = vmatpush1.msra.mxu0 0.0
        %2769 = vmatprep.subr.mxu0 0.0
        %2770 = vmatpush1.msra.mxu0 0.0
        %2771 = vmatprep.subr.mxu0 0.0
        %2772 = vmatpush1.msra.mxu0 0.0
        %2773 = vmatprep.subr.mxu0 0.0
        %2774 = vmatpush1.msra.mxu0 0.0
        %2775 = vmatprep.subr.mxu0 0.0
        %2776 = vmatpush1.msra.mxu0 0.0
        %2777 = vmatprep.subr.mxu0 0.0
        %2778 = vmatpush1.msra.mxu0 0.0
        %2779 = vmatprep.subr.mxu0 0.0
        %2780 = vmatpush1.msra.mxu0 0.0
        %2781 = vmatprep.subr.mxu0 0.0
        %2782 = vmatpush1.msra.mxu0 0.0
        %2783 = vmatprep.subr.mxu0 0.0
        %2784 = vmatpush1.msra.mxu0 0.0
        %2785 = vmatprep.subr.mxu0 0.0
        %2786 = vmatpush1.msra.mxu0 0.0
        %2787 = vmatprep.subr.mxu0 0.0
        %2788 = vmatpush1.msra.mxu0 0.0
        %2789 = vmatprep.subr.mxu0 0.0
        %2790 = vmatpush1.msra.mxu0 0.0
        %2791 = vmatprep.subr.mxu0 0.0
        %2792 = vmatpush1.msra.mxu0 0.0
        %2793 = vmatprep.subr.mxu0 0.0
        %2794 = vmatpush1.msra.mxu0 0.0
        %2795 = vmatprep.subr.mxu0 0.0
        %2796 = vmatpush1.msra.mxu0 0.0
        %2797 = vmatprep.subr.mxu0 0.0
        %2798 = vmatpush1.msra.mxu0 0.0
        %2799 = vmatprep.subr.mxu0 0.0
        %2800 = vmatpush1.msra.mxu0 0.0
        %2801 = vmatprep.subr.mxu0 0.0
        %2802 = vmatpush1.msra.mxu0 0.0
        %2803 = vmatprep.subr.mxu0 0.0
        %2804 = vmatpush1.msra.mxu0 0.0
        %2805 = vmatprep.subr.mxu0 0.0
        %2806 = vmatpush1.msra.mxu0 0.0
        %2807 = vmatprep.subr.mxu0 0.0
        %2808 = vmatpush1.msra.mxu0 0.0
        %2809 = vmatprep.subr.mxu0 0.0
        %2810 = vmatpush1.msra.mxu0 0.0
        %2811 = vmatprep.subr.mxu0 0.0
        %2812 = vmatpush1.msra.mxu0 0.0
        %2813 = vmatprep.subr.mxu0 0.0
        %2814 = vmatpush1.msra.mxu0 0.0
        %2815 = vmatprep.subr.mxu0 0.0
        %2816 = vmatpush1.msra.mxu0 0.0
        %2817 = vmatprep.subr.mxu0 0.0
        %2818 = vmatpush1.msra.mxu0 0.0
        %2819 = vmatprep.subr.mxu0 0.0
        %2820 = vmatpush1.msra.mxu0 0.0
        %2821 = vmatprep.subr.mxu0 0.0
        %2822 = vmatpush1.msra.mxu0 0.0
        %2823 = vmatprep.mubr.f32.mxu0 0.0
        %2824 = vmatmul.mubr.f32.gmra.mrb[0].mxu0 %v2329
        %v2825 = vpop.f32.mrb[0].mxu0
        %v2826 = vadd.f32 %v2757, %v2825
        %v2827 = vpop.f32.mrb[0].mxu0
        %2828 = vmatprep.mubr.f32.mxu0 0.0
        %2829 = vmatmul.mubr.f32.gmra.mrb[0].mxu0 %v2332
        %v2830 = vpop.f32.mrb[0].mxu0
        %v2831 = vadd.f32 %v2757, %v2830
        %v2832 = vpop.f32.mrb[0].mxu0
        %2833 = vdwg.mxu0
        %s2834 = scalar_lea.vmem %s4, 672
        %v2835 = vld [vmem:[%s2834] sm:$0xff]
        %v2836 = vld [vmem:[%s2834 + $0x8] sm:$0xff]
        %v2837 = vld [vmem:[%s2834 + $0x10] sm:$0xff]
        %v2838 = vld [vmem:[%s2834 + $0x18] sm:$0xff]
        %s2839 = scalar_lea.vmem %s5, 21
        %v2840 = vld [vmem:[%s2839] sm:$0x1]
        %v2842 = vlaneseq
        %v2843 = vshrl.u32 %v2842, 7
        %v2844 = vsub.s32 0, %v2843
        %v2845 = vrot.slane %v2840, %v2844
        %2847 = vmatprep.subr.mxu0 0.0
        %2848 = vmatpush1.msra.mxu0 %v2835
        %2849 = vmatprep.subr.mxu0 0.0
        %2850 = vmatpush1.msra.mxu0 %v2836
        %2851 = vmatprep.subr.mxu0 0.0
        %2852 = vmatpush1.msra.mxu0 %v2837
        %2853 = vmatprep.subr.mxu0 0.0
        %2854 = vmatpush1.msra.mxu0 %v2838
        %2855 = vmatprep.subr.mxu0 0.0
        %2856 = vmatpush1.msra.mxu0 0.0
        %2857 = vmatprep.subr.mxu0 0.0
        %2858 = vmatpush1.msra.mxu0 0.0
        %2859 = vmatprep.subr.mxu0 0.0
        %2860 = vmatpush1.msra.mxu0 0.0
        %2861 = vmatprep.subr.mxu0 0.0
        %2862 = vmatpush1.msra.mxu0 0.0
        %2863 = vmatprep.subr.mxu0 0.0
        %2864 = vmatpush1.msra.mxu0 0.0
        %2865 = vmatprep.subr.mxu0 0.0
        %2866 = vmatpush1.msra.mxu0 0.0
        %2867 = vmatprep.subr.mxu0 0.0
        %2868 = vmatpush1.msra.mxu0 0.0
        %2869 = vmatprep.subr.mxu0 0.0
        %2870 = vmatpush1.msra.mxu0 0.0
        %2871 = vmatprep.subr.mxu0 0.0
        %2872 = vmatpush1.msra.mxu0 0.0
        %2873 = vmatprep.subr.mxu0 0.0
        %2874 = vmatpush1.msra.mxu0 0.0
        %2875 = vmatprep.subr.mxu0 0.0
        %2876 = vmatpush1.msra.mxu0 0.0
        %2877 = vmatprep.subr.mxu0 0.0
        %2878 = vmatpush1.msra.mxu0 0.0
        %2879 = vmatprep.subr.mxu0 0.0
        %2880 = vmatpush1.msra.mxu0 0.0
        %2881 = vmatprep.subr.mxu0 0.0
        %2882 = vmatpush1.msra.mxu0 0.0
        %2883 = vmatprep.subr.mxu0 0.0
        %2884 = vmatpush1.msra.mxu0 0.0
        %2885 = vmatprep.subr.mxu0 0.0
        %2886 = vmatpush1.msra.mxu0 0.0
        %2887 = vmatprep.subr.mxu0 0.0
        %2888 = vmatpush1.msra.mxu0 0.0
        %2889 = vmatprep.subr.mxu0 0.0
        %2890 = vmatpush1.msra.mxu0 0.0
        %2891 = vmatprep.subr.mxu0 0.0
        %2892 = vmatpush1.msra.mxu0 0.0
        %2893 = vmatprep.subr.mxu0 0.0
        %2894 = vmatpush1.msra.mxu0 0.0
        %2895 = vmatprep.subr.mxu0 0.0
        %2896 = vmatpush1.msra.mxu0 0.0
        %2897 = vmatprep.subr.mxu0 0.0
        %2898 = vmatpush1.msra.mxu0 0.0
        %2899 = vmatprep.subr.mxu0 0.0
        %2900 = vmatpush1.msra.mxu0 0.0
        %2901 = vmatprep.subr.mxu0 0.0
        %2902 = vmatpush1.msra.mxu0 0.0
        %2903 = vmatprep.subr.mxu0 0.0
        %2904 = vmatpush1.msra.mxu0 0.0
        %2905 = vmatprep.subr.mxu0 0.0
        %2906 = vmatpush1.msra.mxu0 0.0
        %2907 = vmatprep.subr.mxu0 0.0
        %2908 = vmatpush1.msra.mxu0 0.0
        %2909 = vmatprep.subr.mxu0 0.0
        %2910 = vmatpush1.msra.mxu0 0.0
        %2911 = vmatprep.mubr.f32.mxu0 0.0
        %2912 = vmatmul.mubr.f32.gmra.mrb[0].mxu0 %v2329
        %v2913 = vpop.f32.mrb[0].mxu0
        %v2914 = vadd.f32 %v2845, %v2913
        %v2915 = vpop.f32.mrb[0].mxu0
        %2916 = vmatprep.mubr.f32.mxu0 0.0
        %2917 = vmatmul.mubr.f32.gmra.mrb[0].mxu0 %v2332
        %v2918 = vpop.f32.mrb[0].mxu0
        %v2919 = vadd.f32 %v2845, %v2918
        %v2920 = vpop.f32.mrb[0].mxu0
        %2921 = vdwg.mxu0
        %v2923 = vsel %vm706, %v2743, 0
        %v2926 = vsel %vm706, %v2826, 0
        %v2929 = vsel %vm706, %v2831, 0
        %2931 = vmatprep.subr.mxu0 0.0
        %2932 = vmatpush1.xpose.msra.mxu0 %v2926
        %2933 = vmatprep.subr.mxu0 0.0
        %2934 = vmatpush1.xpose.msra.mxu0 %v2929
        %2935 = vmatprep.subr.mxu0 0.0
        %2936 = vmatpush1.xpose.msra.mxu0 0.0
        %2937 = vmatprep.subr.mxu0 0.0
        %2938 = vmatpush1.xpose.msra.mxu0 0.0
        %2939 = vmatprep.subr.mxu0 0.0
        %2940 = vmatpush1.xpose.msra.mxu0 0.0
        %2941 = vmatprep.subr.mxu0 0.0
        %2942 = vmatpush1.xpose.msra.mxu0 0.0
        %2943 = vmatprep.subr.mxu0 0.0
        %2944 = vmatpush1.xpose.msra.mxu0 0.0
        %2945 = vmatprep.subr.mxu0 0.0
        %2946 = vmatpush1.xpose.msra.mxu0 0.0
        %2947 = vmatprep.subr.mxu0 0.0
        %2948 = vmatpush1.xpose.msra.mxu0 0.0
        %2949 = vmatprep.subr.mxu0 0.0
        %2950 = vmatpush1.xpose.msra.mxu0 0.0
        %2951 = vmatprep.subr.mxu0 0.0
        %2952 = vmatpush1.xpose.msra.mxu0 0.0
        %2953 = vmatprep.subr.mxu0 0.0
        %2954 = vmatpush1.xpose.msra.mxu0 0.0
        %2955 = vmatprep.subr.mxu0 0.0
        %2956 = vmatpush1.xpose.msra.mxu0 0.0
        %2957 = vmatprep.subr.mxu0 0.0
        %2958 = vmatpush1.xpose.msra.mxu0 0.0
        %2959 = vmatprep.subr.mxu0 0.0
        %2960 = vmatpush1.xpose.msra.mxu0 0.0
        %2961 = vmatprep.subr.mxu0 0.0
        %2962 = vmatpush1.xpose.msra.mxu0 0.0
        %2963 = vmatprep.subr.mxu0 0.0
        %2964 = vmatpush1.xpose.msra.mxu0 0.0
        %2965 = vmatprep.subr.mxu0 0.0
        %2966 = vmatpush1.xpose.msra.mxu0 0.0
        %2967 = vmatprep.subr.mxu0 0.0
        %2968 = vmatpush1.xpose.msra.mxu0 0.0
        %2969 = vmatprep.subr.mxu0 0.0
        %2970 = vmatpush1.xpose.msra.mxu0 0.0
        %2971 = vmatprep.subr.mxu0 0.0
        %2972 = vmatpush1.xpose.msra.mxu0 0.0
        %2973 = vmatprep.subr.mxu0 0.0
        %2974 = vmatpush1.xpose.msra.mxu0 0.0
        %2975 = vmatprep.subr.mxu0 0.0
        %2976 = vmatpush1.xpose.msra.mxu0 0.0
        %2977 = vmatprep.subr.mxu0 0.0
        %2978 = vmatpush1.xpose.msra.mxu0 0.0
        %2979 = vmatprep.subr.mxu0 0.0
        %2980 = vmatpush1.xpose.msra.mxu0 0.0
        %2981 = vmatprep.subr.mxu0 0.0
        %2982 = vmatpush1.xpose.msra.mxu0 0.0
        %2983 = vmatprep.subr.mxu0 0.0
        %2984 = vmatpush1.xpose.msra.mxu0 0.0
        %2985 = vmatprep.subr.mxu0 0.0
        %2986 = vmatpush1.xpose.msra.mxu0 0.0
        %2987 = vmatprep.subr.mxu0 0.0
        %2988 = vmatpush1.xpose.msra.mxu0 0.0
        %2989 = vmatprep.subr.mxu0 0.0
        %2990 = vmatpush1.xpose.msra.mxu0 0.0
        %2991 = vmatprep.subr.mxu0 0.0
        %2992 = vmatpush1.xpose.msra.mxu0 0.0
        %2993 = vmatprep.subr.mxu0 0.0
        %2994 = vmatpush1.xpose.msra.mxu0 0.0
        %2995 = vmatprep.mubr.f32.mxu0 0.0
        %2996 = vmatmul.mubr.f32.gmra.mrb[0].mxu0 %v2923
        %v2997 = vpop.f32.mrb[0].mxu0
        %v2998 = vadd.f32 0.0, %v2997
        %v2999 = vpop.f32.mrb[0].mxu0
        %3000 = vdwg.mxu0
        %v3001 = vmul.f32 %v2998, 0.35355338
        %v3002 = vadd.f32 %v3001, %v417
        %v3003 = vsel %vm2119, %v3002, -inf
        %3004 = vmax.xlane.f32.xlu0 %v3003
        %v3005 = vpop.xlane.xlu0 %3004
        %v3006 = vsub.f32 %v3002, %v3005
        %v3007 = vmul.f32 %v3006, 1.442695
        %v3008 = vpow.pop %v3007
        %v3009 = vsel %vm2119, %v3008, 0.0
        %3010 = vadd.xlane.f32.xlu0 %v3009
        %v3011 = vpop.xlane.xlu0 %3010
        %v3012 = vrcp.pop %v3011
        %v3013 = vmul.f32 %v3008, %v3012
        %v3014 = vsel %vm416, %v3013, 0.0
        %v3016 = vsel %vm2119, %v3014, 0
        %3018 = vmatprep.subr.mxu0 0.0
        %3019 = vmatpush1.msra.mxu0 %v2914
        %3020 = vmatprep.subr.mxu0 0.0
        %3021 = vmatpush1.msra.mxu0 %v2919
        %3022 = vmatprep.subr.mxu0 0.0
        %3023 = vmatpush1.msra.mxu0 0.0
        %3024 = vmatprep.subr.mxu0 0.0
        %3025 = vmatpush1.msra.mxu0 0.0
        %3026 = vmatprep.subr.mxu0 0.0
        %3027 = vmatpush1.msra.mxu0 0.0
        %3028 = vmatprep.subr.mxu0 0.0
        %3029 = vmatpush1.msra.mxu0 0.0
        %3030 = vmatprep.subr.mxu0 0.0
        %3031 = vmatpush1.msra.mxu0 0.0
        %3032 = vmatprep.subr.mxu0 0.0
        %3033 = vmatpush1.msra.mxu0 0.0
        %3034 = vmatprep.subr.mxu0 0.0
        %3035 = vmatpush1.msra.mxu0 0.0
        %3036 = vmatprep.subr.mxu0 0.0
        %3037 = vmatpush1.msra.mxu0 0.0
        %3038 = vmatprep.subr.mxu0 0.0
        %3039 = vmatpush1.msra.mxu0 0.0
        %3040 = vmatprep.subr.mxu0 0.0
        %3041 = vmatpush1.msra.mxu0 0.0
        %3042 = vmatprep.subr.mxu0 0.0
        %3043 = vmatpush1.msra.mxu0 0.0
        %3044 = vmatprep.subr.mxu0 0.0
        %3045 = vmatpush1.msra.mxu0 0.0
        %3046 = vmatprep.subr.mxu0 0.0
        %3047 = vmatpush1.msra.mxu0 0.0
        %3048 = vmatprep.subr.mxu0 0.0
        %3049 = vmatpush1.msra.mxu0 0.0
        %3050 = vmatprep.subr.mxu0 0.0
        %3051 = vmatpush1.msra.mxu0 0.0
        %3052 = vmatprep.subr.mxu0 0.0
        %3053 = vmatpush1.msra.mxu0 0.0
        %3054 = vmatprep.subr.mxu0 0.0
        %3055 = vmatpush1.msra.mxu0 0.0
        %3056 = vmatprep.subr.mxu0 0.0
        %3057 = vmatpush1.msra.mxu0 0.0
        %3058 = vmatprep.subr.mxu0 0.0
        %3059 = vmatpush1.msra.mxu0 0.0
        %3060 = vmatprep.subr.mxu0 0.0
        %3061 = vmatpush1.msra.mxu0 0.0
        %3062 = vmatprep.subr.mxu0 0.0
        %3063 = vmatpush1.msra.mxu0 0.0
        %3064 = vmatprep.subr.mxu0 0.0
        %3065 = vmatpush1.msra.mxu0 0.0
        %3066 = vmatprep.subr.mxu0 0.0
        %3067 = vmatpush1.msra.mxu0 0.0
        %3068 = vmatprep.subr.mxu0 0.0
        %3069 = vmatpush1.msra.mxu0 0.0
        %3070 = vmatprep.subr.mxu0 0.0
        %3071 = vmatpush1.msra.mxu0 0.0
        %3072 = vmatprep.subr.mxu0 0.0
        %3073 = vmatpush1.msra.mxu0 0.0
        %3074 = vmatprep.subr.mxu0 0.0
        %3075 = vmatpush1.msra.mxu0 0.0
        %3076 = vmatprep.subr.mxu0 0.0
        %3077 = vmatpush1.msra.mxu0 0.0
        %3078 = vmatprep.subr.mxu0 0.0
        %3079 = vmatpush1.msra.mxu0 0.0
        %3080 = vmatprep.subr.mxu0 0.0
        %3081 = vmatpush1.msra.mxu0 0.0
        %3082 = vmatprep.mubr.f32.mxu0 0.0
        %3083 = vmatmul.mubr.f32.gmra.mrb[0].mxu0 %v3016
        %v3084 = vpop.f32.mrb[0].mxu0
        %v3085 = vadd.f32 0.0, %v3084
        %v3086 = vpop.f32.mrb[0].mxu0
        %3087 = vdwg.mxu0
        %s3088 = scalar_lea.vmem %s4, 448
        %v3089 = vld [vmem:[%s3088] sm:$0xff]
        %v3090 = vld [vmem:[%s3088 + $0x8] sm:$0xff]
        %v3091 = vld [vmem:[%s3088 + $0x10] sm:$0xff]
        %v3092 = vld [vmem:[%s3088 + $0x18] sm:$0xff]
        %s3093 = scalar_lea.vmem %s5, 14
        %v3094 = vld [vmem:[%s3093] sm:$0x1]
        %v3096 = vlaneseq
        %v3097 = vshrl.u32 %v3096, 7
        %v3098 = vsub.s32 0, %v3097
        %v3099 = vrot.slane %v3094, %v3098
        %3101 = vmatprep.subr.mxu0 0.0
        %3102 = vmatpush1.msra.mxu0 %v3089
        %3103 = vmatprep.subr.mxu0 0.0
        %3104 = vmatpush1.msra.mxu0 %v3090
        %3105 = vmatprep.subr.mxu0 0.0
        %3106 = vmatpush1.msra.mxu0 %v3091
        %3107 = vmatprep.subr.mxu0 0.0
        %3108 = vmatpush1.msra.mxu0 %v3092
        %3109 = vmatprep.subr.mxu0 0.0
        %3110 = vmatpush1.msra.mxu0 0.0
        %3111 = vmatprep.subr.mxu0 0.0
        %3112 = vmatpush1.msra.mxu0 0.0
        %3113 = vmatprep.subr.mxu0 0.0
        %3114 = vmatpush1.msra.mxu0 0.0
        %3115 = vmatprep.subr.mxu0 0.0
        %3116 = vmatpush1.msra.mxu0 0.0
        %3117 = vmatprep.subr.mxu0 0.0
        %3118 = vmatpush1.msra.mxu0 0.0
        %3119 = vmatprep.subr.mxu0 0.0
        %3120 = vmatpush1.msra.mxu0 0.0
        %3121 = vmatprep.subr.mxu0 0.0
        %3122 = vmatpush1.msra.mxu0 0.0
        %3123 = vmatprep.subr.mxu0 0.0
        %3124 = vmatpush1.msra.mxu0 0.0
        %3125 = vmatprep.subr.mxu0 0.0
        %3126 = vmatpush1.msra.mxu0 0.0
        %3127 = vmatprep.subr.mxu0 0.0
        %3128 = vmatpush1.msra.mxu0 0.0
        %3129 = vmatprep.subr.mxu0 0.0
        %3130 = vmatpush1.msra.mxu0 0.0
        %3131 = vmatprep.subr.mxu0 0.0
        %3132 = vmatpush1.msra.mxu0 0.0
        %3133 = vmatprep.subr.mxu0 0.0
        %3134 = vmatpush1.msra.mxu0 0.0
        %3135 = vmatprep.subr.mxu0 0.0
        %3136 = vmatpush1.msra.mxu0 0.0
        %3137 = vmatprep.subr.mxu0 0.0
        %3138 = vmatpush1.msra.mxu0 0.0
        %3139 = vmatprep.subr.mxu0 0.0
        %3140 = vmatpush1.msra.mxu0 0.0
        %3141 = vmatprep.subr.mxu0 0.0
        %3142 = vmatpush1.msra.mxu0 0.0
        %3143 = vmatprep.subr.mxu0 0.0
        %3144 = vmatpush1.msra.mxu0 0.0
        %3145 = vmatprep.subr.mxu0 0.0
        %3146 = vmatpush1.msra.mxu0 0.0
        %3147 = vmatprep.subr.mxu0 0.0
        %3148 = vmatpush1.msra.mxu0 0.0
        %3149 = vmatprep.subr.mxu0 0.0
        %3150 = vmatpush1.msra.mxu0 0.0
        %3151 = vmatprep.subr.mxu0 0.0
        %3152 = vmatpush1.msra.mxu0 0.0
        %3153 = vmatprep.subr.mxu0 0.0
        %3154 = vmatpush1.msra.mxu0 0.0
        %3155 = vmatprep.subr.mxu0 0.0
        %3156 = vmatpush1.msra.mxu0 0.0
        %3157 = vmatprep.subr.mxu0 0.0
        %3158 = vmatpush1.msra.mxu0 0.0
        %3159 = vmatprep.subr.mxu0 0.0
        %3160 = vmatpush1.msra.mxu0 0.0
        %3161 = vmatprep.subr.mxu0 0.0
        %3162 = vmatpush1.msra.mxu0 0.0
        %3163 = vmatprep.subr.mxu0 0.0
        %3164 = vmatpush1.msra.mxu0 0.0
        %3165 = vmatprep.mubr.f32.mxu0 0.0
        %3166 = vmatmul.mubr.f32.gmra.mrb[0].mxu0 %v2243
        %v3167 = vpop.f32.mrb[0].mxu0
        %v3168 = vadd.f32 %v3099, %v3167
        %v3169 = vpop.f32.mrb[0].mxu0
        %3170 = vdwg.mxu0
        %s3171 = scalar_lea.vmem %s4, 576
        %v3172 = vld [vmem:[%s3171] sm:$0xff]
        %v3173 = vld [vmem:[%s3171 + $0x8] sm:$0xff]
        %v3174 = vld [vmem:[%s3171 + $0x10] sm:$0xff]
        %v3175 = vld [vmem:[%s3171 + $0x18] sm:$0xff]
        %s3176 = scalar_lea.vmem %s5, 18
        %v3177 = vld [vmem:[%s3176] sm:$0x1]
        %v3179 = vlaneseq
        %v3180 = vshrl.u32 %v3179, 7
        %v3181 = vsub.s32 0, %v3180
        %v3182 = vrot.slane %v3177, %v3181
        %3184 = vmatprep.subr.mxu0 0.0
        %3185 = vmatpush1.msra.mxu0 %v3172
        %3186 = vmatprep.subr.mxu0 0.0
        %3187 = vmatpush1.msra.mxu0 %v3173
        %3188 = vmatprep.subr.mxu0 0.0
        %3189 = vmatpush1.msra.mxu0 %v3174
        %3190 = vmatprep.subr.mxu0 0.0
        %3191 = vmatpush1.msra.mxu0 %v3175
        %3192 = vmatprep.subr.mxu0 0.0
        %3193 = vmatpush1.msra.mxu0 0.0
        %3194 = vmatprep.subr.mxu0 0.0
        %3195 = vmatpush1.msra.mxu0 0.0
        %3196 = vmatprep.subr.mxu0 0.0
        %3197 = vmatpush1.msra.mxu0 0.0
        %3198 = vmatprep.subr.mxu0 0.0
        %3199 = vmatpush1.msra.mxu0 0.0
        %3200 = vmatprep.subr.mxu0 0.0
        %3201 = vmatpush1.msra.mxu0 0.0
        %3202 = vmatprep.subr.mxu0 0.0
        %3203 = vmatpush1.msra.mxu0 0.0
        %3204 = vmatprep.subr.mxu0 0.0
        %3205 = vmatpush1.msra.mxu0 0.0
        %3206 = vmatprep.subr.mxu0 0.0
        %3207 = vmatpush1.msra.mxu0 0.0
        %3208 = vmatprep.subr.mxu0 0.0
        %3209 = vmatpush1.msra.mxu0 0.0
        %3210 = vmatprep.subr.mxu0 0.0
        %3211 = vmatpush1.msra.mxu0 0.0
        %3212 = vmatprep.subr.mxu0 0.0
        %3213 = vmatpush1.msra.mxu0 0.0
        %3214 = vmatprep.subr.mxu0 0.0
        %3215 = vmatpush1.msra.mxu0 0.0
        %3216 = vmatprep.subr.mxu0 0.0
        %3217 = vmatpush1.msra.mxu0 0.0
        %3218 = vmatprep.subr.mxu0 0.0
        %3219 = vmatpush1.msra.mxu0 0.0
        %3220 = vmatprep.subr.mxu0 0.0
        %3221 = vmatpush1.msra.mxu0 0.0
        %3222 = vmatprep.subr.mxu0 0.0
        %3223 = vmatpush1.msra.mxu0 0.0
        %3224 = vmatprep.subr.mxu0 0.0
        %3225 = vmatpush1.msra.mxu0 0.0
        %3226 = vmatprep.subr.mxu0 0.0
        %3227 = vmatpush1.msra.mxu0 0.0
        %3228 = vmatprep.subr.mxu0 0.0
        %3229 = vmatpush1.msra.mxu0 0.0
        %3230 = vmatprep.subr.mxu0 0.0
        %3231 = vmatpush1.msra.mxu0 0.0
        %3232 = vmatprep.subr.mxu0 0.0
        %3233 = vmatpush1.msra.mxu0 0.0
        %3234 = vmatprep.subr.mxu0 0.0
        %3235 = vmatpush1.msra.mxu0 0.0
        %3236 = vmatprep.subr.mxu0 0.0
        %3237 = vmatpush1.msra.mxu0 0.0
        %3238 = vmatprep.subr.mxu0 0.0
        %3239 = vmatpush1.msra.mxu0 0.0
        %3240 = vmatprep.subr.mxu0 0.0
        %3241 = vmatpush1.msra.mxu0 0.0
        %3242 = vmatprep.subr.mxu0 0.0
        %3243 = vmatpush1.msra.mxu0 0.0
        %3244 = vmatprep.subr.mxu0 0.0
        %3245 = vmatpush1.msra.mxu0 0.0
        %3246 = vmatprep.subr.mxu0 0.0
        %3247 = vmatpush1.msra.mxu0 0.0
        %3248 = vmatprep.mubr.f32.mxu0 0.0
        %3249 = vmatmul.mubr.f32.gmra.mrb[0].mxu0 %v2329
        %v3250 = vpop.f32.mrb[0].mxu0
        %v3251 = vadd.f32 %v3182, %v3250
        %v3252 = vpop.f32.mrb[0].mxu0
        %3253 = vmatprep.mubr.f32.mxu0 0.0
        %3254 = vmatmul.mubr.f32.gmra.mrb[0].mxu0 %v2332
        %v3255 = vpop.f32.mrb[0].mxu0
        %v3256 = vadd.f32 %v3182, %v3255
        %v3257 = vpop.f32.mrb[0].mxu0
        %3258 = vdwg.mxu0
        %s3259 = scalar_lea.vmem %s4, 704
        %v3260 = vld [vmem:[%s3259] sm:$0xff]
        %v3261 = vld [vmem:[%s3259 + $0x8] sm:$0xff]
        %v3262 = vld [vmem:[%s3259 + $0x10] sm:$0xff]
        %v3263 = vld [vmem:[%s3259 + $0x18] sm:$0xff]
        %s3264 = scalar_lea.vmem %s5, 22
        %v3265 = vld [vmem:[%s3264] sm:$0x1]
        %v3267 = vlaneseq
        %v3268 = vshrl.u32 %v3267, 7
        %v3269 = vsub.s32 0, %v3268
        %v3270 = vrot.slane %v3265, %v3269
        %3272 = vmatprep.subr.mxu0 0.0
        %3273 = vmatpush1.msra.mxu0 %v3260
        %3274 = vmatprep.subr.mxu0 0.0
        %3275 = vmatpush1.msra.mxu0 %v3261
        %3276 = vmatprep.subr.mxu0 0.0
        %3277 = vmatpush1.msra.mxu0 %v3262
        %3278 = vmatprep.subr.mxu0 0.0
        %3279 = vmatpush1.msra.mxu0 %v3263
        %3280 = vmatprep.subr.mxu0 0.0
        %3281 = vmatpush1.msra.mxu0 0.0
        %3282 = vmatprep.subr.mxu0 0.0
        %3283 = vmatpush1.msra.mxu0 0.0
        %3284 = vmatprep.subr.mxu0 0.0
        %3285 = vmatpush1.msra.mxu0 0.0
        %3286 = vmatprep.subr.mxu0 0.0
        %3287 = vmatpush1.msra.mxu0 0.0
        %3288 = vmatprep.subr.mxu0 0.0
        %3289 = vmatpush1.msra.mxu0 0.0
        %3290 = vmatprep.subr.mxu0 0.0
        %3291 = vmatpush1.msra.mxu0 0.0
        %3292 = vmatprep.subr.mxu0 0.0
        %3293 = vmatpush1.msra.mxu0 0.0
        %3294 = vmatprep.subr.mxu0 0.0
        %3295 = vmatpush1.msra.mxu0 0.0
        %3296 = vmatprep.subr.mxu0 0.0
        %3297 = vmatpush1.msra.mxu0 0.0
        %3298 = vmatprep.subr.mxu0 0.0
        %3299 = vmatpush1.msra.mxu0 0.0
        %3300 = vmatprep.subr.mxu0 0.0
        %3301 = vmatpush1.msra.mxu0 0.0
        %3302 = vmatprep.subr.mxu0 0.0
        %3303 = vmatpush1.msra.mxu0 0.0
        %3304 = vmatprep.subr.mxu0 0.0
        %3305 = vmatpush1.msra.mxu0 0.0
        %3306 = vmatprep.subr.mxu0 0.0
        %3307 = vmatpush1.msra.mxu0 0.0
        %3308 = vmatprep.subr.mxu0 0.0
        %3309 = vmatpush1.msra.mxu0 0.0
        %3310 = vmatprep.subr.mxu0 0.0
        %3311 = vmatpush1.msra.mxu0 0.0
        %3312 = vmatprep.subr.mxu0 0.0
        %3313 = vmatpush1.msra.mxu0 0.0
        %3314 = vmatprep.subr.mxu0 0.0
        %3315 = vmatpush1.msra.mxu0 0.0
        %3316 = vmatprep.subr.mxu0 0.0
        %3317 = vmatpush1.msra.mxu0 0.0
        %3318 = vmatprep.subr.mxu0 0.0
        %3319 = vmatpush1.msra.mxu0 0.0
        %3320 = vmatprep.subr.mxu0 0.0
        %3321 = vmatpush1.msra.mxu0 0.0
        %3322 = vmatprep.subr.mxu0 0.0
        %3323 = vmatpush1.msra.mxu0 0.0
        %3324 = vmatprep.subr.mxu0 0.0
        %3325 = vmatpush1.msra.mxu0 0.0
        %3326 = vmatprep.subr.mxu0 0.0
        %3327 = vmatpush1.msra.mxu0 0.0
        %3328 = vmatprep.subr.mxu0 0.0
        %3329 = vmatpush1.msra.mxu0 0.0
        %3330 = vmatprep.subr.mxu0 0.0
        %3331 = vmatpush1.msra.mxu0 0.0
        %3332 = vmatprep.subr.mxu0 0.0
        %3333 = vmatpush1.msra.mxu0 0.0
        %3334 = vmatprep.subr.mxu0 0.0
        %3335 = vmatpush1.msra.mxu0 0.0
        %3336 = vmatprep.mubr.f32.mxu0 0.0
        %3337 = vmatmul.mubr.f32.gmra.mrb[0].mxu0 %v2329
        %v3338 = vpop.f32.mrb[0].mxu0
        %v3339 = vadd.f32 %v3270, %v3338
        %v3340 = vpop.f32.mrb[0].mxu0
        %3341 = vmatprep.mubr.f32.mxu0 0.0
        %3342 = vmatmul.mubr.f32.gmra.mrb[0].mxu0 %v2332
        %v3343 = vpop.f32.mrb[0].mxu0
        %v3344 = vadd.f32 %v3270, %v3343
        %v3345 = vpop.f32.mrb[0].mxu0
        %3346 = vdwg.mxu0
        %v3348 = vsel %vm706, %v3168, 0
        %v3351 = vsel %vm706, %v3251, 0
        %v3354 = vsel %vm706, %v3256, 0
        %3356 = vmatprep.subr.mxu0 0.0
        %3357 = vmatpush1.xpose.msra.mxu0 %v3351
        %3358 = vmatprep.subr.mxu0 0.0
        %3359 = vmatpush1.xpose.msra.mxu0 %v3354
        %3360 = vmatprep.subr.mxu0 0.0
        %3361 = vmatpush1.xpose.msra.mxu0 0.0
        %3362 = vmatprep.subr.mxu0 0.0
        %3363 = vmatpush1.xpose.msra.mxu0 0.0
        %3364 = vmatprep.subr.mxu0 0.0
        %3365 = vmatpush1.xpose.msra.mxu0 0.0
        %3366 = vmatprep.subr.mxu0 0.0
        %3367 = vmatpush1.xpose.msra.mxu0 0.0
        %3368 = vmatprep.subr.mxu0 0.0
        %3369 = vmatpush1.xpose.msra.mxu0 0.0
        %3370 = vmatprep.subr.mxu0 0.0
        %3371 = vmatpush1.xpose.msra.mxu0 0.0
        %3372 = vmatprep.subr.mxu0 0.0
        %3373 = vmatpush1.xpose.msra.mxu0 0.0
        %3374 = vmatprep.subr.mxu0 0.0
        %3375 = vmatpush1.xpose.msra.mxu0 0.0
        %3376 = vmatprep.subr.mxu0 0.0
        %3377 = vmatpush1.xpose.msra.mxu0 0.0
        %3378 = vmatprep.subr.mxu0 0.0
        %3379 = vmatpush1.xpose.msra.mxu0 0.0
        %3380 = vmatprep.subr.mxu0 0.0
        %3381 = vmatpush1.xpose.msra.mxu0 0.0
        %3382 = vmatprep.subr.mxu0 0.0
        %3383 = vmatpush1.xpose.msra.mxu0 0.0
        %3384 = vmatprep.subr.mxu0 0.0
        %3385 = vmatpush1.xpose.msra.mxu0 0.0
        %3386 = vmatprep.subr.mxu0 0.0
        %3387 = vmatpush1.xpose.msra.mxu0 0.0
        %3388 = vmatprep.subr.mxu0 0.0
        %3389 = vmatpush1.xpose.msra.mxu0 0.0
        %3390 = vmatprep.subr.mxu0 0.0
        %3391 = vmatpush1.xpose.msra.mxu0 0.0
        %3392 = vmatprep.subr.mxu0 0.0
        %3393 = vmatpush1.xpose.msra.mxu0 0.0
        %3394 = vmatprep.subr.mxu0 0.0
        %3395 = vmatpush1.xpose.msra.mxu0 0.0
        %3396 = vmatprep.subr.mxu0 0.0
        %3397 = vmatpush1.xpose.msra.mxu0 0.0
        %3398 = vmatprep.subr.mxu0 0.0
        %3399 = vmatpush1.xpose.msra.mxu0 0.0
        %3400 = vmatprep.subr.mxu0 0.0
        %3401 = vmatpush1.xpose.msra.mxu0 0.0
        %3402 = vmatprep.subr.mxu0 0.0
        %3403 = vmatpush1.xpose.msra.mxu0 0.0
        %3404 = vmatprep.subr.mxu0 0.0
        %3405 = vmatpush1.xpose.msra.mxu0 0.0
        %3406 = vmatprep.subr.mxu0 0.0
        %3407 = vmatpush1.xpose.msra.mxu0 0.0
        %3408 = vmatprep.subr.mxu0 0.0
        %3409 = vmatpush1.xpose.msra.mxu0 0.0
        %3410 = vmatprep.subr.mxu0 0.0
        %3411 = vmatpush1.xpose.msra.mxu0 0.0
        %3412 = vmatprep.subr.mxu0 0.0
        %3413 = vmatpush1.xpose.msra.mxu0 0.0
        %3414 = vmatprep.subr.mxu0 0.0
        %3415 = vmatpush1.xpose.msra.mxu0 0.0
        %3416 = vmatprep.subr.mxu0 0.0
        %3417 = vmatpush1.xpose.msra.mxu0 0.0
        %3418 = vmatprep.subr.mxu0 0.0
        %3419 = vmatpush1.xpose.msra.mxu0 0.0
        %3420 = vmatprep.mubr.f32.mxu0 0.0
        %3421 = vmatmul.mubr.f32.gmra.mrb[0].mxu0 %v3348
        %v3422 = vpop.f32.mrb[0].mxu0
        %v3423 = vadd.f32 0.0, %v3422
        %v3424 = vpop.f32.mrb[0].mxu0
        %3425 = vdwg.mxu0
        %v3426 = vmul.f32 %v3423, 0.35355338
        %v3427 = vadd.f32 %v3426, %v417
        %v3428 = vsel %vm2119, %v3427, -inf
        %3429 = vmax.xlane.f32.xlu0 %v3428
        %v3430 = vpop.xlane.xlu0 %3429
        %v3431 = vsub.f32 %v3427, %v3430
        %v3432 = vmul.f32 %v3431, 1.442695
        %v3433 = vpow.pop %v3432
        %v3434 = vsel %vm2119, %v3433, 0.0
        %3435 = vadd.xlane.f32.xlu0 %v3434
        %v3436 = vpop.xlane.xlu0 %3435
        %v3437 = vrcp.pop %v3436
        %v3438 = vmul.f32 %v3433, %v3437
        %v3439 = vsel %vm416, %v3438, 0.0
        %v3441 = vsel %vm2119, %v3439, 0
        %3443 = vmatprep.subr.mxu0 0.0
        %3444 = vmatpush1.msra.mxu0 %v3339
        %3445 = vmatprep.subr.mxu0 0.0
        %3446 = vmatpush1.msra.mxu0 %v3344
        %3447 = vmatprep.subr.mxu0 0.0
        %3448 = vmatpush1.msra.mxu0 0.0
        %3449 = vmatprep.subr.mxu0 0.0
        %3450 = vmatpush1.msra.mxu0 0.0
        %3451 = vmatprep.subr.mxu0 0.0
        %3452 = vmatpush1.msra.mxu0 0.0
        %3453 = vmatprep.subr.mxu0 0.0
        %3454 = vmatpush1.msra.mxu0 0.0
        %3455 = vmatprep.subr.mxu0 0.0
        %3456 = vmatpush1.msra.mxu0 0.0
        %3457 = vmatprep.subr.mxu0 0.0
        %3458 = vmatpush1.msra.mxu0 0.0
        %3459 = vmatprep.subr.mxu0 0.0
        %3460 = vmatpush1.msra.mxu0 0.0
        %3461 = vmatprep.subr.mxu0 0.0
        %3462 = vmatpush1.msra.mxu0 0.0
        %3463 = vmatprep.subr.mxu0 0.0
        %3464 = vmatpush1.msra.mxu0 0.0
        %3465 = vmatprep.subr.mxu0 0.0
        %3466 = vmatpush1.msra.mxu0 0.0
        %3467 = vmatprep.subr.mxu0 0.0
        %3468 = vmatpush1.msra.mxu0 0.0
        %3469 = vmatprep.subr.mxu0 0.0
        %3470 = vmatpush1.msra.mxu0 0.0
        %3471 = vmatprep.subr.mxu0 0.0
        %3472 = vmatpush1.msra.mxu0 0.0
        %3473 = vmatprep.subr.mxu0 0.0
        %3474 = vmatpush1.msra.mxu0 0.0
        %3475 = vmatprep.subr.mxu0 0.0
        %3476 = vmatpush1.msra.mxu0 0.0
        %3477 = vmatprep.subr.mxu0 0.0
        %3478 = vmatpush1.msra.mxu0 0.0
        %3479 = vmatprep.subr.mxu0 0.0
        %3480 = vmatpush1.msra.mxu0 0.0
        %3481 = vmatprep.subr.mxu0 0.0
        %3482 = vmatpush1.msra.mxu0 0.0
        %3483 = vmatprep.subr.mxu0 0.0
        %3484 = vmatpush1.msra.mxu0 0.0
        %3485 = vmatprep.subr.mxu0 0.0
        %3486 = vmatpush1.msra.mxu0 0.0
        %3487 = vmatprep.subr.mxu0 0.0
        %3488 = vmatpush1.msra.mxu0 0.0
        %3489 = vmatprep.subr.mxu0 0.0
        %3490 = vmatpush1.msra.mxu0 0.0
        %3491 = vmatprep.subr.mxu0 0.0
        %3492 = vmatpush1.msra.mxu0 0.0
        %3493 = vmatprep.subr.mxu0 0.0
        %3494 = vmatpush1.msra.mxu0 0.0
        %3495 = vmatprep.subr.mxu0 0.0
        %3496 = vmatpush1.msra.mxu0 0.0
        %3497 = vmatprep.subr.mxu0 0.0
        %3498 = vmatpush1.msra.mxu0 0.0
        %3499 = vmatprep.subr.mxu0 0.0
        %3500 = vmatpush1.msra.mxu0 0.0
        %3501 = vmatprep.subr.mxu0 0.0
        %3502 = vmatpush1.msra.mxu0 0.0
        %3503 = vmatprep.subr.mxu0 0.0
        %3504 = vmatpush1.msra.mxu0 0.0
        %3505 = vmatprep.subr.mxu0 0.0
        %3506 = vmatpush1.msra.mxu0 0.0
        %3507 = vmatprep.mubr.f32.mxu0 0.0
        %3508 = vmatmul.mubr.f32.gmra.mrb[0].mxu0 %v3441
        %v3509 = vpop.f32.mrb[0].mxu0
        %v3510 = vadd.f32 0.0, %v3509
        %v3511 = vpop.f32.mrb[0].mxu0
        %3512 = vdwg.mxu0
        %s3513 = scalar_lea.vmem %s4, 480
        %v3514 = vld [vmem:[%s3513] sm:$0xff]
        %v3515 = vld [vmem:[%s3513 + $0x8] sm:$0xff]
        %v3516 = vld [vmem:[%s3513 + $0x10] sm:$0xff]
        %v3517 = vld [vmem:[%s3513 + $0x18] sm:$0xff]
        %s3518 = scalar_lea.vmem %s5, 15
        %v3519 = vld [vmem:[%s3518] sm:$0x1]
        %v3521 = vlaneseq
        %v3522 = vshrl.u32 %v3521, 7
        %v3523 = vsub.s32 0, %v3522
        %v3524 = vrot.slane %v3519, %v3523
        %3526 = vmatprep.subr.mxu0 0.0
        %3527 = vmatpush1.msra.mxu0 %v3514
        %3528 = vmatprep.subr.mxu0 0.0
        %3529 = vmatpush1.msra.mxu0 %v3515
        %3530 = vmatprep.subr.mxu0 0.0
        %3531 = vmatpush1.msra.mxu0 %v3516
        %3532 = vmatprep.subr.mxu0 0.0
        %3533 = vmatpush1.msra.mxu0 %v3517
        %3534 = vmatprep.subr.mxu0 0.0
        %3535 = vmatpush1.msra.mxu0 0.0
        %3536 = vmatprep.subr.mxu0 0.0
        %3537 = vmatpush1.msra.mxu0 0.0
        %3538 = vmatprep.subr.mxu0 0.0
        %3539 = vmatpush1.msra.mxu0 0.0
        %3540 = vmatprep.subr.mxu0 0.0
        %3541 = vmatpush1.msra.mxu0 0.0
        %3542 = vmatprep.subr.mxu0 0.0
        %3543 = vmatpush1.msra.mxu0 0.0
        %3544 = vmatprep.subr.mxu0 0.0
        %3545 = vmatpush1.msra.mxu0 0.0
        %3546 = vmatprep.subr.mxu0 0.0
        %3547 = vmatpush1.msra.mxu0 0.0
        %3548 = vmatprep.subr.mxu0 0.0
        %3549 = vmatpush1.msra.mxu0 0.0
        %3550 = vmatprep.subr.mxu0 0.0
        %3551 = vmatpush1.msra.mxu0 0.0
        %3552 = vmatprep.subr.mxu0 0.0
        %3553 = vmatpush1.msra.mxu0 0.0
        %3554 = vmatprep.subr.mxu0 0.0
        %3555 = vmatpush1.msra.mxu0 0.0
        %3556 = vmatprep.subr.mxu0 0.0
        %3557 = vmatpush1.msra.mxu0 0.0
        %3558 = vmatprep.subr.mxu0 0.0
        %3559 = vmatpush1.msra.mxu0 0.0
        %3560 = vmatprep.subr.mxu0 0.0
        %3561 = vmatpush1.msra.mxu0 0.0
        %3562 = vmatprep.subr.mxu0 0.0
        %3563 = vmatpush1.msra.mxu0 0.0
        %3564 = vmatprep.subr.mxu0 0.0
        %3565 = vmatpush1.msra.mxu0 0.0
        %3566 = vmatprep.subr.mxu0 0.0
        %3567 = vmatpush1.msra.mxu0 0.0
        %3568 = vmatprep.subr.mxu0 0.0
        %3569 = vmatpush1.msra.mxu0 0.0
        %3570 = vmatprep.subr.mxu0 0.0
        %3571 = vmatpush1.msra.mxu0 0.0
        %3572 = vmatprep.subr.mxu0 0.0
        %3573 = vmatpush1.msra.mxu0 0.0
        %3574 = vmatprep.subr.mxu0 0.0
        %3575 = vmatpush1.msra.mxu0 0.0
        %3576 = vmatprep.subr.mxu0 0.0
        %3577 = vmatpush1.msra.mxu0 0.0
        %3578 = vmatprep.subr.mxu0 0.0
        %3579 = vmatpush1.msra.mxu0 0.0
        %3580 = vmatprep.subr.mxu0 0.0
        %3581 = vmatpush1.msra.mxu0 0.0
        %3582 = vmatprep.subr.mxu0 0.0
        %3583 = vmatpush1.msra.mxu0 0.0
        %3584 = vmatprep.subr.mxu0 0.0
        %3585 = vmatpush1.msra.mxu0 0.0
        %3586 = vmatprep.subr.mxu0 0.0
        %3587 = vmatpush1.msra.mxu0 0.0
        %3588 = vmatprep.subr.mxu0 0.0
        %3589 = vmatpush1.msra.mxu0 0.0
        %3590 = vmatprep.mubr.f32.mxu0 0.0
        %3591 = vmatmul.mubr.f32.gmra.mrb[0].mxu0 %v2243
        %v3592 = vpop.f32.mrb[0].mxu0
        %v3593 = vadd.f32 %v3524, %v3592
        %v3594 = vpop.f32.mrb[0].mxu0
        %3595 = vdwg.mxu0
        %s3596 = scalar_lea.vmem %s4, 608
        %v3597 = vld [vmem:[%s3596] sm:$0xff]
        %v3598 = vld [vmem:[%s3596 + $0x8] sm:$0xff]
        %v3599 = vld [vmem:[%s3596 + $0x10] sm:$0xff]
        %v3600 = vld [vmem:[%s3596 + $0x18] sm:$0xff]
        %s3601 = scalar_lea.vmem %s5, 19
        %v3602 = vld [vmem:[%s3601] sm:$0x1]
        %v3604 = vlaneseq
        %v3605 = vshrl.u32 %v3604, 7
        %v3606 = vsub.s32 0, %v3605
        %v3607 = vrot.slane %v3602, %v3606
        %3609 = vmatprep.subr.mxu0 0.0
        %3610 = vmatpush1.msra.mxu0 %v3597
        %3611 = vmatprep.subr.mxu0 0.0
        %3612 = vmatpush1.msra.mxu0 %v3598
        %3613 = vmatprep.subr.mxu0 0.0
        %3614 = vmatpush1.msra.mxu0 %v3599
        %3615 = vmatprep.subr.mxu0 0.0
        %3616 = vmatpush1.msra.mxu0 %v3600
        %3617 = vmatprep.subr.mxu0 0.0
        %3618 = vmatpush1.msra.mxu0 0.0
        %3619 = vmatprep.subr.mxu0 0.0
        %3620 = vmatpush1.msra.mxu0 0.0
        %3621 = vmatprep.subr.mxu0 0.0
        %3622 = vmatpush1.msra.mxu0 0.0
        %3623 = vmatprep.subr.mxu0 0.0
        %3624 = vmatpush1.msra.mxu0 0.0
        %3625 = vmatprep.subr.mxu0 0.0
        %3626 = vmatpush1.msra.mxu0 0.0
        %3627 = vmatprep.subr.mxu0 0.0
        %3628 = vmatpush1.msra.mxu0 0.0
        %3629 = vmatprep.subr.mxu0 0.0
        %3630 = vmatpush1.msra.mxu0 0.0
        %3631 = vmatprep.subr.mxu0 0.0
        %3632 = vmatpush1.msra.mxu0 0.0
        %3633 = vmatprep.subr.mxu0 0.0
        %3634 = vmatpush1.msra.mxu0 0.0
        %3635 = vmatprep.subr.mxu0 0.0
        %3636 = vmatpush1.msra.mxu0 0.0
        %3637 = vmatprep.subr.mxu0 0.0
        %3638 = vmatpush1.msra.mxu0 0.0
        %3639 = vmatprep.subr.mxu0 0.0
        %3640 = vmatpush1.msra.mxu0 0.0
        %3641 = vmatprep.subr.mxu0 0.0
        %3642 = vmatpush1.msra.mxu0 0.0
        %3643 = vmatprep.subr.mxu0 0.0
        %3644 = vmatpush1.msra.mxu0 0.0
        %3645 = vmatprep.subr.mxu0 0.0
        %3646 = vmatpush1.msra.mxu0 0.0
        %3647 = vmatprep.subr.mxu0 0.0
        %3648 = vmatpush1.msra.mxu0 0.0
        %3649 = vmatprep.subr.mxu0 0.0
        %3650 = vmatpush1.msra.mxu0 0.0
        %3651 = vmatprep.subr.mxu0 0.0
        %3652 = vmatpush1.msra.mxu0 0.0
        %3653 = vmatprep.subr.mxu0 0.0
        %3654 = vmatpush1.msra.mxu0 0.0
        %3655 = vmatprep.subr.mxu0 0.0
        %3656 = vmatpush1.msra.mxu0 0.0
        %3657 = vmatprep.subr.mxu0 0.0
        %3658 = vmatpush1.msra.mxu0 0.0
        %3659 = vmatprep.subr.mxu0 0.0
        %3660 = vmatpush1.msra.mxu0 0.0
        %3661 = vmatprep.subr.mxu0 0.0
        %3662 = vmatpush1.msra.mxu0 0.0
        %3663 = vmatprep.subr.mxu0 0.0
        %3664 = vmatpush1.msra.mxu0 0.0
        %3665 = vmatprep.subr.mxu0 0.0
        %3666 = vmatpush1.msra.mxu0 0.0
        %3667 = vmatprep.subr.mxu0 0.0
        %3668 = vmatpush1.msra.mxu0 0.0
        %3669 = vmatprep.subr.mxu0 0.0
        %3670 = vmatpush1.msra.mxu0 0.0
        %3671 = vmatprep.subr.mxu0 0.0
        %3672 = vmatpush1.msra.mxu0 0.0
        %3673 = vmatprep.mubr.f32.mxu0 0.0
        %3674 = vmatmul.mubr.f32.gmra.mrb[0].mxu0 %v2329
        %v3675 = vpop.f32.mrb[0].mxu0
        %v3676 = vadd.f32 %v3607, %v3675
        %v3677 = vpop.f32.mrb[0].mxu0
        %3678 = vmatprep.mubr.f32.mxu0 0.0
        %3679 = vmatmul.mubr.f32.gmra.mrb[0].mxu0 %v2332
        %v3680 = vpop.f32.mrb[0].mxu0
        %v3681 = vadd.f32 %v3607, %v3680
        %v3682 = vpop.f32.mrb[0].mxu0
        %3683 = vdwg.mxu0
        %s3684 = scalar_lea.vmem %s4, 736
        %v3685 = vld [vmem:[%s3684] sm:$0xff]
        %v3686 = vld [vmem:[%s3684 + $0x8] sm:$0xff]
        %v3687 = vld [vmem:[%s3684 + $0x10] sm:$0xff]
        %v3688 = vld [vmem:[%s3684 + $0x18] sm:$0xff]
        %s3689 = scalar_lea.vmem %s5, 23
        %v3690 = vld [vmem:[%s3689] sm:$0x1]
        %v3692 = vlaneseq
        %v3693 = vshrl.u32 %v3692, 7
        %v3694 = vsub.s32 0, %v3693
        %v3695 = vrot.slane %v3690, %v3694
        %3697 = vmatprep.subr.mxu0 0.0
        %3698 = vmatpush1.msra.mxu0 %v3685
        %3699 = vmatprep.subr.mxu0 0.0
        %3700 = vmatpush1.msra.mxu0 %v3686
        %3701 = vmatprep.subr.mxu0 0.0
        %3702 = vmatpush1.msra.mxu0 %v3687
        %3703 = vmatprep.subr.mxu0 0.0
        %3704 = vmatpush1.msra.mxu0 %v3688
        %3705 = vmatprep.subr.mxu0 0.0
        %3706 = vmatpush1.msra.mxu0 0.0
        %3707 = vmatprep.subr.mxu0 0.0
        %3708 = vmatpush1.msra.mxu0 0.0
        %3709 = vmatprep.subr.mxu0 0.0
        %3710 = vmatpush1.msra.mxu0 0.0
        %3711 = vmatprep.subr.mxu0 0.0
        %3712 = vmatpush1.msra.mxu0 0.0
        %3713 = vmatprep.subr.mxu0 0.0
        %3714 = vmatpush1.msra.mxu0 0.0
        %3715 = vmatprep.subr.mxu0 0.0
        %3716 = vmatpush1.msra.mxu0 0.0
        %3717 = vmatprep.subr.mxu0 0.0
        %3718 = vmatpush1.msra.mxu0 0.0
        %3719 = vmatprep.subr.mxu0 0.0
        %3720 = vmatpush1.msra.mxu0 0.0
        %3721 = vmatprep.subr.mxu0 0.0
        %3722 = vmatpush1.msra.mxu0 0.0
        %3723 = vmatprep.subr.mxu0 0.0
        %3724 = vmatpush1.msra.mxu0 0.0
        %3725 = vmatprep.subr.mxu0 0.0
        %3726 = vmatpush1.msra.mxu0 0.0
        %3727 = vmatprep.subr.mxu0 0.0
        %3728 = vmatpush1.msra.mxu0 0.0
        %3729 = vmatprep.subr.mxu0 0.0
        %3730 = vmatpush1.msra.mxu0 0.0
        %3731 = vmatprep.subr.mxu0 0.0
        %3732 = vmatpush1.msra.mxu0 0.0
        %3733 = vmatprep.subr.mxu0 0.0
        %3734 = vmatpush1.msra.mxu0 0.0
        %3735 = vmatprep.subr.mxu0 0.0
        %3736 = vmatpush1.msra.mxu0 0.0
        %3737 = vmatprep.subr.mxu0 0.0
        %3738 = vmatpush1.msra.mxu0 0.0
        %3739 = vmatprep.subr.mxu0 0.0
        %3740 = vmatpush1.msra.mxu0 0.0
        %3741 = vmatprep.subr.mxu0 0.0
        %3742 = vmatpush1.msra.mxu0 0.0
        %3743 = vmatprep.subr.mxu0 0.0
        %3744 = vmatpush1.msra.mxu0 0.0
        %3745 = vmatprep.subr.mxu0 0.0
        %3746 = vmatpush1.msra.mxu0 0.0
        %3747 = vmatprep.subr.mxu0 0.0
        %3748 = vmatpush1.msra.mxu0 0.0
        %3749 = vmatprep.subr.mxu0 0.0
        %3750 = vmatpush1.msra.mxu0 0.0
        %3751 = vmatprep.subr.mxu0 0.0
        %3752 = vmatpush1.msra.mxu0 0.0
        %3753 = vmatprep.subr.mxu0 0.0
        %3754 = vmatpush1.msra.mxu0 0.0
        %3755 = vmatprep.subr.mxu0 0.0
        %3756 = vmatpush1.msra.mxu0 0.0
        %3757 = vmatprep.subr.mxu0 0.0
        %3758 = vmatpush1.msra.mxu0 0.0
        %3759 = vmatprep.subr.mxu0 0.0
        %3760 = vmatpush1.msra.mxu0 0.0
        %3761 = vmatprep.mubr.f32.mxu0 0.0
        %3762 = vmatmul.mubr.f32.gmra.mrb[0].mxu0 %v2329
        %v3763 = vpop.f32.mrb[0].mxu0
        %v3764 = vadd.f32 %v3695, %v3763
        %v3765 = vpop.f32.mrb[0].mxu0
        %3766 = vmatprep.mubr.f32.mxu0 0.0
        %3767 = vmatmul.mubr.f32.gmra.mrb[0].mxu0 %v2332
        %v3768 = vpop.f32.mrb[0].mxu0
        %v3769 = vadd.f32 %v3695, %v3768
        %v3770 = vpop.f32.mrb[0].mxu0
        %3771 = vdwg.mxu0
        %v3773 = vsel %vm706, %v3593, 0
        %v3776 = vsel %vm706, %v3676, 0
        %v3779 = vsel %vm706, %v3681, 0
        %3781 = vmatprep.subr.mxu0 0.0
        %3782 = vmatpush1.xpose.msra.mxu0 %v3776
        %3783 = vmatprep.subr.mxu0 0.0
        %3784 = vmatpush1.xpose.msra.mxu0 %v3779
        %3785 = vmatprep.subr.mxu0 0.0
        %3786 = vmatpush1.xpose.msra.mxu0 0.0
        %3787 = vmatprep.subr.mxu0 0.0
        %3788 = vmatpush1.xpose.msra.mxu0 0.0
        %3789 = vmatprep.subr.mxu0 0.0
        %3790 = vmatpush1.xpose.msra.mxu0 0.0
        %3791 = vmatprep.subr.mxu0 0.0
        %3792 = vmatpush1.xpose.msra.mxu0 0.0
        %3793 = vmatprep.subr.mxu0 0.0
        %3794 = vmatpush1.xpose.msra.mxu0 0.0
        %3795 = vmatprep.subr.mxu0 0.0
        %3796 = vmatpush1.xpose.msra.mxu0 0.0
        %3797 = vmatprep.subr.mxu0 0.0
        %3798 = vmatpush1.xpose.msra.mxu0 0.0
        %3799 = vmatprep.subr.mxu0 0.0
        %3800 = vmatpush1.xpose.msra.mxu0 0.0
        %3801 = vmatprep.subr.mxu0 0.0
        %3802 = vmatpush1.xpose.msra.mxu0 0.0
        %3803 = vmatprep.subr.mxu0 0.0
        %3804 = vmatpush1.xpose.msra.mxu0 0.0
        %3805 = vmatprep.subr.mxu0 0.0
        %3806 = vmatpush1.xpose.msra.mxu0 0.0
        %3807 = vmatprep.subr.mxu0 0.0
        %3808 = vmatpush1.xpose.msra.mxu0 0.0
        %3809 = vmatprep.subr.mxu0 0.0
        %3810 = vmatpush1.xpose.msra.mxu0 0.0
        %3811 = vmatprep.subr.mxu0 0.0
        %3812 = vmatpush1.xpose.msra.mxu0 0.0
        %3813 = vmatprep.subr.mxu0 0.0
        %3814 = vmatpush1.xpose.msra.mxu0 0.0
        %3815 = vmatprep.subr.mxu0 0.0
        %3816 = vmatpush1.xpose.msra.mxu0 0.0
        %3817 = vmatprep.subr.mxu0 0.0
        %3818 = vmatpush1.xpose.msra.mxu0 0.0
        %3819 = vmatprep.subr.mxu0 0.0
        %3820 = vmatpush1.xpose.msra.mxu0 0.0
        %3821 = vmatprep.subr.mxu0 0.0
        %3822 = vmatpush1.xpose.msra.mxu0 0.0
        %3823 = vmatprep.subr.mxu0 0.0
        %3824 = vmatpush1.xpose.msra.mxu0 0.0
        %3825 = vmatprep.subr.mxu0 0.0
        %3826 = vmatpush1.xpose.msra.mxu0 0.0
        %3827 = vmatprep.subr.mxu0 0.0
        %3828 = vmatpush1.xpose.msra.mxu0 0.0
        %3829 = vmatprep.subr.mxu0 0.0
        %3830 = vmatpush1.xpose.msra.mxu0 0.0
        %3831 = vmatprep.subr.mxu0 0.0
        %3832 = vmatpush1.xpose.msra.mxu0 0.0
        %3833 = vmatprep.subr.mxu0 0.0
        %3834 = vmatpush1.xpose.msra.mxu0 0.0
        %3835 = vmatprep.subr.mxu0 0.0
        %3836 = vmatpush1.xpose.msra.mxu0 0.0
        %3837 = vmatprep.subr.mxu0 0.0
        %3838 = vmatpush1.xpose.msra.mxu0 0.0
        %3839 = vmatprep.subr.mxu0 0.0
        %3840 = vmatpush1.xpose.msra.mxu0 0.0
        %3841 = vmatprep.subr.mxu0 0.0
        %3842 = vmatpush1.xpose.msra.mxu0 0.0
        %3843 = vmatprep.subr.mxu0 0.0
        %3844 = vmatpush1.xpose.msra.mxu0 0.0
        %3845 = vmatprep.mubr.f32.mxu0 0.0
        %3846 = vmatmul.mubr.f32.gmra.mrb[0].mxu0 %v3773
        %v3847 = vpop.f32.mrb[0].mxu0
        %v3848 = vadd.f32 0.0, %v3847
        %v3849 = vpop.f32.mrb[0].mxu0
        %3850 = vdwg.mxu0
        %v3851 = vmul.f32 %v3848, 0.35355338
        %v3852 = vadd.f32 %v3851, %v417
        %v3853 = vsel %vm2119, %v3852, -inf
        %3854 = vmax.xlane.f32.xlu0 %v3853
        %v3855 = vpop.xlane.xlu0 %3854
        %v3856 = vsub.f32 %v3852, %v3855
        %v3857 = vmul.f32 %v3856, 1.442695
        %v3858 = vpow.pop %v3857
        %v3859 = vsel %vm2119, %v3858, 0.0
        %3860 = vadd.xlane.f32.xlu0 %v3859
        %v3861 = vpop.xlane.xlu0 %3860
        %v3862 = vrcp.pop %v3861
        %v3863 = vmul.f32 %v3858, %v3862
        %v3864 = vsel %vm416, %v3863, 0.0
        %v3866 = vsel %vm2119, %v3864, 0
        %3868 = vmatprep.subr.mxu0 0.0
        %3869 = vmatpush1.msra.mxu0 %v3764
        %3870 = vmatprep.subr.mxu0 0.0
        %3871 = vmatpush1.msra.mxu0 %v3769
        %3872 = vmatprep.subr.mxu0 0.0
        %3873 = vmatpush1.msra.mxu0 0.0
        %3874 = vmatprep.subr.mxu0 0.0
        %3875 = vmatpush1.msra.mxu0 0.0
        %3876 = vmatprep.subr.mxu0 0.0
        %3877 = vmatpush1.msra.mxu0 0.0
        %3878 = vmatprep.subr.mxu0 0.0
        %3879 = vmatpush1.msra.mxu0 0.0
        %3880 = vmatprep.subr.mxu0 0.0
        %3881 = vmatpush1.msra.mxu0 0.0
        %3882 = vmatprep.subr.mxu0 0.0
        %3883 = vmatpush1.msra.mxu0 0.0
        %3884 = vmatprep.subr.mxu0 0.0
        %3885 = vmatpush1.msra.mxu0 0.0
        %3886 = vmatprep.subr.mxu0 0.0
        %3887 = vmatpush1.msra.mxu0 0.0
        %3888 = vmatprep.subr.mxu0 0.0
        %3889 = vmatpush1.msra.mxu0 0.0
        %3890 = vmatprep.subr.mxu0 0.0
        %3891 = vmatpush1.msra.mxu0 0.0
        %3892 = vmatprep.subr.mxu0 0.0
        %3893 = vmatpush1.msra.mxu0 0.0
        %3894 = vmatprep.subr.mxu0 0.0
        %3895 = vmatpush1.msra.mxu0 0.0
        %3896 = vmatprep.subr.mxu0 0.0
        %3897 = vmatpush1.msra.mxu0 0.0
        %3898 = vmatprep.subr.mxu0 0.0
        %3899 = vmatpush1.msra.mxu0 0.0
        %3900 = vmatprep.subr.mxu0 0.0
        %3901 = vmatpush1.msra.mxu0 0.0
        %3902 = vmatprep.subr.mxu0 0.0
        %3903 = vmatpush1.msra.mxu0 0.0
        %3904 = vmatprep.subr.mxu0 0.0
        %3905 = vmatpush1.msra.mxu0 0.0
        %3906 = vmatprep.subr.mxu0 0.0
        %3907 = vmatpush1.msra.mxu0 0.0
        %3908 = vmatprep.subr.mxu0 0.0
        %3909 = vmatpush1.msra.mxu0 0.0
        %3910 = vmatprep.subr.mxu0 0.0
        %3911 = vmatpush1.msra.mxu0 0.0
        %3912 = vmatprep.subr.mxu0 0.0
        %3913 = vmatpush1.msra.mxu0 0.0
        %3914 = vmatprep.subr.mxu0 0.0
        %3915 = vmatpush1.msra.mxu0 0.0
        %3916 = vmatprep.subr.mxu0 0.0
        %3917 = vmatpush1.msra.mxu0 0.0
        %3918 = vmatprep.subr.mxu0 0.0
        %3919 = vmatpush1.msra.mxu0 0.0
        %3920 = vmatprep.subr.mxu0 0.0
        %3921 = vmatpush1.msra.mxu0 0.0
        %3922 = vmatprep.subr.mxu0 0.0
        %3923 = vmatpush1.msra.mxu0 0.0
        %3924 = vmatprep.subr.mxu0 0.0
        %3925 = vmatpush1.msra.mxu0 0.0
        %3926 = vmatprep.subr.mxu0 0.0
        %3927 = vmatpush1.msra.mxu0 0.0
        %3928 = vmatprep.subr.mxu0 0.0
        %3929 = vmatpush1.msra.mxu0 0.0
        %3930 = vmatprep.subr.mxu0 0.0
        %3931 = vmatpush1.msra.mxu0 0.0
        %3932 = vmatprep.mubr.f32.mxu0 0.0
        %3933 = vmatmul.mubr.f32.gmra.mrb[0].mxu0 %v3866
        %v3934 = vpop.f32.mrb[0].mxu0
        %v3935 = vadd.f32 0.0, %v3934
        %v3936 = vpop.f32.mrb[0].mxu0
        %3937 = vdwg.mxu0
        %3939 = vrot.lane.b32.xlu0 %v3085, 8
        %v3940 = vpop.permute.xlu0 %3939
        %3943 = vrot.lane.b32.xlu0 %v3510, 16
        %v3944 = vpop.permute.xlu0 %3943
        %3947 = vrot.lane.b32.xlu0 %v3935, 24
        %v3948 = vpop.permute.xlu0 %3947
        %v3950 = vsel %vm706, %v2660, %v3940
        %v3951 = vsel %vm2119, %v3950, %v3944
        %v3952 = vsel %vm2121, %v3951, %v3948
        %v3953 = vlaneseq
        %v3954 = vshrl.u32 %v3953, 7
        %v3955 = vsub.s32 0, %v3954
        %v3956 = vrot.slane %v425, %v3955
        %v3958 = vsel %vm427, %v3952, 0
        %3960 = vmatprep.subr.mxu0 0.0
        %3961 = vmatpush1.msra.mxu0 %v2225
        %3962 = vmatprep.subr.mxu0 0.0
        %3963 = vmatpush1.msra.mxu0 %v2226
        %3964 = vmatprep.subr.mxu0 0.0
        %3965 = vmatpush1.msra.mxu0 %v2227
        %3966 = vmatprep.subr.mxu0 0.0
        %3967 = vmatpush1.msra.mxu0 %v2228
        %3968 = vmatprep.subr.mxu0 0.0
        %3969 = vmatpush1.msra.mxu0 0.0
        %3970 = vmatprep.subr.mxu0 0.0
        %3971 = vmatpush1.msra.mxu0 0.0
        %3972 = vmatprep.subr.mxu0 0.0
        %3973 = vmatpush1.msra.mxu0 0.0
        %3974 = vmatprep.subr.mxu0 0.0
        %3975 = vmatpush1.msra.mxu0 0.0
        %3976 = vmatprep.subr.mxu0 0.0
        %3977 = vmatpush1.msra.mxu0 0.0
        %3978 = vmatprep.subr.mxu0 0.0
        %3979 = vmatpush1.msra.mxu0 0.0
        %3980 = vmatprep.subr.mxu0 0.0
        %3981 = vmatpush1.msra.mxu0 0.0
        %3982 = vmatprep.subr.mxu0 0.0
        %3983 = vmatpush1.msra.mxu0 0.0
        %3984 = vmatprep.subr.mxu0 0.0
        %3985 = vmatpush1.msra.mxu0 0.0
        %3986 = vmatprep.subr.mxu0 0.0
        %3987 = vmatpush1.msra.mxu0 0.0
        %3988 = vmatprep.subr.mxu0 0.0
        %3989 = vmatpush1.msra.mxu0 0.0
        %3990 = vmatprep.subr.mxu0 0.0
        %3991 = vmatpush1.msra.mxu0 0.0
        %3992 = vmatprep.subr.mxu0 0.0
        %3993 = vmatpush1.msra.mxu0 0.0
        %3994 = vmatprep.subr.mxu0 0.0
        %3995 = vmatpush1.msra.mxu0 0.0
        %3996 = vmatprep.subr.mxu0 0.0
        %3997 = vmatpush1.msra.mxu0 0.0
        %3998 = vmatprep.subr.mxu0 0.0
        %3999 = vmatpush1.msra.mxu0 0.0
        %4000 = vmatprep.subr.mxu0 0.0
        %4001 = vmatpush1.msra.mxu0 0.0
        %4002 = vmatprep.subr.mxu0 0.0
        %4003 = vmatpush1.msra.mxu0 0.0
        %4004 = vmatprep.subr.mxu0 0.0
        %4005 = vmatpush1.msra.mxu0 0.0
        %4006 = vmatprep.subr.mxu0 0.0
        %4007 = vmatpush1.msra.mxu0 0.0
        %4008 = vmatprep.subr.mxu0 0.0
        %4009 = vmatpush1.msra.mxu0 0.0
        %4010 = vmatprep.subr.mxu0 0.0
        %4011 = vmatpush1.msra.mxu0 0.0
        %4012 = vmatprep.subr.mxu0 0.0
        %4013 = vmatpush1.msra.mxu0 0.0
        %4014 = vmatprep.subr.mxu0 0.0
        %4015 = vmatpush1.msra.mxu0 0.0
        %4016 = vmatprep.subr.mxu0 0.0
        %4017 = vmatpush1.msra.mxu0 0.0
        %4018 = vmatprep.subr.mxu0 0.0
        %4019 = vmatpush1.msra.mxu0 0.0
        %4020 = vmatprep.subr.mxu0 0.0
        %4021 = vmatpush1.msra.mxu0 0.0
        %4022 = vmatprep.subr.mxu0 0.0
        %4023 = vmatpush1.msra.mxu0 0.0
        %4024 = vmatprep.mubr.f32.mxu0 0.0
        %4025 = vmatmul.mubr.f32.gmra.mrb[0].mxu0 %v3958
        %v4026 = vpop.f32.mrb[0].mxu0
        %v4027 = vadd.f32 %v3956, %v4026
        %v4028 = vpop.f32.mrb[0].mxu0
        %4029 = vdwg.mxu0
        %v4030 = vadd.f32 %v2200, %v4027
        %v4031 = vsel %vm427, %v4030, 0.0
        %4032 = vadd.xlane.f32.xlu0 %v4031
        %v4033 = vpop.xlane.xlu0 %4032
        %v4034 = vmul.f32 %v4033, %v431
        %v4035 = vsub.f32 %v4030, %v4034
        %v4036 = vmul.f32 %v4035, %v4035
        %v4037 = vsel %vm427, %v4036, 0.0
        %4038 = vadd.xlane.f32.xlu0 %v4037
        %v4039 = vpop.xlane.xlu0 %4038
        %v4040 = vmul.f32 %v4039, %v431
        %v4041 = vadd.f32 %v4040, 1e-05
        %v4042 = vrsqrt.pop %v4041
        %v4043 = vmul.f32 %v4035, %v4042
        %v4044 = vlaneseq
        %v4045 = vshrl.u32 %v4044, 7
        %v4046 = vsub.s32 0, %v4045
        %v4047 = vrot.slane %v420, %v4046
        %v4048 = vmul.f32 %v4043, %v4047
        %v4049 = vlaneseq
        %v4050 = vshrl.u32 %v4049, 7
        %v4051 = vsub.s32 0, %v4050
        %v4052 = vrot.slane %v423, %v4051
        %v4053 = vadd.f32 %v4048, %v4052
        %v4054 = vld [vmem:[%s7] sm:$0xff]
        %v4055 = vld [vmem:[%s7 + $0x8] sm:$0xff]
        %v4056 = vld [vmem:[%s7 + $0x10] sm:$0xff]
        %v4057 = vld [vmem:[%s7 + $0x18] sm:$0xff]
        %v4058 = vld [vmem:[%s7 + $0x20] sm:$0x1]
        %v4059 = vlaneseq
        %v4060 = vshrl.u32 %v4059, 7
        %v4061 = vsub.s32 0, %v4060
        %v4062 = vrot.slane %v4058, %v4061
        %v4064 = vsel %vm427, %v4053, 0
        %4066 = vmatprep.subr.mxu0 0.0
        %4067 = vmatpush1.msra.mxu0 %v4054
        %4068 = vmatprep.subr.mxu0 0.0
        %4069 = vmatpush1.msra.mxu0 %v4055
        %4070 = vmatprep.subr.mxu0 0.0
        %4071 = vmatpush1.msra.mxu0 %v4056
        %4072 = vmatprep.subr.mxu0 0.0
        %4073 = vmatpush1.msra.mxu0 %v4057
        %4074 = vmatprep.subr.mxu0 0.0
        %4075 = vmatpush1.msra.mxu0 0.0
        %4076 = vmatprep.subr.mxu0 0.0
        %4077 = vmatpush1.msra.mxu0 0.0
        %4078 = vmatprep.subr.mxu0 0.0
        %4079 = vmatpush1.msra.mxu0 0.0
        %4080 = vmatprep.subr.mxu0 0.0
        %4081 = vmatpush1.msra.mxu0 0.0
        %4082 = vmatprep.subr.mxu0 0.0
        %4083 = vmatpush1.msra.mxu0 0.0
        %4084 = vmatprep.subr.mxu0 0.0
        %4085 = vmatpush1.msra.mxu0 0.0
        %4086 = vmatprep.subr.mxu0 0.0
        %4087 = vmatpush1.msra.mxu0 0.0
        %4088 = vmatprep.subr.mxu0 0.0
        %4089 = vmatpush1.msra.mxu0 0.0
        %4090 = vmatprep.subr.mxu0 0.0
        %4091 = vmatpush1.msra.mxu0 0.0
        %4092 = vmatprep.subr.mxu0 0.0
        %4093 = vmatpush1.msra.mxu0 0.0
        %4094 = vmatprep.subr.mxu0 0.0
        %4095 = vmatpush1.msra.mxu0 0.0
        %4096 = vmatprep.subr.mxu0 0.0
        %4097 = vmatpush1.msra.mxu0 0.0
        %4098 = vmatprep.subr.mxu0 0.0
        %4099 = vmatpush1.msra.mxu0 0.0
        %4100 = vmatprep.subr.mxu0 0.0
        %4101 = vmatpush1.msra.mxu0 0.0
        %4102 = vmatprep.subr.mxu0 0.0
        %4103 = vmatpush1.msra.mxu0 0.0
        %4104 = vmatprep.subr.mxu0 0.0
        %4105 = vmatpush1.msra.mxu0 0.0
        %4106 = vmatprep.subr.mxu0 0.0
        %4107 = vmatpush1.msra.mxu0 0.0
        %4108 = vmatprep.subr.mxu0 0.0
        %4109 = vmatpush1.msra.mxu0 0.0
        %4110 = vmatprep.subr.mxu0 0.0
        %4111 = vmatpush1.msra.mxu0 0.0
        %4112 = vmatprep.subr.mxu0 0.0
        %4113 = vmatpush1.msra.mxu0 0.0
        %4114 = vmatprep.subr.mxu0 0.0
        %4115 = vmatpush1.msra.mxu0 0.0
        %4116 = vmatprep.subr.mxu0 0.0
        %4117 = vmatpush1.msra.mxu0 0.0
        %4118 = vmatprep.subr.mxu0 0.0
        %4119 = vmatpush1.msra.mxu0 0.0
        %4120 = vmatprep.subr.mxu0 0.0
        %4121 = vmatpush1.msra.mxu0 0.0
        %4122 = vmatprep.subr.mxu0 0.0
        %4123 = vmatpush1.msra.mxu0 0.0
        %4124 = vmatprep.subr.mxu0 0.0
        %4125 = vmatpush1.msra.mxu0 0.0
        %4126 = vmatprep.subr.mxu0 0.0
        %4127 = vmatpush1.msra.mxu0 0.0
        %4128 = vmatprep.subr.mxu0 0.0
        %4129 = vmatpush1.msra.mxu0 0.0
        %4130 = vmatprep.mubr.f32.mxu0 0.0
        %4131 = vmatmul.mubr.f32.gmra.mrb[0].mxu0 %v4064
        %v4132 = vpop.f32.mrb[0].mxu0
        %v4133 = vadd.f32 %v4062, %v4132
        %v4134 = vpop.f32.mrb[0].mxu0
        %4135 = vdwg.mxu0
        %v4136 = vmax.f32 %v4133, 0.0
        %v4137 = vld [vmem:[%s8] sm:$0xff]
        %v4138 = vld [vmem:[%s8 + $0x8] sm:$0xff]
        %v4139 = vld [vmem:[%s8 + $0x10] sm:$0xff]
        %v4140 = vld [vmem:[%s8 + $0x18] sm:$0xff]
        %v4141 = vld [vmem:[%s8 + $0x20] sm:$0xff]
        %v4142 = vld [vmem:[%s8 + $0x28] sm:$0xff]
        %v4143 = vld [vmem:[%s8 + $0x30] sm:$0xff]
        %v4144 = vld [vmem:[%s8 + $0x38] sm:$0xff]
        %vm4145 = vcmask 523264
        %v4147 = vsel %vm4145, %v4136, 0
        %4149 = vmatprep.subr.mxu0 0.0
        %4150 = vmatpush1.msra.mxu0 %v4137
        %4151 = vmatprep.subr.mxu0 0.0
        %4152 = vmatpush1.msra.mxu0 %v4138
        %4153 = vmatprep.subr.mxu0 0.0
        %4154 = vmatpush1.msra.mxu0 %v4139
        %4155 = vmatprep.subr.mxu0 0.0
        %4156 = vmatpush1.msra.mxu0 %v4140
        %4157 = vmatprep.subr.mxu0 0.0
        %4158 = vmatpush1.msra.mxu0 %v4141
        %4159 = vmatprep.subr.mxu0 0.0
        %4160 = vmatpush1.msra.mxu0 %v4142
        %4161 = vmatprep.subr.mxu0 0.0
        %4162 = vmatpush1.msra.mxu0 %v4143
        %4163 = vmatprep.subr.mxu0 0.0
        %4164 = vmatpush1.msra.mxu0 %v4144
        %4165 = vmatprep.subr.mxu0 0.0
        %4166 = vmatpush1.msra.mxu0 0.0
        %4167 = vmatprep.subr.mxu0 0.0
        %4168 = vmatpush1.msra.mxu0 0.0
        %4169 = vmatprep.subr.mxu0 0.0
        %4170 = vmatpush1.msra.mxu0 0.0
        %4171 = vmatprep.subr.mxu0 0.0
        %4172 = vmatpush1.msra.mxu0 0.0
        %4173 = vmatprep.subr.mxu0 0.0
        %4174 = vmatpush1.msra.mxu0 0.0
        %4175 = vmatprep.subr.mxu0 0.0
        %4176 = vmatpush1.msra.mxu0 0.0
        %4177 = vmatprep.subr.mxu0 0.0
        %4178 = vmatpush1.msra.mxu0 0.0
        %4179 = vmatprep.subr.mxu0 0.0
        %4180 = vmatpush1.msra.mxu0 0.0
        %4181 = vmatprep.subr.mxu0 0.0
        %4182 = vmatpush1.msra.mxu0 0.0
        %4183 = vmatprep.subr.mxu0 0.0
        %4184 = vmatpush1.msra.mxu0 0.0
        %4185 = vmatprep.subr.mxu0 0.0
        %4186 = vmatpush1.msra.mxu0 0.0
        %4187 = vmatprep.subr.mxu0 0.0
        %4188 = vmatpush1.msra.mxu0 0.0
        %4189 = vmatprep.subr.mxu0 0.0
        %4190 = vmatpush1.msra.mxu0 0.0
        %4191 = vmatprep.subr.mxu0 0.0
        %4192 = vmatpush1.msra.mxu0 0.0
        %4193 = vmatprep.subr.mxu0 0.0
        %4194 = vmatpush1.msra.mxu0 0.0
        %4195 = vmatprep.subr.mxu0 0.0
        %4196 = vmatpush1.msra.mxu0 0.0
        %4197 = vmatprep.subr.mxu0 0.0
        %4198 = vmatpush1.msra.mxu0 0.0
        %4199 = vmatprep.subr.mxu0 0.0
        %4200 = vmatpush1.msra.mxu0 0.0
        %4201 = vmatprep.subr.mxu0 0.0
        %4202 = vmatpush1.msra.mxu0 0.0
        %4203 = vmatprep.subr.mxu0 0.0
        %4204 = vmatpush1.msra.mxu0 0.0
        %4205 = vmatprep.subr.mxu0 0.0
        %4206 = vmatpush1.msra.mxu0 0.0
        %4207 = vmatprep.subr.mxu0 0.0
        %4208 = vmatpush1.msra.mxu0 0.0
        %4209 = vmatprep.subr.mxu0 0.0
        %4210 = vmatpush1.msra.mxu0 0.0
        %4211 = vmatprep.subr.mxu0 0.0
        %4212 = vmatpush1.msra.mxu0 0.0
        %4213 = vmatprep.mubr.f32.mxu0 0.0
        %4214 = vmatmul.mubr.f32.gmra.mrb[0].mxu0 %v4147
        %v4215 = vpop.f32.mrb[0].mxu0
        %v4216 = vadd.f32 0.0, %v4215
        %v4217 = vpop.f32.mrb[0].mxu0
        %4218 = vdwg.mxu0
        %v4219 = vadd.f32 %v4030, %v4216
        %v4220 = vlaneseq
        %v4221 = vshrl.u32 %v4220, 7
        %v4222 = vsub.s32 0, %v4221
        %v4223 = vrot.slane %v426, %v4222
        %v4224 = vadd.f32 %v4219, %v4223
        %s4225 = scalar_lea.vmem %s9, 16
        %v4226 = vld [vmem:[%s4225] sm:$0x1]
        %v4227 = vld [vmem:[%s4225 + $0x1] sm:$0x1]
        %v4228 = vld [vmem:[%s4225 + $0x2] sm:$0x1]
        %v4229 = vld [vmem:[%s4225 + $0x3] sm:$0x1]
        %v4230 = vld [vmem:[%s4225 + $0x4] sm:$0x1]
        %v4231 = vld [vmem:[%s4225 + $0x5] sm:$0x1]
        %v4232 = vld [vmem:[%s4225 + $0x6] sm:$0x1]
        %v4233 = vld [vmem:[%s4225 + $0x7] sm:$0x1]
        %v4234 = vld [vmem:[%s4225 + $0x8] sm:$0x1]
        %v4235 = vsel %vm427, %v4224, 0.0
        %4236 = vadd.xlane.f32.xlu0 %v4235
        %v4237 = vpop.xlane.xlu0 %4236
        %v4238 = vmul.f32 %v4237, %v431
        %v4239 = vsub.f32 %v4224, %v4238
        %v4240 = vmul.f32 %v4239, %v4239
        %v4241 = vsel %vm427, %v4240, 0.0
        %4242 = vadd.xlane.f32.xlu0 %v4241
        %v4243 = vpop.xlane.xlu0 %4242
        %v4244 = vmul.f32 %v4243, %v431
        %v4245 = vadd.f32 %v4244, 1e-05
        %v4246 = vrsqrt.pop %v4245
        %v4247 = vmul.f32 %v4239, %v4246
        %v4248 = vlaneseq
        %v4249 = vshrl.u32 %v4248, 7
        %v4250 = vsub.s32 0, %v4249
        %v4251 = vrot.slane %v4226, %v4250
        %v4252 = vmul.f32 %v4247, %v4251
        %v4253 = vlaneseq
        %v4254 = vshrl.u32 %v4253, 7
        %v4255 = vsub.s32 0, %v4254
        %v4256 = vrot.slane %v4229, %v4255
        %v4257 = vadd.f32 %v4252, %v4256
        %s4258 = scalar_lea.vmem %s6, 64
        %v4259 = vld [vmem:[%s4258] sm:$0xff]
        %v4260 = vld [vmem:[%s4258 + $0x8] sm:$0xff]
        %v4261 = vld [vmem:[%s4258 + $0x10] sm:$0xff]
        %v4262 = vld [vmem:[%s4258 + $0x18] sm:$0xff]
        %s4263 = scalar_lea.vmem %s4, 768
        %v4264 = vld [vmem:[%s4263] sm:$0xff]
        %v4265 = vld [vmem:[%s4263 + $0x8] sm:$0xff]
        %v4266 = vld [vmem:[%s4263 + $0x10] sm:$0xff]
        %v4267 = vld [vmem:[%s4263 + $0x18] sm:$0xff]
        %s4268 = scalar_lea.vmem %s5, 24
        %v4269 = vld [vmem:[%s4268] sm:$0x1]
        %v4271 = vlaneseq
        %v4272 = vshrl.u32 %v4271, 7
        %v4273 = vsub.s32 0, %v4272
        %v4274 = vrot.slane %v4269, %v4273
        %v4277 = vsel %vm427, %v4257, 0
        %4279 = vmatprep.subr.mxu0 0.0
        %4280 = vmatpush1.msra.mxu0 %v4264
        %4281 = vmatprep.subr.mxu0 0.0
        %4282 = vmatpush1.msra.mxu0 %v4265
        %4283 = vmatprep.subr.mxu0 0.0
        %4284 = vmatpush1.msra.mxu0 %v4266
        %4285 = vmatprep.subr.mxu0 0.0
        %4286 = vmatpush1.msra.mxu0 %v4267
        %4287 = vmatprep.subr.mxu0 0.0
        %4288 = vmatpush1.msra.mxu0 0.0
        %4289 = vmatprep.subr.mxu0 0.0
        %4290 = vmatpush1.msra.mxu0 0.0
        %4291 = vmatprep.subr.mxu0 0.0
        %4292 = vmatpush1.msra.mxu0 0.0
        %4293 = vmatprep.subr.mxu0 0.0
        %4294 = vmatpush1.msra.mxu0 0.0
        %4295 = vmatprep.subr.mxu0 0.0
        %4296 = vmatpush1.msra.mxu0 0.0
        %4297 = vmatprep.subr.mxu0 0.0
        %4298 = vmatpush1.msra.mxu0 0.0
        %4299 = vmatprep.subr.mxu0 0.0
        %4300 = vmatpush1.msra.mxu0 0.0
        %4301 = vmatprep.subr.mxu0 0.0
        %4302 = vmatpush1.msra.mxu0 0.0
        %4303 = vmatprep.subr.mxu0 0.0
        %4304 = vmatpush1.msra.mxu0 0.0
        %4305 = vmatprep.subr.mxu0 0.0
        %4306 = vmatpush1.msra.mxu0 0.0
        %4307 = vmatprep.subr.mxu0 0.0
        %4308 = vmatpush1.msra.mxu0 0.0
        %4309 = vmatprep.subr.mxu0 0.0
        %4310 = vmatpush1.msra.mxu0 0.0
        %4311 = vmatprep.subr.mxu0 0.0
        %4312 = vmatpush1.msra.mxu0 0.0
        %4313 = vmatprep.subr.mxu0 0.0
        %4314 = vmatpush1.msra.mxu0 0.0
        %4315 = vmatprep.subr.mxu0 0.0
        %4316 = vmatpush1.msra.mxu0 0.0
        %4317 = vmatprep.subr.mxu0 0.0
        %4318 = vmatpush1.msra.mxu0 0.0
        %4319 = vmatprep.subr.mxu0 0.0
        %4320 = vmatpush1.msra.mxu0 0.0
        %4321 = vmatprep.subr.mxu0 0.0
        %4322 = vmatpush1.msra.mxu0 0.0
        %4323 = vmatprep.subr.mxu0 0.0
        %4324 = vmatpush1.msra.mxu0 0.0
        %4325 = vmatprep.subr.mxu0 0.0
        %4326 = vmatpush1.msra.mxu0 0.0
        %4327 = vmatprep.subr.mxu0 0.0
        %4328 = vmatpush1.msra.mxu0 0.0
        %4329 = vmatprep.subr.mxu0 0.0
        %4330 = vmatpush1.msra.mxu0 0.0
        %4331 = vmatprep.subr.mxu0 0.0
        %4332 = vmatpush1.msra.mxu0 0.0
        %4333 = vmatprep.subr.mxu0 0.0
        %4334 = vmatpush1.msra.mxu0 0.0
        %4335 = vmatprep.subr.mxu0 0.0
        %4336 = vmatpush1.msra.mxu0 0.0
        %4337 = vmatprep.subr.mxu0 0.0
        %4338 = vmatpush1.msra.mxu0 0.0
        %4339 = vmatprep.subr.mxu0 0.0
        %4340 = vmatpush1.msra.mxu0 0.0
        %4341 = vmatprep.subr.mxu0 0.0
        %4342 = vmatpush1.msra.mxu0 0.0
        %4343 = vmatprep.mubr.f32.mxu0 0.0
        %4344 = vmatmul.mubr.f32.gmra.mrb[0].mxu0 %v4277
        %v4345 = vpop.f32.mrb[0].mxu0
        %v4346 = vadd.f32 %v4274, %v4345
        %v4347 = vpop.f32.mrb[0].mxu0
        %4348 = vdwg.mxu0
        %s4349 = scalar_lea.vmem %s4, 896
        %v4350 = vld [vmem:[%s4349] sm:$0xff]
        %v4351 = vld [vmem:[%s4349 + $0x8] sm:$0xff]
        %v4352 = vld [vmem:[%s4349 + $0x10] sm:$0xff]
        %v4353 = vld [vmem:[%s4349 + $0x18] sm:$0xff]
        %s4354 = scalar_lea.vmem %s5, 28
        %v4355 = vld [vmem:[%s4354] sm:$0x1]
        %v4357 = vlaneseq
        %v4358 = vshrl.u32 %v4357, 7
        %v4359 = vsub.s32 0, %v4358
        %v4360 = vrot.slane %v4355, %v4359
        %4362 = vmatprep.subr.mxu0 0.0
        %4363 = vmatpush1.msra.mxu0 %v4350
        %4364 = vmatprep.subr.mxu0 0.0
        %4365 = vmatpush1.msra.mxu0 %v4351
        %4366 = vmatprep.subr.mxu0 0.0
        %4367 = vmatpush1.msra.mxu0 %v4352
        %4368 = vmatprep.subr.mxu0 0.0
        %4369 = vmatpush1.msra.mxu0 %v4353
        %4370 = vmatprep.subr.mxu0 0.0
        %4371 = vmatpush1.msra.mxu0 0.0
        %4372 = vmatprep.subr.mxu0 0.0
        %4373 = vmatpush1.msra.mxu0 0.0
        %4374 = vmatprep.subr.mxu0 0.0
        %4375 = vmatpush1.msra.mxu0 0.0
        %4376 = vmatprep.subr.mxu0 0.0
        %4377 = vmatpush1.msra.mxu0 0.0
        %4378 = vmatprep.subr.mxu0 0.0
        %4379 = vmatpush1.msra.mxu0 0.0
        %4380 = vmatprep.subr.mxu0 0.0
        %4381 = vmatpush1.msra.mxu0 0.0
        %4382 = vmatprep.subr.mxu0 0.0
        %4383 = vmatpush1.msra.mxu0 0.0
        %4384 = vmatprep.subr.mxu0 0.0
        %4385 = vmatpush1.msra.mxu0 0.0
        %4386 = vmatprep.subr.mxu0 0.0
        %4387 = vmatpush1.msra.mxu0 0.0
        %4388 = vmatprep.subr.mxu0 0.0
        %4389 = vmatpush1.msra.mxu0 0.0
        %4390 = vmatprep.subr.mxu0 0.0
        %4391 = vmatpush1.msra.mxu0 0.0
        %4392 = vmatprep.subr.mxu0 0.0
        %4393 = vmatpush1.msra.mxu0 0.0
        %4394 = vmatprep.subr.mxu0 0.0
        %4395 = vmatpush1.msra.mxu0 0.0
        %4396 = vmatprep.subr.mxu0 0.0
        %4397 = vmatpush1.msra.mxu0 0.0
        %4398 = vmatprep.subr.mxu0 0.0
        %4399 = vmatpush1.msra.mxu0 0.0
        %4400 = vmatprep.subr.mxu0 0.0
        %4401 = vmatpush1.msra.mxu0 0.0
        %4402 = vmatprep.subr.mxu0 0.0
        %4403 = vmatpush1.msra.mxu0 0.0
        %4404 = vmatprep.subr.mxu0 0.0
        %4405 = vmatpush1.msra.mxu0 0.0
        %4406 = vmatprep.subr.mxu0 0.0
        %4407 = vmatpush1.msra.mxu0 0.0
        %4408 = vmatprep.subr.mxu0 0.0
        %4409 = vmatpush1.msra.mxu0 0.0
        %4410 = vmatprep.subr.mxu0 0.0
        %4411 = vmatpush1.msra.mxu0 0.0
        %4412 = vmatprep.subr.mxu0 0.0
        %4413 = vmatpush1.msra.mxu0 0.0
        %4414 = vmatprep.subr.mxu0 0.0
        %4415 = vmatpush1.msra.mxu0 0.0
        %4416 = vmatprep.subr.mxu0 0.0
        %4417 = vmatpush1.msra.mxu0 0.0
        %4418 = vmatprep.subr.mxu0 0.0
        %4419 = vmatpush1.msra.mxu0 0.0
        %4420 = vmatprep.subr.mxu0 0.0
        %4421 = vmatpush1.msra.mxu0 0.0
        %4422 = vmatprep.subr.mxu0 0.0
        %4423 = vmatpush1.msra.mxu0 0.0
        %4424 = vmatprep.subr.mxu0 0.0
        %4425 = vmatpush1.msra.mxu0 0.0
        %4426 = vmatprep.mubr.f32.mxu0 0.0
        %4427 = vmatmul.mubr.f32.gmra.mrb[0].mxu0 %v4277
        %v4428 = vpop.f32.mrb[0].mxu0
        %v4429 = vadd.f32 %v4360, %v4428
        %v4430 = vpop.f32.mrb[0].mxu0
        %4431 = vdwg.mxu0
        %s4432 = scalar_lea.vmem %s4, 1024
        %v4433 = vld [vmem:[%s4432] sm:$0xff]
        %v4434 = vld [vmem:[%s4432 + $0x8] sm:$0xff]
        %v4435 = vld [vmem:[%s4432 + $0x10] sm:$0xff]
        %v4436 = vld [vmem:[%s4432 + $0x18] sm:$0xff]
        %s4437 = scalar_lea.vmem %s5, 32
        %v4438 = vld [vmem:[%s4437] sm:$0x1]
        %v4440 = vlaneseq
        %v4441 = vshrl.u32 %v4440, 7
        %v4442 = vsub.s32 0, %v4441
        %v4443 = vrot.slane %v4438, %v4442
        %4445 = vmatprep.subr.mxu0 0.0
        %4446 = vmatpush1.msra.mxu0 %v4433
        %4447 = vmatprep.subr.mxu0 0.0
        %4448 = vmatpush1.msra.mxu0 %v4434
        %4449 = vmatprep.subr.mxu0 0.0
        %4450 = vmatpush1.msra.mxu0 %v4435
        %4451 = vmatprep.subr.mxu0 0.0
        %4452 = vmatpush1.msra.mxu0 %v4436
        %4453 = vmatprep.subr.mxu0 0.0
        %4454 = vmatpush1.msra.mxu0 0.0
        %4455 = vmatprep.subr.mxu0 0.0
        %4456 = vmatpush1.msra.mxu0 0.0
        %4457 = vmatprep.subr.mxu0 0.0
        %4458 = vmatpush1.msra.mxu0 0.0
        %4459 = vmatprep.subr.mxu0 0.0
        %4460 = vmatpush1.msra.mxu0 0.0
        %4461 = vmatprep.subr.mxu0 0.0
        %4462 = vmatpush1.msra.mxu0 0.0
        %4463 = vmatprep.subr.mxu0 0.0
        %4464 = vmatpush1.msra.mxu0 0.0
        %4465 = vmatprep.subr.mxu0 0.0
        %4466 = vmatpush1.msra.mxu0 0.0
        %4467 = vmatprep.subr.mxu0 0.0
        %4468 = vmatpush1.msra.mxu0 0.0
        %4469 = vmatprep.subr.mxu0 0.0
        %4470 = vmatpush1.msra.mxu0 0.0
        %4471 = vmatprep.subr.mxu0 0.0
        %4472 = vmatpush1.msra.mxu0 0.0
        %4473 = vmatprep.subr.mxu0 0.0
        %4474 = vmatpush1.msra.mxu0 0.0
        %4475 = vmatprep.subr.mxu0 0.0
        %4476 = vmatpush1.msra.mxu0 0.0
        %4477 = vmatprep.subr.mxu0 0.0
        %4478 = vmatpush1.msra.mxu0 0.0
        %4479 = vmatprep.subr.mxu0 0.0
        %4480 = vmatpush1.msra.mxu0 0.0
        %4481 = vmatprep.subr.mxu0 0.0
        %4482 = vmatpush1.msra.mxu0 0.0
        %4483 = vmatprep.subr.mxu0 0.0
        %4484 = vmatpush1.msra.mxu0 0.0
        %4485 = vmatprep.subr.mxu0 0.0
        %4486 = vmatpush1.msra.mxu0 0.0
        %4487 = vmatprep.subr.mxu0 0.0
        %4488 = vmatpush1.msra.mxu0 0.0
        %4489 = vmatprep.subr.mxu0 0.0
        %4490 = vmatpush1.msra.mxu0 0.0
        %4491 = vmatprep.subr.mxu0 0.0
        %4492 = vmatpush1.msra.mxu0 0.0
        %4493 = vmatprep.subr.mxu0 0.0
        %4494 = vmatpush1.msra.mxu0 0.0
        %4495 = vmatprep.subr.mxu0 0.0
        %4496 = vmatpush1.msra.mxu0 0.0
        %4497 = vmatprep.subr.mxu0 0.0
        %4498 = vmatpush1.msra.mxu0 0.0
        %4499 = vmatprep.subr.mxu0 0.0
        %4500 = vmatpush1.msra.mxu0 0.0
        %4501 = vmatprep.subr.mxu0 0.0
        %4502 = vmatpush1.msra.mxu0 0.0
        %4503 = vmatprep.subr.mxu0 0.0
        %4504 = vmatpush1.msra.mxu0 0.0
        %4505 = vmatprep.subr.mxu0 0.0
        %4506 = vmatpush1.msra.mxu0 0.0
        %4507 = vmatprep.subr.mxu0 0.0
        %4508 = vmatpush1.msra.mxu0 0.0
        %4509 = vmatprep.mubr.f32.mxu0 0.0
        %4510 = vmatmul.mubr.f32.gmra.mrb[0].mxu0 %v4277
        %v4511 = vpop.f32.mrb[0].mxu0
        %v4512 = vadd.f32 %v4443, %v4511
        %v4513 = vpop.f32.mrb[0].mxu0
        %4514 = vdwg.mxu0
        %v4516 = vsel %vm706, %v4346, 0
        %v4519 = vsel %vm706, %v4429, 0
        %4521 = vmatprep.subr.mxu0 0.0
        %4522 = vmatpush1.xpose.msra.mxu0 %v4519
        %4523 = vmatprep.subr.mxu0 0.0
        %4524 = vmatpush1.xpose.msra.mxu0 0.0
        %4525 = vmatprep.subr.mxu0 0.0
        %4526 = vmatpush1.xpose.msra.mxu0 0.0
        %4527 = vmatprep.subr.mxu0 0.0
        %4528 = vmatpush1.xpose.msra.mxu0 0.0
        %4529 = vmatprep.subr.mxu0 0.0
        %4530 = vmatpush1.xpose.msra.mxu0 0.0
        %4531 = vmatprep.subr.mxu0 0.0
        %4532 = vmatpush1.xpose.msra.mxu0 0.0
        %4533 = vmatprep.subr.mxu0 0.0
        %4534 = vmatpush1.xpose.msra.mxu0 0.0
        %4535 = vmatprep.subr.mxu0 0.0
        %4536 = vmatpush1.xpose.msra.mxu0 0.0
        %4537 = vmatprep.subr.mxu0 0.0
        %4538 = vmatpush1.xpose.msra.mxu0 0.0
        %4539 = vmatprep.subr.mxu0 0.0
        %4540 = vmatpush1.xpose.msra.mxu0 0.0
        %4541 = vmatprep.subr.mxu0 0.0
        %4542 = vmatpush1.xpose.msra.mxu0 0.0
        %4543 = vmatprep.subr.mxu0 0.0
        %4544 = vmatpush1.xpose.msra.mxu0 0.0
        %4545 = vmatprep.subr.mxu0 0.0
        %4546 = vmatpush1.xpose.msra.mxu0 0.0
        %4547 = vmatprep.subr.mxu0 0.0
        %4548 = vmatpush1.xpose.msra.mxu0 0.0
        %4549 = vmatprep.subr.mxu0 0.0
        %4550 = vmatpush1.xpose.msra.mxu0 0.0
        %4551 = vmatprep.subr.mxu0 0.0
        %4552 = vmatpush1.xpose.msra.mxu0 0.0
        %4553 = vmatprep.subr.mxu0 0.0
        %4554 = vmatpush1.xpose.msra.mxu0 0.0
        %4555 = vmatprep.subr.mxu0 0.0
        %4556 = vmatpush1.xpose.msra.mxu0 0.0
        %4557 = vmatprep.subr.mxu0 0.0
        %4558 = vmatpush1.xpose.msra.mxu0 0.0
        %4559 = vmatprep.subr.mxu0 0.0
        %4560 = vmatpush1.xpose.msra.mxu0 0.0
        %4561 = vmatprep.subr.mxu0 0.0
        %4562 = vmatpush1.xpose.msra.mxu0 0.0
        %4563 = vmatprep.subr.mxu0 0.0
        %4564 = vmatpush1.xpose.msra.mxu0 0.0
        %4565 = vmatprep.subr.mxu0 0.0
        %4566 = vmatpush1.xpose.msra.mxu0 0.0
        %4567 = vmatprep.subr.mxu0 0.0
        %4568 = vmatpush1.xpose.msra.mxu0 0.0
        %4569 = vmatprep.subr.mxu0 0.0
        %4570 = vmatpush1.xpose.msra.mxu0 0.0
        %4571 = vmatprep.subr.mxu0 0.0
        %4572 = vmatpush1.xpose.msra.mxu0 0.0
        %4573 = vmatprep.subr.mxu0 0.0
        %4574 = vmatpush1.xpose.msra.mxu0 0.0
        %4575 = vmatprep.subr.mxu0 0.0
        %4576 = vmatpush1.xpose.msra.mxu0 0.0
        %4577 = vmatprep.subr.mxu0 0.0
        %4578 = vmatpush1.xpose.msra.mxu0 0.0
        %4579 = vmatprep.subr.mxu0 0.0
        %4580 = vmatpush1.xpose.msra.mxu0 0.0
        %4581 = vmatprep.subr.mxu0 0.0
        %4582 = vmatpush1.xpose.msra.mxu0 0.0
        %4583 = vmatprep.subr.mxu0 0.0
        %4584 = vmatpush1.xpose.msra.mxu0 0.0
        %4585 = vmatprep.mubr.f32.mxu0 0.0
        %4586 = vmatmul.mubr.f32.gmra.mrb[0].mxu0 %v4516
        %v4587 = vpop.f32.mrb[0].mxu0
        %v4588 = vadd.f32 0.0, %v4587
        %v4589 = vpop.f32.mrb[0].mxu0
        %4590 = vdwg.mxu0
        %v4591 = vmul.f32 %v4588, 0.35355338
        %v4592 = vadd.f32 %v4591, %v408
        %v4593 = vsel %vm706, %v4592, -inf
        %4594 = vmax.xlane.f32.xlu0 %v4593
        %v4595 = vpop.xlane.xlu0 %4594
        %v4596 = vsub.f32 %v4592, %v4595
        %v4597 = vmul.f32 %v4596, 1.442695
        %v4598 = vpow.pop %v4597
        %v4599 = vsel %vm706, %v4598, 0.0
        %4600 = vadd.xlane.f32.xlu0 %v4599
        %v4601 = vpop.xlane.xlu0 %4600
        %v4602 = vrcp.pop %v4601
        %v4603 = vmul.f32 %v4598, %v4602
        %v4604 = vsel %vm407, %v4603, 0.0
        %v4606 = vsel %vm706, %v4604, 0
        %4608 = vmatprep.subr.mxu0 0.0
        %4609 = vmatpush1.msra.mxu0 %v4512
        %4610 = vmatprep.subr.mxu0 0.0
        %4611 = vmatpush1.msra.mxu0 0.0
        %4612 = vmatprep.subr.mxu0 0.0
        %4613 = vmatpush1.msra.mxu0 0.0
        %4614 = vmatprep.subr.mxu0 0.0
        %4615 = vmatpush1.msra.mxu0 0.0
        %4616 = vmatprep.subr.mxu0 0.0
        %4617 = vmatpush1.msra.mxu0 0.0
        %4618 = vmatprep.subr.mxu0 0.0
        %4619 = vmatpush1.msra.mxu0 0.0
        %4620 = vmatprep.subr.mxu0 0.0
        %4621 = vmatpush1.msra.mxu0 0.0
        %4622 = vmatprep.subr.mxu0 0.0
        %4623 = vmatpush1.msra.mxu0 0.0
        %4624 = vmatprep.subr.mxu0 0.0
        %4625 = vmatpush1.msra.mxu0 0.0
        %4626 = vmatprep.subr.mxu0 0.0
        %4627 = vmatpush1.msra.mxu0 0.0
        %4628 = vmatprep.subr.mxu0 0.0
        %4629 = vmatpush1.msra.mxu0 0.0
        %4630 = vmatprep.subr.mxu0 0.0
        %4631 = vmatpush1.msra.mxu0 0.0
        %4632 = vmatprep.subr.mxu0 0.0
        %4633 = vmatpush1.msra.mxu0 0.0
        %4634 = vmatprep.subr.mxu0 0.0
        %4635 = vmatpush1.msra.mxu0 0.0
        %4636 = vmatprep.subr.mxu0 0.0
        %4637 = vmatpush1.msra.mxu0 0.0
        %4638 = vmatprep.subr.mxu0 0.0
        %4639 = vmatpush1.msra.mxu0 0.0
        %4640 = vmatprep.subr.mxu0 0.0
        %4641 = vmatpush1.msra.mxu0 0.0
        %4642 = vmatprep.subr.mxu0 0.0
        %4643 = vmatpush1.msra.mxu0 0.0
        %4644 = vmatprep.subr.mxu0 0.0
        %4645 = vmatpush1.msra.mxu0 0.0
        %4646 = vmatprep.subr.mxu0 0.0
        %4647 = vmatpush1.msra.mxu0 0.0
        %4648 = vmatprep.subr.mxu0 0.0
        %4649 = vmatpush1.msra.mxu0 0.0
        %4650 = vmatprep.subr.mxu0 0.0
        %4651 = vmatpush1.msra.mxu0 0.0
        %4652 = vmatprep.subr.mxu0 0.0
        %4653 = vmatpush1.msra.mxu0 0.0
        %4654 = vmatprep.subr.mxu0 0.0
        %4655 = vmatpush1.msra.mxu0 0.0
        %4656 = vmatprep.subr.mxu0 0.0
        %4657 = vmatpush1.msra.mxu0 0.0
        %4658 = vmatprep.subr.mxu0 0.0
        %4659 = vmatpush1.msra.mxu0 0.0
        %4660 = vmatprep.subr.mxu0 0.0
        %4661 = vmatpush1.msra.mxu0 0.0
        %4662 = vmatprep.subr.mxu0 0.0
        %4663 = vmatpush1.msra.mxu0 0.0
        %4664 = vmatprep.subr.mxu0 0.0
        %4665 = vmatpush1.msra.mxu0 0.0
        %4666 = vmatprep.subr.mxu0 0.0
        %4667 = vmatpush1.msra.mxu0 0.0
        %4668 = vmatprep.subr.mxu0 0.0
        %4669 = vmatpush1.msra.mxu0 0.0
        %4670 = vmatprep.subr.mxu0 0.0
        %4671 = vmatpush1.msra.mxu0 0.0
        %4672 = vmatprep.mubr.f32.mxu0 0.0
        %4673 = vmatmul.mubr.f32.gmra.mrb[0].mxu0 %v4606
        %v4674 = vpop.f32.mrb[0].mxu0
        %v4675 = vadd.f32 0.0, %v4674
        %v4676 = vpop.f32.mrb[0].mxu0
        %4677 = vdwg.mxu0
        %s4678 = scalar_lea.vmem %s4, 800
        %v4679 = vld [vmem:[%s4678] sm:$0xff]
        %v4680 = vld [vmem:[%s4678 + $0x8] sm:$0xff]
        %v4681 = vld [vmem:[%s4678 + $0x10] sm:$0xff]
        %v4682 = vld [vmem:[%s4678 + $0x18] sm:$0xff]
        %s4683 = scalar_lea.vmem %s5, 25
        %v4684 = vld [vmem:[%s4683] sm:$0x1]
        %v4686 = vlaneseq
        %v4687 = vshrl.u32 %v4686, 7
        %v4688 = vsub.s32 0, %v4687
        %v4689 = vrot.slane %v4684, %v4688
        %4691 = vmatprep.subr.mxu0 0.0
        %4692 = vmatpush1.msra.mxu0 %v4679
        %4693 = vmatprep.subr.mxu0 0.0
        %4694 = vmatpush1.msra.mxu0 %v4680
        %4695 = vmatprep.subr.mxu0 0.0
        %4696 = vmatpush1.msra.mxu0 %v4681
        %4697 = vmatprep.subr.mxu0 0.0
        %4698 = vmatpush1.msra.mxu0 %v4682
        %4699 = vmatprep.subr.mxu0 0.0
        %4700 = vmatpush1.msra.mxu0 0.0
        %4701 = vmatprep.subr.mxu0 0.0
        %4702 = vmatpush1.msra.mxu0 0.0
        %4703 = vmatprep.subr.mxu0 0.0
        %4704 = vmatpush1.msra.mxu0 0.0
        %4705 = vmatprep.subr.mxu0 0.0
        %4706 = vmatpush1.msra.mxu0 0.0
        %4707 = vmatprep.subr.mxu0 0.0
        %4708 = vmatpush1.msra.mxu0 0.0
        %4709 = vmatprep.subr.mxu0 0.0
        %4710 = vmatpush1.msra.mxu0 0.0
        %4711 = vmatprep.subr.mxu0 0.0
        %4712 = vmatpush1.msra.mxu0 0.0
        %4713 = vmatprep.subr.mxu0 0.0
        %4714 = vmatpush1.msra.mxu0 0.0
        %4715 = vmatprep.subr.mxu0 0.0
        %4716 = vmatpush1.msra.mxu0 0.0
        %4717 = vmatprep.subr.mxu0 0.0
        %4718 = vmatpush1.msra.mxu0 0.0
        %4719 = vmatprep.subr.mxu0 0.0
        %4720 = vmatpush1.msra.mxu0 0.0
        %4721 = vmatprep.subr.mxu0 0.0
        %4722 = vmatpush1.msra.mxu0 0.0
        %4723 = vmatprep.subr.mxu0 0.0
        %4724 = vmatpush1.msra.mxu0 0.0
        %4725 = vmatprep.subr.mxu0 0.0
        %4726 = vmatpush1.msra.mxu0 0.0
        %4727 = vmatprep.subr.mxu0 0.0
        %4728 = vmatpush1.msra.mxu0 0.0
        %4729 = vmatprep.subr.mxu0 0.0
        %4730 = vmatpush1.msra.mxu0 0.0
        %4731 = vmatprep.subr.mxu0 0.0
        %4732 = vmatpush1.msra.mxu0 0.0
        %4733 = vmatprep.subr.mxu0 0.0
        %4734 = vmatpush1.msra.mxu0 0.0
        %4735 = vmatprep.subr.mxu0 0.0
        %4736 = vmatpush1.msra.mxu0 0.0
        %4737 = vmatprep.subr.mxu0 0.0
        %4738 = vmatpush1.msra.mxu0 0.0
        %4739 = vmatprep.subr.mxu0 0.0
        %4740 = vmatpush1.msra.mxu0 0.0
        %4741 = vmatprep.subr.mxu0 0.0
        %4742 = vmatpush1.msra.mxu0 0.0
        %4743 = vmatprep.subr.mxu0 0.0
        %4744 = vmatpush1.msra.mxu0 0.0
        %4745 = vmatprep.subr.mxu0 0.0
        %4746 = vmatpush1.msra.mxu0 0.0
        %4747 = vmatprep.subr.mxu0 0.0
        %4748 = vmatpush1.msra.mxu0 0.0
        %4749 = vmatprep.subr.mxu0 0.0
        %4750 = vmatpush1.msra.mxu0 0.0
        %4751 = vmatprep.subr.mxu0 0.0
        %4752 = vmatpush1.msra.mxu0 0.0
        %4753 = vmatprep.subr.mxu0 0.0
        %4754 = vmatpush1.msra.mxu0 0.0
        %4755 = vmatprep.mubr.f32.mxu0 0.0
        %4756 = vmatmul.mubr.f32.gmra.mrb[0].mxu0 %v4277
        %v4757 = vpop.f32.mrb[0].mxu0
        %v4758 = vadd.f32 %v4689, %v4757
        %v4759 = vpop.f32.mrb[0].mxu0
        %4760 = vdwg.mxu0
        %s4761 = scalar_lea.vmem %s4, 928
        %v4762 = vld [vmem:[%s4761] sm:$0xff]
        %v4763 = vld [vmem:[%s4761 + $0x8] sm:$0xff]
        %v4764 = vld [vmem:[%s4761 + $0x10] sm:$0xff]
        %v4765 = vld [vmem:[%s4761 + $0x18] sm:$0xff]
        %s4766 = scalar_lea.vmem %s5, 29
        %v4767 = vld [vmem:[%s4766] sm:$0x1]
        %v4769 = vlaneseq
        %v4770 = vshrl.u32 %v4769, 7
        %v4771 = vsub.s32 0, %v4770
        %v4772 = vrot.slane %v4767, %v4771
        %4774 = vmatprep.subr.mxu0 0.0
        %4775 = vmatpush1.msra.mxu0 %v4762
        %4776 = vmatprep.subr.mxu0 0.0
        %4777 = vmatpush1.msra.mxu0 %v4763
        %4778 = vmatprep.subr.mxu0 0.0
        %4779 = vmatpush1.msra.mxu0 %v4764
        %4780 = vmatprep.subr.mxu0 0.0
        %4781 = vmatpush1.msra.mxu0 %v4765
        %4782 = vmatprep.subr.mxu0 0.0
        %4783 = vmatpush1.msra.mxu0 0.0
        %4784 = vmatprep.subr.mxu0 0.0
        %4785 = vmatpush1.msra.mxu0 0.0
        %4786 = vmatprep.subr.mxu0 0.0
        %4787 = vmatpush1.msra.mxu0 0.0
        %4788 = vmatprep.subr.mxu0 0.0
        %4789 = vmatpush1.msra.mxu0 0.0
        %4790 = vmatprep.subr.mxu0 0.0
        %4791 = vmatpush1.msra.mxu0 0.0
        %4792 = vmatprep.subr.mxu0 0.0
        %4793 = vmatpush1.msra.mxu0 0.0
        %4794 = vmatprep.subr.mxu0 0.0
        %4795 = vmatpush1.msra.mxu0 0.0
        %4796 = vmatprep.subr.mxu0 0.0
        %4797 = vmatpush1.msra.mxu0 0.0
        %4798 = vmatprep.subr.mxu0 0.0
        %4799 = vmatpush1.msra.mxu0 0.0
        %4800 = vmatprep.subr.mxu0 0.0
        %4801 = vmatpush1.msra.mxu0 0.0
        %4802 = vmatprep.subr.mxu0 0.0
        %4803 = vmatpush1.msra.mxu0 0.0
        %4804 = vmatprep.subr.mxu0 0.0
        %4805 = vmatpush1.msra.mxu0 0.0
        %4806 = vmatprep.subr.mxu0 0.0
        %4807 = vmatpush1.msra.mxu0 0.0
        %4808 = vmatprep.subr.mxu0 0.0
        %4809 = vmatpush1.msra.mxu0 0.0
        %4810 = vmatprep.subr.mxu0 0.0
        %4811 = vmatpush1.msra.mxu0 0.0
        %4812 = vmatprep.subr.mxu0 0.0
        %4813 = vmatpush1.msra.mxu0 0.0
        %4814 = vmatprep.subr.mxu0 0.0
        %4815 = vmatpush1.msra.mxu0 0.0
        %4816 = vmatprep.subr.mxu0 0.0
        %4817 = vmatpush1.msra.mxu0 0.0
        %4818 = vmatprep.subr.mxu0 0.0
        %4819 = vmatpush1.msra.mxu0 0.0
        %4820 = vmatprep.subr.mxu0 0.0
        %4821 = vmatpush1.msra.mxu0 0.0
        %4822 = vmatprep.subr.mxu0 0.0
        %4823 = vmatpush1.msra.mxu0 0.0
        %4824 = vmatprep.subr.mxu0 0.0
        %4825 = vmatpush1.msra.mxu0 0.0
        %4826 = vmatprep.subr.mxu0 0.0
        %4827 = vmatpush1.msra.mxu0 0.0
        %4828 = vmatprep.subr.mxu0 0.0
        %4829 = vmatpush1.msra.mxu0 0.0
        %4830 = vmatprep.subr.mxu0 0.0
        %4831 = vmatpush1.msra.mxu0 0.0
        %4832 = vmatprep.subr.mxu0 0.0
        %4833 = vmatpush1.msra.mxu0 0.0
        %4834 = vmatprep.subr.mxu0 0.0
        %4835 = vmatpush1.msra.mxu0 0.0
        %4836 = vmatprep.subr.mxu0 0.0
        %4837 = vmatpush1.msra.mxu0 0.0
        %4838 = vmatprep.mubr.f32.mxu0 0.0
        %4839 = vmatmul.mubr.f32.gmra.mrb[0].mxu0 %v4277
        %v4840 = vpop.f32.mrb[0].mxu0
        %v4841 = vadd.f32 %v4772, %v4840
        %v4842 = vpop.f32.mrb[0].mxu0
        %4843 = vdwg.mxu0
        %s4844 = scalar_lea.vmem %s4, 1056
        %v4845 = vld [vmem:[%s4844] sm:$0xff]
        %v4846 = vld [vmem:[%s4844 + $0x8] sm:$0xff]
        %v4847 = vld [vmem:[%s4844 + $0x10] sm:$0xff]
        %v4848 = vld [vmem:[%s4844 + $0x18] sm:$0xff]
        %s4849 = scalar_lea.vmem %s5, 33
        %v4850 = vld [vmem:[%s4849] sm:$0x1]
        %v4852 = vlaneseq
        %v4853 = vshrl.u32 %v4852, 7
        %v4854 = vsub.s32 0, %v4853
        %v4855 = vrot.slane %v4850, %v4854
        %4857 = vmatprep.subr.mxu0 0.0
        %4858 = vmatpush1.msra.mxu0 %v4845
        %4859 = vmatprep.subr.mxu0 0.0
        %4860 = vmatpush1.msra.mxu0 %v4846
        %4861 = vmatprep.subr.mxu0 0.0
        %4862 = vmatpush1.msra.mxu0 %v4847
        %4863 = vmatprep.subr.mxu0 0.0
        %4864 = vmatpush1.msra.mxu0 %v4848
        %4865 = vmatprep.subr.mxu0 0.0
        %4866 = vmatpush1.msra.mxu0 0.0
        %4867 = vmatprep.subr.mxu0 0.0
        %4868 = vmatpush1.msra.mxu0 0.0
        %4869 = vmatprep.subr.mxu0 0.0
        %4870 = vmatpush1.msra.mxu0 0.0
        %4871 = vmatprep.subr.mxu0 0.0
        %4872 = vmatpush1.msra.mxu0 0.0
        %4873 = vmatprep.subr.mxu0 0.0
        %4874 = vmatpush1.msra.mxu0 0.0
        %4875 = vmatprep.subr.mxu0 0.0
        %4876 = vmatpush1.msra.mxu0 0.0
        %4877 = vmatprep.subr.mxu0 0.0
        %4878 = vmatpush1.msra.mxu0 0.0
        %4879 = vmatprep.subr.mxu0 0.0
        %4880 = vmatpush1.msra.mxu0 0.0
        %4881 = vmatprep.subr.mxu0 0.0
        %4882 = vmatpush1.msra.mxu0 0.0
        %4883 = vmatprep.subr.mxu0 0.0
        %4884 = vmatpush1.msra.mxu0 0.0
        %4885 = vmatprep.subr.mxu0 0.0
        %4886 = vmatpush1.msra.mxu0 0.0
        %4887 = vmatprep.subr.mxu0 0.0
        %4888 = vmatpush1.msra.mxu0 0.0
        %4889 = vmatprep.subr.mxu0 0.0
        %4890 = vmatpush1.msra.mxu0 0.0
        %4891 = vmatprep.subr.mxu0 0.0
        %4892 = vmatpush1.msra.mxu0 0.0
        %4893 = vmatprep.subr.mxu0 0.0
        %4894 = vmatpush1.msra.mxu0 0.0
        %4895 = vmatprep.subr.mxu0 0.0
        %4896 = vmatpush1.msra.mxu0 0.0
        %4897 = vmatprep.subr.mxu0 0.0
        %4898 = vmatpush1.msra.mxu0 0.0
        %4899 = vmatprep.subr.mxu0 0.0
        %4900 = vmatpush1.msra.mxu0 0.0
        %4901 = vmatprep.subr.mxu0 0.0
        %4902 = vmatpush1.msra.mxu0 0.0
        %4903 = vmatprep.subr.mxu0 0.0
        %4904 = vmatpush1.msra.mxu0 0.0
        %4905 = vmatprep.subr.mxu0 0.0
        %4906 = vmatpush1.msra.mxu0 0.0
        %4907 = vmatprep.subr.mxu0 0.0
        %4908 = vmatpush1.msra.mxu0 0.0
        %4909 = vmatprep.subr.mxu0 0.0
        %4910 = vmatpush1.msra.mxu0 0.0
        %4911 = vmatprep.subr.mxu0 0.0
        %4912 = vmatpush1.msra.mxu0 0.0
        %4913 = vmatprep.subr.mxu0 0.0
        %4914 = vmatpush1.msra.mxu0 0.0
        %4915 = vmatprep.subr.mxu0 0.0
        %4916 = vmatpush1.msra.mxu0 0.0
        %4917 = vmatprep.subr.mxu0 0.0
        %4918 = vmatpush1.msra.mxu0 0.0
        %4919 = vmatprep.subr.mxu0 0.0
        %4920 = vmatpush1.msra.mxu0 0.0
        %4921 = vmatprep.mubr.f32.mxu0 0.0
        %4922 = vmatmul.mubr.f32.gmra.mrb[0].mxu0 %v4277
        %v4923 = vpop.f32.mrb[0].mxu0
        %v4924 = vadd.f32 %v4855, %v4923
        %v4925 = vpop.f32.mrb[0].mxu0
        %4926 = vdwg.mxu0
        %v4928 = vsel %vm706, %v4758, 0
        %v4931 = vsel %vm706, %v4841, 0
        %4933 = vmatprep.subr.mxu0 0.0
        %4934 = vmatpush1.xpose.msra.mxu0 %v4931
        %4935 = vmatprep.subr.mxu0 0.0
        %4936 = vmatpush1.xpose.msra.mxu0 0.0
        %4937 = vmatprep.subr.mxu0 0.0
        %4938 = vmatpush1.xpose.msra.mxu0 0.0
        %4939 = vmatprep.subr.mxu0 0.0
        %4940 = vmatpush1.xpose.msra.mxu0 0.0
        %4941 = vmatprep.subr.mxu0 0.0
        %4942 = vmatpush1.xpose.msra.mxu0 0.0
        %4943 = vmatprep.subr.mxu0 0.0
        %4944 = vmatpush1.xpose.msra.mxu0 0.0
        %4945 = vmatprep.subr.mxu0 0.0
        %4946 = vmatpush1.xpose.msra.mxu0 0.0
        %4947 = vmatprep.subr.mxu0 0.0
        %4948 = vmatpush1.xpose.msra.mxu0 0.0
        %4949 = vmatprep.subr.mxu0 0.0
        %4950 = vmatpush1.xpose.msra.mxu0 0.0
        %4951 = vmatprep.subr.mxu0 0.0
        %4952 = vmatpush1.xpose.msra.mxu0 0.0
        %4953 = vmatprep.subr.mxu0 0.0
        %4954 = vmatpush1.xpose.msra.mxu0 0.0
        %4955 = vmatprep.subr.mxu0 0.0
        %4956 = vmatpush1.xpose.msra.mxu0 0.0
        %4957 = vmatprep.subr.mxu0 0.0
        %4958 = vmatpush1.xpose.msra.mxu0 0.0
        %4959 = vmatprep.subr.mxu0 0.0
        %4960 = vmatpush1.xpose.msra.mxu0 0.0
        %4961 = vmatprep.subr.mxu0 0.0
        %4962 = vmatpush1.xpose.msra.mxu0 0.0
        %4963 = vmatprep.subr.mxu0 0.0
        %4964 = vmatpush1.xpose.msra.mxu0 0.0
        %4965 = vmatprep.subr.mxu0 0.0
        %4966 = vmatpush1.xpose.msra.mxu0 0.0
        %4967 = vmatprep.subr.mxu0 0.0
        %4968 = vmatpush1.xpose.msra.mxu0 0.0
        %4969 = vmatprep.subr.mxu0 0.0
        %4970 = vmatpush1.xpose.msra.mxu0 0.0
        %4971 = vmatprep.subr.mxu0 0.0
        %4972 = vmatpush1.xpose.msra.mxu0 0.0
        %4973 = vmatprep.subr.mxu0 0.0
        %4974 = vmatpush1.xpose.msra.mxu0 0.0
        %4975 = vmatprep.subr.mxu0 0.0
        %4976 = vmatpush1.xpose.msra.mxu0 0.0
        %4977 = vmatprep.subr.mxu0 0.0
        %4978 = vmatpush1.xpose.msra.mxu0 0.0
        %4979 = vmatprep.subr.mxu0 0.0
        %4980 = vmatpush1.xpose.msra.mxu0 0.0
        %4981 = vmatprep.subr.mxu0 0.0
        %4982 = vmatpush1.xpose.msra.mxu0 0.0
        %4983 = vmatprep.subr.mxu0 0.0
        %4984 = vmatpush1.xpose.msra.mxu0 0.0
        %4985 = vmatprep.subr.mxu0 0.0
        %4986 = vmatpush1.xpose.msra.mxu0 0.0
        %4987 = vmatprep.subr.mxu0 0.0
        %4988 = vmatpush1.xpose.msra.mxu0 0.0
        %4989 = vmatprep.subr.mxu0 0.0
        %4990 = vmatpush1.xpose.msra.mxu0 0.0
        %4991 = vmatprep.subr.mxu0 0.0
        %4992 = vmatpush1.xpose.msra.mxu0 0.0
        %4993 = vmatprep.subr.mxu0 0.0
        %4994 = vmatpush1.xpose.msra.mxu0 0.0
        %4995 = vmatprep.subr.mxu0 0.0
        %4996 = vmatpush1.xpose.msra.mxu0 0.0
        %4997 = vmatprep.mubr.f32.mxu0 0.0
        %4998 = vmatmul.mubr.f32.gmra.mrb[0].mxu0 %v4928
        %v4999 = vpop.f32.mrb[0].mxu0
        %v5000 = vadd.f32 0.0, %v4999
        %v5001 = vpop.f32.mrb[0].mxu0
        %5002 = vdwg.mxu0
        %v5003 = vmul.f32 %v5000, 0.35355338
        %v5004 = vadd.f32 %v5003, %v408
        %v5005 = vsel %vm706, %v5004, -inf
        %5006 = vmax.xlane.f32.xlu0 %v5005
        %v5007 = vpop.xlane.xlu0 %5006
        %v5008 = vsub.f32 %v5004, %v5007
        %v5009 = vmul.f32 %v5008, 1.442695
        %v5010 = vpow.pop %v5009
        %v5011 = vsel %vm706, %v5010, 0.0
        %5012 = vadd.xlane.f32.xlu0 %v5011
        %v5013 = vpop.xlane.xlu0 %5012
        %v5014 = vrcp.pop %v5013
        %v5015 = vmul.f32 %v5010, %v5014
        %v5016 = vsel %vm407, %v5015, 0.0
        %v5018 = vsel %vm706, %v5016, 0
        %5020 = vmatprep.subr.mxu0 0.0
        %5021 = vmatpush1.msra.mxu0 %v4924
        %5022 = vmatprep.subr.mxu0 0.0
        %5023 = vmatpush1.msra.mxu0 0.0
        %5024 = vmatprep.subr.mxu0 0.0
        %5025 = vmatpush1.msra.mxu0 0.0
        %5026 = vmatprep.subr.mxu0 0.0
        %5027 = vmatpush1.msra.mxu0 0.0
        %5028 = vmatprep.subr.mxu0 0.0
        %5029 = vmatpush1.msra.mxu0 0.0
        %5030 = vmatprep.subr.mxu0 0.0
        %5031 = vmatpush1.msra.mxu0 0.0
        %5032 = vmatprep.subr.mxu0 0.0
        %5033 = vmatpush1.msra.mxu0 0.0
        %5034 = vmatprep.subr.mxu0 0.0
        %5035 = vmatpush1.msra.mxu0 0.0
        %5036 = vmatprep.subr.mxu0 0.0
        %5037 = vmatpush1.msra.mxu0 0.0
        %5038 = vmatprep.subr.mxu0 0.0
        %5039 = vmatpush1.msra.mxu0 0.0
        %5040 = vmatprep.subr.mxu0 0.0
        %5041 = vmatpush1.msra.mxu0 0.0
        %5042 = vmatprep.subr.mxu0 0.0
        %5043 = vmatpush1.msra.mxu0 0.0
        %5044 = vmatprep.subr.mxu0 0.0
        %5045 = vmatpush1.msra.mxu0 0.0
        %5046 = vmatprep.subr.mxu0 0.0
        %5047 = vmatpush1.msra.mxu0 0.0
        %5048 = vmatprep.subr.mxu0 0.0
        %5049 = vmatpush1.msra.mxu0 0.0
        %5050 = vmatprep.subr.mxu0 0.0
        %5051 = vmatpush1.msra.mxu0 0.0
        %5052 = vmatprep.subr.mxu0 0.0
        %5053 = vmatpush1.msra.mxu0 0.0
        %5054 = vmatprep.subr.mxu0 0.0
        %5055 = vmatpush1.msra.mxu0 0.0
        %5056 = vmatprep.subr.mxu0 0.0
        %5057 = vmatpush1.msra.mxu0 0.0
        %5058 = vmatprep.subr.mxu0 0.0
        %5059 = vmatpush1.msra.mxu0 0.0
        %5060 = vmatprep.subr.mxu0 0.0
        %5061 = vmatpush1.msra.mxu0 0.0
        %5062 = vmatprep.subr.mxu0 0.0
        %5063 = vmatpush1.msra.mxu0 0.0
        %5064 = vmatprep.subr.mxu0 0.0
        %5065 = vmatpush1.msra.mxu0 0.0
        %5066 = vmatprep.subr.mxu0 0.0
        %5067 = vmatpush1.msra.mxu0 0.0
        %5068 = vmatprep.subr.mxu0 0.0
        %5069 = vmatpush1.msra.mxu0 0.0
        %5070 = vmatprep.subr.mxu0 0.0
        %5071 = vmatpush1.msra.mxu0 0.0
        %5072 = vmatprep.subr.mxu0 0.0
        %5073 = vmatpush1.msra.mxu0 0.0
        %5074 = vmatprep.subr.mxu0 0.0
        %5075 = vmatpush1.msra.mxu0 0.0
        %5076 = vmatprep.subr.mxu0 0.0
        %5077 = vmatpush1.msra.mxu0 0.0
        %5078 = vmatprep.subr.mxu0 0.0
        %5079 = vmatpush1.msra.mxu0 0.0
        %5080 = vmatprep.subr.mxu0 0.0
        %5081 = vmatpush1.msra.mxu0 0.0
        %5082 = vmatprep.subr.mxu0 0.0
        %5083 = vmatpush1.msra.mxu0 0.0
        %5084 = vmatprep.mubr.f32.mxu0 0.0
        %5085 = vmatmul.mubr.f32.gmra.mrb[0].mxu0 %v5018
        %v5086 = vpop.f32.mrb[0].mxu0
        %v5087 = vadd.f32 0.0, %v5086
        %v5088 = vpop.f32.mrb[0].mxu0
        %5089 = vdwg.mxu0
        %s5090 = scalar_lea.vmem %s4, 832
        %v5091 = vld [vmem:[%s5090] sm:$0xff]
        %v5092 = vld [vmem:[%s5090 + $0x8] sm:$0xff]
        %v5093 = vld [vmem:[%s5090 + $0x10] sm:$0xff]
        %v5094 = vld [vmem:[%s5090 + $0x18] sm:$0xff]
        %s5095 = scalar_lea.vmem %s5, 26
        %v5096 = vld [vmem:[%s5095] sm:$0x1]
        %v5098 = vlaneseq
        %v5099 = vshrl.u32 %v5098, 7
        %v5100 = vsub.s32 0, %v5099
        %v5101 = vrot.slane %v5096, %v5100
        %5103 = vmatprep.subr.mxu0 0.0
        %5104 = vmatpush1.msra.mxu0 %v5091
        %5105 = vmatprep.subr.mxu0 0.0
        %5106 = vmatpush1.msra.mxu0 %v5092
        %5107 = vmatprep.subr.mxu0 0.0
        %5108 = vmatpush1.msra.mxu0 %v5093
        %5109 = vmatprep.subr.mxu0 0.0
        %5110 = vmatpush1.msra.mxu0 %v5094
        %5111 = vmatprep.subr.mxu0 0.0
        %5112 = vmatpush1.msra.mxu0 0.0
        %5113 = vmatprep.subr.mxu0 0.0
        %5114 = vmatpush1.msra.mxu0 0.0
        %5115 = vmatprep.subr.mxu0 0.0
        %5116 = vmatpush1.msra.mxu0 0.0
        %5117 = vmatprep.subr.mxu0 0.0
        %5118 = vmatpush1.msra.mxu0 0.0
        %5119 = vmatprep.subr.mxu0 0.0
        %5120 = vmatpush1.msra.mxu0 0.0
        %5121 = vmatprep.subr.mxu0 0.0
        %5122 = vmatpush1.msra.mxu0 0.0
        %5123 = vmatprep.subr.mxu0 0.0
        %5124 = vmatpush1.msra.mxu0 0.0
        %5125 = vmatprep.subr.mxu0 0.0
        %5126 = vmatpush1.msra.mxu0 0.0
        %5127 = vmatprep.subr.mxu0 0.0
        %5128 = vmatpush1.msra.mxu0 0.0
        %5129 = vmatprep.subr.mxu0 0.0
        %5130 = vmatpush1.msra.mxu0 0.0
        %5131 = vmatprep.subr.mxu0 0.0
        %5132 = vmatpush1.msra.mxu0 0.0
        %5133 = vmatprep.subr.mxu0 0.0
        %5134 = vmatpush1.msra.mxu0 0.0
        %5135 = vmatprep.subr.mxu0 0.0
        %5136 = vmatpush1.msra.mxu0 0.0
        %5137 = vmatprep.subr.mxu0 0.0
        %5138 = vmatpush1.msra.mxu0 0.0
        %5139 = vmatprep.subr.mxu0 0.0
        %5140 = vmatpush1.msra.mxu0 0.0
        %5141 = vmatprep.subr.mxu0 0.0
        %5142 = vmatpush1.msra.mxu0 0.0
        %5143 = vmatprep.subr.mxu0 0.0
        %5144 = vmatpush1.msra.mxu0 0.0
        %5145 = vmatprep.subr.mxu0 0.0
        %5146 = vmatpush1.msra.mxu0 0.0
        %5147 = vmatprep.subr.mxu0 0.0
        %5148 = vmatpush1.msra.mxu0 0.0
        %5149 = vmatprep.subr.mxu0 0.0
        %5150 = vmatpush1.msra.mxu0 0.0
        %5151 = vmatprep.subr.mxu0 0.0
        %5152 = vmatpush1.msra.mxu0 0.0
        %5153 = vmatprep.subr.mxu0 0.0
        %5154 = vmatpush1.msra.mxu0 0.0
        %5155 = vmatprep.subr.mxu0 0.0
        %5156 = vmatpush1.msra.mxu0 0.0
        %5157 = vmatprep.subr.mxu0 0.0
        %5158 = vmatpush1.msra.mxu0 0.0
        %5159 = vmatprep.subr.mxu0 0.0
        %5160 = vmatpush1.msra.mxu0 0.0
        %5161 = vmatprep.subr.mxu0 0.0
        %5162 = vmatpush1.msra.mxu0 0.0
        %5163 = vmatprep.subr.mxu0 0.0
        %5164 = vmatpush1.msra.mxu0 0.0
        %5165 = vmatprep.subr.mxu0 0.0
        %5166 = vmatpush1.msra.mxu0 0.0
        %5167 = vmatprep.mubr.f32.mxu0 0.0
        %5168 = vmatmul.mubr.f32.gmra.mrb[0].mxu0 %v4277
        %v5169 = vpop.f32.mrb[0].mxu0
        %v5170 = vadd.f32 %v5101, %v5169
        %v5171 = vpop.f32.mrb[0].mxu0
        %5172 = vdwg.mxu0
        %s5173 = scalar_lea.vmem %s4, 960
        %v5174 = vld [vmem:[%s5173] sm:$0xff]
        %v5175 = vld [vmem:[%s5173 + $0x8] sm:$0xff]
        %v5176 = vld [vmem:[%s5173 + $0x10] sm:$0xff]
        %v5177 = vld [vmem:[%s5173 + $0x18] sm:$0xff]
        %s5178 = scalar_lea.vmem %s5, 30
        %v5179 = vld [vmem:[%s5178] sm:$0x1]
        %v5181 = vlaneseq
        %v5182 = vshrl.u32 %v5181, 7
        %v5183 = vsub.s32 0, %v5182
        %v5184 = vrot.slane %v5179, %v5183
        %5186 = vmatprep.subr.mxu0 0.0
        %5187 = vmatpush1.msra.mxu0 %v5174
        %5188 = vmatprep.subr.mxu0 0.0
        %5189 = vmatpush1.msra.mxu0 %v5175
        %5190 = vmatprep.subr.mxu0 0.0
        %5191 = vmatpush1.msra.mxu0 %v5176
        %5192 = vmatprep.subr.mxu0 0.0
        %5193 = vmatpush1.msra.mxu0 %v5177
        %5194 = vmatprep.subr.mxu0 0.0
        %5195 = vmatpush1.msra.mxu0 0.0
        %5196 = vmatprep.subr.mxu0 0.0
        %5197 = vmatpush1.msra.mxu0 0.0
        %5198 = vmatprep.subr.mxu0 0.0
        %5199 = vmatpush1.msra.mxu0 0.0
        %5200 = vmatprep.subr.mxu0 0.0
        %5201 = vmatpush1.msra.mxu0 0.0
        %5202 = vmatprep.subr.mxu0 0.0
        %5203 = vmatpush1.msra.mxu0 0.0
        %5204 = vmatprep.subr.mxu0 0.0
        %5205 = vmatpush1.msra.mxu0 0.0
        %5206 = vmatprep.subr.mxu0 0.0
        %5207 = vmatpush1.msra.mxu0 0.0
        %5208 = vmatprep.subr.mxu0 0.0
        %5209 = vmatpush1.msra.mxu0 0.0
        %5210 = vmatprep.subr.mxu0 0.0
        %5211 = vmatpush1.msra.mxu0 0.0
        %5212 = vmatprep.subr.mxu0 0.0
        %5213 = vmatpush1.msra.mxu0 0.0
        %5214 = vmatprep.subr.mxu0 0.0
        %5215 = vmatpush1.msra.mxu0 0.0
        %5216 = vmatprep.subr.mxu0 0.0
        %5217 = vmatpush1.msra.mxu0 0.0
        %5218 = vmatprep.subr.mxu0 0.0
        %5219 = vmatpush1.msra.mxu0 0.0
        %5220 = vmatprep.subr.mxu0 0.0
        %5221 = vmatpush1.msra.mxu0 0.0
        %5222 = vmatprep.subr.mxu0 0.0
        %5223 = vmatpush1.msra.mxu0 0.0
        %5224 = vmatprep.subr.mxu0 0.0
        %5225 = vmatpush1.msra.mxu0 0.0
        %5226 = vmatprep.subr.mxu0 0.0
        %5227 = vmatpush1.msra.mxu0 0.0
        %5228 = vmatprep.subr.mxu0 0.0
        %5229 = vmatpush1.msra.mxu0 0.0
        %5230 = vmatprep.subr.mxu0 0.0
        %5231 = vmatpush1.msra.mxu0 0.0
        %5232 = vmatprep.subr.mxu0 0.0
        %5233 = vmatpush1.msra.mxu0 0.0
        %5234 = vmatprep.subr.mxu0 0.0
        %5235 = vmatpush1.msra.mxu0 0.0
        %5236 = vmatprep.subr.mxu0 0.0
        %5237 = vmatpush1.msra.mxu0 0.0
        %5238 = vmatprep.subr.mxu0 0.0
        %5239 = vmatpush1.msra.mxu0 0.0
        %5240 = vmatprep.subr.mxu0 0.0
        %5241 = vmatpush1.msra.mxu0 0.0
        %5242 = vmatprep.subr.mxu0 0.0
        %5243 = vmatpush1.msra.mxu0 0.0
        %5244 = vmatprep.subr.mxu0 0.0
        %5245 = vmatpush1.msra.mxu0 0.0
        %5246 = vmatprep.subr.mxu0 0.0
        %5247 = vmatpush1.msra.mxu0 0.0
        %5248 = vmatprep.subr.mxu0 0.0
        %5249 = vmatpush1.msra.mxu0 0.0
        %5250 = vmatprep.mubr.f32.mxu0 0.0
        %5251 = vmatmul.mubr.f32.gmra.mrb[0].mxu0 %v4277
        %v5252 = vpop.f32.mrb[0].mxu0
        %v5253 = vadd.f32 %v5184, %v5252
        %v5254 = vpop.f32.mrb[0].mxu0
        %5255 = vdwg.mxu0
        %s5256 = scalar_lea.vmem %s4, 1088
        %v5257 = vld [vmem:[%s5256] sm:$0xff]
        %v5258 = vld [vmem:[%s5256 + $0x8] sm:$0xff]
        %v5259 = vld [vmem:[%s5256 + $0x10] sm:$0xff]
        %v5260 = vld [vmem:[%s5256 + $0x18] sm:$0xff]
        %s5261 = scalar_lea.vmem %s5, 34
        %v5262 = vld [vmem:[%s5261] sm:$0x1]
        %v5264 = vlaneseq
        %v5265 = vshrl.u32 %v5264, 7
        %v5266 = vsub.s32 0, %v5265
        %v5267 = vrot.slane %v5262, %v5266
        %5269 = vmatprep.subr.mxu0 0.0
        %5270 = vmatpush1.msra.mxu0 %v5257
        %5271 = vmatprep.subr.mxu0 0.0
        %5272 = vmatpush1.msra.mxu0 %v5258
        %5273 = vmatprep.subr.mxu0 0.0
        %5274 = vmatpush1.msra.mxu0 %v5259
        %5275 = vmatprep.subr.mxu0 0.0
        %5276 = vmatpush1.msra.mxu0 %v5260
        %5277 = vmatprep.subr.mxu0 0.0
        %5278 = vmatpush1.msra.mxu0 0.0
        %5279 = vmatprep.subr.mxu0 0.0
        %5280 = vmatpush1.msra.mxu0 0.0
        %5281 = vmatprep.subr.mxu0 0.0
        %5282 = vmatpush1.msra.mxu0 0.0
        %5283 = vmatprep.subr.mxu0 0.0
        %5284 = vmatpush1.msra.mxu0 0.0
        %5285 = vmatprep.subr.mxu0 0.0
        %5286 = vmatpush1.msra.mxu0 0.0
        %5287 = vmatprep.subr.mxu0 0.0
        %5288 = vmatpush1.msra.mxu0 0.0
        %5289 = vmatprep.subr.mxu0 0.0
        %5290 = vmatpush1.msra.mxu0 0.0
        %5291 = vmatprep.subr.mxu0 0.0
        %5292 = vmatpush1.msra.mxu0 0.0
        %5293 = vmatprep.subr.mxu0 0.0
        %5294 = vmatpush1.msra.mxu0 0.0
        %5295 = vmatprep.subr.mxu0 0.0
        %5296 = vmatpush1.msra.mxu0 0.0
        %5297 = vmatprep.subr.mxu0 0.0
        %5298 = vmatpush1.msra.mxu0 0.0
        %5299 = vmatprep.subr.mxu0 0.0
        %5300 = vmatpush1.msra.mxu0 0.0
        %5301 = vmatprep.subr.mxu0 0.0
        %5302 = vmatpush1.msra.mxu0 0.0
        %5303 = vmatprep.subr.mxu0 0.0
        %5304 = vmatpush1.msra.mxu0 0.0
        %5305 = vmatprep.subr.mxu0 0.0
        %5306 = vmatpush1.msra.mxu0 0.0
        %5307 = vmatprep.subr.mxu0 0.0
        %5308 = vmatpush1.msra.mxu0 0.0
        %5309 = vmatprep.subr.mxu0 0.0
        %5310 = vmatpush1.msra.mxu0 0.0
        %5311 = vmatprep.subr.mxu0 0.0
        %5312 = vmatpush1.msra.mxu0 0.0
        %5313 = vmatprep.subr.mxu0 0.0
        %5314 = vmatpush1.msra.mxu0 0.0
        %5315 = vmatprep.subr.mxu0 0.0
        %5316 = vmatpush1.msra.mxu0 0.0
        %5317 = vmatprep.subr.mxu0 0.0
        %5318 = vmatpush1.msra.mxu0 0.0
        %5319 = vmatprep.subr.mxu0 0.0
        %5320 = vmatpush1.msra.mxu0 0.0
        %5321 = vmatprep.subr.mxu0 0.0
        %5322 = vmatpush1.msra.mxu0 0.0
        %5323 = vmatprep.subr.mxu0 0.0
        %5324 = vmatpush1.msra.mxu0 0.0
        %5325 = vmatprep.subr.mxu0 0.0
        %5326 = vmatpush1.msra.mxu0 0.0
        %5327 = vmatprep.subr.mxu0 0.0
        %5328 = vmatpush1.msra.mxu0 0.0
        %5329 = vmatprep.subr.mxu0 0.0
        %5330 = vmatpush1.msra.mxu0 0.0
        %5331 = vmatprep.subr.mxu0 0.0
        %5332 = vmatpush1.msra.mxu0 0.0
        %5333 = vmatprep.mubr.f32.mxu0 0.0
        %5334 = vmatmul.mubr.f32.gmra.mrb[0].mxu0 %v4277
        %v5335 = vpop.f32.mrb[0].mxu0
        %v5336 = vadd.f32 %v5267, %v5335
        %v5337 = vpop.f32.mrb[0].mxu0
        %5338 = vdwg.mxu0
        %v5340 = vsel %vm706, %v5170, 0
        %v5343 = vsel %vm706, %v5253, 0
        %5345 = vmatprep.subr.mxu0 0.0
        %5346 = vmatpush1.xpose.msra.mxu0 %v5343
        %5347 = vmatprep.subr.mxu0 0.0
        %5348 = vmatpush1.xpose.msra.mxu0 0.0
        %5349 = vmatprep.subr.mxu0 0.0
        %5350 = vmatpush1.xpose.msra.mxu0 0.0
        %5351 = vmatprep.subr.mxu0 0.0
        %5352 = vmatpush1.xpose.msra.mxu0 0.0
        %5353 = vmatprep.subr.mxu0 0.0
        %5354 = vmatpush1.xpose.msra.mxu0 0.0
        %5355 = vmatprep.subr.mxu0 0.0
        %5356 = vmatpush1.xpose.msra.mxu0 0.0
        %5357 = vmatprep.subr.mxu0 0.0
        %5358 = vmatpush1.xpose.msra.mxu0 0.0
        %5359 = vmatprep.subr.mxu0 0.0
        %5360 = vmatpush1.xpose.msra.mxu0 0.0
        %5361 = vmatprep.subr.mxu0 0.0
        %5362 = vmatpush1.xpose.msra.mxu0 0.0
        %5363 = vmatprep.subr.mxu0 0.0
        %5364 = vmatpush1.xpose.msra.mxu0 0.0
        %5365 = vmatprep.subr.mxu0 0.0
        %5366 = vmatpush1.xpose.msra.mxu0 0.0
        %5367 = vmatprep.subr.mxu0 0.0
        %5368 = vmatpush1.xpose.msra.mxu0 0.0
        %5369 = vmatprep.subr.mxu0 0.0
        %5370 = vmatpush1.xpose.msra.mxu0 0.0
        %5371 = vmatprep.subr.mxu0 0.0
        %5372 = vmatpush1.xpose.msra.mxu0 0.0
        %5373 = vmatprep.subr.mxu0 0.0
        %5374 = vmatpush1.xpose.msra.mxu0 0.0
        %5375 = vmatprep.subr.mxu0 0.0
        %5376 = vmatpush1.xpose.msra.mxu0 0.0
        %5377 = vmatprep.subr.mxu0 0.0
        %5378 = vmatpush1.xpose.msra.mxu0 0.0
        %5379 = vmatprep.subr.mxu0 0.0
        %5380 = vmatpush1.xpose.msra.mxu0 0.0
        %5381 = vmatprep.subr.mxu0 0.0
        %5382 = vmatpush1.xpose.msra.mxu0 0.0
        %5383 = vmatprep.subr.mxu0 0.0
        %5384 = vmatpush1.xpose.msra.mxu0 0.0
        %5385 = vmatprep.subr.mxu0 0.0
        %5386 = vmatpush1.xpose.msra.mxu0 0.0
        %5387 = vmatprep.subr.mxu0 0.0
        %5388 = vmatpush1.xpose.msra.mxu0 0.0
        %5389 = vmatprep.subr.mxu0 0.0
        %5390 = vmatpush1.xpose.msra.mxu0 0.0
        %5391 = vmatprep.subr.mxu0 0.0
        %5392 = vmatpush1.xpose.msra.mxu0 0.0
        %5393 = vmatprep.subr.mxu0 0.0
        %5394 = vmatpush1.xpose.msra.mxu0 0.0
        %5395 = vmatprep.subr.mxu0 0.0
        %5396 = vmatpush1.xpose.msra.mxu0 0.0
        %5397 = vmatprep.subr.mxu0 0.0
        %5398 = vmatpush1.xpose.msra.mxu0 0.0
        %5399 = vmatprep.subr.mxu0 0.0
        %5400 = vmatpush1.xpose.msra.mxu0 0.0
        %5401 = vmatprep.subr.mxu0 0.0
        %5402 = vmatpush1.xpose.msra.mxu0 0.0
        %5403 = vmatprep.subr.mxu0 0.0
        %5404 = vmatpush1.xpose.msra.mxu0 0.0
        %5405 = vmatprep.subr.mxu0 0.0
        %5406 = vmatpush1.xpose.msra.mxu0 0.0
        %5407 = vmatprep.subr.mxu0 0.0
        %5408 = vmatpush1.xpose.msra.mxu0 0.0
        %5409 = vmatprep.mubr.f32.mxu0 0.0
        %5410 = vmatmul.mubr.f32.gmra.mrb[0].mxu0 %v5340
        %v5411 = vpop.f32.mrb[0].mxu0
        %v5412 = vadd.f32 0.0, %v5411
        %v5413 = vpop.f32.mrb[0].mxu0
        %5414 = vdwg.mxu0
        %v5415 = vmul.f32 %v5412, 0.35355338
        %v5416 = vadd.f32 %v5415, %v408
        %v5417 = vsel %vm706, %v5416, -inf
        %5418 = vmax.xlane.f32.xlu0 %v5417
        %v5419 = vpop.xlane.xlu0 %5418
        %v5420 = vsub.f32 %v5416, %v5419
        %v5421 = vmul.f32 %v5420, 1.442695
        %v5422 = vpow.pop %v5421
        %v5423 = vsel %vm706, %v5422, 0.0
        %5424 = vadd.xlane.f32.xlu0 %v5423
        %v5425 = vpop.xlane.xlu0 %5424
        %v5426 = vrcp.pop %v5425
        %v5427 = vmul.f32 %v5422, %v5426
        %v5428 = vsel %vm407, %v5427, 0.0
        %v5430 = vsel %vm706, %v5428, 0
        %5432 = vmatprep.subr.mxu0 0.0
        %5433 = vmatpush1.msra.mxu0 %v5336
        %5434 = vmatprep.subr.mxu0 0.0
        %5435 = vmatpush1.msra.mxu0 0.0
        %5436 = vmatprep.subr.mxu0 0.0
        %5437 = vmatpush1.msra.mxu0 0.0
        %5438 = vmatprep.subr.mxu0 0.0
        %5439 = vmatpush1.msra.mxu0 0.0
        %5440 = vmatprep.subr.mxu0 0.0
        %5441 = vmatpush1.msra.mxu0 0.0
        %5442 = vmatprep.subr.mxu0 0.0
        %5443 = vmatpush1.msra.mxu0 0.0
        %5444 = vmatprep.subr.mxu0 0.0
        %5445 = vmatpush1.msra.mxu0 0.0
        %5446 = vmatprep.subr.mxu0 0.0
        %5447 = vmatpush1.msra.mxu0 0.0
        %5448 = vmatprep.subr.mxu0 0.0
        %5449 = vmatpush1.msra.mxu0 0.0
        %5450 = vmatprep.subr.mxu0 0.0
        %5451 = vmatpush1.msra.mxu0 0.0
        %5452 = vmatprep.subr.mxu0 0.0
        %5453 = vmatpush1.msra.mxu0 0.0
        %5454 = vmatprep.subr.mxu0 0.0
        %5455 = vmatpush1.msra.mxu0 0.0
        %5456 = vmatprep.subr.mxu0 0.0
        %5457 = vmatpush1.msra.mxu0 0.0
        %5458 = vmatprep.subr.mxu0 0.0
        %5459 = vmatpush1.msra.mxu0 0.0
        %5460 = vmatprep.subr.mxu0 0.0
        %5461 = vmatpush1.msra.mxu0 0.0
        %5462 = vmatprep.subr.mxu0 0.0
        %5463 = vmatpush1.msra.mxu0 0.0
        %5464 = vmatprep.subr.mxu0 0.0
        %5465 = vmatpush1.msra.mxu0 0.0
        %5466 = vmatprep.subr.mxu0 0.0
        %5467 = vmatpush1.msra.mxu0 0.0
        %5468 = vmatprep.subr.mxu0 0.0
        %5469 = vmatpush1.msra.mxu0 0.0
        %5470 = vmatprep.subr.mxu0 0.0
        %5471 = vmatpush1.msra.mxu0 0.0
        %5472 = vmatprep.subr.mxu0 0.0
        %5473 = vmatpush1.msra.mxu0 0.0
        %5474 = vmatprep.subr.mxu0 0.0
        %5475 = vmatpush1.msra.mxu0 0.0
        %5476 = vmatprep.subr.mxu0 0.0
        %5477 = vmatpush1.msra.mxu0 0.0
        %5478 = vmatprep.subr.mxu0 0.0
        %5479 = vmatpush1.msra.mxu0 0.0
        %5480 = vmatprep.subr.mxu0 0.0
        %5481 = vmatpush1.msra.mxu0 0.0
        %5482 = vmatprep.subr.mxu0 0.0
        %5483 = vmatpush1.msra.mxu0 0.0
        %5484 = vmatprep.subr.mxu0 0.0
        %5485 = vmatpush1.msra.mxu0 0.0
        %5486 = vmatprep.subr.mxu0 0.0
        %5487 = vmatpush1.msra.mxu0 0.0
        %5488 = vmatprep.subr.mxu0 0.0
        %5489 = vmatpush1.msra.mxu0 0.0
        %5490 = vmatprep.subr.mxu0 0.0
        %5491 = vmatpush1.msra.mxu0 0.0
        %5492 = vmatprep.subr.mxu0 0.0
        %5493 = vmatpush1.msra.mxu0 0.0
        %5494 = vmatprep.subr.mxu0 0.0
        %5495 = vmatpush1.msra.mxu0 0.0
        %5496 = vmatprep.mubr.f32.mxu0 0.0
        %5497 = vmatmul.mubr.f32.gmra.mrb[0].mxu0 %v5430
        %v5498 = vpop.f32.mrb[0].mxu0
        %v5499 = vadd.f32 0.0, %v5498
        %v5500 = vpop.f32.mrb[0].mxu0
        %5501 = vdwg.mxu0
        %s5502 = scalar_lea.vmem %s4, 864
        %v5503 = vld [vmem:[%s5502] sm:$0xff]
        %v5504 = vld [vmem:[%s5502 + $0x8] sm:$0xff]
        %v5505 = vld [vmem:[%s5502 + $0x10] sm:$0xff]
        %v5506 = vld [vmem:[%s5502 + $0x18] sm:$0xff]
        %s5507 = scalar_lea.vmem %s5, 27
        %v5508 = vld [vmem:[%s5507] sm:$0x1]
        %v5510 = vlaneseq
        %v5511 = vshrl.u32 %v5510, 7
        %v5512 = vsub.s32 0, %v5511
        %v5513 = vrot.slane %v5508, %v5512
        %5515 = vmatprep.subr.mxu0 0.0
        %5516 = vmatpush1.msra.mxu0 %v5503
        %5517 = vmatprep.subr.mxu0 0.0
        %5518 = vmatpush1.msra.mxu0 %v5504
        %5519 = vmatprep.subr.mxu0 0.0
        %5520 = vmatpush1.msra.mxu0 %v5505
        %5521 = vmatprep.subr.mxu0 0.0
        %5522 = vmatpush1.msra.mxu0 %v5506
        %5523 = vmatprep.subr.mxu0 0.0
        %5524 = vmatpush1.msra.mxu0 0.0
        %5525 = vmatprep.subr.mxu0 0.0
        %5526 = vmatpush1.msra.mxu0 0.0
        %5527 = vmatprep.subr.mxu0 0.0
        %5528 = vmatpush1.msra.mxu0 0.0
        %5529 = vmatprep.subr.mxu0 0.0
        %5530 = vmatpush1.msra.mxu0 0.0
        %5531 = vmatprep.subr.mxu0 0.0
        %5532 = vmatpush1.msra.mxu0 0.0
        %5533 = vmatprep.subr.mxu0 0.0
        %5534 = vmatpush1.msra.mxu0 0.0
        %5535 = vmatprep.subr.mxu0 0.0
        %5536 = vmatpush1.msra.mxu0 0.0
        %5537 = vmatprep.subr.mxu0 0.0
        %5538 = vmatpush1.msra.mxu0 0.0
        %5539 = vmatprep.subr.mxu0 0.0
        %5540 = vmatpush1.msra.mxu0 0.0
        %5541 = vmatprep.subr.mxu0 0.0
        %5542 = vmatpush1.msra.mxu0 0.0
        %5543 = vmatprep.subr.mxu0 0.0
        %5544 = vmatpush1.msra.mxu0 0.0
        %5545 = vmatprep.subr.mxu0 0.0
        %5546 = vmatpush1.msra.mxu0 0.0
        %5547 = vmatprep.subr.mxu0 0.0
        %5548 = vmatpush1.msra.mxu0 0.0
        %5549 = vmatprep.subr.mxu0 0.0
        %5550 = vmatpush1.msra.mxu0 0.0
        %5551 = vmatprep.subr.mxu0 0.0
        %5552 = vmatpush1.msra.mxu0 0.0
        %5553 = vmatprep.subr.mxu0 0.0
        %5554 = vmatpush1.msra.mxu0 0.0
        %5555 = vmatprep.subr.mxu0 0.0
        %5556 = vmatpush1.msra.mxu0 0.0
        %5557 = vmatprep.subr.mxu0 0.0
        %5558 = vmatpush1.msra.mxu0 0.0
        %5559 = vmatprep.subr.mxu0 0.0
        %5560 = vmatpush1.msra.mxu0 0.0
        %5561 = vmatprep.subr.mxu0 0.0
        %5562 = vmatpush1.msra.mxu0 0.0
        %5563 = vmatprep.subr.mxu0 0.0
        %5564 = vmatpush1.msra.mxu0 0.0
        %5565 = vmatprep.subr.mxu0 0.0
        %5566 = vmatpush1.msra.mxu0 0.0
        %5567 = vmatprep.subr.mxu0 0.0
        %5568 = vmatpush1.msra.mxu0 0.0
        %5569 = vmatprep.subr.mxu0 0.0
        %5570 = vmatpush1.msra.mxu0 0.0
        %5571 = vmatprep.subr.mxu0 0.0
        %5572 = vmatpush1.msra.mxu0 0.0
        %5573 = vmatprep.subr.mxu0 0.0
        %5574 = vmatpush1.msra.mxu0 0.0
        %5575 = vmatprep.subr.mxu0 0.0
        %5576 = vmatpush1.msra.mxu0 0.0
        %5577 = vmatprep.subr.mxu0 0.0
        %5578 = vmatpush1.msra.mxu0 0.0
        %5579 = vmatprep.mubr.f32.mxu0 0.0
        %5580 = vmatmul.mubr.f32.gmra.mrb[0].mxu0 %v4277
        %v5581 = vpop.f32.mrb[0].mxu0
        %v5582 = vadd.f32 %v5513, %v5581
        %v5583 = vpop.f32.mrb[0].mxu0
        %5584 = vdwg.mxu0
        %s5585 = scalar_lea.vmem %s4, 992
        %v5586 = vld [vmem:[%s5585] sm:$0xff]
        %v5587 = vld [vmem:[%s5585 + $0x8] sm:$0xff]
        %v5588 = vld [vmem:[%s5585 + $0x10] sm:$0xff]
        %v5589 = vld [vmem:[%s5585 + $0x18] sm:$0xff]
        %s5590 = scalar_lea.vmem %s5, 31
        %v5591 = vld [vmem:[%s5590] sm:$0x1]
        %v5593 = vlaneseq
        %v5594 = vshrl.u32 %v5593, 7
        %v5595 = vsub.s32 0, %v5594
        %v5596 = vrot.slane %v5591, %v5595
        %5598 = vmatprep.subr.mxu0 0.0
        %5599 = vmatpush1.msra.mxu0 %v5586
        %5600 = vmatprep.subr.mxu0 0.0
        %5601 = vmatpush1.msra.mxu0 %v5587
        %5602 = vmatprep.subr.mxu0 0.0
        %5603 = vmatpush1.msra.mxu0 %v5588
        %5604 = vmatprep.subr.mxu0 0.0
        %5605 = vmatpush1.msra.mxu0 %v5589
        %5606 = vmatprep.subr.mxu0 0.0
        %5607 = vmatpush1.msra.mxu0 0.0
        %5608 = vmatprep.subr.mxu0 0.0
        %5609 = vmatpush1.msra.mxu0 0.0
        %5610 = vmatprep.subr.mxu0 0.0
        %5611 = vmatpush1.msra.mxu0 0.0
        %5612 = vmatprep.subr.mxu0 0.0
        %5613 = vmatpush1.msra.mxu0 0.0
        %5614 = vmatprep.subr.mxu0 0.0
        %5615 = vmatpush1.msra.mxu0 0.0
        %5616 = vmatprep.subr.mxu0 0.0
        %5617 = vmatpush1.msra.mxu0 0.0
        %5618 = vmatprep.subr.mxu0 0.0
        %5619 = vmatpush1.msra.mxu0 0.0
        %5620 = vmatprep.subr.mxu0 0.0
        %5621 = vmatpush1.msra.mxu0 0.0
        %5622 = vmatprep.subr.mxu0 0.0
        %5623 = vmatpush1.msra.mxu0 0.0
        %5624 = vmatprep.subr.mxu0 0.0
        %5625 = vmatpush1.msra.mxu0 0.0
        %5626 = vmatprep.subr.mxu0 0.0
        %5627 = vmatpush1.msra.mxu0 0.0
        %5628 = vmatprep.subr.mxu0 0.0
        %5629 = vmatpush1.msra.mxu0 0.0
        %5630 = vmatprep.subr.mxu0 0.0
        %5631 = vmatpush1.msra.mxu0 0.0
        %5632 = vmatprep.subr.mxu0 0.0
        %5633 = vmatpush1.msra.mxu0 0.0
        %5634 = vmatprep.subr.mxu0 0.0
        %5635 = vmatpush1.msra.mxu0 0.0
        %5636 = vmatprep.subr.mxu0 0.0
        %5637 = vmatpush1.msra.mxu0 0.0
        %5638 = vmatprep.subr.mxu0 0.0
        %5639 = vmatpush1.msra.mxu0 0.0
        %5640 = vmatprep.subr.mxu0 0.0
        %5641 = vmatpush1.msra.mxu0 0.0
        %5642 = vmatprep.subr.mxu0 0.0
        %5643 = vmatpush1.msra.mxu0 0.0
        %5644 = vmatprep.subr.mxu0 0.0
        %5645 = vmatpush1.msra.mxu0 0.0
        %5646 = vmatprep.subr.mxu0 0.0
        %5647 = vmatpush1.msra.mxu0 0.0
        %5648 = vmatprep.subr.mxu0 0.0
        %5649 = vmatpush1.msra.mxu0 0.0
        %5650 = vmatprep.subr.mxu0 0.0
        %5651 = vmatpush1.msra.mxu0 0.0
        %5652 = vmatprep.subr.mxu0 0.0
        %5653 = vmatpush1.msra.mxu0 0.0
        %5654 = vmatprep.subr.mxu0 0.0
        %5655 = vmatpush1.msra.mxu0 0.0
        %5656 = vmatprep.subr.mxu0 0.0
        %5657 = vmatpush1.msra.mxu0 0.0
        %5658 = vmatprep.subr.mxu0 0.0
        %5659 = vmatpush1.msra.mxu0 0.0
        %5660 = vmatprep.subr.mxu0 0.0
        %5661 = vmatpush1.msra.mxu0 0.0
        %5662 = vmatprep.mubr.f32.mxu0 0.0
        %5663 = vmatmul.mubr.f32.gmra.mrb[0].mxu0 %v4277
        %v5664 = vpop.f32.mrb[0].mxu0
        %v5665 = vadd.f32 %v5596, %v5664
        %v5666 = vpop.f32.mrb[0].mxu0
        %5667 = vdwg.mxu0
        %s5668 = scalar_lea.vmem %s4, 1120
        %v5669 = vld [vmem:[%s5668] sm:$0xff]
        %v5670 = vld [vmem:[%s5668 + $0x8] sm:$0xff]
        %v5671 = vld [vmem:[%s5668 + $0x10] sm:$0xff]
        %v5672 = vld [vmem:[%s5668 + $0x18] sm:$0xff]
        %s5673 = scalar_lea.vmem %s5, 35
        %v5674 = vld [vmem:[%s5673] sm:$0x1]
        %v5676 = vlaneseq
        %v5677 = vshrl.u32 %v5676, 7
        %v5678 = vsub.s32 0, %v5677
        %v5679 = vrot.slane %v5674, %v5678
        %5681 = vmatprep.subr.mxu0 0.0
        %5682 = vmatpush1.msra.mxu0 %v5669
        %5683 = vmatprep.subr.mxu0 0.0
        %5684 = vmatpush1.msra.mxu0 %v5670
        %5685 = vmatprep.subr.mxu0 0.0
        %5686 = vmatpush1.msra.mxu0 %v5671
        %5687 = vmatprep.subr.mxu0 0.0
        %5688 = vmatpush1.msra.mxu0 %v5672
        %5689 = vmatprep.subr.mxu0 0.0
        %5690 = vmatpush1.msra.mxu0 0.0
        %5691 = vmatprep.subr.mxu0 0.0
        %5692 = vmatpush1.msra.mxu0 0.0
        %5693 = vmatprep.subr.mxu0 0.0
        %5694 = vmatpush1.msra.mxu0 0.0
        %5695 = vmatprep.subr.mxu0 0.0
        %5696 = vmatpush1.msra.mxu0 0.0
        %5697 = vmatprep.subr.mxu0 0.0
        %5698 = vmatpush1.msra.mxu0 0.0
        %5699 = vmatprep.subr.mxu0 0.0
        %5700 = vmatpush1.msra.mxu0 0.0
        %5701 = vmatprep.subr.mxu0 0.0
        %5702 = vmatpush1.msra.mxu0 0.0
        %5703 = vmatprep.subr.mxu0 0.0
        %5704 = vmatpush1.msra.mxu0 0.0
        %5705 = vmatprep.subr.mxu0 0.0
        %5706 = vmatpush1.msra.mxu0 0.0
        %5707 = vmatprep.subr.mxu0 0.0
        %5708 = vmatpush1.msra.mxu0 0.0
        %5709 = vmatprep.subr.mxu0 0.0
        %5710 = vmatpush1.msra.mxu0 0.0
        %5711 = vmatprep.subr.mxu0 0.0
        %5712 = vmatpush1.msra.mxu0 0.0
        %5713 = vmatprep.subr.mxu0 0.0
        %5714 = vmatpush1.msra.mxu0 0.0
        %5715 = vmatprep.subr.mxu0 0.0
        %5716 = vmatpush1.msra.mxu0 0.0
        %5717 = vmatprep.subr.mxu0 0.0
        %5718 = vmatpush1.msra.mxu0 0.0
        %5719 = vmatprep.subr.mxu0 0.0
        %5720 = vmatpush1.msra.mxu0 0.0
        %5721 = vmatprep.subr.mxu0 0.0
        %5722 = vmatpush1.msra.mxu0 0.0
        %5723 = vmatprep.subr.mxu0 0.0
        %5724 = vmatpush1.msra.mxu0 0.0
        %5725 = vmatprep.subr.mxu0 0.0
        %5726 = vmatpush1.msra.mxu0 0.0
        %5727 = vmatprep.subr.mxu0 0.0
        %5728 = vmatpush1.msra.mxu0 0.0
        %5729 = vmatprep.subr.mxu0 0.0
        %5730 = vmatpush1.msra.mxu0 0.0
        %5731 = vmatprep.subr.mxu0 0.0
        %5732 = vmatpush1.msra.mxu0 0.0
        %5733 = vmatprep.subr.mxu0 0.0
        %5734 = vmatpush1.msra.mxu0 0.0
        %5735 = vmatprep.subr.mxu0 0.0
        %5736 = vmatpush1.msra.mxu0 0.0
        %5737 = vmatprep.subr.mxu0 0.0
        %5738 = vmatpush1.msra.mxu0 0.0
        %5739 = vmatprep.subr.mxu0 0.0
        %5740 = vmatpush1.msra.mxu0 0.0
        %5741 = vmatprep.subr.mxu0 0.0
        %5742 = vmatpush1.msra.mxu0 0.0
        %5743 = vmatprep.subr.mxu0 0.0
        %5744 = vmatpush1.msra.mxu0 0.0
        %5745 = vmatprep.mubr.f32.mxu0 0.0
        %5746 = vmatmul.mubr.f32.gmra.mrb[0].mxu0 %v4277
        %v5747 = vpop.f32.mrb[0].mxu0
        %v5748 = vadd.f32 %v5679, %v5747
        %v5749 = vpop.f32.mrb[0].mxu0
        %5750 = vdwg.mxu0
        %v5752 = vsel %vm706, %v5582, 0
        %v5755 = vsel %vm706, %v5665, 0
        %5757 = vmatprep.subr.mxu0 0.0
        %5758 = vmatpush1.xpose.msra.mxu0 %v5755
        %5759 = vmatprep.subr.mxu0 0.0
        %5760 = vmatpush1.xpose.msra.mxu0 0.0
        %5761 = vmatprep.subr.mxu0 0.0
        %5762 = vmatpush1.xpose.msra.mxu0 0.0
        %5763 = vmatprep.subr.mxu0 0.0
        %5764 = vmatpush1.xpose.msra.mxu0 0.0
        %5765 = vmatprep.subr.mxu0 0.0
        %5766 = vmatpush1.xpose.msra.mxu0 0.0
        %5767 = vmatprep.subr.mxu0 0.0
        %5768 = vmatpush1.xpose.msra.mxu0 0.0
        %5769 = vmatprep.subr.mxu0 0.0
        %5770 = vmatpush1.xpose.msra.mxu0 0.0
        %5771 = vmatprep.subr.mxu0 0.0
        %5772 = vmatpush1.xpose.msra.mxu0 0.0
        %5773 = vmatprep.subr.mxu0 0.0
        %5774 = vmatpush1.xpose.msra.mxu0 0.0
        %5775 = vmatprep.subr.mxu0 0.0
        %5776 = vmatpush1.xpose.msra.mxu0 0.0
        %5777 = vmatprep.subr.mxu0 0.0
        %5778 = vmatpush1.xpose.msra.mxu0 0.0
        %5779 = vmatprep.subr.mxu0 0.0
        %5780 = vmatpush1.xpose.msra.mxu0 0.0
        %5781 = vmatprep.subr.mxu0 0.0
        %5782 = vmatpush1.xpose.msra.mxu0 0.0
        %5783 = vmatprep.subr.mxu0 0.0
        %5784 = vmatpush1.xpose.msra.mxu0 0.0
        %5785 = vmatprep.subr.mxu0 0.0
        %5786 = vmatpush1.xpose.msra.mxu0 0.0
        %5787 = vmatprep.subr.mxu0 0.0
        %5788 = vmatpush1.xpose.msra.mxu0 0.0
        %5789 = vmatprep.subr.mxu0 0.0
        %5790 = vmatpush1.xpose.msra.mxu0 0.0
        %5791 = vmatprep.subr.mxu0 0.0
        %5792 = vmatpush1.xpose.msra.mxu0 0.0
        %5793 = vmatprep.subr.mxu0 0.0
        %5794 = vmatpush1.xpose.msra.mxu0 0.0
        %5795 = vmatprep.subr.mxu0 0.0
        %5796 = vmatpush1.xpose.msra.mxu0 0.0
        %5797 = vmatprep.subr.mxu0 0.0
        %5798 = vmatpush1.xpose.msra.mxu0 0.0
        %5799 = vmatprep.subr.mxu0 0.0
        %5800 = vmatpush1.xpose.msra.mxu0 0.0
        %5801 = vmatprep.subr.mxu0 0.0
        %5802 = vmatpush1.xpose.msra.mxu0 0.0
        %5803 = vmatprep.subr.mxu0 0.0
        %5804 = vmatpush1.xpose.msra.mxu0 0.0
        %5805 = vmatprep.subr.mxu0 0.0
        %5806 = vmatpush1.xpose.msra.mxu0 0.0
        %5807 = vmatprep.subr.mxu0 0.0
        %5808 = vmatpush1.xpose.msra.mxu0 0.0
        %5809 = vmatprep.subr.mxu0 0.0
        %5810 = vmatpush1.xpose.msra.mxu0 0.0
        %5811 = vmatprep.subr.mxu0 0.0
        %5812 = vmatpush1.xpose.msra.mxu0 0.0
        %5813 = vmatprep.subr.mxu0 0.0
        %5814 = vmatpush1.xpose.msra.mxu0 0.0
        %5815 = vmatprep.subr.mxu0 0.0
        %5816 = vmatpush1.xpose.msra.mxu0 0.0
        %5817 = vmatprep.subr.mxu0 0.0
        %5818 = vmatpush1.xpose.msra.mxu0 0.0
        %5819 = vmatprep.subr.mxu0 0.0
        %5820 = vmatpush1.xpose.msra.mxu0 0.0
        %5821 = vmatprep.mubr.f32.mxu0 0.0
        %5822 = vmatmul.mubr.f32.gmra.mrb[0].mxu0 %v5752
        %v5823 = vpop.f32.mrb[0].mxu0
        %v5824 = vadd.f32 0.0, %v5823
        %v5825 = vpop.f32.mrb[0].mxu0
        %5826 = vdwg.mxu0
        %v5827 = vmul.f32 %v5824, 0.35355338
        %v5828 = vadd.f32 %v5827, %v408
        %v5829 = vsel %vm706, %v5828, -inf
        %5830 = vmax.xlane.f32.xlu0 %v5829
        %v5831 = vpop.xlane.xlu0 %5830
        %v5832 = vsub.f32 %v5828, %v5831
        %v5833 = vmul.f32 %v5832, 1.442695
        %v5834 = vpow.pop %v5833
        %v5835 = vsel %vm706, %v5834, 0.0
        %5836 = vadd.xlane.f32.xlu0 %v5835
        %v5837 = vpop.xlane.xlu0 %5836
        %v5838 = vrcp.pop %v5837
        %v5839 = vmul.f32 %v5834, %v5838
        %v5840 = vsel %vm407, %v5839, 0.0
        %v5842 = vsel %vm706, %v5840, 0
        %5844 = vmatprep.subr.mxu0 0.0
        %5845 = vmatpush1.msra.mxu0 %v5748
        %5846 = vmatprep.subr.mxu0 0.0
        %5847 = vmatpush1.msra.mxu0 0.0
        %5848 = vmatprep.subr.mxu0 0.0
        %5849 = vmatpush1.msra.mxu0 0.0
        %5850 = vmatprep.subr.mxu0 0.0
        %5851 = vmatpush1.msra.mxu0 0.0
        %5852 = vmatprep.subr.mxu0 0.0
        %5853 = vmatpush1.msra.mxu0 0.0
        %5854 = vmatprep.subr.mxu0 0.0
        %5855 = vmatpush1.msra.mxu0 0.0
        %5856 = vmatprep.subr.mxu0 0.0
        %5857 = vmatpush1.msra.mxu0 0.0
        %5858 = vmatprep.subr.mxu0 0.0
        %5859 = vmatpush1.msra.mxu0 0.0
        %5860 = vmatprep.subr.mxu0 0.0
        %5861 = vmatpush1.msra.mxu0 0.0
        %5862 = vmatprep.subr.mxu0 0.0
        %5863 = vmatpush1.msra.mxu0 0.0
        %5864 = vmatprep.subr.mxu0 0.0
        %5865 = vmatpush1.msra.mxu0 0.0
        %5866 = vmatprep.subr.mxu0 0.0
        %5867 = vmatpush1.msra.mxu0 0.0
        %5868 = vmatprep.subr.mxu0 0.0
        %5869 = vmatpush1.msra.mxu0 0.0
        %5870 = vmatprep.subr.mxu0 0.0
        %5871 = vmatpush1.msra.mxu0 0.0
        %5872 = vmatprep.subr.mxu0 0.0
        %5873 = vmatpush1.msra.mxu0 0.0
        %5874 = vmatprep.subr.mxu0 0.0
        %5875 = vmatpush1.msra.mxu0 0.0
        %5876 = vmatprep.subr.mxu0 0.0
        %5877 = vmatpush1.msra.mxu0 0.0
        %5878 = vmatprep.subr.mxu0 0.0
        %5879 = vmatpush1.msra.mxu0 0.0
        %5880 = vmatprep.subr.mxu0 0.0
        %5881 = vmatpush1.msra.mxu0 0.0
        %5882 = vmatprep.subr.mxu0 0.0
        %5883 = vmatpush1.msra.mxu0 0.0
        %5884 = vmatprep.subr.mxu0 0.0
        %5885 = vmatpush1.msra.mxu0 0.0
        %5886 = vmatprep.subr.mxu0 0.0
        %5887 = vmatpush1.msra.mxu0 0.0
        %5888 = vmatprep.subr.mxu0 0.0
        %5889 = vmatpush1.msra.mxu0 0.0
        %5890 = vmatprep.subr.mxu0 0.0
        %5891 = vmatpush1.msra.mxu0 0.0
        %5892 = vmatprep.subr.mxu0 0.0
        %5893 = vmatpush1.msra.mxu0 0.0
        %5894 = vmatprep.subr.mxu0 0.0
        %5895 = vmatpush1.msra.mxu0 0.0
        %5896 = vmatprep.subr.mxu0 0.0
        %5897 = vmatpush1.msra.mxu0 0.0
        %5898 = vmatprep.subr.mxu0 0.0
        %5899 = vmatpush1.msra.mxu0 0.0
        %5900 = vmatprep.subr.mxu0 0.0
        %5901 = vmatpush1.msra.mxu0 0.0
        %5902 = vmatprep.subr.mxu0 0.0
        %5903 = vmatpush1.msra.mxu0 0.0
        %5904 = vmatprep.subr.mxu0 0.0
        %5905 = vmatpush1.msra.mxu0 0.0
        %5906 = vmatprep.subr.mxu0 0.0
        %5907 = vmatpush1.msra.mxu0 0.0
        %5908 = vmatprep.mubr.f32.mxu0 0.0
        %5909 = vmatmul.mubr.f32.gmra.mrb[0].mxu0 %v5842
        %v5910 = vpop.f32.mrb[0].mxu0
        %v5911 = vadd.f32 0.0, %v5910
        %v5912 = vpop.f32.mrb[0].mxu0
        %5913 = vdwg.mxu0
        %5915 = vrot.lane.b32.xlu0 %v5087, 8
        %v5916 = vpop.permute.xlu0 %5915
        %5919 = vrot.lane.b32.xlu0 %v5499, 16
        %v5920 = vpop.permute.xlu0 %5919
        %5923 = vrot.lane.b32.xlu0 %v5911, 24
        %v5924 = vpop.permute.xlu0 %5923
        %v5926 = vsel %vm706, %v4675, %v5916
        %v5927 = vsel %vm2119, %v5926, %v5920
        %v5928 = vsel %vm2121, %v5927, %v5924
        %v5929 = vlaneseq
        %v5930 = vshrl.u32 %v5929, 7
        %v5931 = vsub.s32 0, %v5930
        %v5932 = vrot.slane %v4232, %v5931
        %v5934 = vsel %vm427, %v5928, 0
        %5936 = vmatprep.subr.mxu0 0.0
        %5937 = vmatpush1.msra.mxu0 %v4259
        %5938 = vmatprep.subr.mxu0 0.0
        %5939 = vmatpush1.msra.mxu0 %v4260
        %5940 = vmatprep.subr.mxu0 0.0
        %5941 = vmatpush1.msra.mxu0 %v4261
        %5942 = vmatprep.subr.mxu0 0.0
        %5943 = vmatpush1.msra.mxu0 %v4262
        %5944 = vmatprep.subr.mxu0 0.0
        %5945 = vmatpush1.msra.mxu0 0.0
        %5946 = vmatprep.subr.mxu0 0.0
        %5947 = vmatpush1.msra.mxu0 0.0
        %5948 = vmatprep.subr.mxu0 0.0
        %5949 = vmatpush1.msra.mxu0 0.0
        %5950 = vmatprep.subr.mxu0 0.0
        %5951 = vmatpush1.msra.mxu0 0.0
        %5952 = vmatprep.subr.mxu0 0.0
        %5953 = vmatpush1.msra.mxu0 0.0
        %5954 = vmatprep.subr.mxu0 0.0
        %5955 = vmatpush1.msra.mxu0 0.0
        %5956 = vmatprep.subr.mxu0 0.0
        %5957 = vmatpush1.msra.mxu0 0.0
        %5958 = vmatprep.subr.mxu0 0.0
        %5959 = vmatpush1.msra.mxu0 0.0
        %5960 = vmatprep.subr.mxu0 0.0
        %5961 = vmatpush1.msra.mxu0 0.0
        %5962 = vmatprep.subr.mxu0 0.0
        %5963 = vmatpush1.msra.mxu0 0.0
        %5964 = vmatprep.subr.mxu0 0.0
        %5965 = vmatpush1.msra.mxu0 0.0
        %5966 = vmatprep.subr.mxu0 0.0
        %5967 = vmatpush1.msra.mxu0 0.0
        %5968 = vmatprep.subr.mxu0 0.0
        %5969 = vmatpush1.msra.mxu0 0.0
        %5970 = vmatprep.subr.mxu0 0.0
        %5971 = vmatpush1.msra.mxu0 0.0
        %5972 = vmatprep.subr.mxu0 0.0
        %5973 = vmatpush1.msra.mxu0 0.0
        %5974 = vmatprep.subr.mxu0 0.0
        %5975 = vmatpush1.msra.mxu0 0.0
        %5976 = vmatprep.subr.mxu0 0.0
        %5977 = vmatpush1.msra.mxu0 0.0
        %5978 = vmatprep.subr.mxu0 0.0
        %5979 = vmatpush1.msra.mxu0 0.0
        %5980 = vmatprep.subr.mxu0 0.0
        %5981 = vmatpush1.msra.mxu0 0.0
        %5982 = vmatprep.subr.mxu0 0.0
        %5983 = vmatpush1.msra.mxu0 0.0
        %5984 = vmatprep.subr.mxu0 0.0
        %5985 = vmatpush1.msra.mxu0 0.0
        %5986 = vmatprep.subr.mxu0 0.0
        %5987 = vmatpush1.msra.mxu0 0.0
        %5988 = vmatprep.subr.mxu0 0.0
        %5989 = vmatpush1.msra.mxu0 0.0
        %5990 = vmatprep.subr.mxu0 0.0
        %5991 = vmatpush1.msra.mxu0 0.0
        %5992 = vmatprep.subr.mxu0 0.0
        %5993 = vmatpush1.msra.mxu0 0.0
        %5994 = vmatprep.subr.mxu0 0.0
        %5995 = vmatpush1.msra.mxu0 0.0
        %5996 = vmatprep.subr.mxu0 0.0
        %5997 = vmatpush1.msra.mxu0 0.0
        %5998 = vmatprep.subr.mxu0 0.0
        %5999 = vmatpush1.msra.mxu0 0.0
        %6000 = vmatprep.mubr.f32.mxu0 0.0
        %6001 = vmatmul.mubr.f32.gmra.mrb[0].mxu0 %v5934
        %v6002 = vpop.f32.mrb[0].mxu0
        %v6003 = vadd.f32 %v5932, %v6002
        %v6004 = vpop.f32.mrb[0].mxu0
        %6005 = vdwg.mxu0
        %v6006 = vadd.f32 %v4224, %v6003
        %v6007 = vsel %vm427, %v6006, 0.0
        %6008 = vadd.xlane.f32.xlu0 %v6007
        %v6009 = vpop.xlane.xlu0 %6008
        %v6010 = vmul.f32 %v6009, %v431
        %v6011 = vsub.f32 %v6006, %v6010
        %v6012 = vmul.f32 %v6011, %v6011
        %v6013 = vsel %vm427, %v6012, 0.0
        %6014 = vadd.xlane.f32.xlu0 %v6013
        %v6015 = vpop.xlane.xlu0 %6014
        %v6016 = vmul.f32 %v6015, %v431
        %v6017 = vadd.f32 %v6016, 1e-05
        %v6018 = vrsqrt.pop %v6017
        %v6019 = vmul.f32 %v6011, %v6018
        %v6020 = vlaneseq
        %v6021 = vshrl.u32 %v6020, 7
        %v6022 = vsub.s32 0, %v6021
        %v6023 = vrot.slane %v4227, %v6022
        %v6024 = vmul.f32 %v6019, %v6023
        %v6025 = vlaneseq
        %v6026 = vshrl.u32 %v6025, 7
        %v6027 = vsub.s32 0, %v6026
        %v6028 = vrot.slane %v4230, %v6027
        %v6029 = vadd.f32 %v6024, %v6028
        %s6030 = scalar_lea.vmem %s6, 96
        %v6031 = vld [vmem:[%s6030] sm:$0xff]
        %v6032 = vld [vmem:[%s6030 + $0x8] sm:$0xff]
        %v6033 = vld [vmem:[%s6030 + $0x10] sm:$0xff]
        %v6034 = vld [vmem:[%s6030 + $0x18] sm:$0xff]
        %s6035 = scalar_lea.vmem %s4, 1152
        %v6036 = vld [vmem:[%s6035] sm:$0xff]
        %v6037 = vld [vmem:[%s6035 + $0x8] sm:$0xff]
        %v6038 = vld [vmem:[%s6035 + $0x10] sm:$0xff]
        %v6039 = vld [vmem:[%s6035 + $0x18] sm:$0xff]
        %s6040 = scalar_lea.vmem %s5, 36
        %v6041 = vld [vmem:[%s6040] sm:$0x1]
        %v6043 = vlaneseq
        %v6044 = vshrl.u32 %v6043, 7
        %v6045 = vsub.s32 0, %v6044
        %v6046 = vrot.slane %v6041, %v6045
        %v6049 = vsel %vm427, %v6029, 0
        %6051 = vmatprep.subr.mxu0 0.0
        %6052 = vmatpush1.msra.mxu0 %v6036
        %6053 = vmatprep.subr.mxu0 0.0
        %6054 = vmatpush1.msra.mxu0 %v6037
        %6055 = vmatprep.subr.mxu0 0.0
        %6056 = vmatpush1.msra.mxu0 %v6038
        %6057 = vmatprep.subr.mxu0 0.0
        %6058 = vmatpush1.msra.mxu0 %v6039
        %6059 = vmatprep.subr.mxu0 0.0
        %6060 = vmatpush1.msra.mxu0 0.0
        %6061 = vmatprep.subr.mxu0 0.0
        %6062 = vmatpush1.msra.mxu0 0.0
        %6063 = vmatprep.subr.mxu0 0.0
        %6064 = vmatpush1.msra.mxu0 0.0
        %6065 = vmatprep.subr.mxu0 0.0
        %6066 = vmatpush1.msra.mxu0 0.0
        %6067 = vmatprep.subr.mxu0 0.0
        %6068 = vmatpush1.msra.mxu0 0.0
        %6069 = vmatprep.subr.mxu0 0.0
        %6070 = vmatpush1.msra.mxu0 0.0
        %6071 = vmatprep.subr.mxu0 0.0
        %6072 = vmatpush1.msra.mxu0 0.0
        %6073 = vmatprep.subr.mxu0 0.0
        %6074 = vmatpush1.msra.mxu0 0.0
        %6075 = vmatprep.subr.mxu0 0.0
        %6076 = vmatpush1.msra.mxu0 0.0
        %6077 = vmatprep.subr.mxu0 0.0
        %6078 = vmatpush1.msra.mxu0 0.0
        %6079 = vmatprep.subr.mxu0 0.0
        %6080 = vmatpush1.msra.mxu0 0.0
        %6081 = vmatprep.subr.mxu0 0.0
        %6082 = vmatpush1.msra.mxu0 0.0
        %6083 = vmatprep.subr.mxu0 0.0
        %6084 = vmatpush1.msra.mxu0 0.0
        %6085 = vmatprep.subr.mxu0 0.0
        %6086 = vmatpush1.msra.mxu0 0.0
        %6087 = vmatprep.subr.mxu0 0.0
        %6088 = vmatpush1.msra.mxu0 0.0
        %6089 = vmatprep.subr.mxu0 0.0
        %6090 = vmatpush1.msra.mxu0 0.0
        %6091 = vmatprep.subr.mxu0 0.0
        %6092 = vmatpush1.msra.mxu0 0.0
        %6093 = vmatprep.subr.mxu0 0.0
        %6094 = vmatpush1.msra.mxu0 0.0
        %6095 = vmatprep.subr.mxu0 0.0
        %6096 = vmatpush1.msra.mxu0 0.0
        %6097 = vmatprep.subr.mxu0 0.0
        %6098 = vmatpush1.msra.mxu0 0.0
        %6099 = vmatprep.subr.mxu0 0.0
        %6100 = vmatpush1.msra.mxu0 0.0
        %6101 = vmatprep.subr.mxu0 0.0
        %6102 = vmatpush1.msra.mxu0 0.0
        %6103 = vmatprep.subr.mxu0 0.0
        %6104 = vmatpush1.msra.mxu0 0.0
        %6105 = vmatprep.subr.mxu0 0.0
        %6106 = vmatpush1.msra.mxu0 0.0
        %6107 = vmatprep.subr.mxu0 0.0
        %6108 = vmatpush1.msra.mxu0 0.0
        %6109 = vmatprep.subr.mxu0 0.0
        %6110 = vmatpush1.msra.mxu0 0.0
        %6111 = vmatprep.subr.mxu0 0.0
        %6112 = vmatpush1.msra.mxu0 0.0
        %6113 = vmatprep.subr.mxu0 0.0
        %6114 = vmatpush1.msra.mxu0 0.0
        %6115 = vmatprep.mubr.f32.mxu0 0.0
        %6116 = vmatmul.mubr.f32.gmra.mrb[0].mxu0 %v6049
        %v6117 = vpop.f32.mrb[0].mxu0
        %v6118 = vadd.f32 %v6046, %v6117
        %v6119 = vpop.f32.mrb[0].mxu0
        %6120 = vdwg.mxu0
        %s6121 = scalar_lea.vmem %s4, 1280
        %v6122 = vld [vmem:[%s6121] sm:$0xff]
        %v6123 = vld [vmem:[%s6121 + $0x8] sm:$0xff]
        %v6124 = vld [vmem:[%s6121 + $0x10] sm:$0xff]
        %v6125 = vld [vmem:[%s6121 + $0x18] sm:$0xff]
        %s6126 = scalar_lea.vmem %s5, 40
        %v6127 = vld [vmem:[%s6126] sm:$0x1]
        %v6129 = vlaneseq
        %v6130 = vshrl.u32 %v6129, 7
        %v6131 = vsub.s32 0, %v6130
        %v6132 = vrot.slane %v6127, %v6131
        %6134 = vmatprep.subr.mxu0 0.0
        %6135 = vmatpush1.msra.mxu0 %v6122
        %6136 = vmatprep.subr.mxu0 0.0
        %6137 = vmatpush1.msra.mxu0 %v6123
        %6138 = vmatprep.subr.mxu0 0.0
        %6139 = vmatpush1.msra.mxu0 %v6124
        %6140 = vmatprep.subr.mxu0 0.0
        %6141 = vmatpush1.msra.mxu0 %v6125
        %6142 = vmatprep.subr.mxu0 0.0
        %6143 = vmatpush1.msra.mxu0 0.0
        %6144 = vmatprep.subr.mxu0 0.0
        %6145 = vmatpush1.msra.mxu0 0.0
        %6146 = vmatprep.subr.mxu0 0.0
        %6147 = vmatpush1.msra.mxu0 0.0
        %6148 = vmatprep.subr.mxu0 0.0
        %6149 = vmatpush1.msra.mxu0 0.0
        %6150 = vmatprep.subr.mxu0 0.0
        %6151 = vmatpush1.msra.mxu0 0.0
        %6152 = vmatprep.subr.mxu0 0.0
        %6153 = vmatpush1.msra.mxu0 0.0
        %6154 = vmatprep.subr.mxu0 0.0
        %6155 = vmatpush1.msra.mxu0 0.0
        %6156 = vmatprep.subr.mxu0 0.0
        %6157 = vmatpush1.msra.mxu0 0.0
        %6158 = vmatprep.subr.mxu0 0.0
        %6159 = vmatpush1.msra.mxu0 0.0
        %6160 = vmatprep.subr.mxu0 0.0
        %6161 = vmatpush1.msra.mxu0 0.0
        %6162 = vmatprep.subr.mxu0 0.0
        %6163 = vmatpush1.msra.mxu0 0.0
        %6164 = vmatprep.subr.mxu0 0.0
        %6165 = vmatpush1.msra.mxu0 0.0
        %6166 = vmatprep.subr.mxu0 0.0
        %6167 = vmatpush1.msra.mxu0 0.0
        %6168 = vmatprep.subr.mxu0 0.0
        %6169 = vmatpush1.msra.mxu0 0.0
        %6170 = vmatprep.subr.mxu0 0.0
        %6171 = vmatpush1.msra.mxu0 0.0
        %6172 = vmatprep.subr.mxu0 0.0
        %6173 = vmatpush1.msra.mxu0 0.0
        %6174 = vmatprep.subr.mxu0 0.0
        %6175 = vmatpush1.msra.mxu0 0.0
        %6176 = vmatprep.subr.mxu0 0.0
        %6177 = vmatpush1.msra.mxu0 0.0
        %6178 = vmatprep.subr.mxu0 0.0
        %6179 = vmatpush1.msra.mxu0 0.0
        %6180 = vmatprep.subr.mxu0 0.0
        %6181 = vmatpush1.msra.mxu0 0.0
        %6182 = vmatprep.subr.mxu0 0.0
        %6183 = vmatpush1.msra.mxu0 0.0
        %6184 = vmatprep.subr.mxu0 0.0
        %6185 = vmatpush1.msra.mxu0 0.0
        %6186 = vmatprep.subr.mxu0 0.0
        %6187 = vmatpush1.msra.mxu0 0.0
        %6188 = vmatprep.subr.mxu0 0.0
        %6189 = vmatpush1.msra.mxu0 0.0
        %6190 = vmatprep.subr.mxu0 0.0
        %6191 = vmatpush1.msra.mxu0 0.0
        %6192 = vmatprep.subr.mxu0 0.0
        %6193 = vmatpush1.msra.mxu0 0.0
        %6194 = vmatprep.subr.mxu0 0.0
        %6195 = vmatpush1.msra.mxu0 0.0
        %6196 = vmatprep.subr.mxu0 0.0
        %6197 = vmatpush1.msra.mxu0 0.0
        %6198 = vmatprep.mubr.f32.mxu0 0.0
        %6199 = vmatmul.mubr.f32.gmra.mrb[0].mxu0 %v2329
        %v6200 = vpop.f32.mrb[0].mxu0
        %v6201 = vadd.f32 %v6132, %v6200
        %v6202 = vpop.f32.mrb[0].mxu0
        %6203 = vmatprep.mubr.f32.mxu0 0.0
        %6204 = vmatmul.mubr.f32.gmra.mrb[0].mxu0 %v2332
        %v6205 = vpop.f32.mrb[0].mxu0
        %v6206 = vadd.f32 %v6132, %v6205
        %v6207 = vpop.f32.mrb[0].mxu0
        %6208 = vdwg.mxu0
        %s6209 = scalar_lea.vmem %s4, 1408
        %v6210 = vld [vmem:[%s6209] sm:$0xff]
        %v6211 = vld [vmem:[%s6209 + $0x8] sm:$0xff]
        %v6212 = vld [vmem:[%s6209 + $0x10] sm:$0xff]
        %v6213 = vld [vmem:[%s6209 + $0x18] sm:$0xff]
        %s6214 = scalar_lea.vmem %s5, 44
        %v6215 = vld [vmem:[%s6214] sm:$0x1]
        %v6217 = vlaneseq
        %v6218 = vshrl.u32 %v6217, 7
        %v6219 = vsub.s32 0, %v6218
        %v6220 = vrot.slane %v6215, %v6219
        %6222 = vmatprep.subr.mxu0 0.0
        %6223 = vmatpush1.msra.mxu0 %v6210
        %6224 = vmatprep.subr.mxu0 0.0
        %6225 = vmatpush1.msra.mxu0 %v6211
        %6226 = vmatprep.subr.mxu0 0.0
        %6227 = vmatpush1.msra.mxu0 %v6212
        %6228 = vmatprep.subr.mxu0 0.0
        %6229 = vmatpush1.msra.mxu0 %v6213
        %6230 = vmatprep.subr.mxu0 0.0
        %6231 = vmatpush1.msra.mxu0 0.0
        %6232 = vmatprep.subr.mxu0 0.0
        %6233 = vmatpush1.msra.mxu0 0.0
        %6234 = vmatprep.subr.mxu0 0.0
        %6235 = vmatpush1.msra.mxu0 0.0
        %6236 = vmatprep.subr.mxu0 0.0
        %6237 = vmatpush1.msra.mxu0 0.0
        %6238 = vmatprep.subr.mxu0 0.0
        %6239 = vmatpush1.msra.mxu0 0.0
        %6240 = vmatprep.subr.mxu0 0.0
        %6241 = vmatpush1.msra.mxu0 0.0
        %6242 = vmatprep.subr.mxu0 0.0
        %6243 = vmatpush1.msra.mxu0 0.0
        %6244 = vmatprep.subr.mxu0 0.0
        %6245 = vmatpush1.msra.mxu0 0.0
        %6246 = vmatprep.subr.mxu0 0.0
        %6247 = vmatpush1.msra.mxu0 0.0
        %6248 = vmatprep.subr.mxu0 0.0
        %6249 = vmatpush1.msra.mxu0 0.0
        %6250 = vmatprep.subr.mxu0 0.0
        %6251 = vmatpush1.msra.mxu0 0.0
        %6252 = vmatprep.subr.mxu0 0.0
        %6253 = vmatpush1.msra.mxu0 0.0
        %6254 = vmatprep.subr.mxu0 0.0
        %6255 = vmatpush1.msra.mxu0 0.0
        %6256 = vmatprep.subr.mxu0 0.0
        %6257 = vmatpush1.msra.mxu0 0.0
        %6258 = vmatprep.subr.mxu0 0.0
        %6259 = vmatpush1.msra.mxu0 0.0
        %6260 = vmatprep.subr.mxu0 0.0
        %6261 = vmatpush1.msra.mxu0 0.0
        %6262 = vmatprep.subr.mxu0 0.0
        %6263 = vmatpush1.msra.mxu0 0.0
        %6264 = vmatprep.subr.mxu0 0.0
        %6265 = vmatpush1.msra.mxu0 0.0
        %6266 = vmatprep.subr.mxu0 0.0
        %6267 = vmatpush1.msra.mxu0 0.0
        %6268 = vmatprep.subr.mxu0 0.0
        %6269 = vmatpush1.msra.mxu0 0.0
        %6270 = vmatprep.subr.mxu0 0.0
        %6271 = vmatpush1.msra.mxu0 0.0
        %6272 = vmatprep.subr.mxu0 0.0
        %6273 = vmatpush1.msra.mxu0 0.0
        %6274 = vmatprep.subr.mxu0 0.0
        %6275 = vmatpush1.msra.mxu0 0.0
        %6276 = vmatprep.subr.mxu0 0.0
        %6277 = vmatpush1.msra.mxu0 0.0
        %6278 = vmatprep.subr.mxu0 0.0
        %6279 = vmatpush1.msra.mxu0 0.0
        %6280 = vmatprep.subr.mxu0 0.0
        %6281 = vmatpush1.msra.mxu0 0.0
        %6282 = vmatprep.subr.mxu0 0.0
        %6283 = vmatpush1.msra.mxu0 0.0
        %6284 = vmatprep.subr.mxu0 0.0
        %6285 = vmatpush1.msra.mxu0 0.0
        %6286 = vmatprep.mubr.f32.mxu0 0.0
        %6287 = vmatmul.mubr.f32.gmra.mrb[0].mxu0 %v2329
        %v6288 = vpop.f32.mrb[0].mxu0
        %v6289 = vadd.f32 %v6220, %v6288
        %v6290 = vpop.f32.mrb[0].mxu0
        %6291 = vmatprep.mubr.f32.mxu0 0.0
        %6292 = vmatmul.mubr.f32.gmra.mrb[0].mxu0 %v2332
        %v6293 = vpop.f32.mrb[0].mxu0
        %v6294 = vadd.f32 %v6220, %v6293
        %v6295 = vpop.f32.mrb[0].mxu0
        %6296 = vdwg.mxu0
        %v6298 = vsel %vm706, %v6118, 0
        %v6301 = vsel %vm706, %v6201, 0
        %v6304 = vsel %vm706, %v6206, 0
        %6306 = vmatprep.subr.mxu0 0.0
        %6307 = vmatpush1.xpose.msra.mxu0 %v6301
        %6308 = vmatprep.subr.mxu0 0.0
        %6309 = vmatpush1.xpose.msra.mxu0 %v6304
        %6310 = vmatprep.subr.mxu0 0.0
        %6311 = vmatpush1.xpose.msra.mxu0 0.0
        %6312 = vmatprep.subr.mxu0 0.0
        %6313 = vmatpush1.xpose.msra.mxu0 0.0
        %6314 = vmatprep.subr.mxu0 0.0
        %6315 = vmatpush1.xpose.msra.mxu0 0.0
        %6316 = vmatprep.subr.mxu0 0.0
        %6317 = vmatpush1.xpose.msra.mxu0 0.0
        %6318 = vmatprep.subr.mxu0 0.0
        %6319 = vmatpush1.xpose.msra.mxu0 0.0
        %6320 = vmatprep.subr.mxu0 0.0
        %6321 = vmatpush1.xpose.msra.mxu0 0.0
        %6322 = vmatprep.subr.mxu0 0.0
        %6323 = vmatpush1.xpose.msra.mxu0 0.0
        %6324 = vmatprep.subr.mxu0 0.0
        %6325 = vmatpush1.xpose.msra.mxu0 0.0
        %6326 = vmatprep.subr.mxu0 0.0
        %6327 = vmatpush1.xpose.msra.mxu0 0.0
        %6328 = vmatprep.subr.mxu0 0.0
        %6329 = vmatpush1.xpose.msra.mxu0 0.0
        %6330 = vmatprep.subr.mxu0 0.0
        %6331 = vmatpush1.xpose.msra.mxu0 0.0
        %6332 = vmatprep.subr.mxu0 0.0
        %6333 = vmatpush1.xpose.msra.mxu0 0.0
        %6334 = vmatprep.subr.mxu0 0.0
        %6335 = vmatpush1.xpose.msra.mxu0 0.0
        %6336 = vmatprep.subr.mxu0 0.0
        %6337 = vmatpush1.xpose.msra.mxu0 0.0
        %6338 = vmatprep.subr.mxu0 0.0
        %6339 = vmatpush1.xpose.msra.mxu0 0.0
        %6340 = vmatprep.subr.mxu0 0.0
        %6341 = vmatpush1.xpose.msra.mxu0 0.0
        %6342 = vmatprep.subr.mxu0 0.0
        %6343 = vmatpush1.xpose.msra.mxu0 0.0
        %6344 = vmatprep.subr.mxu0 0.0
        %6345 = vmatpush1.xpose.msra.mxu0 0.0
        %6346 = vmatprep.subr.mxu0 0.0
        %6347 = vmatpush1.xpose.msra.mxu0 0.0
        %6348 = vmatprep.subr.mxu0 0.0
        %6349 = vmatpush1.xpose.msra.mxu0 0.0
        %6350 = vmatprep.subr.mxu0 0.0
        %6351 = vmatpush1.xpose.msra.mxu0 0.0
        %6352 = vmatprep.subr.mxu0 0.0
        %6353 = vmatpush1.xpose.msra.mxu0 0.0
        %6354 = vmatprep.subr.mxu0 0.0
        %6355 = vmatpush1.xpose.msra.mxu0 0.0
        %6356 = vmatprep.subr.mxu0 0.0
        %6357 = vmatpush1.xpose.msra.mxu0 0.0
        %6358 = vmatprep.subr.mxu0 0.0
        %6359 = vmatpush1.xpose.msra.mxu0 0.0
        %6360 = vmatprep.subr.mxu0 0.0
        %6361 = vmatpush1.xpose.msra.mxu0 0.0
        %6362 = vmatprep.subr.mxu0 0.0
        %6363 = vmatpush1.xpose.msra.mxu0 0.0
        %6364 = vmatprep.subr.mxu0 0.0
        %6365 = vmatpush1.xpose.msra.mxu0 0.0
        %6366 = vmatprep.subr.mxu0 0.0
        %6367 = vmatpush1.xpose.msra.mxu0 0.0
        %6368 = vmatprep.subr.mxu0 0.0
        %6369 = vmatpush1.xpose.msra.mxu0 0.0
        %6370 = vmatprep.mubr.f32.mxu0 0.0
        %6371 = vmatmul.mubr.f32.gmra.mrb[0].mxu0 %v6298
        %v6372 = vpop.f32.mrb[0].mxu0
        %v6373 = vadd.f32 0.0, %v6372
        %v6374 = vpop.f32.mrb[0].mxu0
        %6375 = vdwg.mxu0
        %v6376 = vmul.f32 %v6373, 0.35355338
        %v6377 = vadd.f32 %v6376, %v417
        %v6378 = vsel %vm2119, %v6377, -inf
        %6379 = vmax.xlane.f32.xlu0 %v6378
        %v6380 = vpop.xlane.xlu0 %6379
        %v6381 = vsub.f32 %v6377, %v6380
        %v6382 = vmul.f32 %v6381, 1.442695
        %v6383 = vpow.pop %v6382
        %v6384 = vsel %vm2119, %v6383, 0.0
        %6385 = vadd.xlane.f32.xlu0 %v6384
        %v6386 = vpop.xlane.xlu0 %6385
        %v6387 = vrcp.pop %v6386
        %v6388 = vmul.f32 %v6383, %v6387
        %v6389 = vsel %vm416, %v6388, 0.0
        %v6391 = vsel %vm2119, %v6389, 0
        %6393 = vmatprep.subr.mxu0 0.0
        %6394 = vmatpush1.msra.mxu0 %v6289
        %6395 = vmatprep.subr.mxu0 0.0
        %6396 = vmatpush1.msra.mxu0 %v6294
        %6397 = vmatprep.subr.mxu0 0.0
        %6398 = vmatpush1.msra.mxu0 0.0
        %6399 = vmatprep.subr.mxu0 0.0
        %6400 = vmatpush1.msra.mxu0 0.0
        %6401 = vmatprep.subr.mxu0 0.0
        %6402 = vmatpush1.msra.mxu0 0.0
        %6403 = vmatprep.subr.mxu0 0.0
        %6404 = vmatpush1.msra.mxu0 0.0
        %6405 = vmatprep.subr.mxu0 0.0
        %6406 = vmatpush1.msra.mxu0 0.0
        %6407 = vmatprep.subr.mxu0 0.0
        %6408 = vmatpush1.msra.mxu0 0.0
        %6409 = vmatprep.subr.mxu0 0.0
        %6410 = vmatpush1.msra.mxu0 0.0
        %6411 = vmatprep.subr.mxu0 0.0
        %6412 = vmatpush1.msra.mxu0 0.0
        %6413 = vmatprep.subr.mxu0 0.0
        %6414 = vmatpush1.msra.mxu0 0.0
        %6415 = vmatprep.subr.mxu0 0.0
        %6416 = vmatpush1.msra.mxu0 0.0
        %6417 = vmatprep.subr.mxu0 0.0
        %6418 = vmatpush1.msra.mxu0 0.0
        %6419 = vmatprep.subr.mxu0 0.0
        %6420 = vmatpush1.msra.mxu0 0.0
        %6421 = vmatprep.subr.mxu0 0.0
        %6422 = vmatpush1.msra.mxu0 0.0
        %6423 = vmatprep.subr.mxu0 0.0
        %6424 = vmatpush1.msra.mxu0 0.0
        %6425 = vmatprep.subr.mxu0 0.0
        %6426 = vmatpush1.msra.mxu0 0.0
        %6427 = vmatprep.subr.mxu0 0.0
        %6428 = vmatpush1.msra.mxu0 0.0
        %6429 = vmatprep.subr.mxu0 0.0
        %6430 = vmatpush1.msra.mxu0 0.0
        %6431 = vmatprep.subr.mxu0 0.0
        %6432 = vmatpush1.msra.mxu0 0.0
        %6433 = vmatprep.subr.mxu0 0.0
        %6434 = vmatpush1.msra.mxu0 0.0
        %6435 = vmatprep.subr.mxu0 0.0
        %6436 = vmatpush1.msra.mxu0 0.0
        %6437 = vmatprep.subr.mxu0 0.0
        %6438 = vmatpush1.msra.mxu0 0.0
        %6439 = vmatprep.subr.mxu0 0.0
        %6440 = vmatpush1.msra.mxu0 0.0
        %6441 = vmatprep.subr.mxu0 0.0
        %6442 = vmatpush1.msra.mxu0 0.0
        %6443 = vmatprep.subr.mxu0 0.0
        %6444 = vmatpush1.msra.mxu0 0.0
        %6445 = vmatprep.subr.mxu0 0.0
        %6446 = vmatpush1.msra.mxu0 0.0
        %6447 = vmatprep.subr.mxu0 0.0
        %6448 = vmatpush1.msra.mxu0 0.0
        %6449 = vmatprep.subr.mxu0 0.0
        %6450 = vmatpush1.msra.mxu0 0.0
        %6451 = vmatprep.subr.mxu0 0.0
        %6452 = vmatpush1.msra.mxu0 0.0
        %6453 = vmatprep.subr.mxu0 0.0
        %6454 = vmatpush1.msra.mxu0 0.0
        %6455 = vmatprep.subr.mxu0 0.0
        %6456 = vmatpush1.msra.mxu0 0.0
        %6457 = vmatprep.mubr.f32.mxu0 0.0
        %6458 = vmatmul.mubr.f32.gmra.mrb[0].mxu0 %v6391
        %v6459 = vpop.f32.mrb[0].mxu0
        %v6460 = vadd.f32 0.0, %v6459
        %v6461 = vpop.f32.mrb[0].mxu0
        %6462 = vdwg.mxu0
        %s6463 = scalar_lea.vmem %s4, 1184
        %v6464 = vld [vmem:[%s6463] sm:$0xff]
        %v6465 = vld [vmem:[%s6463 + $0x8] sm:$0xff]
        %v6466 = vld [vmem:[%s6463 + $0x10] sm:$0xff]
        %v6467 = vld [vmem:[%s6463 + $0x18] sm:$0xff]
        %s6468 = scalar_lea.vmem %s5, 37
        %v6469 = vld [vmem:[%s6468] sm:$0x1]
        %v6471 = vlaneseq
        %v6472 = vshrl.u32 %v6471, 7
        %v6473 = vsub.s32 0, %v6472
        %v6474 = vrot.slane %v6469, %v6473
        %6476 = vmatprep.subr.mxu0 0.0
        %6477 = vmatpush1.msra.mxu0 %v6464
        %6478 = vmatprep.subr.mxu0 0.0
        %6479 = vmatpush1.msra.mxu0 %v6465
        %6480 = vmatprep.subr.mxu0 0.0
        %6481 = vmatpush1.msra.mxu0 %v6466
        %6482 = vmatprep.subr.mxu0 0.0
        %6483 = vmatpush1.msra.mxu0 %v6467
        %6484 = vmatprep.subr.mxu0 0.0
        %6485 = vmatpush1.msra.mxu0 0.0
        %6486 = vmatprep.subr.mxu0 0.0
        %6487 = vmatpush1.msra.mxu0 0.0
        %6488 = vmatprep.subr.mxu0 0.0
        %6489 = vmatpush1.msra.mxu0 0.0
        %6490 = vmatprep.subr.mxu0 0.0
        %6491 = vmatpush1.msra.mxu0 0.0
        %6492 = vmatprep.subr.mxu0 0.0
        %6493 = vmatpush1.msra.mxu0 0.0
        %6494 = vmatprep.subr.mxu0 0.0
        %6495 = vmatpush1.msra.mxu0 0.0
        %6496 = vmatprep.subr.mxu0 0.0
        %6497 = vmatpush1.msra.mxu0 0.0
        %6498 = vmatprep.subr.mxu0 0.0
        %6499 = vmatpush1.msra.mxu0 0.0
        %6500 = vmatprep.subr.mxu0 0.0
        %6501 = vmatpush1.msra.mxu0 0.0
        %6502 = vmatprep.subr.mxu0 0.0
        %6503 = vmatpush1.msra.mxu0 0.0
        %6504 = vmatprep.subr.mxu0 0.0
        %6505 = vmatpush1.msra.mxu0 0.0
        %6506 = vmatprep.subr.mxu0 0.0
        %6507 = vmatpush1.msra.mxu0 0.0
        %6508 = vmatprep.subr.mxu0 0.0
        %6509 = vmatpush1.msra.mxu0 0.0
        %6510 = vmatprep.subr.mxu0 0.0
        %6511 = vmatpush1.msra.mxu0 0.0
        %6512 = vmatprep.subr.mxu0 0.0
        %6513 = vmatpush1.msra.mxu0 0.0
        %6514 = vmatprep.subr.mxu0 0.0
        %6515 = vmatpush1.msra.mxu0 0.0
        %6516 = vmatprep.subr.mxu0 0.0
        %6517 = vmatpush1.msra.mxu0 0.0
        %6518 = vmatprep.subr.mxu0 0.0
        %6519 = vmatpush1.msra.mxu0 0.0
        %6520 = vmatprep.subr.mxu0 0.0
        %6521 = vmatpush1.msra.mxu0 0.0
        %6522 = vmatprep.subr.mxu0 0.0
        %6523 = vmatpush1.msra.mxu0 0.0
        %6524 = vmatprep.subr.mxu0 0.0
        %6525 = vmatpush1.msra.mxu0 0.0
        %6526 = vmatprep.subr.mxu0 0.0
        %6527 = vmatpush1.msra.mxu0 0.0
        %6528 = vmatprep.subr.mxu0 0.0
        %6529 = vmatpush1.msra.mxu0 0.0
        %6530 = vmatprep.subr.mxu0 0.0
        %6531 = vmatpush1.msra.mxu0 0.0
        %6532 = vmatprep.subr.mxu0 0.0
        %6533 = vmatpush1.msra.mxu0 0.0
        %6534 = vmatprep.subr.mxu0 0.0
        %6535 = vmatpush1.msra.mxu0 0.0
        %6536 = vmatprep.subr.mxu0 0.0
        %6537 = vmatpush1.msra.mxu0 0.0
        %6538 = vmatprep.subr.mxu0 0.0
        %6539 = vmatpush1.msra.mxu0 0.0
        %6540 = vmatprep.mubr.f32.mxu0 0.0
        %6541 = vmatmul.mubr.f32.gmra.mrb[0].mxu0 %v6049
        %v6542 = vpop.f32.mrb[0].mxu0
        %v6543 = vadd.f32 %v6474, %v6542
        %v6544 = vpop.f32.mrb[0].mxu0
        %6545 = vdwg.mxu0
        %s6546 = scalar_lea.vmem %s4, 1312
        %v6547 = vld [vmem:[%s6546] sm:$0xff]
        %v6548 = vld [vmem:[%s6546 + $0x8] sm:$0xff]
        %v6549 = vld [vmem:[%s6546 + $0x10] sm:$0xff]
        %v6550 = vld [vmem:[%s6546 + $0x18] sm:$0xff]
        %s6551 = scalar_lea.vmem %s5, 41
        %v6552 = vld [vmem:[%s6551] sm:$0x1]
        %v6554 = vlaneseq
        %v6555 = vshrl.u32 %v6554, 7
        %v6556 = vsub.s32 0, %v6555
        %v6557 = vrot.slane %v6552, %v6556
        %6559 = vmatprep.subr.mxu0 0.0
        %6560 = vmatpush1.msra.mxu0 %v6547
        %6561 = vmatprep.subr.mxu0 0.0
        %6562 = vmatpush1.msra.mxu0 %v6548
        %6563 = vmatprep.subr.mxu0 0.0
        %6564 = vmatpush1.msra.mxu0 %v6549
        %6565 = vmatprep.subr.mxu0 0.0
        %6566 = vmatpush1.msra.mxu0 %v6550
        %6567 = vmatprep.subr.mxu0 0.0
        %6568 = vmatpush1.msra.mxu0 0.0
        %6569 = vmatprep.subr.mxu0 0.0
        %6570 = vmatpush1.msra.mxu0 0.0
        %6571 = vmatprep.subr.mxu0 0.0
        %6572 = vmatpush1.msra.mxu0 0.0
        %6573 = vmatprep.subr.mxu0 0.0
        %6574 = vmatpush1.msra.mxu0 0.0
        %6575 = vmatprep.subr.mxu0 0.0
        %6576 = vmatpush1.msra.mxu0 0.0
        %6577 = vmatprep.subr.mxu0 0.0
        %6578 = vmatpush1.msra.mxu0 0.0
        %6579 = vmatprep.subr.mxu0 0.0
        %6580 = vmatpush1.msra.mxu0 0.0
        %6581 = vmatprep.subr.mxu0 0.0
        %6582 = vmatpush1.msra.mxu0 0.0
        %6583 = vmatprep.subr.mxu0 0.0
        %6584 = vmatpush1.msra.mxu0 0.0
        %6585 = vmatprep.subr.mxu0 0.0
        %6586 = vmatpush1.msra.mxu0 0.0
        %6587 = vmatprep.subr.mxu0 0.0
        %6588 = vmatpush1.msra.mxu0 0.0
        %6589 = vmatprep.subr.mxu0 0.0
        %6590 = vmatpush1.msra.mxu0 0.0
        %6591 = vmatprep.subr.mxu0 0.0
        %6592 = vmatpush1.msra.mxu0 0.0
        %6593 = vmatprep.subr.mxu0 0.0
        %6594 = vmatpush1.msra.mxu0 0.0
        %6595 = vmatprep.subr.mxu0 0.0
        %6596 = vmatpush1.msra.mxu0 0.0
        %6597 = vmatprep.subr.mxu0 0.0
        %6598 = vmatpush1.msra.mxu0 0.0
        %6599 = vmatprep.subr.mxu0 0.0
        %6600 = vmatpush1.msra.mxu0 0.0
        %6601 = vmatprep.subr.mxu0 0.0
        %6602 = vmatpush1.msra.mxu0 0.0
        %6603 = vmatprep.subr.mxu0 0.0
        %6604 = vmatpush1.msra.mxu0 0.0
        %6605 = vmatprep.subr.mxu0 0.0
        %6606 = vmatpush1.msra.mxu0 0.0
        %6607 = vmatprep.subr.mxu0 0.0
        %6608 = vmatpush1.msra.mxu0 0.0
        %6609 = vmatprep.subr.mxu0 0.0
        %6610 = vmatpush1.msra.mxu0 0.0
        %6611 = vmatprep.subr.mxu0 0.0
        %6612 = vmatpush1.msra.mxu0 0.0
        %6613 = vmatprep.subr.mxu0 0.0
        %6614 = vmatpush1.msra.mxu0 0.0
        %6615 = vmatprep.subr.mxu0 0.0
        %6616 = vmatpush1.msra.mxu0 0.0
        %6617 = vmatprep.subr.mxu0 0.0
        %6618 = vmatpush1.msra.mxu0 0.0
        %6619 = vmatprep.subr.mxu0 0.0
        %6620 = vmatpush1.msra.mxu0 0.0
        %6621 = vmatprep.subr.mxu0 0.0
        %6622 = vmatpush1.msra.mxu0 0.0
        %6623 = vmatprep.mubr.f32.mxu0 0.0
        %6624 = vmatmul.mubr.f32.gmra.mrb[0].mxu0 %v2329
        %v6625 = vpop.f32.mrb[0].mxu0
        %v6626 = vadd.f32 %v6557, %v6625
        %v6627 = vpop.f32.mrb[0].mxu0
        %6628 = vmatprep.mubr.f32.mxu0 0.0
        %6629 = vmatmul.mubr.f32.gmra.mrb[0].mxu0 %v2332
        %v6630 = vpop.f32.mrb[0].mxu0
        %v6631 = vadd.f32 %v6557, %v6630
        %v6632 = vpop.f32.mrb[0].mxu0
        %6633 = vdwg.mxu0
        %s6634 = scalar_lea.vmem %s4, 1440
        %v6635 = vld [vmem:[%s6634] sm:$0xff]
        %v6636 = vld [vmem:[%s6634 + $0x8] sm:$0xff]
        %v6637 = vld [vmem:[%s6634 + $0x10] sm:$0xff]
        %v6638 = vld [vmem:[%s6634 + $0x18] sm:$0xff]
        %s6639 = scalar_lea.vmem %s5, 45
        %v6640 = vld [vmem:[%s6639] sm:$0x1]
        %v6642 = vlaneseq
        %v6643 = vshrl.u32 %v6642, 7
        %v6644 = vsub.s32 0, %v6643
        %v6645 = vrot.slane %v6640, %v6644
        %6647 = vmatprep.subr.mxu0 0.0
        %6648 = vmatpush1.msra.mxu0 %v6635
        %6649 = vmatprep.subr.mxu0 0.0
        %6650 = vmatpush1.msra.mxu0 %v6636
        %6651 = vmatprep.subr.mxu0 0.0
        %6652 = vmatpush1.msra.mxu0 %v6637
        %6653 = vmatprep.subr.mxu0 0.0
        %6654 = vmatpush1.msra.mxu0 %v6638
        %6655 = vmatprep.subr.mxu0 0.0
        %6656 = vmatpush1.msra.mxu0 0.0
        %6657 = vmatprep.subr.mxu0 0.0
        %6658 = vmatpush1.msra.mxu0 0.0
        %6659 = vmatprep.subr.mxu0 0.0
        %6660 = vmatpush1.msra.mxu0 0.0
        %6661 = vmatprep.subr.mxu0 0.0
        %6662 = vmatpush1.msra.mxu0 0.0
        %6663 = vmatprep.subr.mxu0 0.0
        %6664 = vmatpush1.msra.mxu0 0.0
        %6665 = vmatprep.subr.mxu0 0.0
        %6666 = vmatpush1.msra.mxu0 0.0
        %6667 = vmatprep.subr.mxu0 0.0
        %6668 = vmatpush1.msra.mxu0 0.0
        %6669 = vmatprep.subr.mxu0 0.0
        %6670 = vmatpush1.msra.mxu0 0.0
        %6671 = vmatprep.subr.mxu0 0.0
        %6672 = vmatpush1.msra.mxu0 0.0
        %6673 = vmatprep.subr.mxu0 0.0
        %6674 = vmatpush1.msra.mxu0 0.0
        %6675 = vmatprep.subr.mxu0 0.0
        %6676 = vmatpush1.msra.mxu0 0.0
        %6677 = vmatprep.subr.mxu0 0.0
        %6678 = vmatpush1.msra.mxu0 0.0
        %6679 = vmatprep.subr.mxu0 0.0
        %6680 = vmatpush1.msra.mxu0 0.0
        %6681 = vmatprep.subr.mxu0 0.0
        %6682 = vmatpush1.msra.mxu0 0.0
        %6683 = vmatprep.subr.mxu0 0.0
        %6684 = vmatpush1.msra.mxu0 0.0
        %6685 = vmatprep.subr.mxu0 0.0
        %6686 = vmatpush1.msra.mxu0 0.0
        %6687 = vmatprep.subr.mxu0 0.0
        %6688 = vmatpush1.msra.mxu0 0.0
        %6689 = vmatprep.subr.mxu0 0.0
        %6690 = vmatpush1.msra.mxu0 0.0
        %6691 = vmatprep.subr.mxu0 0.0
        %6692 = vmatpush1.msra.mxu0 0.0
        %6693 = vmatprep.subr.mxu0 0.0
        %6694 = vmatpush1.msra.mxu0 0.0
        %6695 = vmatprep.subr.mxu0 0.0
        %6696 = vmatpush1.msra.mxu0 0.0
        %6697 = vmatprep.subr.mxu0 0.0
        %6698 = vmatpush1.msra.mxu0 0.0
        %6699 = vmatprep.subr.mxu0 0.0
        %6700 = vmatpush1.msra.mxu0 0.0
        %6701 = vmatprep.subr.mxu0 0.0
        %6702 = vmatpush1.msra.mxu0 0.0
        %6703 = vmatprep.subr.mxu0 0.0
        %6704 = vmatpush1.msra.mxu0 0.0
        %6705 = vmatprep.subr.mxu0 0.0
        %6706 = vmatpush1.msra.mxu0 0.0
        %6707 = vmatprep.subr.mxu0 0.0
        %6708 = vmatpush1.msra.mxu0 0.0
        %6709 = vmatprep.subr.mxu0 0.0
        %6710 = vmatpush1.msra.mxu0 0.0
        %6711 = vmatprep.mubr.f32.mxu0 0.0
        %6712 = vmatmul.mubr.f32.gmra.mrb[0].mxu0 %v2329
        %v6713 = vpop.f32.mrb[0].mxu0
        %v6714 = vadd.f32 %v6645, %v6713
        %v6715 = vpop.f32.mrb[0].mxu0
        %6716 = vmatprep.mubr.f32.mxu0 0.0
        %6717 = vmatmul.mubr.f32.gmra.mrb[0].mxu0 %v2332
        %v6718 = vpop.f32.mrb[0].mxu0
        %v6719 = vadd.f32 %v6645, %v6718
        %v6720 = vpop.f32.mrb[0].mxu0
        %6721 = vdwg.mxu0
        %v6723 = vsel %vm706, %v6543, 0
        %v6726 = vsel %vm706, %v6626, 0
        %v6729 = vsel %vm706, %v6631, 0
        %6731 = vmatprep.subr.mxu0 0.0
        %6732 = vmatpush1.xpose.msra.mxu0 %v6726
        %6733 = vmatprep.subr.mxu0 0.0
        %6734 = vmatpush1.xpose.msra.mxu0 %v6729
        %6735 = vmatprep.subr.mxu0 0.0
        %6736 = vmatpush1.xpose.msra.mxu0 0.0
        %6737 = vmatprep.subr.mxu0 0.0
        %6738 = vmatpush1.xpose.msra.mxu0 0.0
        %6739 = vmatprep.subr.mxu0 0.0
        %6740 = vmatpush1.xpose.msra.mxu0 0.0
        %6741 = vmatprep.subr.mxu0 0.0
        %6742 = vmatpush1.xpose.msra.mxu0 0.0
        %6743 = vmatprep.subr.mxu0 0.0
        %6744 = vmatpush1.xpose.msra.mxu0 0.0
        %6745 = vmatprep.subr.mxu0 0.0
        %6746 = vmatpush1.xpose.msra.mxu0 0.0
        %6747 = vmatprep.subr.mxu0 0.0
        %6748 = vmatpush1.xpose.msra.mxu0 0.0
        %6749 = vmatprep.subr.mxu0 0.0
        %6750 = vmatpush1.xpose.msra.mxu0 0.0
        %6751 = vmatprep.subr.mxu0 0.0
        %6752 = vmatpush1.xpose.msra.mxu0 0.0
        %6753 = vmatprep.subr.mxu0 0.0
        %6754 = vmatpush1.xpose.msra.mxu0 0.0
        %6755 = vmatprep.subr.mxu0 0.0
        %6756 = vmatpush1.xpose.msra.mxu0 0.0
        %6757 = vmatprep.subr.mxu0 0.0
        %6758 = vmatpush1.xpose.msra.mxu0 0.0
        %6759 = vmatprep.subr.mxu0 0.0
        %6760 = vmatpush1.xpose.msra.mxu0 0.0
        %6761 = vmatprep.subr.mxu0 0.0
        %6762 = vmatpush1.xpose.msra.mxu0 0.0
        %6763 = vmatprep.subr.mxu0 0.0
        %6764 = vmatpush1.xpose.msra.mxu0 0.0
        %6765 = vmatprep.subr.mxu0 0.0
        %6766 = vmatpush1.xpose.msra.mxu0 0.0
        %6767 = vmatprep.subr.mxu0 0.0
        %6768 = vmatpush1.xpose.msra.mxu0 0.0
        %6769 = vmatprep.subr.mxu0 0.0
        %6770 = vmatpush1.xpose.msra.mxu0 0.0
        %6771 = vmatprep.subr.mxu0 0.0
        %6772 = vmatpush1.xpose.msra.mxu0 0.0
        %6773 = vmatprep.subr.mxu0 0.0
        %6774 = vmatpush1.xpose.msra.mxu0 0.0
        %6775 = vmatprep.subr.mxu0 0.0
        %6776 = vmatpush1.xpose.msra.mxu0 0.0
        %6777 = vmatprep.subr.mxu0 0.0
        %6778 = vmatpush1.xpose.msra.mxu0 0.0
        %6779 = vmatprep.subr.mxu0 0.0
        %6780 = vmatpush1.xpose.msra.mxu0 0.0
        %6781 = vmatprep.subr.mxu0 0.0
        %6782 = vmatpush1.xpose.msra.mxu0 0.0
        %6783 = vmatprep.subr.mxu0 0.0
        %6784 = vmatpush1.xpose.msra.mxu0 0.0
        %6785 = vmatprep.subr.mxu0 0.0
        %6786 = vmatpush1.xpose.msra.mxu0 0.0
        %6787 = vmatprep.subr.mxu0 0.0
        %6788 = vmatpush1.xpose.msra.mxu0 0.0
        %6789 = vmatprep.subr.mxu0 0.0
        %6790 = vmatpush1.xpose.msra.mxu0 0.0
        %6791 = vmatprep.subr.mxu0 0.0
        %6792 = vmatpush1.xpose.msra.mxu0 0.0
        %6793 = vmatprep.subr.mxu0 0.0
        %6794 = vmatpush1.xpose.msra.mxu0 0.0
        %6795 = vmatprep.mubr.f32.mxu0 0.0
        %6796 = vmatmul.mubr.f32.gmra.mrb[0].mxu0 %v6723
        %v6797 = vpop.f32.mrb[0].mxu0
        %v6798 = vadd.f32 0.0, %v6797
        %v6799 = vpop.f32.mrb[0].mxu0
        %6800 = vdwg.mxu0
        %v6801 = vmul.f32 %v6798, 0.35355338
        %v6802 = vadd.f32 %v6801, %v417
        %v6803 = vsel %vm2119, %v6802, -inf
        %6804 = vmax.xlane.f32.xlu0 %v6803
        %v6805 = vpop.xlane.xlu0 %6804
        %v6806 = vsub.f32 %v6802, %v6805
        %v6807 = vmul.f32 %v6806, 1.442695
        %v6808 = vpow.pop %v6807
        %v6809 = vsel %vm2119, %v6808, 0.0
        %6810 = vadd.xlane.f32.xlu0 %v6809
        %v6811 = vpop.xlane.xlu0 %6810
        %v6812 = vrcp.pop %v6811
        %v6813 = vmul.f32 %v6808, %v6812
        %v6814 = vsel %vm416, %v6813, 0.0
        %v6816 = vsel %vm2119, %v6814, 0
        %6818 = vmatprep.subr.mxu0 0.0
        %6819 = vmatpush1.msra.mxu0 %v6714
        %6820 = vmatprep.subr.mxu0 0.0
        %6821 = vmatpush1.msra.mxu0 %v6719
        %6822 = vmatprep.subr.mxu0 0.0
        %6823 = vmatpush1.msra.mxu0 0.0
        %6824 = vmatprep.subr.mxu0 0.0
        %6825 = vmatpush1.msra.mxu0 0.0
        %6826 = vmatprep.subr.mxu0 0.0
        %6827 = vmatpush1.msra.mxu0 0.0
        %6828 = vmatprep.subr.mxu0 0.0
        %6829 = vmatpush1.msra.mxu0 0.0
        %6830 = vmatprep.subr.mxu0 0.0
        %6831 = vmatpush1.msra.mxu0 0.0
        %6832 = vmatprep.subr.mxu0 0.0
        %6833 = vmatpush1.msra.mxu0 0.0
        %6834 = vmatprep.subr.mxu0 0.0
        %6835 = vmatpush1.msra.mxu0 0.0
        %6836 = vmatprep.subr.mxu0 0.0
        %6837 = vmatpush1.msra.mxu0 0.0
        %6838 = vmatprep.subr.mxu0 0.0
        %6839 = vmatpush1.msra.mxu0 0.0
        %6840 = vmatprep.subr.mxu0 0.0
        %6841 = vmatpush1.msra.mxu0 0.0
        %6842 = vmatprep.subr.mxu0 0.0
        %6843 = vmatpush1.msra.mxu0 0.0
        %6844 = vmatprep.subr.mxu0 0.0
        %6845 = vmatpush1.msra.mxu0 0.0
        %6846 = vmatprep.subr.mxu0 0.0
        %6847 = vmatpush1.msra.mxu0 0.0
        %6848 = vmatprep.subr.mxu0 0.0
        %6849 = vmatpush1.msra.mxu0 0.0
        %6850 = vmatprep.subr.mxu0 0.0
        %6851 = vmatpush1.msra.mxu0 0.0
        %6852 = vmatprep.subr.mxu0 0.0
        %6853 = vmatpush1.msra.mxu0 0.0
        %6854 = vmatprep.subr.mxu0 0.0
        %6855 = vmatpush1.msra.mxu0 0.0
        %6856 = vmatprep.subr.mxu0 0.0
        %6857 = vmatpush1.msra.mxu0 0.0
        %6858 = vmatprep.subr.mxu0 0.0
        %6859 = vmatpush1.msra.mxu0 0.0
        %6860 = vmatprep.subr.mxu0 0.0
        %6861 = vmatpush1.msra.mxu0 0.0
        %6862 = vmatprep.subr.mxu0 0.0
        %6863 = vmatpush1.msra.mxu0 0.0
        %6864 = vmatprep.subr.mxu0 0.0
        %6865 = vmatpush1.msra.mxu0 0.0
        %6866 = vmatprep.subr.mxu0 0.0
        %6867 = vmatpush1.msra.mxu0 0.0
        %6868 = vmatprep.subr.mxu0 0.0
        %6869 = vmatpush1.msra.mxu0 0.0
        %6870 = vmatprep.subr.mxu0 0.0
        %6871 = vmatpush1.msra.mxu0 0.0
        %6872 = vmatprep.subr.mxu0 0.0
        %6873 = vmatpush1.msra.mxu0 0.0
        %6874 = vmatprep.subr.mxu0 0.0
        %6875 = vmatpush1.msra.mxu0 0.0
        %6876 = vmatprep.subr.mxu0 0.0
        %6877 = vmatpush1.msra.mxu0 0.0
        %6878 = vmatprep.subr.mxu0 0.0
        %6879 = vmatpush1.msra.mxu0 0.0
        %6880 = vmatprep.subr.mxu0 0.0
        %6881 = vmatpush1.msra.mxu0 0.0
        %6882 = vmatprep.mubr.f32.mxu0 0.0
        %6883 = vmatmul.mubr.f32.gmra.mrb[0].mxu0 %v6816
        %v6884 = vpop.f32.mrb[0].mxu0
        %v6885 = vadd.f32 0.0, %v6884
        %v6886 = vpop.f32.mrb[0].mxu0
        %6887 = vdwg.mxu0
        %s6888 = scalar_lea.vmem %s4, 1216
        %v6889 = vld [vmem:[%s6888] sm:$0xff]
        %v6890 = vld [vmem:[%s6888 + $0x8] sm:$0xff]
        %v6891 = vld [vmem:[%s6888 + $0x10] sm:$0xff]
        %v6892 = vld [vmem:[%s6888 + $0x18] sm:$0xff]
        %s6893 = scalar_lea.vmem %s5, 38
        %v6894 = vld [vmem:[%s6893] sm:$0x1]
        %v6896 = vlaneseq
        %v6897 = vshrl.u32 %v6896, 7
        %v6898 = vsub.s32 0, %v6897
        %v6899 = vrot.slane %v6894, %v6898
        %6901 = vmatprep.subr.mxu0 0.0
        %6902 = vmatpush1.msra.mxu0 %v6889
        %6903 = vmatprep.subr.mxu0 0.0
        %6904 = vmatpush1.msra.mxu0 %v6890
        %6905 = vmatprep.subr.mxu0 0.0
        %6906 = vmatpush1.msra.mxu0 %v6891
        %6907 = vmatprep.subr.mxu0 0.0
        %6908 = vmatpush1.msra.mxu0 %v6892
        %6909 = vmatprep.subr.mxu0 0.0
        %6910 = vmatpush1.msra.mxu0 0.0
        %6911 = vmatprep.subr.mxu0 0.0
        %6912 = vmatpush1.msra.mxu0 0.0
        %6913 = vmatprep.subr.mxu0 0.0
        %6914 = vmatpush1.msra.mxu0 0.0
        %6915 = vmatprep.subr.mxu0 0.0
        %6916 = vmatpush1.msra.mxu0 0.0
        %6917 = vmatprep.subr.mxu0 0.0
        %6918 = vmatpush1.msra.mxu0 0.0
        %6919 = vmatprep.subr.mxu0 0.0
        %6920 = vmatpush1.msra.mxu0 0.0
        %6921 = vmatprep.subr.mxu0 0.0
        %6922 = vmatpush1.msra.mxu0 0.0
        %6923 = vmatprep.subr.mxu0 0.0
        %6924 = vmatpush1.msra.mxu0 0.0
        %6925 = vmatprep.subr.mxu0 0.0
        %6926 = vmatpush1.msra.mxu0 0.0
        %6927 = vmatprep.subr.mxu0 0.0
        %6928 = vmatpush1.msra.mxu0 0.0
        %6929 = vmatprep.subr.mxu0 0.0
        %6930 = vmatpush1.msra.mxu0 0.0
        %6931 = vmatprep.subr.mxu0 0.0
        %6932 = vmatpush1.msra.mxu0 0.0
        %6933 = vmatprep.subr.mxu0 0.0
        %6934 = vmatpush1.msra.mxu0 0.0
        %6935 = vmatprep.subr.mxu0 0.0
        %6936 = vmatpush1.msra.mxu0 0.0
        %6937 = vmatprep.subr.mxu0 0.0
        %6938 = vmatpush1.msra.mxu0 0.0
        %6939 = vmatprep.subr.mxu0 0.0
        %6940 = vmatpush1.msra.mxu0 0.0
        %6941 = vmatprep.subr.mxu0 0.0
        %6942 = vmatpush1.msra.mxu0 0.0
        %6943 = vmatprep.subr.mxu0 0.0
        %6944 = vmatpush1.msra.mxu0 0.0
        %6945 = vmatprep.subr.mxu0 0.0
        %6946 = vmatpush1.msra.mxu0 0.0
        %6947 = vmatprep.subr.mxu0 0.0
        %6948 = vmatpush1.msra.mxu0 0.0
        %6949 = vmatprep.subr.mxu0 0.0
        %6950 = vmatpush1.msra.mxu0 0.0
        %6951 = vmatprep.subr.mxu0 0.0
        %6952 = vmatpush1.msra.mxu0 0.0
        %6953 = vmatprep.subr.mxu0 0.0
        %6954 = vmatpush1.msra.mxu0 0.0
        %6955 = vmatprep.subr.mxu0 0.0
        %6956 = vmatpush1.msra.mxu0 0.0
        %6957 = vmatprep.subr.mxu0 0.0
        %6958 = vmatpush1.msra.mxu0 0.0
        %6959 = vmatprep.subr.mxu0 0.0
        %6960 = vmatpush1.msra.mxu0 0.0
        %6961 = vmatprep.subr.mxu0 0.0
        %6962 = vmatpush1.msra.mxu0 0.0
        %6963 = vmatprep.subr.mxu0 0.0
        %6964 = vmatpush1.msra.mxu0 0.0
        %6965 = vmatprep.mubr.f32.mxu0 0.0
        %6966 = vmatmul.mubr.f32.gmra.mrb[0].mxu0 %v6049
        %v6967 = vpop.f32.mrb[0].mxu0
        %v6968 = vadd.f32 %v6899, %v6967
        %v6969 = vpop.f32.mrb[0].mxu0
        %6970 = vdwg.mxu0
        %s6971 = scalar_lea.vmem %s4, 1344
        %v6972 = vld [vmem:[%s6971] sm:$0xff]
        %v6973 = vld [vmem:[%s6971 + $0x8] sm:$0xff]
        %v6974 = vld [vmem:[%s6971 + $0x10] sm:$0xff]
        %v6975 = vld [vmem:[%s6971 + $0x18] sm:$0xff]
        %s6976 = scalar_lea.vmem %s5, 42
        %v6977 = vld [vmem:[%s6976] sm:$0x1]
        %v6979 = vlaneseq
        %v6980 = vshrl.u32 %v6979, 7
        %v6981 = vsub.s32 0, %v6980
        %v6982 = vrot.slane %v6977, %v6981
        %6984 = vmatprep.subr.mxu0 0.0
        %6985 = vmatpush1.msra.mxu0 %v6972
        %6986 = vmatprep.subr.mxu0 0.0
        %6987 = vmatpush1.msra.mxu0 %v6973
        %6988 = vmatprep.subr.mxu0 0.0
        %6989 = vmatpush1.msra.mxu0 %v6974
        %6990 = vmatprep.subr.mxu0 0.0
        %6991 = vmatpush1.msra.mxu0 %v6975
        %6992 = vmatprep.subr.mxu0 0.0
        %6993 = vmatpush1.msra.mxu0 0.0
        %6994 = vmatprep.subr.mxu0 0.0
        %6995 = vmatpush1.msra.mxu0 0.0
        %6996 = vmatprep.subr.mxu0 0.0
        %6997 = vmatpush1.msra.mxu0 0.0
        %6998 = vmatprep.subr.mxu0 0.0
        %6999 = vmatpush1.msra.mxu0 0.0
        %7000 = vmatprep.subr.mxu0 0.0
        %7001 = vmatpush1.msra.mxu0 0.0
        %7002 = vmatprep.subr.mxu0 0.0
        %7003 = vmatpush1.msra.mxu0 0.0
        %7004 = vmatprep.subr.mxu0 0.0
        %7005 = vmatpush1.msra.mxu0 0.0
        %7006 = vmatprep.subr.mxu0 0.0
        %7007 = vmatpush1.msra.mxu0 0.0
        %7008 = vmatprep.subr.mxu0 0.0
        %7009 = vmatpush1.msra.mxu0 0.0
        %7010 = vmatprep.subr.mxu0 0.0
        %7011 = vmatpush1.msra.mxu0 0.0
        %7012 = vmatprep.subr.mxu0 0.0
        %7013 = vmatpush1.msra.mxu0 0.0
        %7014 = vmatprep.subr.mxu0 0.0
        %7015 = vmatpush1.msra.mxu0 0.0
        %7016 = vmatprep.subr.mxu0 0.0
        %7017 = vmatpush1.msra.mxu0 0.0
        %7018 = vmatprep.subr.mxu0 0.0
        %7019 = vmatpush1.msra.mxu0 0.0
        %7020 = vmatprep.subr.mxu0 0.0
        %7021 = vmatpush1.msra.mxu0 0.0
        %7022 = vmatprep.subr.mxu0 0.0
        %7023 = vmatpush1.msra.mxu0 0.0
        %7024 = vmatprep.subr.mxu0 0.0
        %7025 = vmatpush1.msra.mxu0 0.0
        %7026 = vmatprep.subr.mxu0 0.0
        %7027 = vmatpush1.msra.mxu0 0.0
        %7028 = vmatprep.subr.mxu0 0.0
        %7029 = vmatpush1.msra.mxu0 0.0
        %7030 = vmatprep.subr.mxu0 0.0
        %7031 = vmatpush1.msra.mxu0 0.0
        %7032 = vmatprep.subr.mxu0 0.0
        %7033 = vmatpush1.msra.mxu0 0.0
        %7034 = vmatprep.subr.mxu0 0.0
        %7035 = vmatpush1.msra.mxu0 0.0
        %7036 = vmatprep.subr.mxu0 0.0
        %7037 = vmatpush1.msra.mxu0 0.0
        %7038 = vmatprep.subr.mxu0 0.0
        %7039 = vmatpush1.msra.mxu0 0.0
        %7040 = vmatprep.subr.mxu0 0.0
        %7041 = vmatpush1.msra.mxu0 0.0
        %7042 = vmatprep.subr.mxu0 0.0
        %7043 = vmatpush1.msra.mxu0 0.0
        %7044 = vmatprep.subr.mxu0 0.0
        %7045 = vmatpush1.msra.mxu0 0.0
        %7046 = vmatprep.subr.mxu0 0.0
        %7047 = vmatpush1.msra.mxu0 0.0
        %7048 = vmatprep.mubr.f32.mxu0 0.0
        %7049 = vmatmul.mubr.f32.gmra.mrb[0].mxu0 %v2329
        %v7050 = vpop.f32.mrb[0].mxu0
        %v7051 = vadd.f32 %v6982, %v7050
        %v7052 = vpop.f32.mrb[0].mxu0
        %7053 = vmatprep.mubr.f32.mxu0 0.0
        %7054 = vmatmul.mubr.f32.gmra.mrb[0].mxu0 %v2332
        %v7055 = vpop.f32.mrb[0].mxu0
        %v7056 = vadd.f32 %v6982, %v7055
        %v7057 = vpop.f32.mrb[0].mxu0
        %7058 = vdwg.mxu0
        %s7059 = scalar_lea.vmem %s4, 1472
        %v7060 = vld [vmem:[%s7059] sm:$0xff]
        %v7061 = vld [vmem:[%s7059 + $0x8] sm:$0xff]
        %v7062 = vld [vmem:[%s7059 + $0x10] sm:$0xff]
        %v7063 = vld [vmem:[%s7059 + $0x18] sm:$0xff]
        %s7064 = scalar_lea.vmem %s5, 46
        %v7065 = vld [vmem:[%s7064] sm:$0x1]
        %v7067 = vlaneseq
        %v7068 = vshrl.u32 %v7067, 7
        %v7069 = vsub.s32 0, %v7068
        %v7070 = vrot.slane %v7065, %v7069
        %7072 = vmatprep.subr.mxu0 0.0
        %7073 = vmatpush1.msra.mxu0 %v7060
        %7074 = vmatprep.subr.mxu0 0.0
        %7075 = vmatpush1.msra.mxu0 %v7061
        %7076 = vmatprep.subr.mxu0 0.0
        %7077 = vmatpush1.msra.mxu0 %v7062
        %7078 = vmatprep.subr.mxu0 0.0
        %7079 = vmatpush1.msra.mxu0 %v7063
        %7080 = vmatprep.subr.mxu0 0.0
        %7081 = vmatpush1.msra.mxu0 0.0
        %7082 = vmatprep.subr.mxu0 0.0
        %7083 = vmatpush1.msra.mxu0 0.0
        %7084 = vmatprep.subr.mxu0 0.0
        %7085 = vmatpush1.msra.mxu0 0.0
        %7086 = vmatprep.subr.mxu0 0.0
        %7087 = vmatpush1.msra.mxu0 0.0
        %7088 = vmatprep.subr.mxu0 0.0
        %7089 = vmatpush1.msra.mxu0 0.0
        %7090 = vmatprep.subr.mxu0 0.0
        %7091 = vmatpush1.msra.mxu0 0.0
        %7092 = vmatprep.subr.mxu0 0.0
        %7093 = vmatpush1.msra.mxu0 0.0
        %7094 = vmatprep.subr.mxu0 0.0
        %7095 = vmatpush1.msra.mxu0 0.0
        %7096 = vmatprep.subr.mxu0 0.0
        %7097 = vmatpush1.msra.mxu0 0.0
        %7098 = vmatprep.subr.mxu0 0.0
        %7099 = vmatpush1.msra.mxu0 0.0
        %7100 = vmatprep.subr.mxu0 0.0
        %7101 = vmatpush1.msra.mxu0 0.0
        %7102 = vmatprep.subr.mxu0 0.0
        %7103 = vmatpush1.msra.mxu0 0.0
        %7104 = vmatprep.subr.mxu0 0.0
        %7105 = vmatpush1.msra.mxu0 0.0
        %7106 = vmatprep.subr.mxu0 0.0
        %7107 = vmatpush1.msra.mxu0 0.0
        %7108 = vmatprep.subr.mxu0 0.0
        %7109 = vmatpush1.msra.mxu0 0.0
        %7110 = vmatprep.subr.mxu0 0.0
        %7111 = vmatpush1.msra.mxu0 0.0
        %7112 = vmatprep.subr.mxu0 0.0
        %7113 = vmatpush1.msra.mxu0 0.0
        %7114 = vmatprep.subr.mxu0 0.0
        %7115 = vmatpush1.msra.mxu0 0.0
        %7116 = vmatprep.subr.mxu0 0.0
        %7117 = vmatpush1.msra.mxu0 0.0
        %7118 = vmatprep.subr.mxu0 0.0
        %7119 = vmatpush1.msra.mxu0 0.0
        %7120 = vmatprep.subr.mxu0 0.0
        %7121 = vmatpush1.msra.mxu0 0.0
        %7122 = vmatprep.subr.mxu0 0.0
        %7123 = vmatpush1.msra.mxu0 0.0
        %7124 = vmatprep.subr.mxu0 0.0
        %7125 = vmatpush1.msra.mxu0 0.0
        %7126 = vmatprep.subr.mxu0 0.0
        %7127 = vmatpush1.msra.mxu0 0.0
        %7128 = vmatprep.subr.mxu0 0.0
        %7129 = vmatpush1.msra.mxu0 0.0
        %7130 = vmatprep.subr.mxu0 0.0
        %7131 = vmatpush1.msra.mxu0 0.0
        %7132 = vmatprep.subr.mxu0 0.0
        %7133 = vmatpush1.msra.mxu0 0.0
        %7134 = vmatprep.subr.mxu0 0.0
        %7135 = vmatpush1.msra.mxu0 0.0
        %7136 = vmatprep.mubr.f32.mxu0 0.0
        %7137 = vmatmul.mubr.f32.gmra.mrb[0].mxu0 %v2329
        %v7138 = vpop.f32.mrb[0].mxu0
        %v7139 = vadd.f32 %v7070, %v7138
        %v7140 = vpop.f32.mrb[0].mxu0
        %7141 = vmatprep.mubr.f32.mxu0 0.0
        %7142 = vmatmul.mubr.f32.gmra.mrb[0].mxu0 %v2332
        %v7143 = vpop.f32.mrb[0].mxu0
        %v7144 = vadd.f32 %v7070, %v7143
        %v7145 = vpop.f32.mrb[0].mxu0
        %7146 = vdwg.mxu0
        %v7148 = vsel %vm706, %v6968, 0
        %v7151 = vsel %vm706, %v7051, 0
        %v7154 = vsel %vm706, %v7056, 0
        %7156 = vmatprep.subr.mxu0 0.0
        %7157 = vmatpush1.xpose.msra.mxu0 %v7151
        %7158 = vmatprep.subr.mxu0 0.0
        %7159 = vmatpush1.xpose.msra.mxu0 %v7154
        %7160 = vmatprep.subr.mxu0 0.0
        %7161 = vmatpush1.xpose.msra.mxu0 0.0
        %7162 = vmatprep.subr.mxu0 0.0
        %7163 = vmatpush1.xpose.msra.mxu0 0.0
        %7164 = vmatprep.subr.mxu0 0.0
        %7165 = vmatpush1.xpose.msra.mxu0 0.0
        %7166 = vmatprep.subr.mxu0 0.0
        %7167 = vmatpush1.xpose.msra.mxu0 0.0
        %7168 = vmatprep.subr.mxu0 0.0
        %7169 = vmatpush1.xpose.msra.mxu0 0.0
        %7170 = vmatprep.subr.mxu0 0.0
        %7171 = vmatpush1.xpose.msra.mxu0 0.0
        %7172 = vmatprep.subr.mxu0 0.0
        %7173 = vmatpush1.xpose.msra.mxu0 0.0
        %7174 = vmatprep.subr.mxu0 0.0
        %7175 = vmatpush1.xpose.msra.mxu0 0.0
        %7176 = vmatprep.subr.mxu0 0.0
        %7177 = vmatpush1.xpose.msra.mxu0 0.0
        %7178 = vmatprep.subr.mxu0 0.0
        %7179 = vmatpush1.xpose.msra.mxu0 0.0
        %7180 = vmatprep.subr.mxu0 0.0
        %7181 = vmatpush1.xpose.msra.mxu0 0.0
        %7182 = vmatprep.subr.mxu0 0.0
        %7183 = vmatpush1.xpose.msra.mxu0 0.0
        %7184 = vmatprep.subr.mxu0 0.0
        %7185 = vmatpush1.xpose.msra.mxu0 0.0
        %7186 = vmatprep.subr.mxu0 0.0
        %7187 = vmatpush1.xpose.msra.mxu0 0.0
        %7188 = vmatprep.subr.mxu0 0.0
        %7189 = vmatpush1.xpose.msra.mxu0 0.0
        %7190 = vmatprep.subr.mxu0 0.0
        %7191 = vmatpush1.xpose.msra.mxu0 0.0
        %7192 = vmatprep.subr.mxu0 0.0
        %7193 = vmatpush1.xpose.msra.mxu0 0.0
        %7194 = vmatprep.subr.mxu0 0.0
        %7195 = vmatpush1.xpose.msra.mxu0 0.0
        %7196 = vmatprep.subr.mxu0 0.0
        %7197 = vmatpush1.xpose.msra.mxu0 0.0
        %7198 = vmatprep.subr.mxu0 0.0
        %7199 = vmatpush1.xpose.msra.mxu0 0.0
        %7200 = vmatprep.subr.mxu0 0.0
        %7201 = vmatpush1.xpose.msra.mxu0 0.0
        %7202 = vmatprep.subr.mxu0 0.0
        %7203 = vmatpush1.xpose.msra.mxu0 0.0
        %7204 = vmatprep.subr.mxu0 0.0
        %7205 = vmatpush1.xpose.msra.mxu0 0.0
        %7206 = vmatprep.subr.mxu0 0.0
        %7207 = vmatpush1.xpose.msra.mxu0 0.0
        %7208 = vmatprep.subr.mxu0 0.0
        %7209 = vmatpush1.xpose.msra.mxu0 0.0
        %7210 = vmatprep.subr.mxu0 0.0
        %7211 = vmatpush1.xpose.msra.mxu0 0.0
        %7212 = vmatprep.subr.mxu0 0.0
        %7213 = vmatpush1.xpose.msra.mxu0 0.0
        %7214 = vmatprep.subr.mxu0 0.0
        %7215 = vmatpush1.xpose.msra.mxu0 0.0
        %7216 = vmatprep.subr.mxu0 0.0
        %7217 = vmatpush1.xpose.msra.mxu0 0.0
        %7218 = vmatprep.subr.mxu0 0.0
        %7219 = vmatpush1.xpose.msra.mxu0 0.0
        %7220 = vmatprep.mubr.f32.mxu0 0.0
        %7221 = vmatmul.mubr.f32.gmra.mrb[0].mxu0 %v7148
        %v7222 = vpop.f32.mrb[0].mxu0
        %v7223 = vadd.f32 0.0, %v7222
        %v7224 = vpop.f32.mrb[0].mxu0
        %7225 = vdwg.mxu0
        %v7226 = vmul.f32 %v7223, 0.35355338
        %v7227 = vadd.f32 %v7226, %v417
        %v7228 = vsel %vm2119, %v7227, -inf
        %7229 = vmax.xlane.f32.xlu0 %v7228
        %v7230 = vpop.xlane.xlu0 %7229
        %v7231 = vsub.f32 %v7227, %v7230
        %v7232 = vmul.f32 %v7231, 1.442695
        %v7233 = vpow.pop %v7232
        %v7234 = vsel %vm2119, %v7233, 0.0
        %7235 = vadd.xlane.f32.xlu0 %v7234
        %v7236 = vpop.xlane.xlu0 %7235
        %v7237 = vrcp.pop %v7236
        %v7238 = vmul.f32 %v7233, %v7237
        %v7239 = vsel %vm416, %v7238, 0.0
        %v7241 = vsel %vm2119, %v7239, 0
        %7243 = vmatprep.subr.mxu0 0.0
        %7244 = vmatpush1.msra.mxu0 %v7139
        %7245 = vmatprep.subr.mxu0 0.0
        %7246 = vmatpush1.msra.mxu0 %v7144
        %7247 = vmatprep.subr.mxu0 0.0
        %7248 = vmatpush1.msra.mxu0 0.0
        %7249 = vmatprep.subr.mxu0 0.0
        %7250 = vmatpush1.msra.mxu0 0.0
        %7251 = vmatprep.subr.mxu0 0.0
        %7252 = vmatpush1.msra.mxu0 0.0
        %7253 = vmatprep.subr.mxu0 0.0
        %7254 = vmatpush1.msra.mxu0 0.0
        %7255 = vmatprep.subr.mxu0 0.0
        %7256 = vmatpush1.msra.mxu0 0.0
        %7257 = vmatprep.subr.mxu0 0.0
        %7258 = vmatpush1.msra.mxu0 0.0
        %7259 = vmatprep.subr.mxu0 0.0
        %7260 = vmatpush1.msra.mxu0 0.0
        %7261 = vmatprep.subr.mxu0 0.0
        %7262 = vmatpush1.msra.mxu0 0.0
        %7263 = vmatprep.subr.mxu0 0.0
        %7264 = vmatpush1.msra.mxu0 0.0
        %7265 = vmatprep.subr.mxu0 0.0
        %7266 = vmatpush1.msra.mxu0 0.0
        %7267 = vmatprep.subr.mxu0 0.0
        %7268 = vmatpush1.msra.mxu0 0.0
        %7269 = vmatprep.subr.mxu0 0.0
        %7270 = vmatpush1.msra.mxu0 0.0
        %7271 = vmatprep.subr.mxu0 0.0
        %7272 = vmatpush1.msra.mxu0 0.0
        %7273 = vmatprep.subr.mxu0 0.0
        %7274 = vmatpush1.msra.mxu0 0.0
        %7275 = vmatprep.subr.mxu0 0.0
        %7276 = vmatpush1.msra.mxu0 0.0
        %7277 = vmatprep.subr.mxu0 0.0
        %7278 = vmatpush1.msra.mxu0 0.0
        %7279 = vmatprep.subr.mxu0 0.0
        %7280 = vmatpush1.msra.mxu0 0.0
        %7281 = vmatprep.subr.mxu0 0.0
        %7282 = vmatpush1.msra.mxu0 0.0
        %7283 = vmatprep.subr.mxu0 0.0
        %7284 = vmatpush1.msra.mxu0 0.0
        %7285 = vmatprep.subr.mxu0 0.0
        %7286 = vmatpush1.msra.mxu0 0.0
        %7287 = vmatprep.subr.mxu0 0.0
        %7288 = vmatpush1.msra.mxu0 0.0
        %7289 = vmatprep.subr.mxu0 0.0
        %7290 = vmatpush1.msra.mxu0 0.0
        %7291 = vmatprep.subr.mxu0 0.0
        %7292 = vmatpush1.msra.mxu0 0.0
        %7293 = vmatprep.subr.mxu0 0.0
        %7294 = vmatpush1.msra.mxu0 0.0
        %7295 = vmatprep.subr.mxu0 0.0
        %7296 = vmatpush1.msra.mxu0 0.0
        %7297 = vmatprep.subr.mxu0 0.0
        %7298 = vmatpush1.msra.mxu0 0.0
        %7299 = vmatprep.subr.mxu0 0.0
        %7300 = vmatpush1.msra.mxu0 0.0
        %7301 = vmatprep.subr.mxu0 0.0
        %7302 = vmatpush1.msra.mxu0 0.0
        %7303 = vmatprep.subr.mxu0 0.0
        %7304 = vmatpush1.msra.mxu0 0.0
        %7305 = vmatprep.subr.mxu0 0.0
        %7306 = vmatpush1.msra.mxu0 0.0
        %7307 = vmatprep.mubr.f32.mxu0 0.0
        %7308 = vmatmul.mubr.f32.gmra.mrb[0].mxu0 %v7241
        %v7309 = vpop.f32.mrb[0].mxu0
        %v7310 = vadd.f32 0.0, %v7309
        %v7311 = vpop.f32.mrb[0].mxu0
        %7312 = vdwg.mxu0
        %s7313 = scalar_lea.vmem %s4, 1248
        %v7314 = vld [vmem:[%s7313] sm:$0xff]
        %v7315 = vld [vmem:[%s7313 + $0x8] sm:$0xff]
        %v7316 = vld [vmem:[%s7313 + $0x10] sm:$0xff]
        %v7317 = vld [vmem:[%s7313 + $0x18] sm:$0xff]
        %s7318 = scalar_lea.vmem %s5, 39
        %v7319 = vld [vmem:[%s7318] sm:$0x1]
        %v7321 = vlaneseq
        %v7322 = vshrl.u32 %v7321, 7
        %v7323 = vsub.s32 0, %v7322
        %v7324 = vrot.slane %v7319, %v7323
        %7326 = vmatprep.subr.mxu0 0.0
        %7327 = vmatpush1.msra.mxu0 %v7314
        %7328 = vmatprep.subr.mxu0 0.0
        %7329 = vmatpush1.msra.mxu0 %v7315
        %7330 = vmatprep.subr.mxu0 0.0
        %7331 = vmatpush1.msra.mxu0 %v7316
        %7332 = vmatprep.subr.mxu0 0.0
        %7333 = vmatpush1.msra.mxu0 %v7317
        %7334 = vmatprep.subr.mxu0 0.0
        %7335 = vmatpush1.msra.mxu0 0.0
        %7336 = vmatprep.subr.mxu0 0.0
        %7337 = vmatpush1.msra.mxu0 0.0
        %7338 = vmatprep.subr.mxu0 0.0
        %7339 = vmatpush1.msra.mxu0 0.0
        %7340 = vmatprep.subr.mxu0 0.0
        %7341 = vmatpush1.msra.mxu0 0.0
        %7342 = vmatprep.subr.mxu0 0.0
        %7343 = vmatpush1.msra.mxu0 0.0
        %7344 = vmatprep.subr.mxu0 0.0
        %7345 = vmatpush1.msra.mxu0 0.0
        %7346 = vmatprep.subr.mxu0 0.0
        %7347 = vmatpush1.msra.mxu0 0.0
        %7348 = vmatprep.subr.mxu0 0.0
        %7349 = vmatpush1.msra.mxu0 0.0
        %7350 = vmatprep.subr.mxu0 0.0
        %7351 = vmatpush1.msra.mxu0 0.0
        %7352 = vmatprep.subr.mxu0 0.0
        %7353 = vmatpush1.msra.mxu0 0.0
        %7354 = vmatprep.subr.mxu0 0.0
        %7355 = vmatpush1.msra.mxu0 0.0
        %7356 = vmatprep.subr.mxu0 0.0
        %7357 = vmatpush1.msra.mxu0 0.0
        %7358 = vmatprep.subr.mxu0 0.0
        %7359 = vmatpush1.msra.mxu0 0.0
        %7360 = vmatprep.subr.mxu0 0.0
        %7361 = vmatpush1.msra.mxu0 0.0
        %7362 = vmatprep.subr.mxu0 0.0
        %7363 = vmatpush1.msra.mxu0 0.0
        %7364 = vmatprep.subr.mxu0 0.0
        %7365 = vmatpush1.msra.mxu0 0.0
        %7366 = vmatprep.subr.mxu0 0.0
        %7367 = vmatpush1.msra.mxu0 0.0
        %7368 = vmatprep.subr.mxu0 0.0
        %7369 = vmatpush1.msra.mxu0 0.0
        %7370 = vmatprep.subr.mxu0 0.0
        %7371 = vmatpush1.msra.mxu0 0.0
        %7372 = vmatprep.subr.mxu0 0.0
        %7373 = vmatpush1.msra.mxu0 0.0
        %7374 = vmatprep.subr.mxu0 0.0
        %7375 = vmatpush1.msra.mxu0 0.0
        %7376 = vmatprep.subr.mxu0 0.0
        %7377 = vmatpush1.msra.mxu0 0.0
        %7378 = vmatprep.subr.mxu0 0.0
        %7379 = vmatpush1.msra.mxu0 0.0
        %7380 = vmatprep.subr.mxu0 0.0
        %7381 = vmatpush1.msra.mxu0 0.0
        %7382 = vmatprep.subr.mxu0 0.0
        %7383 = vmatpush1.msra.mxu0 0.0
        %7384 = vmatprep.subr.mxu0 0.0
        %7385 = vmatpush1.msra.mxu0 0.0
        %7386 = vmatprep.subr.mxu0 0.0
        %7387 = vmatpush1.msra.mxu0 0.0
        %7388 = vmatprep.subr.mxu0 0.0
        %7389 = vmatpush1.msra.mxu0 0.0
        %7390 = vmatprep.mubr.f32.mxu0 0.0
        %7391 = vmatmul.mubr.f32.gmra.mrb[0].mxu0 %v6049
        %v7392 = vpop.f32.mrb[0].mxu0
        %v7393 = vadd.f32 %v7324, %v7392
        %v7394 = vpop.f32.mrb[0].mxu0
        %7395 = vdwg.mxu0
        %s7396 = scalar_lea.vmem %s4, 1376
        %v7397 = vld [vmem:[%s7396] sm:$0xff]
        %v7398 = vld [vmem:[%s7396 + $0x8] sm:$0xff]
        %v7399 = vld [vmem:[%s7396 + $0x10] sm:$0xff]
        %v7400 = vld [vmem:[%s7396 + $0x18] sm:$0xff]
        %s7401 = scalar_lea.vmem %s5, 43
        %v7402 = vld [vmem:[%s7401] sm:$0x1]
        %v7404 = vlaneseq
        %v7405 = vshrl.u32 %v7404, 7
        %v7406 = vsub.s32 0, %v7405
        %v7407 = vrot.slane %v7402, %v7406
        %7409 = vmatprep.subr.mxu0 0.0
        %7410 = vmatpush1.msra.mxu0 %v7397
        %7411 = vmatprep.subr.mxu0 0.0
        %7412 = vmatpush1.msra.mxu0 %v7398
        %7413 = vmatprep.subr.mxu0 0.0
        %7414 = vmatpush1.msra.mxu0 %v7399
        %7415 = vmatprep.subr.mxu0 0.0
        %7416 = vmatpush1.msra.mxu0 %v7400
        %7417 = vmatprep.subr.mxu0 0.0
        %7418 = vmatpush1.msra.mxu0 0.0
        %7419 = vmatprep.subr.mxu0 0.0
        %7420 = vmatpush1.msra.mxu0 0.0
        %7421 = vmatprep.subr.mxu0 0.0
        %7422 = vmatpush1.msra.mxu0 0.0
        %7423 = vmatprep.subr.mxu0 0.0
        %7424 = vmatpush1.msra.mxu0 0.0
        %7425 = vmatprep.subr.mxu0 0.0
        %7426 = vmatpush1.msra.mxu0 0.0
        %7427 = vmatprep.subr.mxu0 0.0
        %7428 = vmatpush1.msra.mxu0 0.0
        %7429 = vmatprep.subr.mxu0 0.0
        %7430 = vmatpush1.msra.mxu0 0.0
        %7431 = vmatprep.subr.mxu0 0.0
        %7432 = vmatpush1.msra.mxu0 0.0
        %7433 = vmatprep.subr.mxu0 0.0
        %7434 = vmatpush1.msra.mxu0 0.0
        %7435 = vmatprep.subr.mxu0 0.0
        %7436 = vmatpush1.msra.mxu0 0.0
        %7437 = vmatprep.subr.mxu0 0.0
        %7438 = vmatpush1.msra.mxu0 0.0
        %7439 = vmatprep.subr.mxu0 0.0
        %7440 = vmatpush1.msra.mxu0 0.0
        %7441 = vmatprep.subr.mxu0 0.0
        %7442 = vmatpush1.msra.mxu0 0.0
        %7443 = vmatprep.subr.mxu0 0.0
        %7444 = vmatpush1.msra.mxu0 0.0
        %7445 = vmatprep.subr.mxu0 0.0
        %7446 = vmatpush1.msra.mxu0 0.0
        %7447 = vmatprep.subr.mxu0 0.0
        %7448 = vmatpush1.msra.mxu0 0.0
        %7449 = vmatprep.subr.mxu0 0.0
        %7450 = vmatpush1.msra.mxu0 0.0
        %7451 = vmatprep.subr.mxu0 0.0
        %7452 = vmatpush1.msra.mxu0 0.0
        %7453 = vmatprep.subr.mxu0 0.0
        %7454 = vmatpush1.msra.mxu0 0.0
        %7455 = vmatprep.subr.mxu0 0.0
        %7456 = vmatpush1.msra.mxu0 0.0
        %7457 = vmatprep.subr.mxu0 0.0
        %7458 = vmatpush1.msra.mxu0 0.0
        %7459 = vmatprep.subr.mxu0 0.0
        %7460 = vmatpush1.msra.mxu0 0.0
        %7461 = vmatprep.subr.mxu0 0.0
        %7462 = vmatpush1.msra.mxu0 0.0
        %7463 = vmatprep.subr.mxu0 0.0
        %7464 = vmatpush1.msra.mxu0 0.0
        %7465 = vmatprep.subr.mxu0 0.0
        %7466 = vmatpush1.msra.mxu0 0.0
        %7467 = vmatprep.subr.mxu0 0.0
        %7468 = vmatpush1.msra.mxu0 0.0
        %7469 = vmatprep.subr.mxu0 0.0
        %7470 = vmatpush1.msra.mxu0 0.0
        %7471 = vmatprep.subr.mxu0 0.0
        %7472 = vmatpush1.msra.mxu0 0.0
        %7473 = vmatprep.mubr.f32.mxu0 0.0
        %7474 = vmatmul.mubr.f32.gmra.mrb[0].mxu0 %v2329
        %v7475 = vpop.f32.mrb[0].mxu0
        %v7476 = vadd.f32 %v7407, %v7475
        %v7477 = vpop.f32.mrb[0].mxu0
        %7478 = vmatprep.mubr.f32.mxu0 0.0
        %7479 = vmatmul.mubr.f32.gmra.mrb[0].mxu0 %v2332
        %v7480 = vpop.f32.mrb[0].mxu0
        %v7481 = vadd.f32 %v7407, %v7480
        %v7482 = vpop.f32.mrb[0].mxu0
        %7483 = vdwg.mxu0
        %s7484 = scalar_lea.vmem %s4, 1504
        %v7485 = vld [vmem:[%s7484] sm:$0xff]
        %v7486 = vld [vmem:[%s7484 + $0x8] sm:$0xff]
        %v7487 = vld [vmem:[%s7484 + $0x10] sm:$0xff]
        %v7488 = vld [vmem:[%s7484 + $0x18] sm:$0xff]
        %s7489 = scalar_lea.vmem %s5, 47
        %v7490 = vld [vmem:[%s7489] sm:$0x1]
        %v7492 = vlaneseq
        %v7493 = vshrl.u32 %v7492, 7
        %v7494 = vsub.s32 0, %v7493
        %v7495 = vrot.slane %v7490, %v7494
        %7497 = vmatprep.subr.mxu0 0.0
        %7498 = vmatpush1.msra.mxu0 %v7485
        %7499 = vmatprep.subr.mxu0 0.0
        %7500 = vmatpush1.msra.mxu0 %v7486
        %7501 = vmatprep.subr.mxu0 0.0
        %7502 = vmatpush1.msra.mxu0 %v7487
        %7503 = vmatprep.subr.mxu0 0.0
        %7504 = vmatpush1.msra.mxu0 %v7488
        %7505 = vmatprep.subr.mxu0 0.0
        %7506 = vmatpush1.msra.mxu0 0.0
        %7507 = vmatprep.subr.mxu0 0.0
        %7508 = vmatpush1.msra.mxu0 0.0
        %7509 = vmatprep.subr.mxu0 0.0
        %7510 = vmatpush1.msra.mxu0 0.0
        %7511 = vmatprep.subr.mxu0 0.0
        %7512 = vmatpush1.msra.mxu0 0.0
        %7513 = vmatprep.subr.mxu0 0.0
        %7514 = vmatpush1.msra.mxu0 0.0
        %7515 = vmatprep.subr.mxu0 0.0
        %7516 = vmatpush1.msra.mxu0 0.0
        %7517 = vmatprep.subr.mxu0 0.0
        %7518 = vmatpush1.msra.mxu0 0.0
        %7519 = vmatprep.subr.mxu0 0.0
        %7520 = vmatpush1.msra.mxu0 0.0
        %7521 = vmatprep.subr.mxu0 0.0
        %7522 = vmatpush1.msra.mxu0 0.0
        %7523 = vmatprep.subr.mxu0 0.0
        %7524 = vmatpush1.msra.mxu0 0.0
        %7525 = vmatprep.subr.mxu0 0.0
        %7526 = vmatpush1.msra.mxu0 0.0
        %7527 = vmatprep.subr.mxu0 0.0
        %7528 = vmatpush1.msra.mxu0 0.0
        %7529 = vmatprep.subr.mxu0 0.0
        %7530 = vmatpush1.msra.mxu0 0.0
        %7531 = vmatprep.subr.mxu0 0.0
        %7532 = vmatpush1.msra.mxu0 0.0
        %7533 = vmatprep.subr.mxu0 0.0
        %7534 = vmatpush1.msra.mxu0 0.0
        %7535 = vmatprep.subr.mxu0 0.0
        %7536 = vmatpush1.msra.mxu0 0.0
        %7537 = vmatprep.subr.mxu0 0.0
        %7538 = vmatpush1.msra.mxu0 0.0
        %7539 = vmatprep.subr.mxu0 0.0
        %7540 = vmatpush1.msra.mxu0 0.0
        %7541 = vmatprep.subr.mxu0 0.0
        %7542 = vmatpush1.msra.mxu0 0.0
        %7543 = vmatprep.subr.mxu0 0.0
        %7544 = vmatpush1.msra.mxu0 0.0
        %7545 = vmatprep.subr.mxu0 0.0
        %7546 = vmatpush1.msra.mxu0 0.0
        %7547 = vmatprep.subr.mxu0 0.0
        %7548 = vmatpush1.msra.mxu0 0.0
        %7549 = vmatprep.subr.mxu0 0.0
        %7550 = vmatpush1.msra.mxu0 0.0
        %7551 = vmatprep.subr.mxu0 0.0
        %7552 = vmatpush1.msra.mxu0 0.0
        %7553 = vmatprep.subr.mxu0 0.0
        %7554 = vmatpush1.msra.mxu0 0.0
        %7555 = vmatprep.subr.mxu0 0.0
        %7556 = vmatpush1.msra.mxu0 0.0
        %7557 = vmatprep.subr.mxu0 0.0
        %7558 = vmatpush1.msra.mxu0 0.0
        %7559 = vmatprep.subr.mxu0 0.0
        %7560 = vmatpush1.msra.mxu0 0.0
        %7561 = vmatprep.mubr.f32.mxu0 0.0
        %7562 = vmatmul.mubr.f32.gmra.mrb[0].mxu0 %v2329
        %v7563 = vpop.f32.mrb[0].mxu0
        %v7564 = vadd.f32 %v7495, %v7563
        %v7565 = vpop.f32.mrb[0].mxu0
        %7566 = vmatprep.mubr.f32.mxu0 0.0
        %7567 = vmatmul.mubr.f32.gmra.mrb[0].mxu0 %v2332
        %v7568 = vpop.f32.mrb[0].mxu0
        %v7569 = vadd.f32 %v7495, %v7568
        %v7570 = vpop.f32.mrb[0].mxu0
        %7571 = vdwg.mxu0
        %v7573 = vsel %vm706, %v7393, 0
        %v7576 = vsel %vm706, %v7476, 0
        %v7579 = vsel %vm706, %v7481, 0
        %7581 = vmatprep.subr.mxu0 0.0
        %7582 = vmatpush1.xpose.msra.mxu0 %v7576
        %7583 = vmatprep.subr.mxu0 0.0
        %7584 = vmatpush1.xpose.msra.mxu0 %v7579
        %7585 = vmatprep.subr.mxu0 0.0
        %7586 = vmatpush1.xpose.msra.mxu0 0.0
        %7587 = vmatprep.subr.mxu0 0.0
        %7588 = vmatpush1.xpose.msra.mxu0 0.0
        %7589 = vmatprep.subr.mxu0 0.0
        %7590 = vmatpush1.xpose.msra.mxu0 0.0
        %7591 = vmatprep.subr.mxu0 0.0
        %7592 = vmatpush1.xpose.msra.mxu0 0.0
        %7593 = vmatprep.subr.mxu0 0.0
        %7594 = vmatpush1.xpose.msra.mxu0 0.0
        %7595 = vmatprep.subr.mxu0 0.0
        %7596 = vmatpush1.xpose.msra.mxu0 0.0
        %7597 = vmatprep.subr.mxu0 0.0
        %7598 = vmatpush1.xpose.msra.mxu0 0.0
        %7599 = vmatprep.subr.mxu0 0.0
        %7600 = vmatpush1.xpose.msra.mxu0 0.0
        %7601 = vmatprep.subr.mxu0 0.0
        %7602 = vmatpush1.xpose.msra.mxu0 0.0
        %7603 = vmatprep.subr.mxu0 0.0
        %7604 = vmatpush1.xpose.msra.mxu0 0.0
        %7605 = vmatprep.subr.mxu0 0.0
        %7606 = vmatpush1.xpose.msra.mxu0 0.0
        %7607 = vmatprep.subr.mxu0 0.0
        %7608 = vmatpush1.xpose.msra.mxu0 0.0
        %7609 = vmatprep.subr.mxu0 0.0
        %7610 = vmatpush1.xpose.msra.mxu0 0.0
        %7611 = vmatprep.subr.mxu0 0.0
        %7612 = vmatpush1.xpose.msra.mxu0 0.0
        %7613 = vmatprep.subr.mxu0 0.0
        %7614 = vmatpush1.xpose.msra.mxu0 0.0
        %7615 = vmatprep.subr.mxu0 0.0
        %7616 = vmatpush1.xpose.msra.mxu0 0.0
        %7617 = vmatprep.subr.mxu0 0.0
        %7618 = vmatpush1.xpose.msra.mxu0 0.0
        %7619 = vmatprep.subr.mxu0 0.0
        %7620 = vmatpush1.xpose.msra.mxu0 0.0
        %7621 = vmatprep.subr.mxu0 0.0
        %7622 = vmatpush1.xpose.msra.mxu0 0.0
        %7623 = vmatprep.subr.mxu0 0.0
        %7624 = vmatpush1.xpose.msra.mxu0 0.0
        %7625 = vmatprep.subr.mxu0 0.0
        %7626 = vmatpush1.xpose.msra.mxu0 0.0
        %7627 = vmatprep.subr.mxu0 0.0
        %7628 = vmatpush1.xpose.msra.mxu0 0.0
        %7629 = vmatprep.subr.mxu0 0.0
        %7630 = vmatpush1.xpose.msra.mxu0 0.0
        %7631 = vmatprep.subr.mxu0 0.0
        %7632 = vmatpush1.xpose.msra.mxu0 0.0
        %7633 = vmatprep.subr.mxu0 0.0
        %7634 = vmatpush1.xpose.msra.mxu0 0.0
        %7635 = vmatprep.subr.mxu0 0.0
        %7636 = vmatpush1.xpose.msra.mxu0 0.0
        %7637 = vmatprep.subr.mxu0 0.0
        %7638 = vmatpush1.xpose.msra.mxu0 0.0
        %7639 = vmatprep.subr.mxu0 0.0
        %7640 = vmatpush1.xpose.msra.mxu0 0.0
        %7641 = vmatprep.subr.mxu0 0.0
        %7642 = vmatpush1.xpose.msra.mxu0 0.0
        %7643 = vmatprep.subr.mxu0 0.0
        %7644 = vmatpush1.xpose.msra.mxu0 0.0
        %7645 = vmatprep.mubr.f32.mxu0 0.0
        %7646 = vmatmul.mubr.f32.gmra.mrb[0].mxu0 %v7573
        %v7647 = vpop.f32.mrb[0].mxu0
        %v7648 = vadd.f32 0.0, %v7647
        %v7649 = vpop.f32.mrb[0].mxu0
        %7650 = vdwg.mxu0
        %v7651 = vmul.f32 %v7648, 0.35355338
        %v7652 = vadd.f32 %v7651, %v417
        %v7653 = vsel %vm2119, %v7652, -inf
        %7654 = vmax.xlane.f32.xlu0 %v7653
        %v7655 = vpop.xlane.xlu0 %7654
        %v7656 = vsub.f32 %v7652, %v7655
        %v7657 = vmul.f32 %v7656, 1.442695
        %v7658 = vpow.pop %v7657
        %v7659 = vsel %vm2119, %v7658, 0.0
        %7660 = vadd.xlane.f32.xlu0 %v7659
        %v7661 = vpop.xlane.xlu0 %7660
        %v7662 = vrcp.pop %v7661
        %v7663 = vmul.f32 %v7658, %v7662
        %v7664 = vsel %vm416, %v7663, 0.0
        %v7666 = vsel %vm2119, %v7664, 0
        %7668 = vmatprep.subr.mxu0 0.0
        %7669 = vmatpush1.msra.mxu0 %v7564
        %7670 = vmatprep.subr.mxu0 0.0
        %7671 = vmatpush1.msra.mxu0 %v7569
        %7672 = vmatprep.subr.mxu0 0.0
        %7673 = vmatpush1.msra.mxu0 0.0
        %7674 = vmatprep.subr.mxu0 0.0
        %7675 = vmatpush1.msra.mxu0 0.0
        %7676 = vmatprep.subr.mxu0 0.0
        %7677 = vmatpush1.msra.mxu0 0.0
        %7678 = vmatprep.subr.mxu0 0.0
        %7679 = vmatpush1.msra.mxu0 0.0
        %7680 = vmatprep.subr.mxu0 0.0
        %7681 = vmatpush1.msra.mxu0 0.0
        %7682 = vmatprep.subr.mxu0 0.0
        %7683 = vmatpush1.msra.mxu0 0.0
        %7684 = vmatprep.subr.mxu0 0.0
        %7685 = vmatpush1.msra.mxu0 0.0
        %7686 = vmatprep.subr.mxu0 0.0
        %7687 = vmatpush1.msra.mxu0 0.0
        %7688 = vmatprep.subr.mxu0 0.0
        %7689 = vmatpush1.msra.mxu0 0.0
        %7690 = vmatprep.subr.mxu0 0.0
        %7691 = vmatpush1.msra.mxu0 0.0
        %7692 = vmatprep.subr.mxu0 0.0
        %7693 = vmatpush1.msra.mxu0 0.0
        %7694 = vmatprep.subr.mxu0 0.0
        %7695 = vmatpush1.msra.mxu0 0.0
        %7696 = vmatprep.subr.mxu0 0.0
        %7697 = vmatpush1.msra.mxu0 0.0
        %7698 = vmatprep.subr.mxu0 0.0
        %7699 = vmatpush1.msra.mxu0 0.0
        %7700 = vmatprep.subr.mxu0 0.0
        %7701 = vmatpush1.msra.mxu0 0.0
        %7702 = vmatprep.subr.mxu0 0.0
        %7703 = vmatpush1.msra.mxu0 0.0
        %7704 = vmatprep.subr.mxu0 0.0
        %7705 = vmatpush1.msra.mxu0 0.0
        %7706 = vmatprep.subr.mxu0 0.0
        %7707 = vmatpush1.msra.mxu0 0.0
        %7708 = vmatprep.subr.mxu0 0.0
        %7709 = vmatpush1.msra.mxu0 0.0
        %7710 = vmatprep.subr.mxu0 0.0
        %7711 = vmatpush1.msra.mxu0 0.0
        %7712 = vmatprep.subr.mxu0 0.0
        %7713 = vmatpush1.msra.mxu0 0.0
        %7714 = vmatprep.subr.mxu0 0.0
        %7715 = vmatpush1.msra.mxu0 0.0
        %7716 = vmatprep.subr.mxu0 0.0
        %7717 = vmatpush1.msra.mxu0 0.0
        %7718 = vmatprep.subr.mxu0 0.0
        %7719 = vmatpush1.msra.mxu0 0.0
        %7720 = vmatprep.subr.mxu0 0.0
        %7721 = vmatpush1.msra.mxu0 0.0
        %7722 = vmatprep.subr.mxu0 0.0
        %7723 = vmatpush1.msra.mxu0 0.0
        %7724 = vmatprep.subr.mxu0 0.0
        %7725 = vmatpush1.msra.mxu0 0.0
        %7726 = vmatprep.subr.mxu0 0.0
        %7727 = vmatpush1.msra.mxu0 0.0
        %7728 = vmatprep.subr.mxu0 0.0
        %7729 = vmatpush1.msra.mxu0 0.0
        %7730 = vmatprep.subr.mxu0 0.0
        %7731 = vmatpush1.msra.mxu0 0.0
        %7732 = vmatprep.mubr.f32.mxu0 0.0
        %7733 = vmatmul.mubr.f32.gmra.mrb[0].mxu0 %v7666
        %v7734 = vpop.f32.mrb[0].mxu0
        %v7735 = vadd.f32 0.0, %v7734
        %v7736 = vpop.f32.mrb[0].mxu0
        %7737 = vdwg.mxu0
        %7739 = vrot.lane.b32.xlu0 %v6885, 8
        %v7740 = vpop.permute.xlu0 %7739
        %7743 = vrot.lane.b32.xlu0 %v7310, 16
        %v7744 = vpop.permute.xlu0 %7743
        %7747 = vrot.lane.b32.xlu0 %v7735, 24
        %v7748 = vpop.permute.xlu0 %7747
        %v7750 = vsel %vm706, %v6460, %v7740
        %v7751 = vsel %vm2119, %v7750, %v7744
        %v7752 = vsel %vm2121, %v7751, %v7748
        %v7753 = vlaneseq
        %v7754 = vshrl.u32 %v7753, 7
        %v7755 = vsub.s32 0, %v7754
        %v7756 = vrot.slane %v4233, %v7755
        %v7758 = vsel %vm427, %v7752, 0
        %7760 = vmatprep.subr.mxu0 0.0
        %7761 = vmatpush1.msra.mxu0 %v6031
        %7762 = vmatprep.subr.mxu0 0.0
        %7763 = vmatpush1.msra.mxu0 %v6032
        %7764 = vmatprep.subr.mxu0 0.0
        %7765 = vmatpush1.msra.mxu0 %v6033
        %7766 = vmatprep.subr.mxu0 0.0
        %7767 = vmatpush1.msra.mxu0 %v6034
        %7768 = vmatprep.subr.mxu0 0.0
        %7769 = vmatpush1.msra.mxu0 0.0
        %7770 = vmatprep.subr.mxu0 0.0
        %7771 = vmatpush1.msra.mxu0 0.0
        %7772 = vmatprep.subr.mxu0 0.0
        %7773 = vmatpush1.msra.mxu0 0.0
        %7774 = vmatprep.subr.mxu0 0.0
        %7775 = vmatpush1.msra.mxu0 0.0
        %7776 = vmatprep.subr.mxu0 0.0
        %7777 = vmatpush1.msra.mxu0 0.0
        %7778 = vmatprep.subr.mxu0 0.0
        %7779 = vmatpush1.msra.mxu0 0.0
        %7780 = vmatprep.subr.mxu0 0.0
        %7781 = vmatpush1.msra.mxu0 0.0
        %7782 = vmatprep.subr.mxu0 0.0
        %7783 = vmatpush1.msra.mxu0 0.0
        %7784 = vmatprep.subr.mxu0 0.0
        %7785 = vmatpush1.msra.mxu0 0.0
        %7786 = vmatprep.subr.mxu0 0.0
        %7787 = vmatpush1.msra.mxu0 0.0
        %7788 = vmatprep.subr.mxu0 0.0
        %7789 = vmatpush1.msra.mxu0 0.0
        %7790 = vmatprep.subr.mxu0 0.0
        %7791 = vmatpush1.msra.mxu0 0.0
        %7792 = vmatprep.subr.mxu0 0.0
        %7793 = vmatpush1.msra.mxu0 0.0
        %7794 = vmatprep.subr.mxu0 0.0
        %7795 = vmatpush1.msra.mxu0 0.0
        %7796 = vmatprep.subr.mxu0 0.0
        %7797 = vmatpush1.msra.mxu0 0.0
        %7798 = vmatprep.subr.mxu0 0.0
        %7799 = vmatpush1.msra.mxu0 0.0
        %7800 = vmatprep.subr.mxu0 0.0
        %7801 = vmatpush1.msra.mxu0 0.0
        %7802 = vmatprep.subr.mxu0 0.0
        %7803 = vmatpush1.msra.mxu0 0.0
        %7804 = vmatprep.subr.mxu0 0.0
        %7805 = vmatpush1.msra.mxu0 0.0
        %7806 = vmatprep.subr.mxu0 0.0
        %7807 = vmatpush1.msra.mxu0 0.0
        %7808 = vmatprep.subr.mxu0 0.0
        %7809 = vmatpush1.msra.mxu0 0.0
        %7810 = vmatprep.subr.mxu0 0.0
        %7811 = vmatpush1.msra.mxu0 0.0
        %7812 = vmatprep.subr.mxu0 0.0
        %7813 = vmatpush1.msra.mxu0 0.0
        %7814 = vmatprep.subr.mxu0 0.0
        %7815 = vmatpush1.msra.mxu0 0.0
        %7816 = vmatprep.subr.mxu0 0.0
        %7817 = vmatpush1.msra.mxu0 0.0
        %7818 = vmatprep.subr.mxu0 0.0
        %7819 = vmatpush1.msra.mxu0 0.0
        %7820 = vmatprep.subr.mxu0 0.0
        %7821 = vmatpush1.msra.mxu0 0.0
        %7822 = vmatprep.subr.mxu0 0.0
        %7823 = vmatpush1.msra.mxu0 0.0
        %7824 = vmatprep.mubr.f32.mxu0 0.0
        %7825 = vmatmul.mubr.f32.gmra.mrb[0].mxu0 %v7758
        %v7826 = vpop.f32.mrb[0].mxu0
        %v7827 = vadd.f32 %v7756, %v7826
        %v7828 = vpop.f32.mrb[0].mxu0
        %7829 = vdwg.mxu0
        %v7830 = vadd.f32 %v6006, %v7827
        %v7831 = vsel %vm427, %v7830, 0.0
        %7832 = vadd.xlane.f32.xlu0 %v7831
        %v7833 = vpop.xlane.xlu0 %7832
        %v7834 = vmul.f32 %v7833, %v431
        %v7835 = vsub.f32 %v7830, %v7834
        %v7836 = vmul.f32 %v7835, %v7835
        %v7837 = vsel %vm427, %v7836, 0.0
        %7838 = vadd.xlane.f32.xlu0 %v7837
        %v7839 = vpop.xlane.xlu0 %7838
        %v7840 = vmul.f32 %v7839, %v431
        %v7841 = vadd.f32 %v7840, 1e-05
        %v7842 = vrsqrt.pop %v7841
        %v7843 = vmul.f32 %v7835, %v7842
        %v7844 = vlaneseq
        %v7845 = vshrl.u32 %v7844, 7
        %v7846 = vsub.s32 0, %v7845
        %v7847 = vrot.slane %v4228, %v7846
        %v7848 = vmul.f32 %v7843, %v7847
        %v7849 = vlaneseq
        %v7850 = vshrl.u32 %v7849, 7
        %v7851 = vsub.s32 0, %v7850
        %v7852 = vrot.slane %v4231, %v7851
        %v7853 = vadd.f32 %v7848, %v7852
        %s7854 = scalar_lea.vmem %s7, 40
        %v7855 = vld [vmem:[%s7854] sm:$0xff]
        %v7856 = vld [vmem:[%s7854 + $0x8] sm:$0xff]
        %v7857 = vld [vmem:[%s7854 + $0x10] sm:$0xff]
        %v7858 = vld [vmem:[%s7854 + $0x18] sm:$0xff]
        %v7859 = vld [vmem:[%s7854 + $0x20] sm:$0x1]
        %v7860 = vlaneseq
        %v7861 = vshrl.u32 %v7860, 7
        %v7862 = vsub.s32 0, %v7861
        %v7863 = vrot.slane %v7859, %v7862
        %v7865 = vsel %vm427, %v7853, 0
        %7867 = vmatprep.subr.mxu0 0.0
        %7868 = vmatpush1.msra.mxu0 %v7855
        %7869 = vmatprep.subr.mxu0 0.0
        %7870 = vmatpush1.msra.mxu0 %v7856
        %7871 = vmatprep.subr.mxu0 0.0
        %7872 = vmatpush1.msra.mxu0 %v7857
        %7873 = vmatprep.subr.mxu0 0.0
        %7874 = vmatpush1.msra.mxu0 %v7858
        %7875 = vmatprep.subr.mxu0 0.0
        %7876 = vmatpush1.msra.mxu0 0.0
        %7877 = vmatprep.subr.mxu0 0.0
        %7878 = vmatpush1.msra.mxu0 0.0
        %7879 = vmatprep.subr.mxu0 0.0
        %7880 = vmatpush1.msra.mxu0 0.0
        %7881 = vmatprep.subr.mxu0 0.0
        %7882 = vmatpush1.msra.mxu0 0.0
        %7883 = vmatprep.subr.mxu0 0.0
        %7884 = vmatpush1.msra.mxu0 0.0
        %7885 = vmatprep.subr.mxu0 0.0
        %7886 = vmatpush1.msra.mxu0 0.0
        %7887 = vmatprep.subr.mxu0 0.0
        %7888 = vmatpush1.msra.mxu0 0.0
        %7889 = vmatprep.subr.mxu0 0.0
        %7890 = vmatpush1.msra.mxu0 0.0
        %7891 = vmatprep.subr.mxu0 0.0
        %7892 = vmatpush1.msra.mxu0 0.0
        %7893 = vmatprep.subr.mxu0 0.0
        %7894 = vmatpush1.msra.mxu0 0.0
        %7895 = vmatprep.subr.mxu0 0.0
        %7896 = vmatpush1.msra.mxu0 0.0
        %7897 = vmatprep.subr.mxu0 0.0
        %7898 = vmatpush1.msra.mxu0 0.0
        %7899 = vmatprep.subr.mxu0 0.0
        %7900 = vmatpush1.msra.mxu0 0.0
        %7901 = vmatprep.subr.mxu0 0.0
        %7902 = vmatpush1.msra.mxu0 0.0
        %7903 = vmatprep.subr.mxu0 0.0
        %7904 = vmatpush1.msra.mxu0 0.0
        %7905 = vmatprep.subr.mxu0 0.0
        %7906 = vmatpush1.msra.mxu0 0.0
        %7907 = vmatprep.subr.mxu0 0.0
        %7908 = vmatpush1.msra.mxu0 0.0
        %7909 = vmatprep.subr.mxu0 0.0
        %7910 = vmatpush1.msra.mxu0 0.0
        %7911 = vmatprep.subr.mxu0 0.0
        %7912 = vmatpush1.msra.mxu0 0.0
        %7913 = vmatprep.subr.mxu0 0.0
        %7914 = vmatpush1.msra.mxu0 0.0
        %7915 = vmatprep.subr.mxu0 0.0
        %7916 = vmatpush1.msra.mxu0 0.0
        %7917 = vmatprep.subr.mxu0 0.0
        %7918 = vmatpush1.msra.mxu0 0.0
        %7919 = vmatprep.subr.mxu0 0.0
        %7920 = vmatpush1.msra.mxu0 0.0
        %7921 = vmatprep.subr.mxu0 0.0
        %7922 = vmatpush1.msra.mxu0 0.0
        %7923 = vmatprep.subr.mxu0 0.0
        %7924 = vmatpush1.msra.mxu0 0.0
        %7925 = vmatprep.subr.mxu0 0.0
        %7926 = vmatpush1.msra.mxu0 0.0
        %7927 = vmatprep.subr.mxu0 0.0
        %7928 = vmatpush1.msra.mxu0 0.0
        %7929 = vmatprep.subr.mxu0 0.0
        %7930 = vmatpush1.msra.mxu0 0.0
        %7931 = vmatprep.mubr.f32.mxu0 0.0
        %7932 = vmatmul.mubr.f32.gmra.mrb[0].mxu0 %v7865
        %v7933 = vpop.f32.mrb[0].mxu0
        %v7934 = vadd.f32 %v7863, %v7933
        %v7935 = vpop.f32.mrb[0].mxu0
        %7936 = vdwg.mxu0
        %v7937 = vmax.f32 %v7934, 0.0
        %s7938 = scalar_lea.vmem %s8, 64
        %v7939 = vld [vmem:[%s7938] sm:$0xff]
        %v7940 = vld [vmem:[%s7938 + $0x8] sm:$0xff]
        %v7941 = vld [vmem:[%s7938 + $0x10] sm:$0xff]
        %v7942 = vld [vmem:[%s7938 + $0x18] sm:$0xff]
        %v7943 = vld [vmem:[%s7938 + $0x20] sm:$0xff]
        %v7944 = vld [vmem:[%s7938 + $0x28] sm:$0xff]
        %v7945 = vld [vmem:[%s7938 + $0x30] sm:$0xff]
        %v7946 = vld [vmem:[%s7938 + $0x38] sm:$0xff]
        %v7948 = vsel %vm4145, %v7937, 0
        %7950 = vmatprep.subr.mxu0 0.0
        %7951 = vmatpush1.msra.mxu0 %v7939
        %7952 = vmatprep.subr.mxu0 0.0
        %7953 = vmatpush1.msra.mxu0 %v7940
        %7954 = vmatprep.subr.mxu0 0.0
        %7955 = vmatpush1.msra.mxu0 %v7941
        %7956 = vmatprep.subr.mxu0 0.0
        %7957 = vmatpush1.msra.mxu0 %v7942
        %7958 = vmatprep.subr.mxu0 0.0
        %7959 = vmatpush1.msra.mxu0 %v7943
        %7960 = vmatprep.subr.mxu0 0.0
        %7961 = vmatpush1.msra.mxu0 %v7944
        %7962 = vmatprep.subr.mxu0 0.0
        %7963 = vmatpush1.msra.mxu0 %v7945
        %7964 = vmatprep.subr.mxu0 0.0
        %7965 = vmatpush1.msra.mxu0 %v7946
        %7966 = vmatprep.subr.mxu0 0.0
        %7967 = vmatpush1.msra.mxu0 0.0
        %7968 = vmatprep.subr.mxu0 0.0
        %7969 = vmatpush1.msra.mxu0 0.0
        %7970 = vmatprep.subr.mxu0 0.0
        %7971 = vmatpush1.msra.mxu0 0.0
        %7972 = vmatprep.subr.mxu0 0.0
        %7973 = vmatpush1.msra.mxu0 0.0
        %7974 = vmatprep.subr.mxu0 0.0
        %7975 = vmatpush1.msra.mxu0 0.0
        %7976 = vmatprep.subr.mxu0 0.0
        %7977 = vmatpush1.msra.mxu0 0.0
        %7978 = vmatprep.subr.mxu0 0.0
        %7979 = vmatpush1.msra.mxu0 0.0
        %7980 = vmatprep.subr.mxu0 0.0
        %7981 = vmatpush1.msra.mxu0 0.0
        %7982 = vmatprep.subr.mxu0 0.0
        %7983 = vmatpush1.msra.mxu0 0.0
        %7984 = vmatprep.subr.mxu0 0.0
        %7985 = vmatpush1.msra.mxu0 0.0
        %7986 = vmatprep.subr.mxu0 0.0
        %7987 = vmatpush1.msra.mxu0 0.0
        %7988 = vmatprep.subr.mxu0 0.0
        %7989 = vmatpush1.msra.mxu0 0.0
        %7990 = vmatprep.subr.mxu0 0.0
        %7991 = vmatpush1.msra.mxu0 0.0
        %7992 = vmatprep.subr.mxu0 0.0
        %7993 = vmatpush1.msra.mxu0 0.0
        %7994 = vmatprep.subr.mxu0 0.0
        %7995 = vmatpush1.msra.mxu0 0.0
        %7996 = vmatprep.subr.mxu0 0.0
        %7997 = vmatpush1.msra.mxu0 0.0
        %7998 = vmatprep.subr.mxu0 0.0
        %7999 = vmatpush1.msra.mxu0 0.0
        %8000 = vmatprep.subr.mxu0 0.0
        %8001 = vmatpush1.msra.mxu0 0.0
        %8002 = vmatprep.subr.mxu0 0.0
        %8003 = vmatpush1.msra.mxu0 0.0
        %8004 = vmatprep.subr.mxu0 0.0
        %8005 = vmatpush1.msra.mxu0 0.0
        %8006 = vmatprep.subr.mxu0 0.0
        %8007 = vmatpush1.msra.mxu0 0.0
        %8008 = vmatprep.subr.mxu0 0.0
        %8009 = vmatpush1.msra.mxu0 0.0
        %8010 = vmatprep.subr.mxu0 0.0
        %8011 = vmatpush1.msra.mxu0 0.0
        %8012 = vmatprep.subr.mxu0 0.0
        %8013 = vmatpush1.msra.mxu0 0.0
        %8014 = vmatprep.mubr.f32.mxu0 0.0
        %8015 = vmatmul.mubr.f32.gmra.mrb[0].mxu0 %v7948
        %v8016 = vpop.f32.mrb[0].mxu0
        %v8017 = vadd.f32 0.0, %v8016
        %v8018 = vpop.f32.mrb[0].mxu0
        %8019 = vdwg.mxu0
        %v8020 = vadd.f32 %v7830, %v8017
        %v8021 = vlaneseq
        %v8022 = vshrl.u32 %v8021, 7
        %v8023 = vsub.s32 0, %v8022
        %v8024 = vrot.slane %v4234, %v8023
        %v8025 = vadd.f32 %v8020, %v8024
        %v8026 = vld [vmem:[%s10] sm:$0x1]
        %v8027 = vld [vmem:[%s10 + $0x1] sm:$0x1]
        %v8028 = vld [vmem:[%s10 + $0x2] sm:$0x1]
        %v8029 = vld [vmem:[%s10 + $0x8] sm:$0xff]
        %v8030 = vld [vmem:[%s10 + $0x10] sm:$0xff]
        %v8031 = vld [vmem:[%s10 + $0x18] sm:$0xff]
        %v8032 = vld [vmem:[%s10 + $0x20] sm:$0xff]
        %v8033 = vsel %vm427, %v8025, 0.0
        %8034 = vadd.xlane.f32.xlu0 %v8033
        %v8035 = vpop.xlane.xlu0 %8034
        %v8036 = vmul.f32 %v8035, %v431
        %v8037 = vsub.f32 %v8025, %v8036
        %v8038 = vmul.f32 %v8037, %v8037
        %v8039 = vsel %vm427, %v8038, 0.0
        %8040 = vadd.xlane.f32.xlu0 %v8039
        %v8041 = vpop.xlane.xlu0 %8040
        %v8042 = vmul.f32 %v8041, %v431
        %v8043 = vadd.f32 %v8042, 1e-05
        %v8044 = vrsqrt.pop %v8043
        %v8045 = vmul.f32 %v8037, %v8044
        %v8046 = vlaneseq
        %v8047 = vshrl.u32 %v8046, 7
        %v8048 = vsub.s32 0, %v8047
        %v8049 = vrot.slane %v8026, %v8048
        %v8050 = vmul.f32 %v8045, %v8049
        %v8051 = vlaneseq
        %v8052 = vshrl.u32 %v8051, 7
        %v8053 = vsub.s32 0, %v8052
        %v8054 = vrot.slane %v8027, %v8053
        %v8055 = vadd.f32 %v8050, %v8054
        %v8056 = vlaneseq
        %v8057 = vshrl.u32 %v8056, 7
        %v8058 = vsub.s32 0, %v8057
        %v8059 = vrot.slane %v8028, %v8058
        %v8061 = vsel %vm427, %v8055, 0
        %8063 = vmatprep.subr.mxu0 0.0
        %8064 = vmatpush1.msra.mxu0 %v8029
        %8065 = vmatprep.subr.mxu0 0.0
        %8066 = vmatpush1.msra.mxu0 %v8030
        %8067 = vmatprep.subr.mxu0 0.0
        %8068 = vmatpush1.msra.mxu0 %v8031
        %8069 = vmatprep.subr.mxu0 0.0
        %8070 = vmatpush1.msra.mxu0 %v8032
        %8071 = vmatprep.subr.mxu0 0.0
        %8072 = vmatpush1.msra.mxu0 0.0
        %8073 = vmatprep.subr.mxu0 0.0
        %8074 = vmatpush1.msra.mxu0 0.0
        %8075 = vmatprep.subr.mxu0 0.0
        %8076 = vmatpush1.msra.mxu0 0.0
        %8077 = vmatprep.subr.mxu0 0.0
        %8078 = vmatpush1.msra.mxu0 0.0
        %8079 = vmatprep.subr.mxu0 0.0
        %8080 = vmatpush1.msra.mxu0 0.0
        %8081 = vmatprep.subr.mxu0 0.0
        %8082 = vmatpush1.msra.mxu0 0.0
        %8083 = vmatprep.subr.mxu0 0.0
        %8084 = vmatpush1.msra.mxu0 0.0
        %8085 = vmatprep.subr.mxu0 0.0
        %8086 = vmatpush1.msra.mxu0 0.0
        %8087 = vmatprep.subr.mxu0 0.0
        %8088 = vmatpush1.msra.mxu0 0.0
        %8089 = vmatprep.subr.mxu0 0.0
        %8090 = vmatpush1.msra.mxu0 0.0
        %8091 = vmatprep.subr.mxu0 0.0
        %8092 = vmatpush1.msra.mxu0 0.0
        %8093 = vmatprep.subr.mxu0 0.0
        %8094 = vmatpush1.msra.mxu0 0.0
        %8095 = vmatprep.subr.mxu0 0.0
        %8096 = vmatpush1.msra.mxu0 0.0
        %8097 = vmatprep.subr.mxu0 0.0
        %8098 = vmatpush1.msra.mxu0 0.0
        %8099 = vmatprep.subr.mxu0 0.0
        %8100 = vmatpush1.msra.mxu0 0.0
        %8101 = vmatprep.subr.mxu0 0.0
        %8102 = vmatpush1.msra.mxu0 0.0
        %8103 = vmatprep.subr.mxu0 0.0
        %8104 = vmatpush1.msra.mxu0 0.0
        %8105 = vmatprep.subr.mxu0 0.0
        %8106 = vmatpush1.msra.mxu0 0.0
        %8107 = vmatprep.subr.mxu0 0.0
        %8108 = vmatpush1.msra.mxu0 0.0
        %8109 = vmatprep.subr.mxu0 0.0
        %8110 = vmatpush1.msra.mxu0 0.0
        %8111 = vmatprep.subr.mxu0 0.0
        %8112 = vmatpush1.msra.mxu0 0.0
        %8113 = vmatprep.subr.mxu0 0.0
        %8114 = vmatpush1.msra.mxu0 0.0
        %8115 = vmatprep.subr.mxu0 0.0
        %8116 = vmatpush1.msra.mxu0 0.0
        %8117 = vmatprep.subr.mxu0 0.0
        %8118 = vmatpush1.msra.mxu0 0.0
        %8119 = vmatprep.subr.mxu0 0.0
        %8120 = vmatpush1.msra.mxu0 0.0
        %8121 = vmatprep.subr.mxu0 0.0
        %8122 = vmatpush1.msra.mxu0 0.0
        %8123 = vmatprep.subr.mxu0 0.0
        %8124 = vmatpush1.msra.mxu0 0.0
        %8125 = vmatprep.subr.mxu0 0.0
        %8126 = vmatpush1.msra.mxu0 0.0
        %8127 = vmatprep.mubr.f32.mxu0 0.0
        %8128 = vmatmul.mubr.f32.gmra.mrb[0].mxu0 %v8061
        %v8129 = vpop.f32.mrb[0].mxu0
        %v8130 = vadd.f32 %v8059, %v8129
        %v8131 = vpop.f32.mrb[0].mxu0
        %8132 = vdwg.mxu0
        %8133 = vst [vmem:[%s383] sm:$0xff] %v8130
        %s8134 = sand.u32 %s264, 1
        %s8135 = scalar_lea.sflag [#allocation5], %s8134
        %s8136 = sand.u32 %s264, 1
        %s8137 = smul.addr %s8136, 8
        %s8138 = scalar_lea.vmem [#allocation4], %s8137
        // Predicated region
        $region61: #{transformer_decoder_forward.1} parent=59 // pred_check
          %p8139 = pneg %p274
        $region62: #{transformer_decoder_forward.1} parent=59 // pred_check_branch
          %8141 = sbr.rel (%p8139) target = $region64
        $region63: #{transformer_decoder_forward.1} parent=59 // pred_region
          %s8143 = ssub.s32 128, 128
          %8144 = vsyncadd %s8135, %s8143
          %s8145 = smul.addr %s31, 128
          %s8146 = scalar_lea.hbm %s11, %s8145
          %s8148 = sshll.u32 %s8138, 4
          %s8149 = int_to_ptr.vmem [resolvable:$true] %s8148
          %8151 = dma.vmem_to_hbm [thread:$0]  %s8149, 128, %s8146, %s8135
        $region64: #{transformer_decoder_forward.1} parent=59 // pred_fallthru
          _
      $region60: #{transformer_decoder_forward.1} parent=5 // pred_fallthru
        _
      %p8152 = scmp.le.s32.totalorder 2, %s26
      // Predicated region
      $region65: #{transformer_decoder_forward.1} parent=5 // pred_check
        %p8153 = pneg %p8152
      $region66: #{transformer_decoder_forward.1} parent=5 // pred_check_branch
        %8155 = sbr.rel (%p8153) target = $region68
      $region67: #{transformer_decoder_forward.1} parent=5 // pred_region
        %s8156 = ssub.s32 %s26, 2
        // Predicated region
        $region69: #{transformer_decoder_forward.1} parent=67 // pred_check
          %p8157 = pneg %p280
        $region70: #{transformer_decoder_forward.1} parent=67 // pred_check_branch
          %8159 = sbr.rel (%p8157) target = $region72
        $region71: #{transformer_decoder_forward.1} parent=67 // pred_region
          %s8160 = sand.u32 %s265, 1
          %s8161 = scalar_lea.sflag [#allocation5], %s8160
          %s8162 = sand.u32 %s265, 1
          %s8163 = smul.addr %s8162, 8
          %s8164 = scalar_lea.vmem [#allocation4], %s8163
          %8165 = dma.done %s8161, 128
        $region72: #{transformer_decoder_forward.1} parent=67 // pred_fallthru
          _
      $region68: #{transformer_decoder_forward.1} parent=5 // pred_fallthru
        _
    $region6: #{transformer_decoder_forward.1} parent=1 // loop_footer
      %s30 = sadd.s32 1, %s26
    $region7: #{transformer_decoder_forward.1} parent=1 // loop_footer_branch
      %25 = sbr.rel target = $region3
    $region8: #{transformer_decoder_forward.1} parent=1 // loop_exit
      _
    %8166 = vsyncpa [#allocation5], 1
    %s8167 = scalar_lea.sflag [#allocation5], 1
    %8168 = vsyncpa %s8167, 1

</llo_original>
